<compile_context>
chip_gen: v7x
topology: tpu7x:2x2x1
jax: 0.10.0
libtpu: 0.0.40
codegen_flags: <defaults>
</compile_context>

<pallas_src>
import functools

import jax
import jax.numpy as jnp
from jax.experimental import pallas as pl
from jax.experimental.pallas import tpu as pltpu


def _round_up(x, m):
    return (x + m - 1) // m * m


# --- sub-pixel decomposition tables for ConvTranspose2d(k=4, s=2, p=1) ------
# deconv output row: oy = 2*iy - 1 + ky.  Layer-3 reads layer-2's output y
# through its parity planes P[p][q] = y[2*q + p].  For output row oy = 4*i + m
# the two taps come from one of four (plane, shift) slices of those planes:
_L3_SLICES = ((0, 0),    # y[2i]     -> plane 0, shift  0
              (1, 0),    # y[2i + 1] -> plane 1, shift  0
              (1, -1),   # y[2i - 1] -> plane 1, shift -1
              (0, 1))    # y[2i + 2] -> plane 0, shift +1
# _L3_K[s][m] = kernel tap ky used by output parity m when reading slice s
# (None -> slice s does not contribute to parity m).
_L3_K = ((1, 2, 3, None),
         (None, 0, 1, 2),
         (3, None, None, None),
         (None, None, None, 0))


# ----------------------------------------------------------------------------
# Fused decoder kernel (one grid step == Bblk images, flattened into matmul M)
# ----------------------------------------------------------------------------
def _decoder_kernel(x_ref, w1_ref, b1_ref, w2_ref, b2_ref, w3_ref, b3_ref,
                    o_ref, x1p_ref, p2p_ref, stage_ref, *,
                    H, W, Cin, Chid, NOUT, Bblk, NP, NPT):
    Wp = W + 2               # padded row width, shared by every stage
    M = H * Wp               # valid rows per image (incl. 2 halo cols per row)
    RT = Bblk * NP           # slab compute rows per grid step
    HEAD = Wp + 1            # top-halo rows of every padded stage buffer
    f32 = jnp.float32
    cdt = stage_ref.dtype    # MXU operand dtype (bf16 by default)

    k1, k2, k3 = 9 * Cin, 4 * Chid, 16 * Chid

    # Re-zero only the halo rows the slab writes below never touch (top halo
    # of image 0 and the slab tail).  Per step -- not gated on program_id --
    # so it is safe under megacore "parallel" sharding (scratch is per-core).
    zhead = jnp.zeros((HEAD, Chid), f32)
    ztail = jnp.zeros((NPT - HEAD - RT, Chid), f32)
    x1p_ref[0:HEAD, :] = zhead
    x1p_ref[HEAD + RT:NPT, :] = ztail
    for py in range(2):
        for px in range(2):
            p2p_ref[py, px, 0:HEAD, :] = zhead
            p2p_ref[py, px, HEAD + RT:NPT, :] = ztail

    # Row-validity mask, hoisted & broadcast exactly once: zero the 2 halo
    # columns of every flattened row and the inter-image filler rows so the
    # next stage's zero halos stay exactly zero.
    r = jax.lax.broadcasted_iota(jnp.int32, (RT, 1), 0)
    m_loc = r % NP
    valid = jnp.broadcast_to((m_loc < M) & ((m_loc % Wp) < W), (RT, Chid))

    # ---- layer 1: Conv2d 3x3 pad 1 + ReLU  (9 taps K-folded, one matmul) ----
    for ky in range(3):
        for kx in range(3):
            t = ky * 3 + kx
            off = ky * Wp + kx
            stage_ref[:, t * Cin:(t + 1) * Cin] = (
                x_ref[0, off:off + RT, :].astype(cdt))
    acc = jnp.dot(stage_ref[:, :k1], w1_ref[...], preferred_element_type=f32)
    h1 = jnp.where(valid, jnp.maximum(acc + b1_ref[...], 0.0), 0.0)
    x1p_ref[HEAD:HEAD + RT, :] = h1

    # ---- layer 2: ConvTranspose2d 4x4 s2 p1 + ReLU (sub-pixel, K-folded) ----
    # Output parity (py, px): out[2i+py, 2j+px] uses a 2x2 window of h1.
    for py in range(2):
        for px in range(2):
            for ay in range(2):
                for ax in range(2):
                    t = ay * 2 + ax
                    off = (py + ay) * Wp + (px + ax)
                    stage_ref[:, t * Chid:(t + 1) * Chid] = (
                        x1p_ref[off:off + RT, :].astype(cdt))
            acc = jnp.dot(stage_ref[:, :k2], w2_ref[py * 2 + px],
                          preferred_element_type=f32)
            h2 = jnp.where(valid, jnp.maximum(acc + b2_ref[...], 0.0), 0.0)
            p2p_ref[py, px, HEAD:HEAD + RT, :] = h2

    # ---- layer 3: ConvTranspose2d 4x4 s2 p1 + sigmoid ------------------------
    # 16 output parities folded into N (zero-padded to NOUT=128 lanes so the
    # HBM store is a full-width vst) and the 16 (slice_y, slice_x) taps folded
    # into K -> one (RT, 16*Chid) @ (16*Chid, NOUT) matmul per grid step.
    for sy in range(4):
        plane_y, shift_y = _L3_SLICES[sy]
        for sx in range(4):
            plane_x, shift_x = _L3_SLICES[sx]
            t = sy * 4 + sx
            off = (1 + shift_y) * Wp + (1 + shift_x)
            stage_ref[:, t * Chid:(t + 1) * Chid] = (
                p2p_ref[plane_y, plane_x, off:off + RT, :].astype(cdt))
    acc = jnp.dot(stage_ref[:, :k3], w3_ref[...], preferred_element_type=f32)
    out = jax.nn.sigmoid(acc + b3_ref[...])
    for b in range(Bblk):
        o_ref[b] = out[b * NP:b * NP + M, :].astype(o_ref.dtype)


# ----------------------------------------------------------------------------
# Trace-time weight folding (K-folded / parity-folded layouts)
# ----------------------------------------------------------------------------
def _fold_w2(w2_pt):
    """PyTorch (Cin, Cout, 4, 4) ConvTranspose weight -> (4, 4*Cin, Cout):
    per output parity, the 2x2 sub-kernel taps concatenated along K."""
    folds = []
    for py in range(2):
        for px in range(2):
            blocks = []
            for ay in range(2):
                for ax in range(2):
                    ky, kx = 3 - 2 * ay - py, 3 - 2 * ax - px
                    blocks.append(w2_pt[:, :, ky, kx])
            folds.append(jnp.concatenate(blocks, axis=0))
    return jnp.stack(folds)


def _fold_w3(w3_pt, nout):
    """PyTorch (Chid, Cout, 4, 4) ConvTranspose weight -> (16*Chid, nout):
    16 (slice_y, slice_x) taps folded into K; 16 output parities folded into N
    (zero where a slice doesn't feed a parity) and zero-padded to nout lanes."""
    Chid, Cout = w3_pt.shape[0], w3_pt.shape[1]
    zero = jnp.zeros((Chid, Cout), w3_pt.dtype)
    blocks = []
    for sy in range(4):
        for sx in range(4):
            cols = []
            for m in range(4):
                for n in range(4):
                    ky, kx = _L3_K[sy][m], _L3_K[sx][n]
                    cols.append(zero if (ky is None or kx is None)
                                else w3_pt[:, :, ky, kx])
            blocks.append(jnp.concatenate(cols, axis=1))   # (Chid, 16*Cout)
    wf = jnp.concatenate(blocks, axis=0)                    # (16*Chid, 16*Cout)
    return jnp.pad(wf, ((0, 0), (0, nout - 16 * Cout)))


# ----------------------------------------------------------------------------
# Wrapper: layout plumbing (trace time), pallas_call, output un-interleave
# ----------------------------------------------------------------------------
def decoder_forward(z_q, params, *, mxu_dtype=jnp.bfloat16, block_batch=None):
    """z_q: (B, H, W, embed_dim) NHWC.  Returns (B, 4H, 4W, out_channels)."""
    B, H, W, Cin = z_q.shape
    Chid = params["conv1_w"].shape[0]
    Cout = params["deconv2_w"].shape[1]
    Wp = W + 2
    M = H * Wp
    NP = _round_up((H + 2) * Wp, 8)        # per-image padded-buffer rows
    TAIL = _round_up(2 * Wp + 2, 8)        # slack covering the largest tap offset
    NOUT = _round_up(16 * Cout, 128)       # lane-dense store width
    kmax = max(9 * Cin, 4 * Chid, 16 * Chid)
    cbytes = jnp.dtype(mxu_dtype).itemsize

    # ---- images per grid step (amortizes per-step overhead & DMA latency) ---
    if block_batch is None:
        block_batch = 8 if B >= 16 else max(1, B // 2)   # keep grid >= 2 (v7x)
    Bblk = max(1, min(int(block_batch), B))

    def vmem_est(bb):   # rough per-step VMEM footprint (for v7x re-budgeting)
        rt = bb * NP
        npt = rt + TAIL
        scratch = 5 * npt * Chid * 4 + rt * kmax * cbytes
        io = 2 * (npt * Cin * 4 + bb * M * NOUT * 4)          # double-buffered
        wts = 2 * (9 * Cin * Chid + 16 * Chid * Chid + 16 * Chid * NOUT) * cbytes
        return scratch + io + wts

    while Bblk > 1 and vmem_est(Bblk) > 12 * 1024 * 1024:
        Bblk //= 2

    G = -(-B // Bblk)
    Bpad = G * Bblk
    RT = Bblk * NP
    NPT = RT + TAIL

    # ---- weight / bias re-layout (tiny, trace-time) --------------------------
    w1 = jnp.transpose(params["conv1_w"], (2, 3, 1, 0)).reshape(9 * Cin, Chid)
    w1 = w1.astype(mxu_dtype)
    w2 = _fold_w2(params["deconv1_w"]).astype(mxu_dtype)        # (4, 4*Chid, Chid)
    w3 = _fold_w3(params["deconv2_w"], NOUT).astype(mxu_dtype)  # (16*Chid, NOUT)
    b1 = params["conv1_b"].reshape(1, Chid).astype(jnp.float32)
    b2 = params["deconv1_b"].reshape(1, Chid).astype(jnp.float32)
    b3 = jnp.pad(jnp.tile(params["deconv2_b"], 16),
                 (0, NOUT - 16 * Cout)).reshape(1, NOUT).astype(jnp.float32)

    # ---- zero-halo + flatten the (tiny) input once in XLA --------------------
    z = z_q.astype(jnp.float32)
    z = jnp.pad(z, ((0, Bpad - B), (1, 1), (1, 1), (0, 0)))
    z = z.reshape(Bpad, (H + 2) * Wp, Cin)
    z = jnp.pad(z, ((0, 0), (0, NP - (H + 2) * Wp), (0, 0)))
    z = z.reshape(G, RT, Cin)
    z = jnp.pad(z, ((0, 0), (0, TAIL), (0, 0)))                 # (G, NPT, Cin)

    kernel = functools.partial(_decoder_kernel, H=H, W=W, Cin=Cin, Chid=Chid,
                               NOUT=NOUT, Bblk=Bblk, NP=NP, NPT=NPT)
    out_flat = pl.pallas_call(
        kernel,
        out_shape=jax.ShapeDtypeStruct((Bpad, M, NOUT), jnp.float32),
        grid_spec=pltpu.PrefetchScalarGridSpec(
            num_scalar_prefetch=0,
            grid=(G,),
            in_specs=[
                pl.BlockSpec((1, NPT, Cin), lambda g: (g, 0, 0)),
                pl.BlockSpec((9 * Cin, Chid), lambda g: (0, 0)),
                pl.BlockSpec((1, Chid), lambda g: (0, 0)),
                pl.BlockSpec((4, 4 * Chid, Chid), lambda g: (0, 0, 0)),
                pl.BlockSpec((1, Chid), lambda g: (0, 0)),
                pl.BlockSpec((16 * Chid, NOUT), lambda g: (0, 0)),
                pl.BlockSpec((1, NOUT), lambda g: (0, 0)),
            ],
            out_specs=pl.BlockSpec((Bblk, M, NOUT), lambda g: (g, 0, 0)),
            scratch_shapes=[
                pltpu.VMEM((NPT, Chid), jnp.float32),        # padded layer-1 slab
                pltpu.VMEM((2, 2, NPT, Chid), jnp.float32),  # padded layer-2 parity slabs
                pltpu.VMEM((RT, kmax), mxu_dtype),           # K-folded matmul LHS staging
            ],
        ),
        compiler_params=pltpu.CompilerParams(
            dimension_semantics=("parallel",),   # batch blocks across TCs on v7x
            vmem_limit_bytes=int(min(max(2 * vmem_est(Bblk), 32 * 1024 * 1024),
                                     56 * 1024 * 1024)),
        ),
    )(z, w1, b1, w2, b2, w3, b3)

    # Un-interleave: out_flat[b, i*Wp + j, (m*4+n)*Cout + c] == y[b, 4i+m, 4j+n, c]
    out = out_flat[:B].reshape(B, H, Wp, NOUT)[:, :, :W, :16 * Cout]
    out = out.reshape(B, H, W, 4, 4, Cout)
    out = jnp.transpose(out, (0, 1, 3, 2, 4, 5))
    return out.reshape(B, 4 * H, 4 * W, Cout)


def init_params(key, embed_dim, hidden_channels, out_channels):
    ks = jax.random.split(key, 6)
    s = 0.05
    return {
        "conv1_w": s * jax.random.normal(ks[0], (hidden_channels, embed_dim, 3, 3), jnp.float32),
        "conv1_b": s * jax.random.normal(ks[1], (hidden_channels,), jnp.float32),
        "deconv1_w": s * jax.random.normal(ks[2], (hidden_channels, hidden_channels, 4, 4), jnp.float32),
        "deconv1_b": s * jax.random.normal(ks[3], (hidden_channels,), jnp.float32),
        "deconv2_w": s * jax.random.normal(ks[4], (hidden_channels, out_channels, 4, 4), jnp.float32),
        "deconv2_b": s * jax.random.normal(ks[5], (out_channels,), jnp.float32),
    }


# ----------------------------------------------------------------------------
# Pure-JAX reference (XLA convs) for a correctness sanity check
# ----------------------------------------------------------------------------
def _ref_forward(z_q, params):
    dn = ("NHWC", "HWIO", "NHWC")
    w1 = jnp.transpose(params["conv1_w"], (2, 3, 1, 0))
    x = jax.lax.conv_general_dilated(z_q, w1, (1, 1), ((1, 1), (1, 1)),
                                     dimension_numbers=dn)
    x = jax.nn.relu(x + params["conv1_b"])

    def deconv(x, w_pt, b):
        w = jnp.transpose(w_pt[:, :, ::-1, ::-1], (2, 3, 0, 1))
        y = jax.lax.conv_general_dilated(x, w, (1, 1), ((2, 2), (2, 2)),
                                         lhs_dilation=(2, 2),
                                         dimension_numbers=dn)
        return y + b

    x = jax.nn.relu(deconv(x, params["deconv1_w"], params["deconv1_b"]))
    return jax.nn.sigmoid(deconv(x, params["deconv2_w"], params["deconv2_b"]))


if __name__ == "__main__":
    # Small shapes: batch=4 (-> 2 images per grid step, grid of 2),
    # embed_dim=8, hidden=16, out=1, latent spatial 8x8 (-> 32x32 output).
    B, EMBED, HIDDEN, OUT, H, W = 4, 8, 16, 1, 8, 8

    key = jax.random.PRNGKey(0)
    k_in, k_p = jax.random.split(key)
    # z_q in NHWC (the PyTorch module would take the NCHW transpose of this).
    z_q = jax.random.normal(k_in, (B, H, W, EMBED), jnp.float32)
    params = init_params(k_p, EMBED, HIDDEN, OUT)

    ref = jax.block_until_ready(_ref_forward(z_q, params))

    # f32-MXU path: tight numerical check against the XLA reference.
    fwd_f32 = jax.jit(functools.partial(decoder_forward, mxu_dtype=jnp.float32))
    out32 = jax.block_until_ready(fwd_f32(z_q, params))
    assert out32.shape == (B, 4 * H, 4 * W, OUT), out32.shape
    err32 = float(jnp.max(jnp.abs(out32 - ref)))
    assert err32 < 1e-4, f"f32 path mismatch vs reference: {err32}"

    # Default fast path: bf16 MXU operands (looser tolerance).
    fwd = jax.jit(decoder_forward)
    out16 = jax.block_until_ready(fwd(z_q, params))
    assert out16.shape == (B, 4 * H, 4 * W, OUT), out16.shape
    err16 = float(jnp.max(jnp.abs(out16 - ref)))
    assert err16 < 2e-2, f"bf16 path mismatch vs reference: {err16}"

    print("KERNEL_OK")
</pallas_src>

<mosaic_0001>
module attributes {stable_mosaic.version = 11 : i64} {
  func.func @_decoder_kernel(%arg0: i32, %arg1: memref<1x232x8xf32, #tpu.memory_space<vmem>>, %arg2: memref<72x16xf32, #tpu.memory_space<vmem>>, %arg3: memref<1x16xf32, #tpu.memory_space<vmem>>, %arg4: memref<4x64x16xf32, #tpu.memory_space<vmem>>, %arg5: memref<1x16xf32, #tpu.memory_space<vmem>>, %arg6: memref<256x128xf32, #tpu.memory_space<vmem>>, %arg7: memref<1x128xf32, #tpu.memory_space<vmem>>, %arg8: memref<2x80x128xf32, #tpu.memory_space<vmem>>, %arg9: memref<232x16xf32, #tpu.memory_space<vmem>>, %arg10: memref<2x2x232x16xf32, #tpu.memory_space<vmem>>, %arg11: memref<208x256xf32, #tpu.memory_space<vmem>>) attributes {dimension_semantics = [#tpu.dimension_semantics<parallel>], iteration_bounds = array<i64: 2>, scalar_prefetch = 0 : i64, scratch_operands = 3 : i64, tpu.core_type = #tpu.core_type<tc>, window_params = [{transform_indices = @transform_0, window_bounds = array<i64: 1, 232, 8>}, {pipeline_mode = #tpu.pipeline_mode<synchronous>, transform_indices = @transform_1, window_bounds = array<i64: 72, 16>}, {pipeline_mode = #tpu.pipeline_mode<synchronous>, transform_indices = @transform_2, window_bounds = array<i64: 1, 16>}, {pipeline_mode = #tpu.pipeline_mode<synchronous>, transform_indices = @transform_3, window_bounds = array<i64: 4, 64, 16>}, {pipeline_mode = #tpu.pipeline_mode<synchronous>, transform_indices = @transform_4, window_bounds = array<i64: 1, 16>}, {pipeline_mode = #tpu.pipeline_mode<synchronous>, transform_indices = @transform_5, window_bounds = array<i64: 256, 128>}, {pipeline_mode = #tpu.pipeline_mode<synchronous>, transform_indices = @transform_6, window_bounds = array<i64: 1, 128>}, {transform_indices = @transform_7, window_bounds = array<i64: 2, 80, 128>}]} {
    %cst = arith.constant 0.000000e+00 : f32
    %0 = vector.broadcast %cst : f32 to vector<11x16xf32>
    %cst_0 = arith.constant 0.000000e+00 : f32
    %1 = vector.broadcast %cst_0 : f32 to vector<13x16xf32>
    %c0 = arith.constant 0 : index
    %c0_1 = arith.constant 0 : index
    %2 = vector.load %arg9[%c0, %c0_1] : memref<232x16xf32, #tpu.memory_space<vmem>>, vector<11x16xf32>
    tpu.vector_store %arg9[%c0, %c0_1], %0 {strides = array<i32>} : memref<232x16xf32, #tpu.memory_space<vmem>>, vector<11x16xf32>,
    %c219 = arith.constant 219 : index
    %c0_2 = arith.constant 0 : index
    %3 = vector.load %arg9[%c219, %c0_2] : memref<232x16xf32, #tpu.memory_space<vmem>>, vector<13x16xf32>
    tpu.vector_store %arg9[%c219, %c0_2], %1 {strides = array<i32>} : memref<232x16xf32, #tpu.memory_space<vmem>>, vector<13x16xf32>,
    %c0_3 = arith.constant 0 : index
    %c0_4 = arith.constant 0 : index
    %c0_5 = arith.constant 0 : index
    %c0_6 = arith.constant 0 : index
    %4 = vector.load %arg10[%c0_3, %c0_4, %c0_5, %c0_6] : memref<2x2x232x16xf32, #tpu.memory_space<vmem>>, vector<1x1x11x16xf32>
    %5 = vector.shape_cast %4 : vector<1x1x11x16xf32> to vector<11x16xf32>
    %6 = vector.shape_cast %0 : vector<11x16xf32> to vector<1x1x11x16xf32>
    tpu.vector_store %arg10[%c0_3, %c0_4, %c0_5, %c0_6], %6 {strides = array<i32>} : memref<2x2x232x16xf32, #tpu.memory_space<vmem>>, vector<1x1x11x16xf32>,
    %c0_7 = arith.constant 0 : index
    %c0_8 = arith.constant 0 : index
    %c219_9 = arith.constant 219 : index
    %c0_10 = arith.constant 0 : index
    %7 = vector.load %arg10[%c0_7, %c0_8, %c219_9, %c0_10] : memref<2x2x232x16xf32, #tpu.memory_space<vmem>>, vector<1x1x13x16xf32>
    %8 = vector.shape_cast %7 : vector<1x1x13x16xf32> to vector<13x16xf32>
    %9 = vector.shape_cast %1 : vector<13x16xf32> to vector<1x1x13x16xf32>
    tpu.vector_store %arg10[%c0_7, %c0_8, %c219_9, %c0_10], %9 {strides = array<i32>} : memref<2x2x232x16xf32, #tpu.memory_space<vmem>>, vector<1x1x13x16xf32>,
    %c0_11 = arith.constant 0 : index
    %c1 = arith.constant 1 : index
    %c0_12 = arith.constant 0 : index
    %c0_13 = arith.constant 0 : index
    %10 = vector.load %arg10[%c0_11, %c1, %c0_12, %c0_13] : memref<2x2x232x16xf32, #tpu.memory_space<vmem>>, vector<1x1x11x16xf32>
    %11 = vector.shape_cast %10 : vector<1x1x11x16xf32> to vector<11x16xf32>
    %12 = vector.shape_cast %0 : vector<11x16xf32> to vector<1x1x11x16xf32>
    tpu.vector_store %arg10[%c0_11, %c1, %c0_12, %c0_13], %12 {strides = array<i32>} : memref<2x2x232x16xf32, #tpu.memory_space<vmem>>, vector<1x1x11x16xf32>,
    %c0_14 = arith.constant 0 : index
    %c1_15 = arith.constant 1 : index
    %c219_16 = arith.constant 219 : index
    %c0_17 = arith.constant 0 : index
    %13 = vector.load %arg10[%c0_14, %c1_15, %c219_16, %c0_17] : memref<2x2x232x16xf32, #tpu.memory_space<vmem>>, vector<1x1x13x16xf32>
    %14 = vector.shape_cast %13 : vector<1x1x13x16xf32> to vector<13x16xf32>
    %15 = vector.shape_cast %1 : vector<13x16xf32> to vector<1x1x13x16xf32>
    tpu.vector_store %arg10[%c0_14, %c1_15, %c219_16, %c0_17], %15 {strides = array<i32>} : memref<2x2x232x16xf32, #tpu.memory_space<vmem>>, vector<1x1x13x16xf32>,
    %c1_18 = arith.constant 1 : index
    %c0_19 = arith.constant 0 : index
    %c0_20 = arith.constant 0 : index
    %c0_21 = arith.constant 0 : index
    %16 = vector.load %arg10[%c1_18, %c0_19, %c0_20, %c0_21] : memref<2x2x232x16xf32, #tpu.memory_space<vmem>>, vector<1x1x11x16xf32>
    %17 = vector.shape_cast %16 : vector<1x1x11x16xf32> to vector<11x16xf32>
    %18 = vector.shape_cast %0 : vector<11x16xf32> to vector<1x1x11x16xf32>
    tpu.vector_store %arg10[%c1_18, %c0_19, %c0_20, %c0_21], %18 {strides = array<i32>} : memref<2x2x232x16xf32, #tpu.memory_space<vmem>>, vector<1x1x11x16xf32>,
    %c1_22 = arith.constant 1 : index
    %c0_23 = arith.constant 0 : index
    %c219_24 = arith.constant 219 : index
    %c0_25 = arith.constant 0 : index
    %19 = vector.load %arg10[%c1_22, %c0_23, %c219_24, %c0_25] : memref<2x2x232x16xf32, #tpu.memory_space<vmem>>, vector<1x1x13x16xf32>
    %20 = vector.shape_cast %19 : vector<1x1x13x16xf32> to vector<13x16xf32>
    %21 = vector.shape_cast %1 : vector<13x16xf32> to vector<1x1x13x16xf32>
    tpu.vector_store %arg10[%c1_22, %c0_23, %c219_24, %c0_25], %21 {strides = array<i32>} : memref<2x2x232x16xf32, #tpu.memory_space<vmem>>, vector<1x1x13x16xf32>,
    %c1_26 = arith.constant 1 : index
    %c1_27 = arith.constant 1 : index
    %c0_28 = arith.constant 0 : index
    %c0_29 = arith.constant 0 : index
    %22 = vector.load %arg10[%c1_26, %c1_27, %c0_28, %c0_29] : memref<2x2x232x16xf32, #tpu.memory_space<vmem>>, vector<1x1x11x16xf32>
    %23 = vector.shape_cast %22 : vector<1x1x11x16xf32> to vector<11x16xf32>
    %24 = vector.shape_cast %0 : vector<11x16xf32> to vector<1x1x11x16xf32>
    tpu.vector_store %arg10[%c1_26, %c1_27, %c0_28, %c0_29], %24 {strides = array<i32>} : memref<2x2x232x16xf32, #tpu.memory_space<vmem>>, vector<1x1x11x16xf32>,
    %c1_30 = arith.constant 1 : index
    %c1_31 = arith.constant 1 : index
    %c219_32 = arith.constant 219 : index
    %c0_33 = arith.constant 0 : index
    %25 = vector.load %arg10[%c1_30, %c1_31, %c219_32, %c0_33] : memref<2x2x232x16xf32, #tpu.memory_space<vmem>>, vector<1x1x13x16xf32>
    %26 = vector.shape_cast %25 : vector<1x1x13x16xf32> to vector<13x16xf32>
    %27 = vector.shape_cast %1 : vector<13x16xf32> to vector<1x1x13x16xf32>
    tpu.vector_store %arg10[%c1_30, %c1_31, %c219_32, %c0_33], %27 {strides = array<i32>} : memref<2x2x232x16xf32, #tpu.memory_space<vmem>>, vector<1x1x13x16xf32>,
    %28 = tpu.iota {dimensions = array<i32: 0>} : vector<208x1xi32>
    %c104_i32 = arith.constant 104 : i32
    %c0_i32 = arith.constant 0 : i32
    %29 = arith.cmpi eq, %c104_i32, %c0_i32 : i32
    %c1_i32 = arith.constant 1 : i32
    %30 = arith.select %29, %c1_i32, %c104_i32 : i32
    %31 = vector.broadcast %30 : i32 to vector<208x1xi32>
    %32 = arith.remsi %28, %31 : vector<208x1xi32>
    %c0_i32_34 = arith.constant 0 : i32
    %33 = vector.broadcast %c0_i32_34 : i32 to vector<208x1xi32>
    %34 = arith.cmpi ne, %32, %33 : vector<208x1xi32>
    %c0_i32_35 = arith.constant 0 : i32
    %35 = vector.broadcast %c0_i32_35 : i32 to vector<208x1xi32>
    %36 = arith.cmpi slt, %32, %35 : vector<208x1xi32>
    %c0_i32_36 = arith.constant 0 : i32
    %37 = arith.cmpi slt, %30, %c0_i32_36 : i32
    %38 = vector.broadcast %37 : i1 to vector<208x1xi1>
    %39 = vector.broadcast %38 : vector<208x1xi1> to vector<208x1xi1>
    %40 = arith.xori %36, %39 : vector<208x1xi1>
    %41 = arith.andi %40, %34 : vector<208x1xi1>
    %42 = vector.broadcast %30 : i32 to vector<208x1xi32>
    %43 = arith.addi %32, %42 : vector<208x1xi32>
    %44 = arith.select %41, %43, %32 : vector<208x1xi1>, vector<208x1xi32>
    %c80_i32 = arith.constant 80 : i32
    %45 = vector.broadcast %c80_i32 : i32 to vector<208x1xi32>
    %46 = arith.cmpi slt, %44, %45 : vector<208x1xi32>
    %c10_i32 = arith.constant 10 : i32
    %c0_i32_37 = arith.constant 0 : i32
    %47 = arith.cmpi eq, %c10_i32, %c0_i32_37 : i32
    %c1_i32_38 = arith.constant 1 : i32
    %48 = arith.select %47, %c1_i32_38, %c10_i32 : i32
    %49 = vector.broadcast %48 : i32 to vector<208x1xi32>
    %50 = arith.remsi %44, %49 : vector<208x1xi32>
    %c0_i32_39 = arith.constant 0 : i32
    %51 = vector.broadcast %c0_i32_39 : i32 to vector<208x1xi32>
    %52 = arith.cmpi ne, %50, %51 : vector<208x1xi32>
    %c0_i32_40 = arith.constant 0 : i32
    %53 = vector.broadcast %c0_i32_40 : i32 to vector<208x1xi32>
    %54 = arith.cmpi slt, %50, %53 : vector<208x1xi32>
    %c0_i32_41 = arith.constant 0 : i32
    %55 = arith.cmpi slt, %48, %c0_i32_41 : i32
    %56 = vector.broadcast %55 : i1 to vector<208x1xi1>
    %57 = vector.broadcast %56 : vector<208x1xi1> to vector<208x1xi1>
    %58 = arith.xori %54, %57 : vector<208x1xi1>
    %59 = arith.andi %58, %52 : vector<208x1xi1>
    %60 = vector.broadcast %48 : i32 to vector<208x1xi32>
    %61 = arith.addi %50, %60 : vector<208x1xi32>
    %62 = arith.select %59, %61, %50 : vector<208x1xi1>, vector<208x1xi32>
    %c8_i32 = arith.constant 8 : i32
    %63 = vector.broadcast %c8_i32 : i32 to vector<208x1xi32>
    %64 = arith.cmpi slt, %62, %63 : vector<208x1xi32>
    %65 = arith.andi %46, %64 : vector<208x1xi1>
    %66 = vector.shape_cast %65 : vector<208x1xi1> to vector<208x1xi1>
    %67 = vector.broadcast %66 : vector<208x1xi1> to vector<208x16xi1>
    %c0_42 = arith.constant 0 : index
    %c0_43 = arith.constant 0 : index
    %c0_44 = arith.constant 0 : index
    %68 = vector.load %arg1[%c0_42, %c0_43, %c0_44] : memref<1x232x8xf32, #tpu.memory_space<vmem>>, vector<1x208x8xf32>
    %69 = vector.shape_cast %68 : vector<1x208x8xf32> to vector<208x8xf32>
    %c0_45 = arith.constant 0 : index
    %c0_46 = arith.constant 0 : index
    %70 = vector.load %arg11[%c0_45, %c0_46] : memref<208x256xf32, #tpu.memory_space<vmem>>, vector<208x8xf32>
    tpu.vector_store %arg11[%c0_45, %c0_46], %69 {strides = array<i32>} : memref<208x256xf32, #tpu.memory_space<vmem>>, vector<208x8xf32>,
    %c0_47 = arith.constant 0 : index
    %c1_48 = arith.constant 1 : index
    %c0_49 = arith.constant 0 : index
    %71 = vector.load %arg1[%c0_47, %c1_48, %c0_49] : memref<1x232x8xf32, #tpu.memory_space<vmem>>, vector<1x208x8xf32>
    %72 = vector.shape_cast %71 : vector<1x208x8xf32> to vector<208x8xf32>
    %c0_50 = arith.constant 0 : index
    %c8 = arith.constant 8 : index
    %73 = vector.load %arg11[%c0_50, %c8] : memref<208x256xf32, #tpu.memory_space<vmem>>, vector<208x8xf32>
    tpu.vector_store %arg11[%c0_50, %c8], %72 {strides = array<i32>} : memref<208x256xf32, #tpu.memory_space<vmem>>, vector<208x8xf32>,
    %c0_51 = arith.constant 0 : index
    %c2 = arith.constant 2 : index
    %c0_52 = arith.constant 0 : index
    %74 = vector.load %arg1[%c0_51, %c2, %c0_52] : memref<1x232x8xf32, #tpu.memory_space<vmem>>, vector<1x208x8xf32>
    %75 = vector.shape_cast %74 : vector<1x208x8xf32> to vector<208x8xf32>
    %c0_53 = arith.constant 0 : index
    %c16 = arith.constant 16 : index
    %76 = vector.load %arg11[%c0_53, %c16] : memref<208x256xf32, #tpu.memory_space<vmem>>, vector<208x8xf32>
    tpu.vector_store %arg11[%c0_53, %c16], %75 {strides = array<i32>} : memref<208x256xf32, #tpu.memory_space<vmem>>, vector<208x8xf32>,
    %c0_54 = arith.constant 0 : index
    %c10 = arith.constant 10 : index
    %c0_55 = arith.constant 0 : index
    %77 = vector.load %arg1[%c0_54, %c10, %c0_55] : memref<1x232x8xf32, #tpu.memory_space<vmem>>, vector<1x208x8xf32>
    %78 = vector.shape_cast %77 : vector<1x208x8xf32> to vector<208x8xf32>
    %c0_56 = arith.constant 0 : index
    %c24 = arith.constant 24 : index
    %79 = vector.load %arg11[%c0_56, %c24] : memref<208x256xf32, #tpu.memory_space<vmem>>, vector<208x8xf32>
    tpu.vector_store %arg11[%c0_56, %c24], %78 {strides = array<i32>} : memref<208x256xf32, #tpu.memory_space<vmem>>, vector<208x8xf32>,
    %c0_57 = arith.constant 0 : index
    %c11 = arith.constant 11 : index
    %c0_58 = arith.constant 0 : index
    %80 = vector.load %arg1[%c0_57, %c11, %c0_58] : memref<1x232x8xf32, #tpu.memory_space<vmem>>, vector<1x208x8xf32>
    %81 = vector.shape_cast %80 : vector<1x208x8xf32> to vector<208x8xf32>
    %c0_59 = arith.constant 0 : index
    %c32 = arith.constant 32 : index
    %82 = vector.load %arg11[%c0_59, %c32] : memref<208x256xf32, #tpu.memory_space<vmem>>, vector<208x8xf32>
    tpu.vector_store %arg11[%c0_59, %c32], %81 {strides = array<i32>} : memref<208x256xf32, #tpu.memory_space<vmem>>, vector<208x8xf32>,
    %c0_60 = arith.constant 0 : index
    %c12 = arith.constant 12 : index
    %c0_61 = arith.constant 0 : index
    %83 = vector.load %arg1[%c0_60, %c12, %c0_61] : memref<1x232x8xf32, #tpu.memory_space<vmem>>, vector<1x208x8xf32>
    %84 = vector.shape_cast %83 : vector<1x208x8xf32> to vector<208x8xf32>
    %c0_62 = arith.constant 0 : index
    %c40 = arith.constant 40 : index
    %85 = vector.load %arg11[%c0_62, %c40] : memref<208x256xf32, #tpu.memory_space<vmem>>, vector<208x8xf32>
    tpu.vector_store %arg11[%c0_62, %c40], %84 {strides = array<i32>} : memref<208x256xf32, #tpu.memory_space<vmem>>, vector<208x8xf32>,
    %c0_63 = arith.constant 0 : index
    %c20 = arith.constant 20 : index
    %c0_64 = arith.constant 0 : index
    %86 = vector.load %arg1[%c0_63, %c20, %c0_64] : memref<1x232x8xf32, #tpu.memory_space<vmem>>, vector<1x208x8xf32>
    %87 = vector.shape_cast %86 : vector<1x208x8xf32> to vector<208x8xf32>
    %c0_65 = arith.constant 0 : index
    %c48 = arith.constant 48 : index
    %88 = vector.load %arg11[%c0_65, %c48] : memref<208x256xf32, #tpu.memory_space<vmem>>, vector<208x8xf32>
    tpu.vector_store %arg11[%c0_65, %c48], %87 {strides = array<i32>} : memref<208x256xf32, #tpu.memory_space<vmem>>, vector<208x8xf32>,
    %c0_66 = arith.constant 0 : index
    %c21 = arith.constant 21 : index
    %c0_67 = arith.constant 0 : index
    %89 = vector.load %arg1[%c0_66, %c21, %c0_67] : memref<1x232x8xf32, #tpu.memory_space<vmem>>, vector<1x208x8xf32>
    %90 = vector.shape_cast %89 : vector<1x208x8xf32> to vector<208x8xf32>
    %c0_68 = arith.constant 0 : index
    %c56 = arith.constant 56 : index
    %91 = vector.load %arg11[%c0_68, %c56] : memref<208x256xf32, #tpu.memory_space<vmem>>, vector<208x8xf32>
    tpu.vector_store %arg11[%c0_68, %c56], %90 {strides = array<i32>} : memref<208x256xf32, #tpu.memory_space<vmem>>, vector<208x8xf32>,
    %c0_69 = arith.constant 0 : index
    %c22 = arith.constant 22 : index
    %c0_70 = arith.constant 0 : index
    %92 = vector.load %arg1[%c0_69, %c22, %c0_70] : memref<1x232x8xf32, #tpu.memory_space<vmem>>, vector<1x208x8xf32>
    %93 = vector.shape_cast %92 : vector<1x208x8xf32> to vector<208x8xf32>
    %c0_71 = arith.constant 0 : index
    %c64 = arith.constant 64 : index
    %94 = vector.load %arg11[%c0_71, %c64] : memref<208x256xf32, #tpu.memory_space<vmem>>, vector<208x8xf32>
    tpu.vector_store %arg11[%c0_71, %c64], %93 {strides = array<i32>} : memref<208x256xf32, #tpu.memory_space<vmem>>, vector<208x8xf32>,
    %c0_72 = arith.constant 0 : index
    %c0_73 = arith.constant 0 : index
    %95 = vector.load %arg11[%c0_72, %c0_73] : memref<208x256xf32, #tpu.memory_space<vmem>>, vector<208x72xf32>
    %c0_74 = arith.constant 0 : index
    %c0_75 = arith.constant 0 : index
    %96 = vector.load %arg2[%c0_74, %c0_75] : memref<72x16xf32, #tpu.memory_space<vmem>>, vector<72x16xf32>
    %cst_76 = arith.constant dense<0.000000e+00> : vector<208x16xf32>
    %97 = tpu.matmul %95, %96, %cst_76 {dimension_numbers = #tpu.dot_dimension_numbers<[1], [0], [0], [1], [0, 0, 1, 1], [], []>} : vector<208x72xf32>, vector<72x16xf32>, vector<208x16xf32> -> vector<208x16xf32>
    %c0_77 = arith.constant 0 : index
    %c0_78 = arith.constant 0 : index
    %98 = vector.load %arg3[%c0_77, %c0_78] : memref<1x16xf32, #tpu.memory_space<vmem>>, vector<1x16xf32>
    %99 = vector.broadcast %98 : vector<1x16xf32> to vector<208x16xf32>
    %100 = arith.addf %97, %99 : vector<208x16xf32>
    %cst_79 = arith.constant 0.000000e+00 : f32
    %101 = vector.broadcast %cst_79 : f32 to vector<208x16xf32>
    %102 = arith.maximumf %100, %101 : vector<208x16xf32>
    %cst_80 = arith.constant 0.000000e+00 : f32
    %103 = vector.broadcast %cst_80 : f32 to vector<208x16xf32>
    %104 = arith.select %67, %102, %103 : vector<208x16xi1>, vector<208x16xf32>
    %c11_81 = arith.constant 11 : index
    %c0_82 = arith.constant 0 : index
    %105 = vector.load %arg9[%c11_81, %c0_82] : memref<232x16xf32, #tpu.memory_space<vmem>>, vector<208x16xf32>
    tpu.vector_store %arg9[%c11_81, %c0_82], %104 {strides = array<i32>} : memref<232x16xf32, #tpu.memory_space<vmem>>, vector<208x16xf32>,
    %c0_83 = arith.constant 0 : index
    %c0_84 = arith.constant 0 : index
    %106 = vector.load %arg9[%c0_83, %c0_84] : memref<232x16xf32, #tpu.memory_space<vmem>>, vector<208x16xf32>
    %c0_85 = arith.constant 0 : index
    %c0_86 = arith.constant 0 : index
    %107 = vector.load %arg11[%c0_85, %c0_86] : memref<208x256xf32, #tpu.memory_space<vmem>>, vector<208x16xf32>
    tpu.vector_store %arg11[%c0_85, %c0_86], %106 {strides = array<i32>} : memref<208x256xf32, #tpu.memory_space<vmem>>, vector<208x16xf32>,
    %c1_87 = arith.constant 1 : index
    %c0_88 = arith.constant 0 : index
    %108 = vector.load %arg9[%c1_87, %c0_88] : memref<232x16xf32, #tpu.memory_space<vmem>>, vector<208x16xf32>
    %c0_89 = arith.constant 0 : index
    %c16_90 = arith.constant 16 : index
    %109 = vector.load %arg11[%c0_89, %c16_90] : memref<208x256xf32, #tpu.memory_space<vmem>>, vector<208x16xf32>
    tpu.vector_store %arg11[%c0_89, %c16_90], %108 {strides = array<i32>} : memref<208x256xf32, #tpu.memory_space<vmem>>, vector<208x16xf32>,
    %c10_91 = arith.constant 10 : index
    %c0_92 = arith.constant 0 : index
    %110 = vector.load %arg9[%c10_91, %c0_92] : memref<232x16xf32, #tpu.memory_space<vmem>>, vector<208x16xf32>
    %c0_93 = arith.constant 0 : index
    %c32_94 = arith.constant 32 : index
    %111 = vector.load %arg11[%c0_93, %c32_94] : memref<208x256xf32, #tpu.memory_space<vmem>>, vector<208x16xf32>
    tpu.vector_store %arg11[%c0_93, %c32_94], %110 {strides = array<i32>} : memref<208x256xf32, #tpu.memory_space<vmem>>, vector<208x16xf32>,
    %c11_95 = arith.constant 11 : index
    %c0_96 = arith.constant 0 : index
    %112 = vector.load %arg9[%c11_95, %c0_96] : memref<232x16xf32, #tpu.memory_space<vmem>>, vector<208x16xf32>
    %c0_97 = arith.constant 0 : index
    %c48_98 = arith.constant 48 : index
    %113 = vector.load %arg11[%c0_97, %c48_98] : memref<208x256xf32, #tpu.memory_space<vmem>>, vector<208x16xf32>
    tpu.vector_store %arg11[%c0_97, %c48_98], %112 {strides = array<i32>} : memref<208x256xf32, #tpu.memory_space<vmem>>, vector<208x16xf32>,
    %c0_99 = arith.constant 0 : index
    %c0_100 = arith.constant 0 : index
    %114 = vector.load %arg11[%c0_99, %c0_100] : memref<208x256xf32, #tpu.memory_space<vmem>>, vector<208x64xf32>
    %c0_101 = arith.constant 0 : index
    %c0_102 = arith.constant 0 : index
    %c0_103 = arith.constant 0 : index
    %115 = vector.load %arg4[%c0_101, %c0_102, %c0_103] : memref<4x64x16xf32, #tpu.memory_space<vmem>>, vector<1x64x16xf32>
    %116 = vector.shape_cast %115 : vector<1x64x16xf32> to vector<64x16xf32>
    %cst_104 = arith.constant dense<0.000000e+00> : vector<208x16xf32>
    %117 = tpu.matmul %114, %116, %cst_104 {dimension_numbers = #tpu.dot_dimension_numbers<[1], [0], [0], [1], [0, 0, 1, 1], [], []>} : vector<208x64xf32>, vector<64x16xf32>, vector<208x16xf32> -> vector<208x16xf32>
    %c0_105 = arith.constant 0 : index
    %c0_106 = arith.constant 0 : index
    %118 = vector.load %arg5[%c0_105, %c0_106] : memref<1x16xf32, #tpu.memory_space<vmem>>, vector<1x16xf32>
    %119 = vector.broadcast %118 : vector<1x16xf32> to vector<208x16xf32>
    %120 = arith.addf %117, %119 : vector<208x16xf32>
    %cst_107 = arith.constant 0.000000e+00 : f32
    %121 = vector.broadcast %cst_107 : f32 to vector<208x16xf32>
    %122 = arith.maximumf %120, %121 : vector<208x16xf32>
    %cst_108 = arith.constant 0.000000e+00 : f32
    %123 = vector.broadcast %cst_108 : f32 to vector<208x16xf32>
    %124 = arith.select %67, %122, %123 : vector<208x16xi1>, vector<208x16xf32>
    %c0_109 = arith.constant 0 : index
    %c0_110 = arith.constant 0 : index
    %c11_111 = arith.constant 11 : index
    %c0_112 = arith.constant 0 : index
    %125 = vector.load %arg10[%c0_109, %c0_110, %c11_111, %c0_112] : memref<2x2x232x16xf32, #tpu.memory_space<vmem>>, vector<1x1x208x16xf32>
    %126 = vector.shape_cast %125 : vector<1x1x208x16xf32> to vector<208x16xf32>
    %127 = vector.shape_cast %124 : vector<208x16xf32> to vector<1x1x208x16xf32>
    tpu.vector_store %arg10[%c0_109, %c0_110, %c11_111, %c0_112], %127 {strides = array<i32>} : memref<2x2x232x16xf32, #tpu.memory_space<vmem>>, vector<1x1x208x16xf32>,
    %c1_113 = arith.constant 1 : index
    %c0_114 = arith.constant 0 : index
    %128 = vector.load %arg9[%c1_113, %c0_114] : memref<232x16xf32, #tpu.memory_space<vmem>>, vector<208x16xf32>
    %c0_115 = arith.constant 0 : index
    %c0_116 = arith.constant 0 : index
    %129 = vector.load %arg11[%c0_115, %c0_116] : memref<208x256xf32, #tpu.memory_space<vmem>>, vector<208x16xf32>
    tpu.vector_store %arg11[%c0_115, %c0_116], %128 {strides = array<i32>} : memref<208x256xf32, #tpu.memory_space<vmem>>, vector<208x16xf32>,
    %c2_117 = arith.constant 2 : index
    %c0_118 = arith.constant 0 : index
    %130 = vector.load %arg9[%c2_117, %c0_118] : memref<232x16xf32, #tpu.memory_space<vmem>>, vector<208x16xf32>
    %c0_119 = arith.constant 0 : index
    %c16_120 = arith.constant 16 : index
    %131 = vector.load %arg11[%c0_119, %c16_120] : memref<208x256xf32, #tpu.memory_space<vmem>>, vector<208x16xf32>
    tpu.vector_store %arg11[%c0_119, %c16_120], %130 {strides = array<i32>} : memref<208x256xf32, #tpu.memory_space<vmem>>, vector<208x16xf32>,
    %c11_121 = arith.constant 11 : index
    %c0_122 = arith.constant 0 : index
    %132 = vector.load %arg9[%c11_121, %c0_122] : memref<232x16xf32, #tpu.memory_space<vmem>>, vector<208x16xf32>
    %c0_123 = arith.constant 0 : index
    %c32_124 = arith.constant 32 : index
    %133 = vector.load %arg11[%c0_123, %c32_124] : memref<208x256xf32, #tpu.memory_space<vmem>>, vector<208x16xf32>
    tpu.vector_store %arg11[%c0_123, %c32_124], %132 {strides = array<i32>} : memref<208x256xf32, #tpu.memory_space<vmem>>, vector<208x16xf32>,
    %c12_125 = arith.constant 12 : index
    %c0_126 = arith.constant 0 : index
    %134 = vector.load %arg9[%c12_125, %c0_126] : memref<232x16xf32, #tpu.memory_space<vmem>>, vector<208x16xf32>
    %c0_127 = arith.constant 0 : index
    %c48_128 = arith.constant 48 : index
    %135 = vector.load %arg11[%c0_127, %c48_128] : memref<208x256xf32, #tpu.memory_space<vmem>>, vector<208x16xf32>
    tpu.vector_store %arg11[%c0_127, %c48_128], %134 {strides = array<i32>} : memref<208x256xf32, #tpu.memory_space<vmem>>, vector<208x16xf32>,
    %c0_129 = arith.constant 0 : index
    %c0_130 = arith.constant 0 : index
    %136 = vector.load %arg11[%c0_129, %c0_130] : memref<208x256xf32, #tpu.memory_space<vmem>>, vector<208x64xf32>
    %c1_131 = arith.constant 1 : index
    %c0_132 = arith.constant 0 : index
    %c0_133 = arith.constant 0 : index
    %137 = vector.load %arg4[%c1_131, %c0_132, %c0_133] : memref<4x64x16xf32, #tpu.memory_space<vmem>>, vector<1x64x16xf32>
    %138 = vector.shape_cast %137 : vector<1x64x16xf32> to vector<64x16xf32>
    %cst_134 = arith.constant dense<0.000000e+00> : vector<208x16xf32>
    %139 = tpu.matmul %136, %138, %cst_134 {dimension_numbers = #tpu.dot_dimension_numbers<[1], [0], [0], [1], [0, 0, 1, 1], [], []>} : vector<208x64xf32>, vector<64x16xf32>, vector<208x16xf32> -> vector<208x16xf32>
    %c0_135 = arith.constant 0 : index
    %c0_136 = arith.constant 0 : index
    %140 = vector.load %arg5[%c0_135, %c0_136] : memref<1x16xf32, #tpu.memory_space<vmem>>, vector<1x16xf32>
    %141 = vector.broadcast %140 : vector<1x16xf32> to vector<208x16xf32>
    %142 = arith.addf %139, %141 : vector<208x16xf32>
    %cst_137 = arith.constant 0.000000e+00 : f32
    %143 = vector.broadcast %cst_137 : f32 to vector<208x16xf32>
    %144 = arith.maximumf %142, %143 : vector<208x16xf32>
    %cst_138 = arith.constant 0.000000e+00 : f32
    %145 = vector.broadcast %cst_138 : f32 to vector<208x16xf32>
    %146 = arith.select %67, %144, %145 : vector<208x16xi1>, vector<208x16xf32>
    %c0_139 = arith.constant 0 : index
    %c1_140 = arith.constant 1 : index
    %c11_141 = arith.constant 11 : index
    %c0_142 = arith.constant 0 : index
    %147 = vector.load %arg10[%c0_139, %c1_140, %c11_141, %c0_142] : memref<2x2x232x16xf32, #tpu.memory_space<vmem>>, vector<1x1x208x16xf32>
    %148 = vector.shape_cast %147 : vector<1x1x208x16xf32> to vector<208x16xf32>
    %149 = vector.shape_cast %146 : vector<208x16xf32> to vector<1x1x208x16xf32>
    tpu.vector_store %arg10[%c0_139, %c1_140, %c11_141, %c0_142], %149 {strides = array<i32>} : memref<2x2x232x16xf32, #tpu.memory_space<vmem>>, vector<1x1x208x16xf32>,
    %c10_143 = arith.constant 10 : index
    %c0_144 = arith.constant 0 : index
    %150 = vector.load %arg9[%c10_143, %c0_144] : memref<232x16xf32, #tpu.memory_space<vmem>>, vector<208x16xf32>
    %c0_145 = arith.constant 0 : index
    %c0_146 = arith.constant 0 : index
    %151 = vector.load %arg11[%c0_145, %c0_146] : memref<208x256xf32, #tpu.memory_space<vmem>>, vector<208x16xf32>
    tpu.vector_store %arg11[%c0_145, %c0_146], %150 {strides = array<i32>} : memref<208x256xf32, #tpu.memory_space<vmem>>, vector<208x16xf32>,
    %c11_147 = arith.constant 11 : index
    %c0_148 = arith.constant 0 : index
    %152 = vector.load %arg9[%c11_147, %c0_148] : memref<232x16xf32, #tpu.memory_space<vmem>>, vector<208x16xf32>
    %c0_149 = arith.constant 0 : index
    %c16_150 = arith.constant 16 : index
    %153 = vector.load %arg11[%c0_149, %c16_150] : memref<208x256xf32, #tpu.memory_space<vmem>>, vector<208x16xf32>
    tpu.vector_store %arg11[%c0_149, %c16_150], %152 {strides = array<i32>} : memref<208x256xf32, #tpu.memory_space<vmem>>, vector<208x16xf32>,
    %c20_151 = arith.constant 20 : index
    %c0_152 = arith.constant 0 : index
    %154 = vector.load %arg9[%c20_151, %c0_152] : memref<232x16xf32, #tpu.memory_space<vmem>>, vector<208x16xf32>
    %c0_153 = arith.constant 0 : index
    %c32_154 = arith.constant 32 : index
    %155 = vector.load %arg11[%c0_153, %c32_154] : memref<208x256xf32, #tpu.memory_space<vmem>>, vector<208x16xf32>
    tpu.vector_store %arg11[%c0_153, %c32_154], %154 {strides = array<i32>} : memref<208x256xf32, #tpu.memory_space<vmem>>, vector<208x16xf32>,
    %c21_155 = arith.constant 21 : index
    %c0_156 = arith.constant 0 : index
    %156 = vector.load %arg9[%c21_155, %c0_156] : memref<232x16xf32, #tpu.memory_space<vmem>>, vector<208x16xf32>
    %c0_157 = arith.constant 0 : index
    %c48_158 = arith.constant 48 : index
    %157 = vector.load %arg11[%c0_157, %c48_158] : memref<208x256xf32, #tpu.memory_space<vmem>>, vector<208x16xf32>
    tpu.vector_store %arg11[%c0_157, %c48_158], %156 {strides = array<i32>} : memref<208x256xf32, #tpu.memory_space<vmem>>, vector<208x16xf32>,
    %c0_159 = arith.constant 0 : index
    %c0_160 = arith.constant 0 : index
    %158 = vector.load %arg11[%c0_159, %c0_160] : memref<208x256xf32, #tpu.memory_space<vmem>>, vector<208x64xf32>
    %c2_161 = arith.constant 2 : index
    %c0_162 = arith.constant 0 : index
    %c0_163 = arith.constant 0 : index
    %159 = vector.load %arg4[%c2_161, %c0_162, %c0_163] : memref<4x64x16xf32, #tpu.memory_space<vmem>>, vector<1x64x16xf32>
    %160 = vector.shape_cast %159 : vector<1x64x16xf32> to vector<64x16xf32>
    %cst_164 = arith.constant dense<0.000000e+00> : vector<208x16xf32>
    %161 = tpu.matmul %158, %160, %cst_164 {dimension_numbers = #tpu.dot_dimension_numbers<[1], [0], [0], [1], [0, 0, 1, 1], [], []>} : vector<208x64xf32>, vector<64x16xf32>, vector<208x16xf32> -> vector<208x16xf32>
    %c0_165 = arith.constant 0 : index
    %c0_166 = arith.constant 0 : index
    %162 = vector.load %arg5[%c0_165, %c0_166] : memref<1x16xf32, #tpu.memory_space<vmem>>, vector<1x16xf32>
    %163 = vector.broadcast %162 : vector<1x16xf32> to vector<208x16xf32>
    %164 = arith.addf %161, %163 : vector<208x16xf32>
    %cst_167 = arith.constant 0.000000e+00 : f32
    %165 = vector.broadcast %cst_167 : f32 to vector<208x16xf32>
    %166 = arith.maximumf %164, %165 : vector<208x16xf32>
    %cst_168 = arith.constant 0.000000e+00 : f32
    %167 = vector.broadcast %cst_168 : f32 to vector<208x16xf32>
    %168 = arith.select %67, %166, %167 : vector<208x16xi1>, vector<208x16xf32>
    %c1_169 = arith.constant 1 : index
    %c0_170 = arith.constant 0 : index
    %c11_171 = arith.constant 11 : index
    %c0_172 = arith.constant 0 : index
    %169 = vector.load %arg10[%c1_169, %c0_170, %c11_171, %c0_172] : memref<2x2x232x16xf32, #tpu.memory_space<vmem>>, vector<1x1x208x16xf32>
    %170 = vector.shape_cast %169 : vector<1x1x208x16xf32> to vector<208x16xf32>
    %171 = vector.shape_cast %168 : vector<208x16xf32> to vector<1x1x208x16xf32>
    tpu.vector_store %arg10[%c1_169, %c0_170, %c11_171, %c0_172], %171 {strides = array<i32>} : memref<2x2x232x16xf32, #tpu.memory_space<vmem>>, vector<1x1x208x16xf32>,
    %c11_173 = arith.constant 11 : index
    %c0_174 = arith.constant 0 : index
    %172 = vector.load %arg9[%c11_173, %c0_174] : memref<232x16xf32, #tpu.memory_space<vmem>>, vector<208x16xf32>
    %c0_175 = arith.constant 0 : index
    %c0_176 = arith.constant 0 : index
    %173 = vector.load %arg11[%c0_175, %c0_176] : memref<208x256xf32, #tpu.memory_space<vmem>>, vector<208x16xf32>
    tpu.vector_store %arg11[%c0_175, %c0_176], %172 {strides = array<i32>} : memref<208x256xf32, #tpu.memory_space<vmem>>, vector<208x16xf32>,
    %c12_177 = arith.constant 12 : index
    %c0_178 = arith.constant 0 : index
    %174 = vector.load %arg9[%c12_177, %c0_178] : memref<232x16xf32, #tpu.memory_space<vmem>>, vector<208x16xf32>
    %c0_179 = arith.constant 0 : index
    %c16_180 = arith.constant 16 : index
    %175 = vector.load %arg11[%c0_179, %c16_180] : memref<208x256xf32, #tpu.memory_space<vmem>>, vector<208x16xf32>
    tpu.vector_store %arg11[%c0_179, %c16_180], %174 {strides = array<i32>} : memref<208x256xf32, #tpu.memory_space<vmem>>, vector<208x16xf32>,
    %c21_181 = arith.constant 21 : index
    %c0_182 = arith.constant 0 : index
    %176 = vector.load %arg9[%c21_181, %c0_182] : memref<232x16xf32, #tpu.memory_space<vmem>>, vector<208x16xf32>
    %c0_183 = arith.constant 0 : index
    %c32_184 = arith.constant 32 : index
    %177 = vector.load %arg11[%c0_183, %c32_184] : memref<208x256xf32, #tpu.memory_space<vmem>>, vector<208x16xf32>
    tpu.vector_store %arg11[%c0_183, %c32_184], %176 {strides = array<i32>} : memref<208x256xf32, #tpu.memory_space<vmem>>, vector<208x16xf32>,
    %c22_185 = arith.constant 22 : index
    %c0_186 = arith.constant 0 : index
    %178 = vector.load %arg9[%c22_185, %c0_186] : memref<232x16xf32, #tpu.memory_space<vmem>>, vector<208x16xf32>
    %c0_187 = arith.constant 0 : index
    %c48_188 = arith.constant 48 : index
    %179 = vector.load %arg11[%c0_187, %c48_188] : memref<208x256xf32, #tpu.memory_space<vmem>>, vector<208x16xf32>
    tpu.vector_store %arg11[%c0_187, %c48_188], %178 {strides = array<i32>} : memref<208x256xf32, #tpu.memory_space<vmem>>, vector<208x16xf32>,
    %c0_189 = arith.constant 0 : index
    %c0_190 = arith.constant 0 : index
    %180 = vector.load %arg11[%c0_189, %c0_190] : memref<208x256xf32, #tpu.memory_space<vmem>>, vector<208x64xf32>
    %c3 = arith.constant 3 : index
    %c0_191 = arith.constant 0 : index
    %c0_192 = arith.constant 0 : index
    %181 = vector.load %arg4[%c3, %c0_191, %c0_192] : memref<4x64x16xf32, #tpu.memory_space<vmem>>, vector<1x64x16xf32>
    %182 = vector.shape_cast %181 : vector<1x64x16xf32> to vector<64x16xf32>
    %cst_193 = arith.constant dense<0.000000e+00> : vector<208x16xf32>
    %183 = tpu.matmul %180, %182, %cst_193 {dimension_numbers = #tpu.dot_dimension_numbers<[1], [0], [0], [1], [0, 0, 1, 1], [], []>} : vector<208x64xf32>, vector<64x16xf32>, vector<208x16xf32> -> vector<208x16xf32>
    %c0_194 = arith.constant 0 : index
    %c0_195 = arith.constant 0 : index
    %184 = vector.load %arg5[%c0_194, %c0_195] : memref<1x16xf32, #tpu.memory_space<vmem>>, vector<1x16xf32>
    %185 = vector.broadcast %184 : vector<1x16xf32> to vector<208x16xf32>
    %186 = arith.addf %183, %185 : vector<208x16xf32>
    %cst_196 = arith.constant 0.000000e+00 : f32
    %187 = vector.broadcast %cst_196 : f32 to vector<208x16xf32>
    %188 = arith.maximumf %186, %187 : vector<208x16xf32>
    %cst_197 = arith.constant 0.000000e+00 : f32
    %189 = vector.broadcast %cst_197 : f32 to vector<208x16xf32>
    %190 = arith.select %67, %188, %189 : vector<208x16xi1>, vector<208x16xf32>
    %c1_198 = arith.constant 1 : index
    %c1_199 = arith.constant 1 : index
    %c11_200 = arith.constant 11 : index
    %c0_201 = arith.constant 0 : index
    %191 = vector.load %arg10[%c1_198, %c1_199, %c11_200, %c0_201] : memref<2x2x232x16xf32, #tpu.memory_space<vmem>>, vector<1x1x208x16xf32>
    %192 = vector.shape_cast %191 : vector<1x1x208x16xf32> to vector<208x16xf32>
    %193 = vector.shape_cast %190 : vector<208x16xf32> to vector<1x1x208x16xf32>
    tpu.vector_store %arg10[%c1_198, %c1_199, %c11_200, %c0_201], %193 {strides = array<i32>} : memref<2x2x232x16xf32, #tpu.memory_space<vmem>>, vector<1x1x208x16xf32>,
    %c0_202 = arith.constant 0 : index
    %c0_203 = arith.constant 0 : index
    %c11_204 = arith.constant 11 : index
    %c0_205 = arith.constant 0 : index
    %194 = vector.load %arg10[%c0_202, %c0_203, %c11_204, %c0_205] : memref<2x2x232x16xf32, #tpu.memory_space<vmem>>, vector<1x1x208x16xf32>
    %195 = vector.shape_cast %194 : vector<1x1x208x16xf32> to vector<208x16xf32>
    %c0_206 = arith.constant 0 : index
    %c0_207 = arith.constant 0 : index
    %196 = vector.load %arg11[%c0_206, %c0_207] : memref<208x256xf32, #tpu.memory_space<vmem>>, vector<208x16xf32>
    tpu.vector_store %arg11[%c0_206, %c0_207], %195 {strides = array<i32>} : memref<208x256xf32, #tpu.memory_space<vmem>>, vector<208x16xf32>,
    %c0_208 = arith.constant 0 : index
    %c1_209 = arith.constant 1 : index
    %c11_210 = arith.constant 11 : index
    %c0_211 = arith.constant 0 : index
    %197 = vector.load %arg10[%c0_208, %c1_209, %c11_210, %c0_211] : memref<2x2x232x16xf32, #tpu.memory_space<vmem>>, vector<1x1x208x16xf32>
    %198 = vector.shape_cast %197 : vector<1x1x208x16xf32> to vector<208x16xf32>
    %c0_212 = arith.constant 0 : index
    %c16_213 = arith.constant 16 : index
    %199 = vector.load %arg11[%c0_212, %c16_213] : memref<208x256xf32, #tpu.memory_space<vmem>>, vector<208x16xf32>
    tpu.vector_store %arg11[%c0_212, %c16_213], %198 {strides = array<i32>} : memref<208x256xf32, #tpu.memory_space<vmem>>, vector<208x16xf32>,
    %c0_214 = arith.constant 0 : index
    %c1_215 = arith.constant 1 : index
    %c10_216 = arith.constant 10 : index
    %c0_217 = arith.constant 0 : index
    %200 = vector.load %arg10[%c0_214, %c1_215, %c10_216, %c0_217] : memref<2x2x232x16xf32, #tpu.memory_space<vmem>>, vector<1x1x208x16xf32>
    %201 = vector.shape_cast %200 : vector<1x1x208x16xf32> to vector<208x16xf32>
    %c0_218 = arith.constant 0 : index
    %c32_219 = arith.constant 32 : index
    %202 = vector.load %arg11[%c0_218, %c32_219] : memref<208x256xf32, #tpu.memory_space<vmem>>, vector<208x16xf32>
    tpu.vector_store %arg11[%c0_218, %c32_219], %201 {strides = array<i32>} : memref<208x256xf32, #tpu.memory_space<vmem>>, vector<208x16xf32>,
    %c0_220 = arith.constant 0 : index
    %c0_221 = arith.constant 0 : index
    %c12_222 = arith.constant 12 : index
    %c0_223 = arith.constant 0 : index
    %203 = vector.load %arg10[%c0_220, %c0_221, %c12_222, %c0_223] : memref<2x2x232x16xf32, #tpu.memory_space<vmem>>, vector<1x1x208x16xf32>
    %204 = vector.shape_cast %203 : vector<1x1x208x16xf32> to vector<208x16xf32>
    %c0_224 = arith.constant 0 : index
    %c48_225 = arith.constant 48 : index
    %205 = vector.load %arg11[%c0_224, %c48_225] : memref<208x256xf32, #tpu.memory_space<vmem>>, vector<208x16xf32>
    tpu.vector_store %arg11[%c0_224, %c48_225], %204 {strides = array<i32>} : memref<208x256xf32, #tpu.memory_space<vmem>>, vector<208x16xf32>,
    %c1_226 = arith.constant 1 : index
    %c0_227 = arith.constant 0 : index
    %c11_228 = arith.constant 11 : index
    %c0_229 = arith.constant 0 : index
    %206 = vector.load %arg10[%c1_226, %c0_227, %c11_228, %c0_229] : memref<2x2x232x16xf32, #tpu.memory_space<vmem>>, vector<1x1x208x16xf32>
    %207 = vector.shape_cast %206 : vector<1x1x208x16xf32> to vector<208x16xf32>
    %c0_230 = arith.constant 0 : index
    %c64_231 = arith.constant 64 : index
    %208 = vector.load %arg11[%c0_230, %c64_231] : memref<208x256xf32, #tpu.memory_space<vmem>>, vector<208x16xf32>
    tpu.vector_store %arg11[%c0_230, %c64_231], %207 {strides = array<i32>} : memref<208x256xf32, #tpu.memory_space<vmem>>, vector<208x16xf32>,
    %c1_232 = arith.constant 1 : index
    %c1_233 = arith.constant 1 : index
    %c11_234 = arith.constant 11 : index
    %c0_235 = arith.constant 0 : index
    %209 = vector.load %arg10[%c1_232, %c1_233, %c11_234, %c0_235] : memref<2x2x232x16xf32, #tpu.memory_space<vmem>>, vector<1x1x208x16xf32>
    %210 = vector.shape_cast %209 : vector<1x1x208x16xf32> to vector<208x16xf32>
    %c0_236 = arith.constant 0 : index
    %c80 = arith.constant 80 : index
    %211 = vector.load %arg11[%c0_236, %c80] : memref<208x256xf32, #tpu.memory_space<vmem>>, vector<208x16xf32>
    tpu.vector_store %arg11[%c0_236, %c80], %210 {strides = array<i32>} : memref<208x256xf32, #tpu.memory_space<vmem>>, vector<208x16xf32>,
    %c1_237 = arith.constant 1 : index
    %c1_238 = arith.constant 1 : index
    %c10_239 = arith.constant 10 : index
    %c0_240 = arith.constant 0 : index
    %212 = vector.load %arg10[%c1_237, %c1_238, %c10_239, %c0_240] : memref<2x2x232x16xf32, #tpu.memory_space<vmem>>, vector<1x1x208x16xf32>
    %213 = vector.shape_cast %212 : vector<1x1x208x16xf32> to vector<208x16xf32>
    %c0_241 = arith.constant 0 : index
    %c96 = arith.constant 96 : index
    %214 = vector.load %arg11[%c0_241, %c96] : memref<208x256xf32, #tpu.memory_space<vmem>>, vector<208x16xf32>
    tpu.vector_store %arg11[%c0_241, %c96], %213 {strides = array<i32>} : memref<208x256xf32, #tpu.memory_space<vmem>>, vector<208x16xf32>,
    %c1_242 = arith.constant 1 : index
    %c0_243 = arith.constant 0 : index
    %c12_244 = arith.constant 12 : index
    %c0_245 = arith.constant 0 : index
    %215 = vector.load %arg10[%c1_242, %c0_243, %c12_244, %c0_245] : memref<2x2x232x16xf32, #tpu.memory_space<vmem>>, vector<1x1x208x16xf32>
    %216 = vector.shape_cast %215 : vector<1x1x208x16xf32> to vector<208x16xf32>
    %c0_246 = arith.constant 0 : index
    %c112 = arith.constant 112 : index
    %217 = vector.load %arg11[%c0_246, %c112] : memref<208x256xf32, #tpu.memory_space<vmem>>, vector<208x16xf32>
    tpu.vector_store %arg11[%c0_246, %c112], %216 {strides = array<i32>} : memref<208x256xf32, #tpu.memory_space<vmem>>, vector<208x16xf32>,
    %c1_247 = arith.constant 1 : index
    %c0_248 = arith.constant 0 : index
    %c1_249 = arith.constant 1 : index
    %c0_250 = arith.constant 0 : index
    %218 = vector.load %arg10[%c1_247, %c0_248, %c1_249, %c0_250] : memref<2x2x232x16xf32, #tpu.memory_space<vmem>>, vector<1x1x208x16xf32>
    %219 = vector.shape_cast %218 : vector<1x1x208x16xf32> to vector<208x16xf32>
    %c0_251 = arith.constant 0 : index
    %c128 = arith.constant 128 : index
    %220 = vector.load %arg11[%c0_251, %c128] : memref<208x256xf32, #tpu.memory_space<vmem>>, vector<208x16xf32>
    tpu.vector_store %arg11[%c0_251, %c128], %219 {strides = array<i32>} : memref<208x256xf32, #tpu.memory_space<vmem>>, vector<208x16xf32>,
    %c1_252 = arith.constant 1 : index
    %c1_253 = arith.constant 1 : index
    %c1_254 = arith.constant 1 : index
    %c0_255 = arith.constant 0 : index
    %221 = vector.load %arg10[%c1_252, %c1_253, %c1_254, %c0_255] : memref<2x2x232x16xf32, #tpu.memory_space<vmem>>, vector<1x1x208x16xf32>
    %222 = vector.shape_cast %221 : vector<1x1x208x16xf32> to vector<208x16xf32>
    %c0_256 = arith.constant 0 : index
    %c144 = arith.constant 144 : index
    %223 = vector.load %arg11[%c0_256, %c144] : memref<208x256xf32, #tpu.memory_space<vmem>>, vector<208x16xf32>
    tpu.vector_store %arg11[%c0_256, %c144], %222 {strides = array<i32>} : memref<208x256xf32, #tpu.memory_space<vmem>>, vector<208x16xf32>,
    %c1_257 = arith.constant 1 : index
    %c1_258 = arith.constant 1 : index
    %c0_259 = arith.constant 0 : index
    %c0_260 = arith.constant 0 : index
    %224 = vector.load %arg10[%c1_257, %c1_258, %c0_259, %c0_260] : memref<2x2x232x16xf32, #tpu.memory_space<vmem>>, vector<1x1x208x16xf32>
    %225 = vector.shape_cast %224 : vector<1x1x208x16xf32> to vector<208x16xf32>
    %c0_261 = arith.constant 0 : index
    %c160 = arith.constant 160 : index
    %226 = vector.load %arg11[%c0_261, %c160] : memref<208x256xf32, #tpu.memory_space<vmem>>, vector<208x16xf32>
    tpu.vector_store %arg11[%c0_261, %c160], %225 {strides = array<i32>} : memref<208x256xf32, #tpu.memory_space<vmem>>, vector<208x16xf32>,
    %c1_262 = arith.constant 1 : index
    %c0_263 = arith.constant 0 : index
    %c2_264 = arith.constant 2 : index
    %c0_265 = arith.constant 0 : index
    %227 = vector.load %arg10[%c1_262, %c0_263, %c2_264, %c0_265] : memref<2x2x232x16xf32, #tpu.memory_space<vmem>>, vector<1x1x208x16xf32>
    %228 = vector.shape_cast %227 : vector<1x1x208x16xf32> to vector<208x16xf32>
    %c0_266 = arith.constant 0 : index
    %c176 = arith.constant 176 : index
    %229 = vector.load %arg11[%c0_266, %c176] : memref<208x256xf32, #tpu.memory_space<vmem>>, vector<208x16xf32>
    tpu.vector_store %arg11[%c0_266, %c176], %228 {strides = array<i32>} : memref<208x256xf32, #tpu.memory_space<vmem>>, vector<208x16xf32>,
    %c0_267 = arith.constant 0 : index
    %c0_268 = arith.constant 0 : index
    %c21_269 = arith.constant 21 : index
    %c0_270 = arith.constant 0 : index
    %230 = vector.load %arg10[%c0_267, %c0_268, %c21_269, %c0_270] : memref<2x2x232x16xf32, #tpu.memory_space<vmem>>, vector<1x1x208x16xf32>
    %231 = vector.shape_cast %230 : vector<1x1x208x16xf32> to vector<208x16xf32>
    %c0_271 = arith.constant 0 : index
    %c192 = arith.constant 192 : index
    %232 = vector.load %arg11[%c0_271, %c192] : memref<208x256xf32, #tpu.memory_space<vmem>>, vector<208x16xf32>
    tpu.vector_store %arg11[%c0_271, %c192], %231 {strides = array<i32>} : memref<208x256xf32, #tpu.memory_space<vmem>>, vector<208x16xf32>,
    %c0_272 = arith.constant 0 : index
    %c1_273 = arith.constant 1 : index
    %c21_274 = arith.constant 21 : index
    %c0_275 = arith.constant 0 : index
    %233 = vector.load %arg10[%c0_272, %c1_273, %c21_274, %c0_275] : memref<2x2x232x16xf32, #tpu.memory_space<vmem>>, vector<1x1x208x16xf32>
    %234 = vector.shape_cast %233 : vector<1x1x208x16xf32> to vector<208x16xf32>
    %c0_276 = arith.constant 0 : index
    %c208 = arith.constant 208 : index
    %235 = vector.load %arg11[%c0_276, %c208] : memref<208x256xf32, #tpu.memory_space<vmem>>, vector<208x16xf32>
    tpu.vector_store %arg11[%c0_276, %c208], %234 {strides = array<i32>} : memref<208x256xf32, #tpu.memory_space<vmem>>, vector<208x16xf32>,
    %c0_277 = arith.constant 0 : index
    %c1_278 = arith.constant 1 : index
    %c20_279 = arith.constant 20 : index
    %c0_280 = arith.constant 0 : index
    %236 = vector.load %arg10[%c0_277, %c1_278, %c20_279, %c0_280] : memref<2x2x232x16xf32, #tpu.memory_space<vmem>>, vector<1x1x208x16xf32>
    %237 = vector.shape_cast %236 : vector<1x1x208x16xf32> to vector<208x16xf32>
    %c0_281 = arith.constant 0 : index
    %c224 = arith.constant 224 : index
    %238 = vector.load %arg11[%c0_281, %c224] : memref<208x256xf32, #tpu.memory_space<vmem>>, vector<208x16xf32>
    tpu.vector_store %arg11[%c0_281, %c224], %237 {strides = array<i32>} : memref<208x256xf32, #tpu.memory_space<vmem>>, vector<208x16xf32>,
    %c0_282 = arith.constant 0 : index
    %c0_283 = arith.constant 0 : index
    %c22_284 = arith.constant 22 : index
    %c0_285 = arith.constant 0 : index
    %239 = vector.load %arg10[%c0_282, %c0_283, %c22_284, %c0_285] : memref<2x2x232x16xf32, #tpu.memory_space<vmem>>, vector<1x1x208x16xf32>
    %240 = vector.shape_cast %239 : vector<1x1x208x16xf32> to vector<208x16xf32>
    %c0_286 = arith.constant 0 : index
    %c240 = arith.constant 240 : index
    %241 = vector.load %arg11[%c0_286, %c240] : memref<208x256xf32, #tpu.memory_space<vmem>>, vector<208x16xf32>
    tpu.vector_store %arg11[%c0_286, %c240], %240 {strides = array<i32>} : memref<208x256xf32, #tpu.memory_space<vmem>>, vector<208x16xf32>,
    %c0_287 = arith.constant 0 : index
    %c0_288 = arith.constant 0 : index
    %242 = vector.load %arg11[%c0_287, %c0_288] : memref<208x256xf32, #tpu.memory_space<vmem>>, vector<208x256xf32>
    %c0_289 = arith.constant 0 : index
    %c0_290 = arith.constant 0 : index
    %243 = vector.load %arg6[%c0_289, %c0_290] : memref<256x128xf32, #tpu.memory_space<vmem>>, vector<256x128xf32>
    %cst_291 = arith.constant dense<0.000000e+00> : vector<208x128xf32>
    %244 = tpu.matmul %242, %243, %cst_291 {dimension_numbers = #tpu.dot_dimension_numbers<[1], [0], [0], [1], [0, 0, 1, 1], [], []>} : vector<208x256xf32>, vector<256x128xf32>, vector<208x128xf32> -> vector<208x128xf32>
    %c0_292 = arith.constant 0 : index
    %c0_293 = arith.constant 0 : index
    %245 = vector.load %arg7[%c0_292, %c0_293] : memref<1x128xf32, #tpu.memory_space<vmem>>, vector<1x128xf32>
    %246 = vector.broadcast %245 : vector<1x128xf32> to vector<208x128xf32>
    %247 = arith.addf %244, %246 : vector<208x128xf32>
    %248 = arith.negf %247 : vector<208x128xf32>
    %249 = math.exp %248 : vector<208x128xf32>
    %cst_294 = arith.constant 1.000000e+00 : f32
    %250 = vector.broadcast %cst_294 : f32 to vector<208x128xf32>
    %251 = arith.addf %250, %249 : vector<208x128xf32>
    %252 = arith.divf %250, %251 : vector<208x128xf32>
    %253 = vector.extract_strided_slice %252 {offsets = [0, 0], sizes = [80, 128], strides = [1, 1]} : vector<208x128xf32> to vector<80x128xf32>
    %c0_295 = arith.constant 0 : index
    %c0_296 = arith.constant 0 : index
    %c0_297 = arith.constant 0 : index
    %254 = vector.load %arg8[%c0_295, %c0_296, %c0_297] : memref<2x80x128xf32, #tpu.memory_space<vmem>>, vector<1x80x128xf32>
    %255 = vector.shape_cast %254 : vector<1x80x128xf32> to vector<80x128xf32>
    %256 = vector.shape_cast %253 : vector<80x128xf32> to vector<1x80x128xf32>
    tpu.vector_store %arg8[%c0_295, %c0_296, %c0_297], %256 {strides = array<i32>} : memref<2x80x128xf32, #tpu.memory_space<vmem>>, vector<1x80x128xf32>,
    %257 = vector.extract_strided_slice %252 {offsets = [104, 0], sizes = [80, 128], strides = [1, 1]} : vector<208x128xf32> to vector<80x128xf32>
    %c1_298 = arith.constant 1 : index
    %c0_299 = arith.constant 0 : index
    %c0_300 = arith.constant 0 : index
    %258 = vector.load %arg8[%c1_298, %c0_299, %c0_300] : memref<2x80x128xf32, #tpu.memory_space<vmem>>, vector<1x80x128xf32>
    %259 = vector.shape_cast %258 : vector<1x80x128xf32> to vector<80x128xf32>
    %260 = vector.shape_cast %257 : vector<80x128xf32> to vector<1x80x128xf32>
    tpu.vector_store %arg8[%c1_298, %c0_299, %c0_300], %260 {strides = array<i32>} : memref<2x80x128xf32, #tpu.memory_space<vmem>>, vector<1x80x128xf32>,
    return
  }
  func.func @transform_0(%arg0: i32) -> (i32, i32, i32) {
    %c0_i32 = arith.constant 0 : i32
    %c0_i32_0 = arith.constant 0 : i32
    %c0_i32_1 = arith.constant 0 : i32
    return %arg0, %c0_i32, %c0_i32_0 : i32, i32, i32
  }
  func.func @transform_1(%arg0: i32) -> (i32, i32) {
    %c0_i32 = arith.constant 0 : i32
    %c0_i32_0 = arith.constant 0 : i32
    %c0_i32_1 = arith.constant 0 : i32
    return %c0_i32, %c0_i32_0 : i32, i32
  }
  func.func @transform_2(%arg0: i32) -> (i32, i32) {
    %c0_i32 = arith.constant 0 : i32
    %c0_i32_0 = arith.constant 0 : i32
    %c0_i32_1 = arith.constant 0 : i32
    return %c0_i32, %c0_i32_0 : i32, i32
  }
  func.func @transform_3(%arg0: i32) -> (i32, i32, i32) {
    %c0_i32 = arith.constant 0 : i32
    %c0_i32_0 = arith.constant 0 : i32
    %c0_i32_1 = arith.constant 0 : i32
    %c0_i32_2 = arith.constant 0 : i32
    return %c0_i32, %c0_i32_0, %c0_i32_1 : i32, i32, i32
  }
  func.func @transform_4(%arg0: i32) -> (i32, i32) {
    %c0_i32 = arith.constant 0 : i32
    %c0_i32_0 = arith.constant 0 : i32
    %c0_i32_1 = arith.constant 0 : i32
    return %c0_i32, %c0_i32_0 : i32, i32
  }
  func.func @transform_5(%arg0: i32) -> (i32, i32) {
    %c0_i32 = arith.constant 0 : i32
    %c0_i32_0 = arith.constant 0 : i32
    %c0_i32_1 = arith.constant 0 : i32
    return %c0_i32, %c0_i32_0 : i32, i32
  }
  func.func @transform_6(%arg0: i32) -> (i32, i32) {
    %c0_i32 = arith.constant 0 : i32
    %c0_i32_0 = arith.constant 0 : i32
    %c0_i32_1 = arith.constant 0 : i32
    return %c0_i32, %c0_i32_0 : i32, i32
  }
  func.func @transform_7(%arg0: i32) -> (i32, i32, i32) {
    %c0_i32 = arith.constant 0 : i32
    %c0_i32_0 = arith.constant 0 : i32
    %c0_i32_1 = arith.constant 0 : i32
    return %arg0, %c0_i32, %c0_i32_0 : i32, i32, i32
  }
}

</mosaic_0001>

<llo_original>
// kernel: decoder_forward.1
$region0: #{decoder_forward.1}
  #allocation0 [shape = 'u32[]', space=smem, size = 0x4, offset = 0x4, fixed_abs, tag = 'smem constant byte address 0x4 - core index']
  #allocation1 [shape = 'u32[144,128]{1,0:T(1,128)}', space=vmem, size = 0x12000, scoped, tag = 'internal scratch']
  #allocation2 [shape = 'f32[232,16]{1,0:T(8,128)}', space=vmem, size = 0x1d000, scoped, tag = 'scratch operand']
  #allocation3 [shape = 'f32[2,2,232,16]{3,2,1,0:T(8,128)}', space=vmem, size = 0x74000, scoped, tag = 'scratch operand']
  #allocation4 [shape = 'f32[208,256]{1,0:T(8,128)}', space=vmem, size = 0x34000, scoped, tag = 'scratch operand']
  %s0 = inlined_call_operand.vmem [shape: f32[2,232,8], index: 0, kind: input, shape index: {}]
  %s1 = inlined_call_operand.vmem [shape: f32[72,16], index: 1, kind: input, shape index: {}]
  %s2 = inlined_call_operand.vmem [shape: f32[1,16], index: 2, kind: input, shape index: {}]
  %s3 = inlined_call_operand.vmem [shape: f32[4,64,16], index: 3, kind: input, shape index: {}]
  %s4 = inlined_call_operand.vmem [shape: f32[1,16], index: 4, kind: input, shape index: {}]
  %s5 = inlined_call_operand.vmem [shape: f32[256,128], index: 5, kind: input, shape index: {}]
  %s6 = inlined_call_operand.vmem [shape: f32[1,128], index: 6, kind: input, shape index: {}]
  %s7 = inlined_call_operand.vmem [shape: f32[4,80,128], index: 7, kind: output, shape index: {}]
  %s8 = sld [smem:[#allocation0]]
  $region61: #{decoder_forward.1} parent=0
    _
  %s10 = ssub.s32 1, %s8
  %s11 = scalar_select 0, %s10, %s8
  loop: start=0, step=1, limit=4
  $region2: #{decoder_forward.1} parent=0 // loop_pre_header
    _
  $region3: #{decoder_forward.1} parent=0 // loop_header
    %s13 = sphi 0, %s17
    %p14 = scmp.ge.s32.totalorder %s13, 4
    %s23 = sphi 0, %s25
    %s26 = sphi 0, %s23
    %s27 = sphi 0, %s26
    %s43 = sphi 0, %s27
    %s47 = sphi 0, %s47
    %s49 = sphi 0, %s47
    %s50 = sphi 0, %s49
    %s64 = sphi 0, %s50
    %s68 = sphi 0, %s68
    %s70 = sphi 0, %s68
    %s71 = sphi 0, %s70
    %s85 = sphi 0, %s71
    %s89 = sphi 0, %s89
    %s91 = sphi 0, %s89
    %s92 = sphi 0, %s91
    %s106 = sphi 0, %s92
    %s110 = sphi 0, %s110
    %s112 = sphi 0, %s110
    %s113 = sphi 0, %s112
    %s127 = sphi 0, %s113
    %s131 = sphi 0, %s131
    %s133 = sphi 0, %s131
    %s134 = sphi 0, %s133
    %s148 = sphi 0, %s134
    %s152 = sphi 0, %s152
    %s154 = sphi 0, %s152
    %s155 = sphi 0, %s154
    %s169 = sphi 0, %s155
    %s175 = sphi 0, %s177
    %s178 = sphi 0, %s175
    %s179 = sphi 0, %s178
    %s195 = sphi 0, %s179
  $region4: #{decoder_forward.1} parent=0 // loop_header_branch
    %16 = sbr.rel (%p14) target = $region8
  $region5: #{decoder_forward.1} parent=0 // loop_body
    %s18 = ssub.s32 %s13, 1
    %s19 = ssub.s32 %s13, 2
    %s20 = sadd.s32 %s13, 1
    %s21 = ssub.s32 %s13, %s20
    %p22 = scmp.eq.s32.totalorder %s21, 0
    %s24 = sadd.s32 %s23, 1
    %s25 = scalar_select %p22, %s23, %s24
    %p28 = pneg %p22
    %p29 = scmp.eq.s32.totalorder %s13, 1
    %p30 = por %p28, %p29
    %p31 = scmp.ne.s32.totalorder %s23, %s26
    %p32 = scmp.eq.s32.totalorder %s13, 0
    %p33 = por %p31, %p32
    %p34 = scmp.ne.s32.totalorder %s23, %s26
    %p35 = scmp.eq.s32.totalorder %s18, 1
    %p36 = por %p34, %p35
    %p37 = scmp.ne.s32.totalorder %s26, %s27
    %p38 = scmp.eq.s32.totalorder %s18, 0
    %p39 = por %p37, %p38
    %p40 = scmp.ne.s32.totalorder %s26, %s27
    %p41 = scmp.eq.s32.totalorder %s19, 1
    %p42 = por %p40, %p41
    %p44 = scmp.ne.s32.totalorder %s27, %s43
    %p45 = scmp.eq.s32.totalorder %s19, 0
    %p46 = por %p44, %p45
    %s48 = sadd.s32 %s47, 1
    %p51 = scmp.eq.s32.totalorder %s13, 1
    %p52 = scmp.ne.s32.totalorder %s47, %s49
    %p53 = scmp.eq.s32.totalorder %s13, 0
    %p54 = por %p52, %p53
    %p55 = scmp.ne.s32.totalorder %s47, %s49
    %p56 = scmp.eq.s32.totalorder %s18, 1
    %p57 = por %p55, %p56
    %p58 = scmp.ne.s32.totalorder %s49, %s50
    %p59 = scmp.eq.s32.totalorder %s18, 0
    %p60 = por %p58, %p59
    %p61 = scmp.ne.s32.totalorder %s49, %s50
    %p62 = scmp.eq.s32.totalorder %s19, 1
    %p63 = por %p61, %p62
    %p65 = scmp.ne.s32.totalorder %s50, %s64
    %p66 = scmp.eq.s32.totalorder %s19, 0
    %p67 = por %p65, %p66
    %s69 = sadd.s32 %s68, 1
    %p72 = scmp.eq.s32.totalorder %s13, 1
    %p73 = scmp.ne.s32.totalorder %s68, %s70
    %p74 = scmp.eq.s32.totalorder %s13, 0
    %p75 = por %p73, %p74
    %p76 = scmp.ne.s32.totalorder %s68, %s70
    %p77 = scmp.eq.s32.totalorder %s18, 1
    %p78 = por %p76, %p77
    %p79 = scmp.ne.s32.totalorder %s70, %s71
    %p80 = scmp.eq.s32.totalorder %s18, 0
    %p81 = por %p79, %p80
    %p82 = scmp.ne.s32.totalorder %s70, %s71
    %p83 = scmp.eq.s32.totalorder %s19, 1
    %p84 = por %p82, %p83
    %p86 = scmp.ne.s32.totalorder %s71, %s85
    %p87 = scmp.eq.s32.totalorder %s19, 0
    %p88 = por %p86, %p87
    %s90 = sadd.s32 %s89, 1
    %p93 = scmp.eq.s32.totalorder %s13, 1
    %p94 = scmp.ne.s32.totalorder %s89, %s91
    %p95 = scmp.eq.s32.totalorder %s13, 0
    %p96 = por %p94, %p95
    %p97 = scmp.ne.s32.totalorder %s89, %s91
    %p98 = scmp.eq.s32.totalorder %s18, 1
    %p99 = por %p97, %p98
    %p100 = scmp.ne.s32.totalorder %s91, %s92
    %p101 = scmp.eq.s32.totalorder %s18, 0
    %p102 = por %p100, %p101
    %p103 = scmp.ne.s32.totalorder %s91, %s92
    %p104 = scmp.eq.s32.totalorder %s19, 1
    %p105 = por %p103, %p104
    %p107 = scmp.ne.s32.totalorder %s92, %s106
    %p108 = scmp.eq.s32.totalorder %s19, 0
    %p109 = por %p107, %p108
    %s111 = sadd.s32 %s110, 1
    %p114 = scmp.eq.s32.totalorder %s13, 1
    %p115 = scmp.ne.s32.totalorder %s110, %s112
    %p116 = scmp.eq.s32.totalorder %s13, 0
    %p117 = por %p115, %p116
    %p118 = scmp.ne.s32.totalorder %s110, %s112
    %p119 = scmp.eq.s32.totalorder %s18, 1
    %p120 = por %p118, %p119
    %p121 = scmp.ne.s32.totalorder %s112, %s113
    %p122 = scmp.eq.s32.totalorder %s18, 0
    %p123 = por %p121, %p122
    %p124 = scmp.ne.s32.totalorder %s112, %s113
    %p125 = scmp.eq.s32.totalorder %s19, 1
    %p126 = por %p124, %p125
    %p128 = scmp.ne.s32.totalorder %s113, %s127
    %p129 = scmp.eq.s32.totalorder %s19, 0
    %p130 = por %p128, %p129
    %s132 = sadd.s32 %s131, 1
    %p135 = scmp.eq.s32.totalorder %s13, 1
    %p136 = scmp.ne.s32.totalorder %s131, %s133
    %p137 = scmp.eq.s32.totalorder %s13, 0
    %p138 = por %p136, %p137
    %p139 = scmp.ne.s32.totalorder %s131, %s133
    %p140 = scmp.eq.s32.totalorder %s18, 1
    %p141 = por %p139, %p140
    %p142 = scmp.ne.s32.totalorder %s133, %s134
    %p143 = scmp.eq.s32.totalorder %s18, 0
    %p144 = por %p142, %p143
    %p145 = scmp.ne.s32.totalorder %s133, %s134
    %p146 = scmp.eq.s32.totalorder %s19, 1
    %p147 = por %p145, %p146
    %p149 = scmp.ne.s32.totalorder %s134, %s148
    %p150 = scmp.eq.s32.totalorder %s19, 0
    %p151 = por %p149, %p150
    %s153 = sadd.s32 %s152, 1
    %p156 = scmp.eq.s32.totalorder %s13, 1
    %p157 = scmp.ne.s32.totalorder %s152, %s154
    %p158 = scmp.eq.s32.totalorder %s13, 0
    %p159 = por %p157, %p158
    %p160 = scmp.ne.s32.totalorder %s152, %s154
    %p161 = scmp.eq.s32.totalorder %s18, 1
    %p162 = por %p160, %p161
    %p163 = scmp.ne.s32.totalorder %s154, %s155
    %p164 = scmp.eq.s32.totalorder %s18, 0
    %p165 = por %p163, %p164
    %p166 = scmp.ne.s32.totalorder %s154, %s155
    %p167 = scmp.eq.s32.totalorder %s19, 1
    %p168 = por %p166, %p167
    %p170 = scmp.ne.s32.totalorder %s155, %s169
    %p171 = scmp.eq.s32.totalorder %s19, 0
    %p172 = por %p170, %p171
    %s173 = ssub.s32 %s13, %s20
    %p174 = scmp.eq.s32.totalorder %s173, 0
    %s176 = sadd.s32 %s175, 1
    %s177 = scalar_select %p174, %s175, %s176
    %p180 = pneg %p174
    %p181 = scmp.eq.s32.totalorder %s13, 1
    %p182 = por %p180, %p181
    %p183 = scmp.ne.s32.totalorder %s175, %s178
    %p184 = scmp.eq.s32.totalorder %s13, 0
    %p185 = por %p183, %p184
    %p186 = scmp.ne.s32.totalorder %s175, %s178
    %p187 = scmp.eq.s32.totalorder %s18, 1
    %p188 = por %p186, %p187
    %p189 = scmp.ne.s32.totalorder %s178, %s179
    %p190 = scmp.eq.s32.totalorder %s18, 0
    %p191 = por %p189, %p190
    %p192 = scmp.ne.s32.totalorder %s178, %s179
    %p193 = scmp.eq.s32.totalorder %s19, 1
    %p194 = por %p192, %p193
    %p196 = scmp.ne.s32.totalorder %s179, %s195
    %p197 = scmp.eq.s32.totalorder %s19, 0
    %p198 = por %p196, %p197
    %p199 = scmp.le.s32.totalorder 1, %s13
    %p200 = scmp.lt.s32.totalorder %s13, 3
    %p201 = pnand %p199, %p200
    %p202 = pneg %p201
    // Predicated region
    $region9: #{decoder_forward.1} parent=5 // pred_check
      _
    $region10: #{decoder_forward.1} parent=5 // pred_check_branch
      %204 = sbr.rel (%p201) target = $region12
    $region11: #{decoder_forward.1} parent=5 // pred_region
      %s205 = ssub.s32 %s13, 1
      // Predicated region
      $region13: #{decoder_forward.1} parent=11 // pred_check
        %p206 = pneg %p60
      $region14: #{decoder_forward.1} parent=11 // pred_check_branch
        %208 = sbr.rel (%p206) target = $region16
      $region15: #{decoder_forward.1} parent=11 // pred_region
        _
      $region16: #{decoder_forward.1} parent=11 // pred_fallthru
        _
      // Predicated region
      $region17: #{decoder_forward.1} parent=11 // pred_check
        %p209 = pneg %p81
      $region18: #{decoder_forward.1} parent=11 // pred_check_branch
        %211 = sbr.rel (%p209) target = $region20
      $region19: #{decoder_forward.1} parent=11 // pred_region
        _
      $region20: #{decoder_forward.1} parent=11 // pred_fallthru
        _
      // Predicated region
      $region21: #{decoder_forward.1} parent=11 // pred_check
        %p212 = pneg %p102
      $region22: #{decoder_forward.1} parent=11 // pred_check_branch
        %214 = sbr.rel (%p212) target = $region24
      $region23: #{decoder_forward.1} parent=11 // pred_region
        _
      $region24: #{decoder_forward.1} parent=11 // pred_fallthru
        _
      // Predicated region
      $region25: #{decoder_forward.1} parent=11 // pred_check
        %p215 = pneg %p123
      $region26: #{decoder_forward.1} parent=11 // pred_check_branch
        %217 = sbr.rel (%p215) target = $region28
      $region27: #{decoder_forward.1} parent=11 // pred_region
        _
      $region28: #{decoder_forward.1} parent=11 // pred_fallthru
        _
      // Predicated region
      $region29: #{decoder_forward.1} parent=11 // pred_check
        %p218 = pneg %p144
      $region30: #{decoder_forward.1} parent=11 // pred_check_branch
        %220 = sbr.rel (%p218) target = $region32
      $region31: #{decoder_forward.1} parent=11 // pred_region
        _
      $region32: #{decoder_forward.1} parent=11 // pred_fallthru
        _
      // Predicated region
      $region33: #{decoder_forward.1} parent=11 // pred_check
        %p221 = pneg %p165
      $region34: #{decoder_forward.1} parent=11 // pred_check_branch
        %223 = sbr.rel (%p221) target = $region36
      $region35: #{decoder_forward.1} parent=11 // pred_region
        _
      $region36: #{decoder_forward.1} parent=11 // pred_fallthru
        _
    $region12: #{decoder_forward.1} parent=5 // pred_fallthru
      _
    %p224 = scmp.lt.s32.totalorder %s13, 2
    // Predicated region
    $region37: #{decoder_forward.1} parent=5 // pred_check
      %p225 = pneg %p224
    $region38: #{decoder_forward.1} parent=5 // pred_check_branch
      %227 = sbr.rel (%p225) target = $region40
    $region39: #{decoder_forward.1} parent=5 // pred_region
      // Predicated region
      $region41: #{decoder_forward.1} parent=39 // pred_check
        %p228 = pneg %p33
      $region42: #{decoder_forward.1} parent=39 // pred_check_branch
        %230 = sbr.rel (%p228) target = $region44
      $region43: #{decoder_forward.1} parent=39 // pred_region
        %p231 = scmp.lt.s32.totalorder %s13, 1
        %s232 = scalar_select %p231, %s13, 1
        %s233 = smul.addr %s232, 29
        %s234 = smul.addr %s233, 8
        %s235 = scalar_lea.vmem %s0, %s234
      $region44: #{decoder_forward.1} parent=39 // pred_fallthru
        _
    $region40: #{decoder_forward.1} parent=5 // pred_fallthru
      _
    %p236 = scmp.le.s32.totalorder 1, %s13
    %p237 = scmp.lt.s32.totalorder %s13, 3
    %p238 = pnand %p236, %p237
    %p239 = pneg %p238
    // Predicated region
    $region45: #{decoder_forward.1} parent=5 // pred_check
      _
    $region46: #{decoder_forward.1} parent=5 // pred_check_branch
      %241 = sbr.rel (%p238) target = $region48
    $region47: #{decoder_forward.1} parent=5 // pred_region
      %s242 = ssub.s32 %s13, 1
      %p243 = scmp.lt.s32.totalorder %s18, 1
      %s244 = scalar_select %p243, %s18, 1
      %s245 = smul.addr %s244, 29
      %s246 = smul.addr %s245, 8
      %s247 = scalar_lea.vmem %s0, %s246
      %p248 = pneg %p39
      %p249 = pneg %p36
      %p250 = pneg %p60
      %p251 = pneg %p57
      %p252 = pneg %p81
      %p253 = pneg %p78
      %p254 = pneg %p102
      %p255 = pneg %p99
      %p256 = pneg %p123
      %p257 = pneg %p120
      %p258 = pneg %p144
      %p259 = pneg %p141
      %p260 = pneg %p165
      %p261 = pneg %p162
      %p262 = pneg %p191
      %p263 = pneg %p188
      %s264 = smul.u32 2, %s18
      %p265 = scmp.lt.s32.totalorder %s264, 3
      %s266 = scalar_select %p265, %s264, 3
      %s267 = smul.addr %s266, 10
      %s268 = smul.addr %s267, 8
      %s269 = scalar_lea.vmem %s7, %s268
      %p270 = scmp.lt.s32.totalorder %s18, 1
      %s271 = scalar_select %p270, %s18, 1
      %s272 = smul.addr %s271, 29
      %s273 = smul.addr %s272, 8
      %s274 = scalar_lea.vmem %s0, %s273
      %s275 = smul.u32 2, %s18
      %p276 = scmp.lt.s32.totalorder %s275, 3
      %s277 = scalar_select %p276, %s275, 3
      %s278 = smul.addr %s277, 10
      %s279 = smul.addr %s278, 8
      %s280 = scalar_lea.vmem %s7, %s279
      %s281 = smul.u32 2, %s18
      %vm282 = vcmask 130048
      %283 = vst.msk [vmem:[#allocation2] sm:$0xff] %vm282, 0.0
      %vm284 = vcmask 124928
      %285 = vst.msk [vmem:[#allocation2 + $0x8] sm:$0x7] %vm284, 0.0
      %286 = vst.msk [vmem:[#allocation2 + $0xdb] sm:$0xff] %vm282, 0.0
      %vm287 = vcmask 126976
      %288 = vst.msk [vmem:[#allocation2 + $0xe3] sm:$0x1f] %vm287, 0.0
      %289 = vst.msk [vmem:[#allocation3] sm:$0xff] %vm282, 0.0
      %290 = vst.msk [vmem:[#allocation3 + $0x8] sm:$0x7] %vm284, 0.0
      %291 = vst.msk [vmem:[#allocation3 + $0xdb] sm:$0xff] %vm282, 0.0
      %292 = vst.msk [vmem:[#allocation3 + $0xe3] sm:$0x1f] %vm287, 0.0
      %s293 = scalar_lea.vmem [#allocation3], 232
      %294 = vst.msk [vmem:[%s293] sm:$0xff] %vm282, 0.0
      %295 = vst.msk [vmem:[%s293 + $0x8] sm:$0x7] %vm284, 0.0
      %296 = vst.msk [vmem:[%s293 + $0xdb] sm:$0xff] %vm282, 0.0
      %297 = vst.msk [vmem:[%s293 + $0xe3] sm:$0x1f] %vm287, 0.0
      %s298 = scalar_lea.vmem [#allocation3], 464
      %299 = vst.msk [vmem:[%s298] sm:$0xff] %vm282, 0.0
      %300 = vst.msk [vmem:[%s298 + $0x8] sm:$0x7] %vm284, 0.0
      %301 = vst.msk [vmem:[%s298 + $0xdb] sm:$0xff] %vm282, 0.0
      %302 = vst.msk [vmem:[%s298 + $0xe3] sm:$0x1f] %vm287, 0.0
      %s303 = scalar_lea.vmem [#allocation3], 696
      %304 = vst.msk [vmem:[%s303] sm:$0xff] %vm282, 0.0
      %305 = vst.msk [vmem:[%s303 + $0x8] sm:$0x7] %vm284, 0.0
      %306 = vst.msk [vmem:[%s303 + $0xdb] sm:$0xff] %vm282, 0.0
      %307 = vst.msk [vmem:[%s303 + $0xe3] sm:$0x1f] %vm287, 0.0
      %v308 = vlaneseq
      %v309 = vshrl.u32 %v308, 7
      %v310 = vadd.s32 %v309, 8
      %v311 = vadd.s32 %v309, 16
      %v312 = vadd.s32 %v309, 24
      %v313 = vadd.s32 %v309, 32
      %v314 = vadd.s32 %v309, 40
      %v315 = vadd.s32 %v309, 48
      %v316 = vadd.s32 %v309, 56
      %v317 = vadd.s32 %v309, 64
      %v318 = vadd.s32 %v309, 72
      %v319 = vadd.s32 %v309, 80
      %v320 = vadd.s32 %v309, 88
      %v321 = vadd.s32 %v309, 96
      %v322 = vadd.s32 %v309, 104
      %v323 = vadd.s32 %v309, 112
      %v324 = vadd.s32 %v309, 120
      %v325 = vadd.s32 %v309, 128
      %v326 = vadd.s32 %v309, 136
      %v327 = vadd.s32 %v309, 144
      %v328 = vadd.s32 %v309, 152
      %v329 = vadd.s32 %v309, 160
      %v330 = vadd.s32 %v309, 168
      %v331 = vadd.s32 %v309, 176
      %v332 = vadd.s32 %v309, 184
      %v333 = vadd.s32 %v309, 192
      %v334 = vadd.s32 %v309, 200
      %vm335 = vcmp.lt.s32.totalorder %v309, 0
      %v336 = vsub.s32 0, %v309
      %v337 = vsel %vm335, %v336, %v309
      %v338 = vmul.u32.u64.compose %v337, 2643056798
      %v339 = vextract.low.u32 %v338
      %v340 = vextract.high.u32 %v338
      %v341 = vshrl.u32 %v340, 6
      %v342 = vmul.u32 %v341, 104
      %v343 = vsub.s32 %v337, %v342
      %v344 = vsub.s32 0, %v343
      %v345 = vsel %vm335, %v344, %v343
      %vm346 = vcmp.lt.s32.totalorder %v310, 0
      %v347 = vsub.s32 0, %v310
      %v348 = vsel %vm346, %v347, %v310
      %v349 = vmul.u32.u64.compose %v348, 2643056798
      %v350 = vextract.low.u32 %v349
      %v351 = vextract.high.u32 %v349
      %v352 = vshrl.u32 %v351, 6
      %v353 = vmul.u32 %v352, 104
      %v354 = vsub.s32 %v348, %v353
      %v355 = vsub.s32 0, %v354
      %v356 = vsel %vm346, %v355, %v354
      %vm357 = vcmp.lt.s32.totalorder %v311, 0
      %v358 = vsub.s32 0, %v311
      %v359 = vsel %vm357, %v358, %v311
      %v360 = vmul.u32.u64.compose %v359, 2643056798
      %v361 = vextract.low.u32 %v360
      %v362 = vextract.high.u32 %v360
      %v363 = vshrl.u32 %v362, 6
      %v364 = vmul.u32 %v363, 104
      %v365 = vsub.s32 %v359, %v364
      %v366 = vsub.s32 0, %v365
      %v367 = vsel %vm357, %v366, %v365
      %vm368 = vcmp.lt.s32.totalorder %v312, 0
      %v369 = vsub.s32 0, %v312
      %v370 = vsel %vm368, %v369, %v312
      %v371 = vmul.u32.u64.compose %v370, 2643056798
      %v372 = vextract.low.u32 %v371
      %v373 = vextract.high.u32 %v371
      %v374 = vshrl.u32 %v373, 6
      %v375 = vmul.u32 %v374, 104
      %v376 = vsub.s32 %v370, %v375
      %v377 = vsub.s32 0, %v376
      %v378 = vsel %vm368, %v377, %v376
      %vm379 = vcmp.lt.s32.totalorder %v313, 0
      %v380 = vsub.s32 0, %v313
      %v381 = vsel %vm379, %v380, %v313
      %v382 = vmul.u32.u64.compose %v381, 2643056798
      %v383 = vextract.low.u32 %v382
      %v384 = vextract.high.u32 %v382
      %v385 = vshrl.u32 %v384, 6
      %v386 = vmul.u32 %v385, 104
      %v387 = vsub.s32 %v381, %v386
      %v388 = vsub.s32 0, %v387
      %v389 = vsel %vm379, %v388, %v387
      %vm390 = vcmp.lt.s32.totalorder %v314, 0
      %v391 = vsub.s32 0, %v314
      %v392 = vsel %vm390, %v391, %v314
      %v393 = vmul.u32.u64.compose %v392, 2643056798
      %v394 = vextract.low.u32 %v393
      %v395 = vextract.high.u32 %v393
      %v396 = vshrl.u32 %v395, 6
      %v397 = vmul.u32 %v396, 104
      %v398 = vsub.s32 %v392, %v397
      %v399 = vsub.s32 0, %v398
      %v400 = vsel %vm390, %v399, %v398
      %vm401 = vcmp.lt.s32.totalorder %v315, 0
      %v402 = vsub.s32 0, %v315
      %v403 = vsel %vm401, %v402, %v315
      %v404 = vmul.u32.u64.compose %v403, 2643056798
      %v405 = vextract.low.u32 %v404
      %v406 = vextract.high.u32 %v404
      %v407 = vshrl.u32 %v406, 6
      %v408 = vmul.u32 %v407, 104
      %v409 = vsub.s32 %v403, %v408
      %v410 = vsub.s32 0, %v409
      %v411 = vsel %vm401, %v410, %v409
      %vm412 = vcmp.lt.s32.totalorder %v316, 0
      %v413 = vsub.s32 0, %v316
      %v414 = vsel %vm412, %v413, %v316
      %v415 = vmul.u32.u64.compose %v414, 2643056798
      %v416 = vextract.low.u32 %v415
      %v417 = vextract.high.u32 %v415
      %v418 = vshrl.u32 %v417, 6
      %v419 = vmul.u32 %v418, 104
      %v420 = vsub.s32 %v414, %v419
      %v421 = vsub.s32 0, %v420
      %v422 = vsel %vm412, %v421, %v420
      %vm423 = vcmp.lt.s32.totalorder %v317, 0
      %v424 = vsub.s32 0, %v317
      %v425 = vsel %vm423, %v424, %v317
      %v426 = vmul.u32.u64.compose %v425, 2643056798
      %v427 = vextract.low.u32 %v426
      %v428 = vextract.high.u32 %v426
      %v429 = vshrl.u32 %v428, 6
      %v430 = vmul.u32 %v429, 104
      %v431 = vsub.s32 %v425, %v430
      %v432 = vsub.s32 0, %v431
      %v433 = vsel %vm423, %v432, %v431
      %vm434 = vcmp.lt.s32.totalorder %v318, 0
      %v435 = vsub.s32 0, %v318
      %v436 = vsel %vm434, %v435, %v318
      %v437 = vmul.u32.u64.compose %v436, 2643056798
      %v438 = vextract.low.u32 %v437
      %v439 = vextract.high.u32 %v437
      %v440 = vshrl.u32 %v439, 6
      %v441 = vmul.u32 %v440, 104
      %v442 = vsub.s32 %v436, %v441
      %v443 = vsub.s32 0, %v442
      %v444 = vsel %vm434, %v443, %v442
      %vm445 = vcmp.lt.s32.totalorder %v319, 0
      %v446 = vsub.s32 0, %v319
      %v447 = vsel %vm445, %v446, %v319
      %v448 = vmul.u32.u64.compose %v447, 2643056798
      %v449 = vextract.low.u32 %v448
      %v450 = vextract.high.u32 %v448
      %v451 = vshrl.u32 %v450, 6
      %v452 = vmul.u32 %v451, 104
      %v453 = vsub.s32 %v447, %v452
      %v454 = vsub.s32 0, %v453
      %v455 = vsel %vm445, %v454, %v453
      %vm456 = vcmp.lt.s32.totalorder %v320, 0
      %v457 = vsub.s32 0, %v320
      %v458 = vsel %vm456, %v457, %v320
      %v459 = vmul.u32.u64.compose %v458, 2643056798
      %v460 = vextract.low.u32 %v459
      %v461 = vextract.high.u32 %v459
      %v462 = vshrl.u32 %v461, 6
      %v463 = vmul.u32 %v462, 104
      %v464 = vsub.s32 %v458, %v463
      %v465 = vsub.s32 0, %v464
      %v466 = vsel %vm456, %v465, %v464
      %vm467 = vcmp.lt.s32.totalorder %v321, 0
      %v468 = vsub.s32 0, %v321
      %v469 = vsel %vm467, %v468, %v321
      %v470 = vmul.u32.u64.compose %v469, 2643056798
      %v471 = vextract.low.u32 %v470
      %v472 = vextract.high.u32 %v470
      %v473 = vshrl.u32 %v472, 6
      %v474 = vmul.u32 %v473, 104
      %v475 = vsub.s32 %v469, %v474
      %v476 = vsub.s32 0, %v475
      %v477 = vsel %vm467, %v476, %v475
      %vm478 = vcmp.lt.s32.totalorder %v322, 0
      %v479 = vsub.s32 0, %v322
      %v480 = vsel %vm478, %v479, %v322
      %v481 = vmul.u32.u64.compose %v480, 2643056798
      %v482 = vextract.low.u32 %v481
      %v483 = vextract.high.u32 %v481
      %v484 = vshrl.u32 %v483, 6
      %v485 = vmul.u32 %v484, 104
      %v486 = vsub.s32 %v480, %v485
      %v487 = vsub.s32 0, %v486
      %v488 = vsel %vm478, %v487, %v486
      %vm489 = vcmp.lt.s32.totalorder %v323, 0
      %v490 = vsub.s32 0, %v323
      %v491 = vsel %vm489, %v490, %v323
      %v492 = vmul.u32.u64.compose %v491, 2643056798
      %v493 = vextract.low.u32 %v492
      %v494 = vextract.high.u32 %v492
      %v495 = vshrl.u32 %v494, 6
      %v496 = vmul.u32 %v495, 104
      %v497 = vsub.s32 %v491, %v496
      %v498 = vsub.s32 0, %v497
      %v499 = vsel %vm489, %v498, %v497
      %vm500 = vcmp.lt.s32.totalorder %v324, 0
      %v501 = vsub.s32 0, %v324
      %v502 = vsel %vm500, %v501, %v324
      %v503 = vmul.u32.u64.compose %v502, 2643056798
      %v504 = vextract.low.u32 %v503
      %v505 = vextract.high.u32 %v503
      %v506 = vshrl.u32 %v505, 6
      %v507 = vmul.u32 %v506, 104
      %v508 = vsub.s32 %v502, %v507
      %v509 = vsub.s32 0, %v508
      %v510 = vsel %vm500, %v509, %v508
      %vm511 = vcmp.lt.s32.totalorder %v325, 0
      %v512 = vsub.s32 0, %v325
      %v513 = vsel %vm511, %v512, %v325
      %v514 = vmul.u32.u64.compose %v513, 2643056798
      %v515 = vextract.low.u32 %v514
      %v516 = vextract.high.u32 %v514
      %v517 = vshrl.u32 %v516, 6
      %v518 = vmul.u32 %v517, 104
      %v519 = vsub.s32 %v513, %v518
      %v520 = vsub.s32 0, %v519
      %v521 = vsel %vm511, %v520, %v519
      %vm522 = vcmp.lt.s32.totalorder %v326, 0
      %v523 = vsub.s32 0, %v326
      %v524 = vsel %vm522, %v523, %v326
      %v525 = vmul.u32.u64.compose %v524, 2643056798
      %v526 = vextract.low.u32 %v525
      %v527 = vextract.high.u32 %v525
      %v528 = vshrl.u32 %v527, 6
      %v529 = vmul.u32 %v528, 104
      %v530 = vsub.s32 %v524, %v529
      %v531 = vsub.s32 0, %v530
      %v532 = vsel %vm522, %v531, %v530
      %vm533 = vcmp.lt.s32.totalorder %v327, 0
      %v534 = vsub.s32 0, %v327
      %v535 = vsel %vm533, %v534, %v327
      %v536 = vmul.u32.u64.compose %v535, 2643056798
      %v537 = vextract.low.u32 %v536
      %v538 = vextract.high.u32 %v536
      %v539 = vshrl.u32 %v538, 6
      %v540 = vmul.u32 %v539, 104
      %v541 = vsub.s32 %v535, %v540
      %v542 = vsub.s32 0, %v541
      %v543 = vsel %vm533, %v542, %v541
      %vm544 = vcmp.lt.s32.totalorder %v328, 0
      %v545 = vsub.s32 0, %v328
      %v546 = vsel %vm544, %v545, %v328
      %v547 = vmul.u32.u64.compose %v546, 2643056798
      %v548 = vextract.low.u32 %v547
      %v549 = vextract.high.u32 %v547
      %v550 = vshrl.u32 %v549, 6
      %v551 = vmul.u32 %v550, 104
      %v552 = vsub.s32 %v546, %v551
      %v553 = vsub.s32 0, %v552
      %v554 = vsel %vm544, %v553, %v552
      %vm555 = vcmp.lt.s32.totalorder %v329, 0
      %v556 = vsub.s32 0, %v329
      %v557 = vsel %vm555, %v556, %v329
      %v558 = vmul.u32.u64.compose %v557, 2643056798
      %v559 = vextract.low.u32 %v558
      %v560 = vextract.high.u32 %v558
      %v561 = vshrl.u32 %v560, 6
      %v562 = vmul.u32 %v561, 104
      %v563 = vsub.s32 %v557, %v562
      %v564 = vsub.s32 0, %v563
      %v565 = vsel %vm555, %v564, %v563
      %vm566 = vcmp.lt.s32.totalorder %v330, 0
      %v567 = vsub.s32 0, %v330
      %v568 = vsel %vm566, %v567, %v330
      %v569 = vmul.u32.u64.compose %v568, 2643056798
      %v570 = vextract.low.u32 %v569
      %v571 = vextract.high.u32 %v569
      %v572 = vshrl.u32 %v571, 6
      %v573 = vmul.u32 %v572, 104
      %v574 = vsub.s32 %v568, %v573
      %v575 = vsub.s32 0, %v574
      %v576 = vsel %vm566, %v575, %v574
      %vm577 = vcmp.lt.s32.totalorder %v331, 0
      %v578 = vsub.s32 0, %v331
      %v579 = vsel %vm577, %v578, %v331
      %v580 = vmul.u32.u64.compose %v579, 2643056798
      %v581 = vextract.low.u32 %v580
      %v582 = vextract.high.u32 %v580
      %v583 = vshrl.u32 %v582, 6
      %v584 = vmul.u32 %v583, 104
      %v585 = vsub.s32 %v579, %v584
      %v586 = vsub.s32 0, %v585
      %v587 = vsel %vm577, %v586, %v585
      %vm588 = vcmp.lt.s32.totalorder %v332, 0
      %v589 = vsub.s32 0, %v332
      %v590 = vsel %vm588, %v589, %v332
      %v591 = vmul.u32.u64.compose %v590, 2643056798
      %v592 = vextract.low.u32 %v591
      %v593 = vextract.high.u32 %v591
      %v594 = vshrl.u32 %v593, 6
      %v595 = vmul.u32 %v594, 104
      %v596 = vsub.s32 %v590, %v595
      %v597 = vsub.s32 0, %v596
      %v598 = vsel %vm588, %v597, %v596
      %vm599 = vcmp.lt.s32.totalorder %v333, 0
      %v600 = vsub.s32 0, %v333
      %v601 = vsel %vm599, %v600, %v333
      %v602 = vmul.u32.u64.compose %v601, 2643056798
      %v603 = vextract.low.u32 %v602
      %v604 = vextract.high.u32 %v602
      %v605 = vshrl.u32 %v604, 6
      %v606 = vmul.u32 %v605, 104
      %v607 = vsub.s32 %v601, %v606
      %v608 = vsub.s32 0, %v607
      %v609 = vsel %vm599, %v608, %v607
      %vm610 = vcmp.lt.s32.totalorder %v334, 0
      %v611 = vsub.s32 0, %v334
      %v612 = vsel %vm610, %v611, %v334
      %v613 = vmul.u32.u64.compose %v612, 2643056798
      %v614 = vextract.low.u32 %v613
      %v615 = vextract.high.u32 %v613
      %v616 = vshrl.u32 %v615, 6
      %v617 = vmul.u32 %v616, 104
      %v618 = vsub.s32 %v612, %v617
      %v619 = vsub.s32 0, %v618
      %v620 = vsel %vm610, %v619, %v618
      %vm621 = vcmp.ne.s32.totalorder %v345, 0
      %vm622 = vcmp.ne.s32.totalorder %v356, 0
      %vm623 = vcmp.ne.s32.totalorder %v367, 0
      %vm624 = vcmp.ne.s32.totalorder %v378, 0
      %vm625 = vcmp.ne.s32.totalorder %v389, 0
      %vm626 = vcmp.ne.s32.totalorder %v400, 0
      %vm627 = vcmp.ne.s32.totalorder %v411, 0
      %vm628 = vcmp.ne.s32.totalorder %v422, 0
      %vm629 = vcmp.ne.s32.totalorder %v433, 0
      %vm630 = vcmp.ne.s32.totalorder %v444, 0
      %vm631 = vcmp.ne.s32.totalorder %v455, 0
      %vm632 = vcmp.ne.s32.totalorder %v466, 0
      %vm633 = vcmp.ne.s32.totalorder %v477, 0
      %vm634 = vcmp.ne.s32.totalorder %v488, 0
      %vm635 = vcmp.ne.s32.totalorder %v499, 0
      %vm636 = vcmp.ne.s32.totalorder %v510, 0
      %vm637 = vcmp.ne.s32.totalorder %v521, 0
      %vm638 = vcmp.ne.s32.totalorder %v532, 0
      %vm639 = vcmp.ne.s32.totalorder %v543, 0
      %vm640 = vcmp.ne.s32.totalorder %v554, 0
      %vm641 = vcmp.ne.s32.totalorder %v565, 0
      %vm642 = vcmp.ne.s32.totalorder %v576, 0
      %vm643 = vcmp.ne.s32.totalorder %v587, 0
      %vm644 = vcmp.ne.s32.totalorder %v598, 0
      %vm645 = vcmp.ne.s32.totalorder %v609, 0
      %vm646 = vcmp.ne.s32.totalorder %v620, 0
      %vm647 = vcmp.lt.s32.totalorder %v345, 0
      %vm648 = vcmp.lt.s32.totalorder %v356, 0
      %vm649 = vcmp.lt.s32.totalorder %v367, 0
      %vm650 = vcmp.lt.s32.totalorder %v378, 0
      %vm651 = vcmp.lt.s32.totalorder %v389, 0
      %vm652 = vcmp.lt.s32.totalorder %v400, 0
      %vm653 = vcmp.lt.s32.totalorder %v411, 0
      %vm654 = vcmp.lt.s32.totalorder %v422, 0
      %vm655 = vcmp.lt.s32.totalorder %v433, 0
      %vm656 = vcmp.lt.s32.totalorder %v444, 0
      %vm657 = vcmp.lt.s32.totalorder %v455, 0
      %vm658 = vcmp.lt.s32.totalorder %v466, 0
      %vm659 = vcmp.lt.s32.totalorder %v477, 0
      %vm660 = vcmp.lt.s32.totalorder %v488, 0
      %vm661 = vcmp.lt.s32.totalorder %v499, 0
      %vm662 = vcmp.lt.s32.totalorder %v510, 0
      %vm663 = vcmp.lt.s32.totalorder %v521, 0
      %vm664 = vcmp.lt.s32.totalorder %v532, 0
      %vm665 = vcmp.lt.s32.totalorder %v543, 0
      %vm666 = vcmp.lt.s32.totalorder %v554, 0
      %vm667 = vcmp.lt.s32.totalorder %v565, 0
      %vm668 = vcmp.lt.s32.totalorder %v576, 0
      %vm669 = vcmp.lt.s32.totalorder %v587, 0
      %vm670 = vcmp.lt.s32.totalorder %v598, 0
      %vm671 = vcmp.lt.s32.totalorder %v609, 0
      %vm672 = vcmp.lt.s32.totalorder %v620, 0
      %vm673 = vmand %vm647, %vm621
      %vm674 = vmand %vm648, %vm622
      %vm675 = vmand %vm649, %vm623
      %vm676 = vmand %vm650, %vm624
      %vm677 = vmand %vm651, %vm625
      %vm678 = vmand %vm652, %vm626
      %vm679 = vmand %vm653, %vm627
      %vm680 = vmand %vm654, %vm628
      %vm681 = vmand %vm655, %vm629
      %vm682 = vmand %vm656, %vm630
      %vm683 = vmand %vm657, %vm631
      %vm684 = vmand %vm658, %vm632
      %vm685 = vmand %vm659, %vm633
      %vm686 = vmand %vm660, %vm634
      %vm687 = vmand %vm661, %vm635
      %vm688 = vmand %vm662, %vm636
      %vm689 = vmand %vm663, %vm637
      %vm690 = vmand %vm664, %vm638
      %vm691 = vmand %vm665, %vm639
      %vm692 = vmand %vm666, %vm640
      %vm693 = vmand %vm667, %vm641
      %vm694 = vmand %vm668, %vm642
      %vm695 = vmand %vm669, %vm643
      %vm696 = vmand %vm670, %vm644
      %vm697 = vmand %vm671, %vm645
      %vm698 = vmand %vm672, %vm646
      %v699 = vadd.s32 %v345, 104
      %v700 = vadd.s32 %v356, 104
      %v701 = vadd.s32 %v367, 104
      %v702 = vadd.s32 %v378, 104
      %v703 = vadd.s32 %v389, 104
      %v704 = vadd.s32 %v400, 104
      %v705 = vadd.s32 %v411, 104
      %v706 = vadd.s32 %v422, 104
      %v707 = vadd.s32 %v433, 104
      %v708 = vadd.s32 %v444, 104
      %v709 = vadd.s32 %v455, 104
      %v710 = vadd.s32 %v466, 104
      %v711 = vadd.s32 %v477, 104
      %v712 = vadd.s32 %v488, 104
      %v713 = vadd.s32 %v499, 104
      %v714 = vadd.s32 %v510, 104
      %v715 = vadd.s32 %v521, 104
      %v716 = vadd.s32 %v532, 104
      %v717 = vadd.s32 %v543, 104
      %v718 = vadd.s32 %v554, 104
      %v719 = vadd.s32 %v565, 104
      %v720 = vadd.s32 %v576, 104
      %v721 = vadd.s32 %v587, 104
      %v722 = vadd.s32 %v598, 104
      %v723 = vadd.s32 %v609, 104
      %v724 = vadd.s32 %v620, 104
      %v725 = vsel %vm673, %v699, %v345
      %v726 = vsel %vm674, %v700, %v356
      %v727 = vsel %vm675, %v701, %v367
      %v728 = vsel %vm676, %v702, %v378
      %v729 = vsel %vm677, %v703, %v389
      %v730 = vsel %vm678, %v704, %v400
      %v731 = vsel %vm679, %v705, %v411
      %v732 = vsel %vm680, %v706, %v422
      %v733 = vsel %vm681, %v707, %v433
      %v734 = vsel %vm682, %v708, %v444
      %v735 = vsel %vm683, %v709, %v455
      %v736 = vsel %vm684, %v710, %v466
      %v737 = vsel %vm685, %v711, %v477
      %v738 = vsel %vm686, %v712, %v488
      %v739 = vsel %vm687, %v713, %v499
      %v740 = vsel %vm688, %v714, %v510
      %v741 = vsel %vm689, %v715, %v521
      %v742 = vsel %vm690, %v716, %v532
      %v743 = vsel %vm691, %v717, %v543
      %v744 = vsel %vm692, %v718, %v554
      %v745 = vsel %vm693, %v719, %v565
      %v746 = vsel %vm694, %v720, %v576
      %v747 = vsel %vm695, %v721, %v587
      %v748 = vsel %vm696, %v722, %v598
      %v749 = vsel %vm697, %v723, %v609
      %v750 = vsel %vm698, %v724, %v620
      %vm751 = vcmp.lt.s32.totalorder %v725, 80
      %vm752 = vcmp.lt.s32.totalorder %v726, 80
      %vm753 = vcmp.lt.s32.totalorder %v727, 80
      %vm754 = vcmp.lt.s32.totalorder %v728, 80
      %vm755 = vcmp.lt.s32.totalorder %v729, 80
      %vm756 = vcmp.lt.s32.totalorder %v730, 80
      %vm757 = vcmp.lt.s32.totalorder %v731, 80
      %vm758 = vcmp.lt.s32.totalorder %v732, 80
      %vm759 = vcmp.lt.s32.totalorder %v733, 80
      %vm760 = vcmp.lt.s32.totalorder %v734, 80
      %vm761 = vcmp.lt.s32.totalorder %v735, 80
      %vm762 = vcmp.lt.s32.totalorder %v736, 80
      %vm763 = vcmp.lt.s32.totalorder %v737, 80
      %vm764 = vcmp.lt.s32.totalorder %v738, 80
      %vm765 = vcmp.lt.s32.totalorder %v739, 80
      %vm766 = vcmp.lt.s32.totalorder %v740, 80
      %vm767 = vcmp.lt.s32.totalorder %v741, 80
      %vm768 = vcmp.lt.s32.totalorder %v742, 80
      %vm769 = vcmp.lt.s32.totalorder %v743, 80
      %vm770 = vcmp.lt.s32.totalorder %v744, 80
      %vm771 = vcmp.lt.s32.totalorder %v745, 80
      %vm772 = vcmp.lt.s32.totalorder %v746, 80
      %vm773 = vcmp.lt.s32.totalorder %v747, 80
      %vm774 = vcmp.lt.s32.totalorder %v748, 80
      %vm775 = vcmp.lt.s32.totalorder %v749, 80
      %vm776 = vcmp.lt.s32.totalorder %v750, 80
      %vm777 = vcmp.lt.s32.totalorder %v725, 0
      %v778 = vsub.s32 0, %v725
      %v779 = vsel %vm777, %v778, %v725
      %v780 = vmul.u32.u64.compose %v779, 3435973837
      %v781 = vextract.low.u32 %v780
      %v782 = vextract.high.u32 %v780
      %v783 = vshrl.u32 %v782, 3
      %v784 = vmul.u32 %v783, 10
      %v785 = vsub.s32 %v779, %v784
      %v786 = vsub.s32 0, %v785
      %v787 = vsel %vm777, %v786, %v785
      %vm788 = vcmp.lt.s32.totalorder %v726, 0
      %v789 = vsub.s32 0, %v726
      %v790 = vsel %vm788, %v789, %v726
      %v791 = vmul.u32.u64.compose %v790, 3435973837
      %v792 = vextract.low.u32 %v791
      %v793 = vextract.high.u32 %v791
      %v794 = vshrl.u32 %v793, 3
      %v795 = vmul.u32 %v794, 10
      %v796 = vsub.s32 %v790, %v795
      %v797 = vsub.s32 0, %v796
      %v798 = vsel %vm788, %v797, %v796
      %vm799 = vcmp.lt.s32.totalorder %v727, 0
      %v800 = vsub.s32 0, %v727
      %v801 = vsel %vm799, %v800, %v727
      %v802 = vmul.u32.u64.compose %v801, 3435973837
      %v803 = vextract.low.u32 %v802
      %v804 = vextract.high.u32 %v802
      %v805 = vshrl.u32 %v804, 3
      %v806 = vmul.u32 %v805, 10
      %v807 = vsub.s32 %v801, %v806
      %v808 = vsub.s32 0, %v807
      %v809 = vsel %vm799, %v808, %v807
      %vm810 = vcmp.lt.s32.totalorder %v728, 0
      %v811 = vsub.s32 0, %v728
      %v812 = vsel %vm810, %v811, %v728
      %v813 = vmul.u32.u64.compose %v812, 3435973837
      %v814 = vextract.low.u32 %v813
      %v815 = vextract.high.u32 %v813
      %v816 = vshrl.u32 %v815, 3
      %v817 = vmul.u32 %v816, 10
      %v818 = vsub.s32 %v812, %v817
      %v819 = vsub.s32 0, %v818
      %v820 = vsel %vm810, %v819, %v818
      %vm821 = vcmp.lt.s32.totalorder %v729, 0
      %v822 = vsub.s32 0, %v729
      %v823 = vsel %vm821, %v822, %v729
      %v824 = vmul.u32.u64.compose %v823, 3435973837
      %v825 = vextract.low.u32 %v824
      %v826 = vextract.high.u32 %v824
      %v827 = vshrl.u32 %v826, 3
      %v828 = vmul.u32 %v827, 10
      %v829 = vsub.s32 %v823, %v828
      %v830 = vsub.s32 0, %v829
      %v831 = vsel %vm821, %v830, %v829
      %vm832 = vcmp.lt.s32.totalorder %v730, 0
      %v833 = vsub.s32 0, %v730
      %v834 = vsel %vm832, %v833, %v730
      %v835 = vmul.u32.u64.compose %v834, 3435973837
      %v836 = vextract.low.u32 %v835
      %v837 = vextract.high.u32 %v835
      %v838 = vshrl.u32 %v837, 3
      %v839 = vmul.u32 %v838, 10
      %v840 = vsub.s32 %v834, %v839
      %v841 = vsub.s32 0, %v840
      %v842 = vsel %vm832, %v841, %v840
      %vm843 = vcmp.lt.s32.totalorder %v731, 0
      %v844 = vsub.s32 0, %v731
      %v845 = vsel %vm843, %v844, %v731
      %v846 = vmul.u32.u64.compose %v845, 3435973837
      %v847 = vextract.low.u32 %v846
      %v848 = vextract.high.u32 %v846
      %v849 = vshrl.u32 %v848, 3
      %v850 = vmul.u32 %v849, 10
      %v851 = vsub.s32 %v845, %v850
      %v852 = vsub.s32 0, %v851
      %v853 = vsel %vm843, %v852, %v851
      %vm854 = vcmp.lt.s32.totalorder %v732, 0
      %v855 = vsub.s32 0, %v732
      %v856 = vsel %vm854, %v855, %v732
      %v857 = vmul.u32.u64.compose %v856, 3435973837
      %v858 = vextract.low.u32 %v857
      %v859 = vextract.high.u32 %v857
      %v860 = vshrl.u32 %v859, 3
      %v861 = vmul.u32 %v860, 10
      %v862 = vsub.s32 %v856, %v861
      %v863 = vsub.s32 0, %v862
      %v864 = vsel %vm854, %v863, %v862
      %vm865 = vcmp.lt.s32.totalorder %v733, 0
      %v866 = vsub.s32 0, %v733
      %v867 = vsel %vm865, %v866, %v733
      %v868 = vmul.u32.u64.compose %v867, 3435973837
      %v869 = vextract.low.u32 %v868
      %v870 = vextract.high.u32 %v868
      %v871 = vshrl.u32 %v870, 3
      %v872 = vmul.u32 %v871, 10
      %v873 = vsub.s32 %v867, %v872
      %v874 = vsub.s32 0, %v873
      %v875 = vsel %vm865, %v874, %v873
      %vm876 = vcmp.lt.s32.totalorder %v734, 0
      %v877 = vsub.s32 0, %v734
      %v878 = vsel %vm876, %v877, %v734
      %v879 = vmul.u32.u64.compose %v878, 3435973837
      %v880 = vextract.low.u32 %v879
      %v881 = vextract.high.u32 %v879
      %v882 = vshrl.u32 %v881, 3
      %v883 = vmul.u32 %v882, 10
      %v884 = vsub.s32 %v878, %v883
      %v885 = vsub.s32 0, %v884
      %v886 = vsel %vm876, %v885, %v884
      %vm887 = vcmp.lt.s32.totalorder %v735, 0
      %v888 = vsub.s32 0, %v735
      %v889 = vsel %vm887, %v888, %v735
      %v890 = vmul.u32.u64.compose %v889, 3435973837
      %v891 = vextract.low.u32 %v890
      %v892 = vextract.high.u32 %v890
      %v893 = vshrl.u32 %v892, 3
      %v894 = vmul.u32 %v893, 10
      %v895 = vsub.s32 %v889, %v894
      %v896 = vsub.s32 0, %v895
      %v897 = vsel %vm887, %v896, %v895
      %vm898 = vcmp.lt.s32.totalorder %v736, 0
      %v899 = vsub.s32 0, %v736
      %v900 = vsel %vm898, %v899, %v736
      %v901 = vmul.u32.u64.compose %v900, 3435973837
      %v902 = vextract.low.u32 %v901
      %v903 = vextract.high.u32 %v901
      %v904 = vshrl.u32 %v903, 3
      %v905 = vmul.u32 %v904, 10
      %v906 = vsub.s32 %v900, %v905
      %v907 = vsub.s32 0, %v906
      %v908 = vsel %vm898, %v907, %v906
      %vm909 = vcmp.lt.s32.totalorder %v737, 0
      %v910 = vsub.s32 0, %v737
      %v911 = vsel %vm909, %v910, %v737
      %v912 = vmul.u32.u64.compose %v911, 3435973837
      %v913 = vextract.low.u32 %v912
      %v914 = vextract.high.u32 %v912
      %v915 = vshrl.u32 %v914, 3
      %v916 = vmul.u32 %v915, 10
      %v917 = vsub.s32 %v911, %v916
      %v918 = vsub.s32 0, %v917
      %v919 = vsel %vm909, %v918, %v917
      %vm920 = vcmp.lt.s32.totalorder %v738, 0
      %v921 = vsub.s32 0, %v738
      %v922 = vsel %vm920, %v921, %v738
      %v923 = vmul.u32.u64.compose %v922, 3435973837
      %v924 = vextract.low.u32 %v923
      %v925 = vextract.high.u32 %v923
      %v926 = vshrl.u32 %v925, 3
      %v927 = vmul.u32 %v926, 10
      %v928 = vsub.s32 %v922, %v927
      %v929 = vsub.s32 0, %v928
      %v930 = vsel %vm920, %v929, %v928
      %vm931 = vcmp.lt.s32.totalorder %v739, 0
      %v932 = vsub.s32 0, %v739
      %v933 = vsel %vm931, %v932, %v739
      %v934 = vmul.u32.u64.compose %v933, 3435973837
      %v935 = vextract.low.u32 %v934
      %v936 = vextract.high.u32 %v934
      %v937 = vshrl.u32 %v936, 3
      %v938 = vmul.u32 %v937, 10
      %v939 = vsub.s32 %v933, %v938
      %v940 = vsub.s32 0, %v939
      %v941 = vsel %vm931, %v940, %v939
      %vm942 = vcmp.lt.s32.totalorder %v740, 0
      %v943 = vsub.s32 0, %v740
      %v944 = vsel %vm942, %v943, %v740
      %v945 = vmul.u32.u64.compose %v944, 3435973837
      %v946 = vextract.low.u32 %v945
      %v947 = vextract.high.u32 %v945
      %v948 = vshrl.u32 %v947, 3
      %v949 = vmul.u32 %v948, 10
      %v950 = vsub.s32 %v944, %v949
      %v951 = vsub.s32 0, %v950
      %v952 = vsel %vm942, %v951, %v950
      %vm953 = vcmp.lt.s32.totalorder %v741, 0
      %v954 = vsub.s32 0, %v741
      %v955 = vsel %vm953, %v954, %v741
      %v956 = vmul.u32.u64.compose %v955, 3435973837
      %v957 = vextract.low.u32 %v956
      %v958 = vextract.high.u32 %v956
      %v959 = vshrl.u32 %v958, 3
      %v960 = vmul.u32 %v959, 10
      %v961 = vsub.s32 %v955, %v960
      %v962 = vsub.s32 0, %v961
      %v963 = vsel %vm953, %v962, %v961
      %vm964 = vcmp.lt.s32.totalorder %v742, 0
      %v965 = vsub.s32 0, %v742
      %v966 = vsel %vm964, %v965, %v742
      %v967 = vmul.u32.u64.compose %v966, 3435973837
      %v968 = vextract.low.u32 %v967
      %v969 = vextract.high.u32 %v967
      %v970 = vshrl.u32 %v969, 3
      %v971 = vmul.u32 %v970, 10
      %v972 = vsub.s32 %v966, %v971
      %v973 = vsub.s32 0, %v972
      %v974 = vsel %vm964, %v973, %v972
      %vm975 = vcmp.lt.s32.totalorder %v743, 0
      %v976 = vsub.s32 0, %v743
      %v977 = vsel %vm975, %v976, %v743
      %v978 = vmul.u32.u64.compose %v977, 3435973837
      %v979 = vextract.low.u32 %v978
      %v980 = vextract.high.u32 %v978
      %v981 = vshrl.u32 %v980, 3
      %v982 = vmul.u32 %v981, 10
      %v983 = vsub.s32 %v977, %v982
      %v984 = vsub.s32 0, %v983
      %v985 = vsel %vm975, %v984, %v983
      %vm986 = vcmp.lt.s32.totalorder %v744, 0
      %v987 = vsub.s32 0, %v744
      %v988 = vsel %vm986, %v987, %v744
      %v989 = vmul.u32.u64.compose %v988, 3435973837
      %v990 = vextract.low.u32 %v989
      %v991 = vextract.high.u32 %v989
      %v992 = vshrl.u32 %v991, 3
      %v993 = vmul.u32 %v992, 10
      %v994 = vsub.s32 %v988, %v993
      %v995 = vsub.s32 0, %v994
      %v996 = vsel %vm986, %v995, %v994
      %vm997 = vcmp.lt.s32.totalorder %v745, 0
      %v998 = vsub.s32 0, %v745
      %v999 = vsel %vm997, %v998, %v745
      %v1000 = vmul.u32.u64.compose %v999, 3435973837
      %v1001 = vextract.low.u32 %v1000
      %v1002 = vextract.high.u32 %v1000
      %v1003 = vshrl.u32 %v1002, 3
      %v1004 = vmul.u32 %v1003, 10
      %v1005 = vsub.s32 %v999, %v1004
      %v1006 = vsub.s32 0, %v1005
      %v1007 = vsel %vm997, %v1006, %v1005
      %vm1008 = vcmp.lt.s32.totalorder %v746, 0
      %v1009 = vsub.s32 0, %v746
      %v1010 = vsel %vm1008, %v1009, %v746
      %v1011 = vmul.u32.u64.compose %v1010, 3435973837
      %v1012 = vextract.low.u32 %v1011
      %v1013 = vextract.high.u32 %v1011
      %v1014 = vshrl.u32 %v1013, 3
      %v1015 = vmul.u32 %v1014, 10
      %v1016 = vsub.s32 %v1010, %v1015
      %v1017 = vsub.s32 0, %v1016
      %v1018 = vsel %vm1008, %v1017, %v1016
      %vm1019 = vcmp.lt.s32.totalorder %v747, 0
      %v1020 = vsub.s32 0, %v747
      %v1021 = vsel %vm1019, %v1020, %v747
      %v1022 = vmul.u32.u64.compose %v1021, 3435973837
      %v1023 = vextract.low.u32 %v1022
      %v1024 = vextract.high.u32 %v1022
      %v1025 = vshrl.u32 %v1024, 3
      %v1026 = vmul.u32 %v1025, 10
      %v1027 = vsub.s32 %v1021, %v1026
      %v1028 = vsub.s32 0, %v1027
      %v1029 = vsel %vm1019, %v1028, %v1027
      %vm1030 = vcmp.lt.s32.totalorder %v748, 0
      %v1031 = vsub.s32 0, %v748
      %v1032 = vsel %vm1030, %v1031, %v748
      %v1033 = vmul.u32.u64.compose %v1032, 3435973837
      %v1034 = vextract.low.u32 %v1033
      %v1035 = vextract.high.u32 %v1033
      %v1036 = vshrl.u32 %v1035, 3
      %v1037 = vmul.u32 %v1036, 10
      %v1038 = vsub.s32 %v1032, %v1037
      %v1039 = vsub.s32 0, %v1038
      %v1040 = vsel %vm1030, %v1039, %v1038
      %vm1041 = vcmp.lt.s32.totalorder %v749, 0
      %v1042 = vsub.s32 0, %v749
      %v1043 = vsel %vm1041, %v1042, %v749
      %v1044 = vmul.u32.u64.compose %v1043, 3435973837
      %v1045 = vextract.low.u32 %v1044
      %v1046 = vextract.high.u32 %v1044
      %v1047 = vshrl.u32 %v1046, 3
      %v1048 = vmul.u32 %v1047, 10
      %v1049 = vsub.s32 %v1043, %v1048
      %v1050 = vsub.s32 0, %v1049
      %v1051 = vsel %vm1041, %v1050, %v1049
      %vm1052 = vcmp.lt.s32.totalorder %v750, 0
      %v1053 = vsub.s32 0, %v750
      %v1054 = vsel %vm1052, %v1053, %v750
      %v1055 = vmul.u32.u64.compose %v1054, 3435973837
      %v1056 = vextract.low.u32 %v1055
      %v1057 = vextract.high.u32 %v1055
      %v1058 = vshrl.u32 %v1057, 3
      %v1059 = vmul.u32 %v1058, 10
      %v1060 = vsub.s32 %v1054, %v1059
      %v1061 = vsub.s32 0, %v1060
      %v1062 = vsel %vm1052, %v1061, %v1060
      %vm1063 = vcmp.ne.s32.totalorder %v787, 0
      %vm1064 = vcmp.ne.s32.totalorder %v798, 0
      %vm1065 = vcmp.ne.s32.totalorder %v809, 0
      %vm1066 = vcmp.ne.s32.totalorder %v820, 0
      %vm1067 = vcmp.ne.s32.totalorder %v831, 0
      %vm1068 = vcmp.ne.s32.totalorder %v842, 0
      %vm1069 = vcmp.ne.s32.totalorder %v853, 0
      %vm1070 = vcmp.ne.s32.totalorder %v864, 0
      %vm1071 = vcmp.ne.s32.totalorder %v875, 0
      %vm1072 = vcmp.ne.s32.totalorder %v886, 0
      %vm1073 = vcmp.ne.s32.totalorder %v897, 0
      %vm1074 = vcmp.ne.s32.totalorder %v908, 0
      %vm1075 = vcmp.ne.s32.totalorder %v919, 0
      %vm1076 = vcmp.ne.s32.totalorder %v930, 0
      %vm1077 = vcmp.ne.s32.totalorder %v941, 0
      %vm1078 = vcmp.ne.s32.totalorder %v952, 0
      %vm1079 = vcmp.ne.s32.totalorder %v963, 0
      %vm1080 = vcmp.ne.s32.totalorder %v974, 0
      %vm1081 = vcmp.ne.s32.totalorder %v985, 0
      %vm1082 = vcmp.ne.s32.totalorder %v996, 0
      %vm1083 = vcmp.ne.s32.totalorder %v1007, 0
      %vm1084 = vcmp.ne.s32.totalorder %v1018, 0
      %vm1085 = vcmp.ne.s32.totalorder %v1029, 0
      %vm1086 = vcmp.ne.s32.totalorder %v1040, 0
      %vm1087 = vcmp.ne.s32.totalorder %v1051, 0
      %vm1088 = vcmp.ne.s32.totalorder %v1062, 0
      %vm1089 = vcmp.lt.s32.totalorder %v787, 0
      %vm1090 = vcmp.lt.s32.totalorder %v798, 0
      %vm1091 = vcmp.lt.s32.totalorder %v809, 0
      %vm1092 = vcmp.lt.s32.totalorder %v820, 0
      %vm1093 = vcmp.lt.s32.totalorder %v831, 0
      %vm1094 = vcmp.lt.s32.totalorder %v842, 0
      %vm1095 = vcmp.lt.s32.totalorder %v853, 0
      %vm1096 = vcmp.lt.s32.totalorder %v864, 0
      %vm1097 = vcmp.lt.s32.totalorder %v875, 0
      %vm1098 = vcmp.lt.s32.totalorder %v886, 0
      %vm1099 = vcmp.lt.s32.totalorder %v897, 0
      %vm1100 = vcmp.lt.s32.totalorder %v908, 0
      %vm1101 = vcmp.lt.s32.totalorder %v919, 0
      %vm1102 = vcmp.lt.s32.totalorder %v930, 0
      %vm1103 = vcmp.lt.s32.totalorder %v941, 0
      %vm1104 = vcmp.lt.s32.totalorder %v952, 0
      %vm1105 = vcmp.lt.s32.totalorder %v963, 0
      %vm1106 = vcmp.lt.s32.totalorder %v974, 0
      %vm1107 = vcmp.lt.s32.totalorder %v985, 0
      %vm1108 = vcmp.lt.s32.totalorder %v996, 0
      %vm1109 = vcmp.lt.s32.totalorder %v1007, 0
      %vm1110 = vcmp.lt.s32.totalorder %v1018, 0
      %vm1111 = vcmp.lt.s32.totalorder %v1029, 0
      %vm1112 = vcmp.lt.s32.totalorder %v1040, 0
      %vm1113 = vcmp.lt.s32.totalorder %v1051, 0
      %vm1114 = vcmp.lt.s32.totalorder %v1062, 0
      %vm1115 = vmand %vm1089, %vm1063
      %vm1116 = vmand %vm1090, %vm1064
      %vm1117 = vmand %vm1091, %vm1065
      %vm1118 = vmand %vm1092, %vm1066
      %vm1119 = vmand %vm1093, %vm1067
      %vm1120 = vmand %vm1094, %vm1068
      %vm1121 = vmand %vm1095, %vm1069
      %vm1122 = vmand %vm1096, %vm1070
      %vm1123 = vmand %vm1097, %vm1071
      %vm1124 = vmand %vm1098, %vm1072
      %vm1125 = vmand %vm1099, %vm1073
      %vm1126 = vmand %vm1100, %vm1074
      %vm1127 = vmand %vm1101, %vm1075
      %vm1128 = vmand %vm1102, %vm1076
      %vm1129 = vmand %vm1103, %vm1077
      %vm1130 = vmand %vm1104, %vm1078
      %vm1131 = vmand %vm1105, %vm1079
      %vm1132 = vmand %vm1106, %vm1080
      %vm1133 = vmand %vm1107, %vm1081
      %vm1134 = vmand %vm1108, %vm1082
      %vm1135 = vmand %vm1109, %vm1083
      %vm1136 = vmand %vm1110, %vm1084
      %vm1137 = vmand %vm1111, %vm1085
      %vm1138 = vmand %vm1112, %vm1086
      %vm1139 = vmand %vm1113, %vm1087
      %vm1140 = vmand %vm1114, %vm1088
      %v1141 = vadd.s32 %v787, 10
      %v1142 = vadd.s32 %v798, 10
      %v1143 = vadd.s32 %v809, 10
      %v1144 = vadd.s32 %v820, 10
      %v1145 = vadd.s32 %v831, 10
      %v1146 = vadd.s32 %v842, 10
      %v1147 = vadd.s32 %v853, 10
      %v1148 = vadd.s32 %v864, 10
      %v1149 = vadd.s32 %v875, 10
      %v1150 = vadd.s32 %v886, 10
      %v1151 = vadd.s32 %v897, 10
      %v1152 = vadd.s32 %v908, 10
      %v1153 = vadd.s32 %v919, 10
      %v1154 = vadd.s32 %v930, 10
      %v1155 = vadd.s32 %v941, 10
      %v1156 = vadd.s32 %v952, 10
      %v1157 = vadd.s32 %v963, 10
      %v1158 = vadd.s32 %v974, 10
      %v1159 = vadd.s32 %v985, 10
      %v1160 = vadd.s32 %v996, 10
      %v1161 = vadd.s32 %v1007, 10
      %v1162 = vadd.s32 %v1018, 10
      %v1163 = vadd.s32 %v1029, 10
      %v1164 = vadd.s32 %v1040, 10
      %v1165 = vadd.s32 %v1051, 10
      %v1166 = vadd.s32 %v1062, 10
      %v1167 = vsel %vm1115, %v1141, %v787
      %v1168 = vsel %vm1116, %v1142, %v798
      %v1169 = vsel %vm1117, %v1143, %v809
      %v1170 = vsel %vm1118, %v1144, %v820
      %v1171 = vsel %vm1119, %v1145, %v831
      %v1172 = vsel %vm1120, %v1146, %v842
      %v1173 = vsel %vm1121, %v1147, %v853
      %v1174 = vsel %vm1122, %v1148, %v864
      %v1175 = vsel %vm1123, %v1149, %v875
      %v1176 = vsel %vm1124, %v1150, %v886
      %v1177 = vsel %vm1125, %v1151, %v897
      %v1178 = vsel %vm1126, %v1152, %v908
      %v1179 = vsel %vm1127, %v1153, %v919
      %v1180 = vsel %vm1128, %v1154, %v930
      %v1181 = vsel %vm1129, %v1155, %v941
      %v1182 = vsel %vm1130, %v1156, %v952
      %v1183 = vsel %vm1131, %v1157, %v963
      %v1184 = vsel %vm1132, %v1158, %v974
      %v1185 = vsel %vm1133, %v1159, %v985
      %v1186 = vsel %vm1134, %v1160, %v996
      %v1187 = vsel %vm1135, %v1161, %v1007
      %v1188 = vsel %vm1136, %v1162, %v1018
      %v1189 = vsel %vm1137, %v1163, %v1029
      %v1190 = vsel %vm1138, %v1164, %v1040
      %v1191 = vsel %vm1139, %v1165, %v1051
      %v1192 = vsel %vm1140, %v1166, %v1062
      %vm1193 = vcmp.lt.s32.totalorder %v1167, 8
      %vm1194 = vcmp.lt.s32.totalorder %v1168, 8
      %vm1195 = vcmp.lt.s32.totalorder %v1169, 8
      %vm1196 = vcmp.lt.s32.totalorder %v1170, 8
      %vm1197 = vcmp.lt.s32.totalorder %v1171, 8
      %vm1198 = vcmp.lt.s32.totalorder %v1172, 8
      %vm1199 = vcmp.lt.s32.totalorder %v1173, 8
      %vm1200 = vcmp.lt.s32.totalorder %v1174, 8
      %vm1201 = vcmp.lt.s32.totalorder %v1175, 8
      %vm1202 = vcmp.lt.s32.totalorder %v1176, 8
      %vm1203 = vcmp.lt.s32.totalorder %v1177, 8
      %vm1204 = vcmp.lt.s32.totalorder %v1178, 8
      %vm1205 = vcmp.lt.s32.totalorder %v1179, 8
      %vm1206 = vcmp.lt.s32.totalorder %v1180, 8
      %vm1207 = vcmp.lt.s32.totalorder %v1181, 8
      %vm1208 = vcmp.lt.s32.totalorder %v1182, 8
      %vm1209 = vcmp.lt.s32.totalorder %v1183, 8
      %vm1210 = vcmp.lt.s32.totalorder %v1184, 8
      %vm1211 = vcmp.lt.s32.totalorder %v1185, 8
      %vm1212 = vcmp.lt.s32.totalorder %v1186, 8
      %vm1213 = vcmp.lt.s32.totalorder %v1187, 8
      %vm1214 = vcmp.lt.s32.totalorder %v1188, 8
      %vm1215 = vcmp.lt.s32.totalorder %v1189, 8
      %vm1216 = vcmp.lt.s32.totalorder %v1190, 8
      %vm1217 = vcmp.lt.s32.totalorder %v1191, 8
      %vm1218 = vcmp.lt.s32.totalorder %v1192, 8
      %vm1219 = vmand %vm751, %vm1193
      %vm1220 = vmand %vm752, %vm1194
      %vm1221 = vmand %vm753, %vm1195
      %vm1222 = vmand %vm754, %vm1196
      %vm1223 = vmand %vm755, %vm1197
      %vm1224 = vmand %vm756, %vm1198
      %vm1225 = vmand %vm757, %vm1199
      %vm1226 = vmand %vm758, %vm1200
      %vm1227 = vmand %vm759, %vm1201
      %vm1228 = vmand %vm760, %vm1202
      %vm1229 = vmand %vm761, %vm1203
      %vm1230 = vmand %vm762, %vm1204
      %vm1231 = vmand %vm763, %vm1205
      %vm1232 = vmand %vm764, %vm1206
      %vm1233 = vmand %vm765, %vm1207
      %vm1234 = vmand %vm766, %vm1208
      %vm1235 = vmand %vm767, %vm1209
      %vm1236 = vmand %vm768, %vm1210
      %vm1237 = vmand %vm769, %vm1211
      %vm1238 = vmand %vm770, %vm1212
      %vm1239 = vmand %vm771, %vm1213
      %vm1240 = vmand %vm772, %vm1214
      %vm1241 = vmand %vm773, %vm1215
      %vm1242 = vmand %vm774, %vm1216
      %vm1243 = vmand %vm775, %vm1217
      %vm1244 = vmand %vm776, %vm1218
      %v1245 = vsel %vm1219, 1, 0
      %v1246 = vsel %vm1220, 1, 0
      %v1247 = vsel %vm1221, 1, 0
      %v1248 = vsel %vm1222, 1, 0
      %v1249 = vsel %vm1223, 1, 0
      %v1250 = vsel %vm1224, 1, 0
      %v1251 = vsel %vm1225, 1, 0
      %v1252 = vsel %vm1226, 1, 0
      %v1253 = vsel %vm1227, 1, 0
      %v1254 = vsel %vm1228, 1, 0
      %v1255 = vsel %vm1229, 1, 0
      %v1256 = vsel %vm1230, 1, 0
      %v1257 = vsel %vm1231, 1, 0
      %v1258 = vsel %vm1232, 1, 0
      %v1259 = vsel %vm1233, 1, 0
      %v1260 = vsel %vm1234, 1, 0
      %v1261 = vsel %vm1235, 1, 0
      %v1262 = vsel %vm1236, 1, 0
      %v1263 = vsel %vm1237, 1, 0
      %v1264 = vsel %vm1238, 1, 0
      %v1265 = vsel %vm1239, 1, 0
      %v1266 = vsel %vm1240, 1, 0
      %v1267 = vsel %vm1241, 1, 0
      %v1268 = vsel %vm1242, 1, 0
      %v1269 = vsel %vm1243, 1, 0
      %v1270 = vsel %vm1244, 1, 0
      %vm1271 = vcmp.eq.s32.totalorder %v1245, 1
      %vm1272 = vcmp.eq.s32.totalorder %v1246, 1
      %vm1273 = vcmp.eq.s32.totalorder %v1247, 1
      %vm1274 = vcmp.eq.s32.totalorder %v1248, 1
      %vm1275 = vcmp.eq.s32.totalorder %v1249, 1
      %vm1276 = vcmp.eq.s32.totalorder %v1250, 1
      %vm1277 = vcmp.eq.s32.totalorder %v1251, 1
      %vm1278 = vcmp.eq.s32.totalorder %v1252, 1
      %vm1279 = vcmp.eq.s32.totalorder %v1253, 1
      %vm1280 = vcmp.eq.s32.totalorder %v1254, 1
      %vm1281 = vcmp.eq.s32.totalorder %v1255, 1
      %vm1282 = vcmp.eq.s32.totalorder %v1256, 1
      %vm1283 = vcmp.eq.s32.totalorder %v1257, 1
      %vm1284 = vcmp.eq.s32.totalorder %v1258, 1
      %vm1285 = vcmp.eq.s32.totalorder %v1259, 1
      %vm1286 = vcmp.eq.s32.totalorder %v1260, 1
      %vm1287 = vcmp.eq.s32.totalorder %v1261, 1
      %vm1288 = vcmp.eq.s32.totalorder %v1262, 1
      %vm1289 = vcmp.eq.s32.totalorder %v1263, 1
      %vm1290 = vcmp.eq.s32.totalorder %v1264, 1
      %vm1291 = vcmp.eq.s32.totalorder %v1265, 1
      %vm1292 = vcmp.eq.s32.totalorder %v1266, 1
      %vm1293 = vcmp.eq.s32.totalorder %v1267, 1
      %vm1294 = vcmp.eq.s32.totalorder %v1268, 1
      %vm1295 = vcmp.eq.s32.totalorder %v1269, 1
      %vm1296 = vcmp.eq.s32.totalorder %v1270, 1
      %v1297 = vld [vmem:[%s274] sm:$0xff]
      %v1298 = vld [vmem:[%s274 + $0x8] sm:$0xff]
      %v1299 = vld [vmem:[%s274 + $0x10] sm:$0xff]
      %v1300 = vld [vmem:[%s274 + $0x18] sm:$0xff]
      %v1301 = vld [vmem:[%s274 + $0x20] sm:$0xff]
      %v1302 = vld [vmem:[%s274 + $0x28] sm:$0xff]
      %v1303 = vld [vmem:[%s274 + $0x30] sm:$0xff]
      %v1304 = vld [vmem:[%s274 + $0x38] sm:$0xff]
      %v1305 = vld [vmem:[%s274 + $0x40] sm:$0xff]
      %v1306 = vld [vmem:[%s274 + $0x48] sm:$0xff]
      %v1307 = vld [vmem:[%s274 + $0x50] sm:$0xff]
      %v1308 = vld [vmem:[%s274 + $0x58] sm:$0xff]
      %v1309 = vld [vmem:[%s274 + $0x60] sm:$0xff]
      %v1310 = vld [vmem:[%s274 + $0x68] sm:$0xff]
      %v1311 = vld [vmem:[%s274 + $0x70] sm:$0xff]
      %v1312 = vld [vmem:[%s274 + $0x78] sm:$0xff]
      %v1313 = vld [vmem:[%s274 + $0x80] sm:$0xff]
      %v1314 = vld [vmem:[%s274 + $0x88] sm:$0xff]
      %v1315 = vld [vmem:[%s274 + $0x90] sm:$0xff]
      %v1316 = vld [vmem:[%s274 + $0x98] sm:$0xff]
      %v1317 = vld [vmem:[%s274 + $0xa0] sm:$0xff]
      %v1318 = vld [vmem:[%s274 + $0xa8] sm:$0xff]
      %v1319 = vld [vmem:[%s274 + $0xb0] sm:$0xff]
      %v1320 = vld [vmem:[%s274 + $0xb8] sm:$0xff]
      %v1321 = vld [vmem:[%s274 + $0xc0] sm:$0xff]
      %v1322 = vld [vmem:[%s274 + $0xc8] sm:$0xff]
      %vm1323 = vcmask 64512
      %1324 = vst.msk [vmem:[#allocation4] sm:$0xff] %vm1323, %v1297
      %1325 = vst.msk [vmem:[#allocation4 + $0x10] sm:$0xff] %vm1323, %v1298
      %1326 = vst.msk [vmem:[#allocation4 + $0x20] sm:$0xff] %vm1323, %v1299
      %1327 = vst.msk [vmem:[#allocation4 + $0x30] sm:$0xff] %vm1323, %v1300
      %1328 = vst.msk [vmem:[#allocation4 + $0x40] sm:$0xff] %vm1323, %v1301
      %1329 = vst.msk [vmem:[#allocation4 + $0x50] sm:$0xff] %vm1323, %v1302
      %1330 = vst.msk [vmem:[#allocation4 + $0x60] sm:$0xff] %vm1323, %v1303
      %1331 = vst.msk [vmem:[#allocation4 + $0x70] sm:$0xff] %vm1323, %v1304
      %1332 = vst.msk [vmem:[#allocation4 + $0x80] sm:$0xff] %vm1323, %v1305
      %1333 = vst.msk [vmem:[#allocation4 + $0x90] sm:$0xff] %vm1323, %v1306
      %1334 = vst.msk [vmem:[#allocation4 + $0xa0] sm:$0xff] %vm1323, %v1307
      %1335 = vst.msk [vmem:[#allocation4 + $0xb0] sm:$0xff] %vm1323, %v1308
      %1336 = vst.msk [vmem:[#allocation4 + $0xc0] sm:$0xff] %vm1323, %v1309
      %1337 = vst.msk [vmem:[#allocation4 + $0xd0] sm:$0xff] %vm1323, %v1310
      %1338 = vst.msk [vmem:[#allocation4 + $0xe0] sm:$0xff] %vm1323, %v1311
      %1339 = vst.msk [vmem:[#allocation4 + $0xf0] sm:$0xff] %vm1323, %v1312
      %1340 = vst.msk [vmem:[#allocation4 + $0x100] sm:$0xff] %vm1323, %v1313
      %1341 = vst.msk [vmem:[#allocation4 + $0x110] sm:$0xff] %vm1323, %v1314
      %1342 = vst.msk [vmem:[#allocation4 + $0x120] sm:$0xff] %vm1323, %v1315
      %1343 = vst.msk [vmem:[#allocation4 + $0x130] sm:$0xff] %vm1323, %v1316
      %1344 = vst.msk [vmem:[#allocation4 + $0x140] sm:$0xff] %vm1323, %v1317
      %1345 = vst.msk [vmem:[#allocation4 + $0x150] sm:$0xff] %vm1323, %v1318
      %1346 = vst.msk [vmem:[#allocation4 + $0x160] sm:$0xff] %vm1323, %v1319
      %1347 = vst.msk [vmem:[#allocation4 + $0x170] sm:$0xff] %vm1323, %v1320
      %1348 = vst.msk [vmem:[#allocation4 + $0x180] sm:$0xff] %vm1323, %v1321
      %1349 = vst.msk [vmem:[#allocation4 + $0x190] sm:$0xff] %vm1323, %v1322
      %v1350 = vld [vmem:[%s274 + $0x1] sm:$0xff]
      %v1351 = vld [vmem:[%s274 + $0x9] sm:$0xff]
      %v1352 = vld [vmem:[%s274 + $0x11] sm:$0xff]
      %v1353 = vld [vmem:[%s274 + $0x19] sm:$0xff]
      %v1354 = vld [vmem:[%s274 + $0x21] sm:$0xff]
      %v1355 = vld [vmem:[%s274 + $0x29] sm:$0xff]
      %v1356 = vld [vmem:[%s274 + $0x31] sm:$0xff]
      %v1357 = vld [vmem:[%s274 + $0x39] sm:$0xff]
      %v1358 = vld [vmem:[%s274 + $0x41] sm:$0xff]
      %v1359 = vld [vmem:[%s274 + $0x49] sm:$0xff]
      %v1360 = vld [vmem:[%s274 + $0x51] sm:$0xff]
      %v1361 = vld [vmem:[%s274 + $0x59] sm:$0xff]
      %v1362 = vld [vmem:[%s274 + $0x61] sm:$0xff]
      %v1363 = vld [vmem:[%s274 + $0x69] sm:$0xff]
      %v1364 = vld [vmem:[%s274 + $0x71] sm:$0xff]
      %v1365 = vld [vmem:[%s274 + $0x79] sm:$0xff]
      %v1366 = vld [vmem:[%s274 + $0x81] sm:$0xff]
      %v1367 = vld [vmem:[%s274 + $0x89] sm:$0xff]
      %v1368 = vld [vmem:[%s274 + $0x91] sm:$0xff]
      %v1369 = vld [vmem:[%s274 + $0x99] sm:$0xff]
      %v1370 = vld [vmem:[%s274 + $0xa1] sm:$0xff]
      %v1371 = vld [vmem:[%s274 + $0xa9] sm:$0xff]
      %v1372 = vld [vmem:[%s274 + $0xb1] sm:$0xff]
      %v1373 = vld [vmem:[%s274 + $0xb9] sm:$0xff]
      %v1374 = vld [vmem:[%s274 + $0xc1] sm:$0xff]
      %v1375 = vld [vmem:[%s274 + $0xc9] sm:$0xff]
      %1402 = vrot.lane.b32.xlu0 %v1350, 8
      %v1403 = vpop.permute.xlu0 %1402
      %1404 = vrot.lane.b32.xlu0 %v1351, 8
      %v1405 = vpop.permute.xlu0 %1404
      %1406 = vrot.lane.b32.xlu0 %v1352, 8
      %v1407 = vpop.permute.xlu0 %1406
      %1408 = vrot.lane.b32.xlu0 %v1353, 8
      %v1409 = vpop.permute.xlu0 %1408
      %1410 = vrot.lane.b32.xlu0 %v1354, 8
      %v1411 = vpop.permute.xlu0 %1410
      %1412 = vrot.lane.b32.xlu0 %v1355, 8
      %v1413 = vpop.permute.xlu0 %1412
      %1414 = vrot.lane.b32.xlu0 %v1356, 8
      %v1415 = vpop.permute.xlu0 %1414
      %1416 = vrot.lane.b32.xlu0 %v1357, 8
      %v1417 = vpop.permute.xlu0 %1416
      %1418 = vrot.lane.b32.xlu0 %v1358, 8
      %v1419 = vpop.permute.xlu0 %1418
      %1420 = vrot.lane.b32.xlu0 %v1359, 8
      %v1421 = vpop.permute.xlu0 %1420
      %1422 = vrot.lane.b32.xlu0 %v1360, 8
      %v1423 = vpop.permute.xlu0 %1422
      %1424 = vrot.lane.b32.xlu0 %v1361, 8
      %v1425 = vpop.permute.xlu0 %1424
      %1426 = vrot.lane.b32.xlu0 %v1362, 8
      %v1427 = vpop.permute.xlu0 %1426
      %1428 = vrot.lane.b32.xlu0 %v1363, 8
      %v1429 = vpop.permute.xlu0 %1428
      %1430 = vrot.lane.b32.xlu0 %v1364, 8
      %v1431 = vpop.permute.xlu0 %1430
      %1432 = vrot.lane.b32.xlu0 %v1365, 8
      %v1433 = vpop.permute.xlu0 %1432
      %1434 = vrot.lane.b32.xlu0 %v1366, 8
      %v1435 = vpop.permute.xlu0 %1434
      %1436 = vrot.lane.b32.xlu0 %v1367, 8
      %v1437 = vpop.permute.xlu0 %1436
      %1438 = vrot.lane.b32.xlu0 %v1368, 8
      %v1439 = vpop.permute.xlu0 %1438
      %1440 = vrot.lane.b32.xlu0 %v1369, 8
      %v1441 = vpop.permute.xlu0 %1440
      %1442 = vrot.lane.b32.xlu0 %v1370, 8
      %v1443 = vpop.permute.xlu0 %1442
      %1444 = vrot.lane.b32.xlu0 %v1371, 8
      %v1445 = vpop.permute.xlu0 %1444
      %1446 = vrot.lane.b32.xlu0 %v1372, 8
      %v1447 = vpop.permute.xlu0 %1446
      %1448 = vrot.lane.b32.xlu0 %v1373, 8
      %v1449 = vpop.permute.xlu0 %1448
      %1450 = vrot.lane.b32.xlu0 %v1374, 8
      %v1451 = vpop.permute.xlu0 %1450
      %1452 = vrot.lane.b32.xlu0 %v1375, 8
      %v1453 = vpop.permute.xlu0 %1452
      %vm1480 = vcmask 130112
      %1481 = vst.msk [vmem:[#allocation4] sm:$0xff] %vm1480, %v1403
      %1482 = vst.msk [vmem:[#allocation4 + $0x10] sm:$0xff] %vm1480, %v1405
      %1483 = vst.msk [vmem:[#allocation4 + $0x20] sm:$0xff] %vm1480, %v1407
      %1484 = vst.msk [vmem:[#allocation4 + $0x30] sm:$0xff] %vm1480, %v1409
      %1485 = vst.msk [vmem:[#allocation4 + $0x40] sm:$0xff] %vm1480, %v1411
      %1486 = vst.msk [vmem:[#allocation4 + $0x50] sm:$0xff] %vm1480, %v1413
      %1487 = vst.msk [vmem:[#allocation4 + $0x60] sm:$0xff] %vm1480, %v1415
      %1488 = vst.msk [vmem:[#allocation4 + $0x70] sm:$0xff] %vm1480, %v1417
      %1489 = vst.msk [vmem:[#allocation4 + $0x80] sm:$0xff] %vm1480, %v1419
      %1490 = vst.msk [vmem:[#allocation4 + $0x90] sm:$0xff] %vm1480, %v1421
      %1491 = vst.msk [vmem:[#allocation4 + $0xa0] sm:$0xff] %vm1480, %v1423
      %1492 = vst.msk [vmem:[#allocation4 + $0xb0] sm:$0xff] %vm1480, %v1425
      %1493 = vst.msk [vmem:[#allocation4 + $0xc0] sm:$0xff] %vm1480, %v1427
      %1494 = vst.msk [vmem:[#allocation4 + $0xd0] sm:$0xff] %vm1480, %v1429
      %1495 = vst.msk [vmem:[#allocation4 + $0xe0] sm:$0xff] %vm1480, %v1431
      %1496 = vst.msk [vmem:[#allocation4 + $0xf0] sm:$0xff] %vm1480, %v1433
      %1497 = vst.msk [vmem:[#allocation4 + $0x100] sm:$0xff] %vm1480, %v1435
      %1498 = vst.msk [vmem:[#allocation4 + $0x110] sm:$0xff] %vm1480, %v1437
      %1499 = vst.msk [vmem:[#allocation4 + $0x120] sm:$0xff] %vm1480, %v1439
      %1500 = vst.msk [vmem:[#allocation4 + $0x130] sm:$0xff] %vm1480, %v1441
      %1501 = vst.msk [vmem:[#allocation4 + $0x140] sm:$0xff] %vm1480, %v1443
      %1502 = vst.msk [vmem:[#allocation4 + $0x150] sm:$0xff] %vm1480, %v1445
      %1503 = vst.msk [vmem:[#allocation4 + $0x160] sm:$0xff] %vm1480, %v1447
      %1504 = vst.msk [vmem:[#allocation4 + $0x170] sm:$0xff] %vm1480, %v1449
      %1505 = vst.msk [vmem:[#allocation4 + $0x180] sm:$0xff] %vm1480, %v1451
      %1506 = vst.msk [vmem:[#allocation4 + $0x190] sm:$0xff] %vm1480, %v1453
      %v1507 = vld [vmem:[%s274 + $0x2] sm:$0xff]
      %v1508 = vld [vmem:[%s274 + $0xa] sm:$0xff]
      %v1509 = vld [vmem:[%s274 + $0x12] sm:$0xff]
      %v1510 = vld [vmem:[%s274 + $0x1a] sm:$0xff]
      %v1511 = vld [vmem:[%s274 + $0x22] sm:$0xff]
      %v1512 = vld [vmem:[%s274 + $0x2a] sm:$0xff]
      %v1513 = vld [vmem:[%s274 + $0x32] sm:$0xff]
      %v1514 = vld [vmem:[%s274 + $0x3a] sm:$0xff]
      %v1515 = vld [vmem:[%s274 + $0x42] sm:$0xff]
      %v1516 = vld [vmem:[%s274 + $0x4a] sm:$0xff]
      %v1517 = vld [vmem:[%s274 + $0x52] sm:$0xff]
      %v1518 = vld [vmem:[%s274 + $0x5a] sm:$0xff]
      %v1519 = vld [vmem:[%s274 + $0x62] sm:$0xff]
      %v1520 = vld [vmem:[%s274 + $0x6a] sm:$0xff]
      %v1521 = vld [vmem:[%s274 + $0x72] sm:$0xff]
      %v1522 = vld [vmem:[%s274 + $0x7a] sm:$0xff]
      %v1523 = vld [vmem:[%s274 + $0x82] sm:$0xff]
      %v1524 = vld [vmem:[%s274 + $0x8a] sm:$0xff]
      %v1525 = vld [vmem:[%s274 + $0x92] sm:$0xff]
      %v1526 = vld [vmem:[%s274 + $0x9a] sm:$0xff]
      %v1527 = vld [vmem:[%s274 + $0xa2] sm:$0xff]
      %v1528 = vld [vmem:[%s274 + $0xaa] sm:$0xff]
      %v1529 = vld [vmem:[%s274 + $0xb2] sm:$0xff]
      %v1530 = vld [vmem:[%s274 + $0xba] sm:$0xff]
      %v1531 = vld [vmem:[%s274 + $0xc2] sm:$0xff]
      %v1532 = vld [vmem:[%s274 + $0xca] sm:$0xff]
      %1559 = vrot.lane.b32.xlu0 %v1507, 16
      %v1560 = vpop.permute.xlu0 %1559
      %1561 = vrot.lane.b32.xlu0 %v1508, 16
      %v1562 = vpop.permute.xlu0 %1561
      %1563 = vrot.lane.b32.xlu0 %v1509, 16
      %v1564 = vpop.permute.xlu0 %1563
      %1565 = vrot.lane.b32.xlu0 %v1510, 16
      %v1566 = vpop.permute.xlu0 %1565
      %1567 = vrot.lane.b32.xlu0 %v1511, 16
      %v1568 = vpop.permute.xlu0 %1567
      %1569 = vrot.lane.b32.xlu0 %v1512, 16
      %v1570 = vpop.permute.xlu0 %1569
      %1571 = vrot.lane.b32.xlu0 %v1513, 16
      %v1572 = vpop.permute.xlu0 %1571
      %1573 = vrot.lane.b32.xlu0 %v1514, 16
      %v1574 = vpop.permute.xlu0 %1573
      %1575 = vrot.lane.b32.xlu0 %v1515, 16
      %v1576 = vpop.permute.xlu0 %1575
      %1577 = vrot.lane.b32.xlu0 %v1516, 16
      %v1578 = vpop.permute.xlu0 %1577
      %1579 = vrot.lane.b32.xlu0 %v1517, 16
      %v1580 = vpop.permute.xlu0 %1579
      %1581 = vrot.lane.b32.xlu0 %v1518, 16
      %v1582 = vpop.permute.xlu0 %1581
      %1583 = vrot.lane.b32.xlu0 %v1519, 16
      %v1584 = vpop.permute.xlu0 %1583
      %1585 = vrot.lane.b32.xlu0 %v1520, 16
      %v1586 = vpop.permute.xlu0 %1585
      %1587 = vrot.lane.b32.xlu0 %v1521, 16
      %v1588 = vpop.permute.xlu0 %1587
      %1589 = vrot.lane.b32.xlu0 %v1522, 16
      %v1590 = vpop.permute.xlu0 %1589
      %1591 = vrot.lane.b32.xlu0 %v1523, 16
      %v1592 = vpop.permute.xlu0 %1591
      %1593 = vrot.lane.b32.xlu0 %v1524, 16
      %v1594 = vpop.permute.xlu0 %1593
      %1595 = vrot.lane.b32.xlu0 %v1525, 16
      %v1596 = vpop.permute.xlu0 %1595
      %1597 = vrot.lane.b32.xlu0 %v1526, 16
      %v1598 = vpop.permute.xlu0 %1597
      %1599 = vrot.lane.b32.xlu0 %v1527, 16
      %v1600 = vpop.permute.xlu0 %1599
      %1601 = vrot.lane.b32.xlu0 %v1528, 16
      %v1602 = vpop.permute.xlu0 %1601
      %1603 = vrot.lane.b32.xlu0 %v1529, 16
      %v1604 = vpop.permute.xlu0 %1603
      %1605 = vrot.lane.b32.xlu0 %v1530, 16
      %v1606 = vpop.permute.xlu0 %1605
      %1607 = vrot.lane.b32.xlu0 %v1531, 16
      %v1608 = vpop.permute.xlu0 %1607
      %1609 = vrot.lane.b32.xlu0 %v1532, 16
      %v1610 = vpop.permute.xlu0 %1609
      %vm1637 = vcmask 195712
      %1638 = vst.msk [vmem:[#allocation4] sm:$0xff] %vm1637, %v1560
      %1639 = vst.msk [vmem:[#allocation4 + $0x10] sm:$0xff] %vm1637, %v1562
      %1640 = vst.msk [vmem:[#allocation4 + $0x20] sm:$0xff] %vm1637, %v1564
      %1641 = vst.msk [vmem:[#allocation4 + $0x30] sm:$0xff] %vm1637, %v1566
      %1642 = vst.msk [vmem:[#allocation4 + $0x40] sm:$0xff] %vm1637, %v1568
      %1643 = vst.msk [vmem:[#allocation4 + $0x50] sm:$0xff] %vm1637, %v1570
      %1644 = vst.msk [vmem:[#allocation4 + $0x60] sm:$0xff] %vm1637, %v1572
      %1645 = vst.msk [vmem:[#allocation4 + $0x70] sm:$0xff] %vm1637, %v1574
      %1646 = vst.msk [vmem:[#allocation4 + $0x80] sm:$0xff] %vm1637, %v1576
      %1647 = vst.msk [vmem:[#allocation4 + $0x90] sm:$0xff] %vm1637, %v1578
      %1648 = vst.msk [vmem:[#allocation4 + $0xa0] sm:$0xff] %vm1637, %v1580
      %1649 = vst.msk [vmem:[#allocation4 + $0xb0] sm:$0xff] %vm1637, %v1582
      %1650 = vst.msk [vmem:[#allocation4 + $0xc0] sm:$0xff] %vm1637, %v1584
      %1651 = vst.msk [vmem:[#allocation4 + $0xd0] sm:$0xff] %vm1637, %v1586
      %1652 = vst.msk [vmem:[#allocation4 + $0xe0] sm:$0xff] %vm1637, %v1588
      %1653 = vst.msk [vmem:[#allocation4 + $0xf0] sm:$0xff] %vm1637, %v1590
      %1654 = vst.msk [vmem:[#allocation4 + $0x100] sm:$0xff] %vm1637, %v1592
      %1655 = vst.msk [vmem:[#allocation4 + $0x110] sm:$0xff] %vm1637, %v1594
      %1656 = vst.msk [vmem:[#allocation4 + $0x120] sm:$0xff] %vm1637, %v1596
      %1657 = vst.msk [vmem:[#allocation4 + $0x130] sm:$0xff] %vm1637, %v1598
      %1658 = vst.msk [vmem:[#allocation4 + $0x140] sm:$0xff] %vm1637, %v1600
      %1659 = vst.msk [vmem:[#allocation4 + $0x150] sm:$0xff] %vm1637, %v1602
      %1660 = vst.msk [vmem:[#allocation4 + $0x160] sm:$0xff] %vm1637, %v1604
      %1661 = vst.msk [vmem:[#allocation4 + $0x170] sm:$0xff] %vm1637, %v1606
      %1662 = vst.msk [vmem:[#allocation4 + $0x180] sm:$0xff] %vm1637, %v1608
      %1663 = vst.msk [vmem:[#allocation4 + $0x190] sm:$0xff] %vm1637, %v1610
      %v1664 = vld [vmem:[%s274 + $0xa] sm:$0xff]
      %v1665 = vld [vmem:[%s274 + $0x12] sm:$0xff]
      %v1666 = vld [vmem:[%s274 + $0x1a] sm:$0xff]
      %v1667 = vld [vmem:[%s274 + $0x22] sm:$0xff]
      %v1668 = vld [vmem:[%s274 + $0x2a] sm:$0xff]
      %v1669 = vld [vmem:[%s274 + $0x32] sm:$0xff]
      %v1670 = vld [vmem:[%s274 + $0x3a] sm:$0xff]
      %v1671 = vld [vmem:[%s274 + $0x42] sm:$0xff]
      %v1672 = vld [vmem:[%s274 + $0x4a] sm:$0xff]
      %v1673 = vld [vmem:[%s274 + $0x52] sm:$0xff]
      %v1674 = vld [vmem:[%s274 + $0x5a] sm:$0xff]
      %v1675 = vld [vmem:[%s274 + $0x62] sm:$0xff]
      %v1676 = vld [vmem:[%s274 + $0x6a] sm:$0xff]
      %v1677 = vld [vmem:[%s274 + $0x72] sm:$0xff]
      %v1678 = vld [vmem:[%s274 + $0x7a] sm:$0xff]
      %v1679 = vld [vmem:[%s274 + $0x82] sm:$0xff]
      %v1680 = vld [vmem:[%s274 + $0x8a] sm:$0xff]
      %v1681 = vld [vmem:[%s274 + $0x92] sm:$0xff]
      %v1682 = vld [vmem:[%s274 + $0x9a] sm:$0xff]
      %v1683 = vld [vmem:[%s274 + $0xa2] sm:$0xff]
      %v1684 = vld [vmem:[%s274 + $0xaa] sm:$0xff]
      %v1685 = vld [vmem:[%s274 + $0xb2] sm:$0xff]
      %v1686 = vld [vmem:[%s274 + $0xba] sm:$0xff]
      %v1687 = vld [vmem:[%s274 + $0xc2] sm:$0xff]
      %v1688 = vld [vmem:[%s274 + $0xca] sm:$0xff]
      %v1689 = vld [vmem:[%s274 + $0xd2] sm:$0xff]
      %1716 = vrot.lane.b32.xlu0 %v1664, 24
      %v1717 = vpop.permute.xlu0 %1716
      %1718 = vrot.lane.b32.xlu0 %v1665, 24
      %v1719 = vpop.permute.xlu0 %1718
      %1720 = vrot.lane.b32.xlu0 %v1666, 24
      %v1721 = vpop.permute.xlu0 %1720
      %1722 = vrot.lane.b32.xlu0 %v1667, 24
      %v1723 = vpop.permute.xlu0 %1722
      %1724 = vrot.lane.b32.xlu0 %v1668, 24
      %v1725 = vpop.permute.xlu0 %1724
      %1726 = vrot.lane.b32.xlu0 %v1669, 24
      %v1727 = vpop.permute.xlu0 %1726
      %1728 = vrot.lane.b32.xlu0 %v1670, 24
      %v1729 = vpop.permute.xlu0 %1728
      %1730 = vrot.lane.b32.xlu0 %v1671, 24
      %v1731 = vpop.permute.xlu0 %1730
      %1732 = vrot.lane.b32.xlu0 %v1672, 24
      %v1733 = vpop.permute.xlu0 %1732
      %1734 = vrot.lane.b32.xlu0 %v1673, 24
      %v1735 = vpop.permute.xlu0 %1734
      %1736 = vrot.lane.b32.xlu0 %v1674, 24
      %v1737 = vpop.permute.xlu0 %1736
      %1738 = vrot.lane.b32.xlu0 %v1675, 24
      %v1739 = vpop.permute.xlu0 %1738
      %1740 = vrot.lane.b32.xlu0 %v1676, 24
      %v1741 = vpop.permute.xlu0 %1740
      %1742 = vrot.lane.b32.xlu0 %v1677, 24
      %v1743 = vpop.permute.xlu0 %1742
      %1744 = vrot.lane.b32.xlu0 %v1678, 24
      %v1745 = vpop.permute.xlu0 %1744
      %1746 = vrot.lane.b32.xlu0 %v1679, 24
      %v1747 = vpop.permute.xlu0 %1746
      %1748 = vrot.lane.b32.xlu0 %v1680, 24
      %v1749 = vpop.permute.xlu0 %1748
      %1750 = vrot.lane.b32.xlu0 %v1681, 24
      %v1751 = vpop.permute.xlu0 %1750
      %1752 = vrot.lane.b32.xlu0 %v1682, 24
      %v1753 = vpop.permute.xlu0 %1752
      %1754 = vrot.lane.b32.xlu0 %v1683, 24
      %v1755 = vpop.permute.xlu0 %1754
      %1756 = vrot.lane.b32.xlu0 %v1684, 24
      %v1757 = vpop.permute.xlu0 %1756
      %1758 = vrot.lane.b32.xlu0 %v1685, 24
      %v1759 = vpop.permute.xlu0 %1758
      %1760 = vrot.lane.b32.xlu0 %v1686, 24
      %v1761 = vpop.permute.xlu0 %1760
      %1762 = vrot.lane.b32.xlu0 %v1687, 24
      %v1763 = vpop.permute.xlu0 %1762
      %1764 = vrot.lane.b32.xlu0 %v1688, 24
      %v1765 = vpop.permute.xlu0 %1764
      %1766 = vrot.lane.b32.xlu0 %v1689, 24
      %v1767 = vpop.permute.xlu0 %1766
      %vm1794 = vcmask 261312
      %1795 = vst.msk [vmem:[#allocation4] sm:$0xff] %vm1794, %v1717
      %1796 = vst.msk [vmem:[#allocation4 + $0x10] sm:$0xff] %vm1794, %v1719
      %1797 = vst.msk [vmem:[#allocation4 + $0x20] sm:$0xff] %vm1794, %v1721
      %1798 = vst.msk [vmem:[#allocation4 + $0x30] sm:$0xff] %vm1794, %v1723
      %1799 = vst.msk [vmem:[#allocation4 + $0x40] sm:$0xff] %vm1794, %v1725
      %1800 = vst.msk [vmem:[#allocation4 + $0x50] sm:$0xff] %vm1794, %v1727
      %1801 = vst.msk [vmem:[#allocation4 + $0x60] sm:$0xff] %vm1794, %v1729
      %1802 = vst.msk [vmem:[#allocation4 + $0x70] sm:$0xff] %vm1794, %v1731
      %1803 = vst.msk [vmem:[#allocation4 + $0x80] sm:$0xff] %vm1794, %v1733
      %1804 = vst.msk [vmem:[#allocation4 + $0x90] sm:$0xff] %vm1794, %v1735
      %1805 = vst.msk [vmem:[#allocation4 + $0xa0] sm:$0xff] %vm1794, %v1737
      %1806 = vst.msk [vmem:[#allocation4 + $0xb0] sm:$0xff] %vm1794, %v1739
      %1807 = vst.msk [vmem:[#allocation4 + $0xc0] sm:$0xff] %vm1794, %v1741
      %1808 = vst.msk [vmem:[#allocation4 + $0xd0] sm:$0xff] %vm1794, %v1743
      %1809 = vst.msk [vmem:[#allocation4 + $0xe0] sm:$0xff] %vm1794, %v1745
      %1810 = vst.msk [vmem:[#allocation4 + $0xf0] sm:$0xff] %vm1794, %v1747
      %1811 = vst.msk [vmem:[#allocation4 + $0x100] sm:$0xff] %vm1794, %v1749
      %1812 = vst.msk [vmem:[#allocation4 + $0x110] sm:$0xff] %vm1794, %v1751
      %1813 = vst.msk [vmem:[#allocation4 + $0x120] sm:$0xff] %vm1794, %v1753
      %1814 = vst.msk [vmem:[#allocation4 + $0x130] sm:$0xff] %vm1794, %v1755
      %1815 = vst.msk [vmem:[#allocation4 + $0x140] sm:$0xff] %vm1794, %v1757
      %1816 = vst.msk [vmem:[#allocation4 + $0x150] sm:$0xff] %vm1794, %v1759
      %1817 = vst.msk [vmem:[#allocation4 + $0x160] sm:$0xff] %vm1794, %v1761
      %1818 = vst.msk [vmem:[#allocation4 + $0x170] sm:$0xff] %vm1794, %v1763
      %1819 = vst.msk [vmem:[#allocation4 + $0x180] sm:$0xff] %vm1794, %v1765
      %1820 = vst.msk [vmem:[#allocation4 + $0x190] sm:$0xff] %vm1794, %v1767
      %v1821 = vld [vmem:[%s274 + $0xb] sm:$0xff]
      %v1822 = vld [vmem:[%s274 + $0x13] sm:$0xff]
      %v1823 = vld [vmem:[%s274 + $0x1b] sm:$0xff]
      %v1824 = vld [vmem:[%s274 + $0x23] sm:$0xff]
      %v1825 = vld [vmem:[%s274 + $0x2b] sm:$0xff]
      %v1826 = vld [vmem:[%s274 + $0x33] sm:$0xff]
      %v1827 = vld [vmem:[%s274 + $0x3b] sm:$0xff]
      %v1828 = vld [vmem:[%s274 + $0x43] sm:$0xff]
      %v1829 = vld [vmem:[%s274 + $0x4b] sm:$0xff]
      %v1830 = vld [vmem:[%s274 + $0x53] sm:$0xff]
      %v1831 = vld [vmem:[%s274 + $0x5b] sm:$0xff]
      %v1832 = vld [vmem:[%s274 + $0x63] sm:$0xff]
      %v1833 = vld [vmem:[%s274 + $0x6b] sm:$0xff]
      %v1834 = vld [vmem:[%s274 + $0x73] sm:$0xff]
      %v1835 = vld [vmem:[%s274 + $0x7b] sm:$0xff]
      %v1836 = vld [vmem:[%s274 + $0x83] sm:$0xff]
      %v1837 = vld [vmem:[%s274 + $0x8b] sm:$0xff]
      %v1838 = vld [vmem:[%s274 + $0x93] sm:$0xff]
      %v1839 = vld [vmem:[%s274 + $0x9b] sm:$0xff]
      %v1840 = vld [vmem:[%s274 + $0xa3] sm:$0xff]
      %v1841 = vld [vmem:[%s274 + $0xab] sm:$0xff]
      %v1842 = vld [vmem:[%s274 + $0xb3] sm:$0xff]
      %v1843 = vld [vmem:[%s274 + $0xbb] sm:$0xff]
      %v1844 = vld [vmem:[%s274 + $0xc3] sm:$0xff]
      %v1845 = vld [vmem:[%s274 + $0xcb] sm:$0xff]
      %v1846 = vld [vmem:[%s274 + $0xd3] sm:$0xff]
      %1873 = vrot.lane.b32.xlu0 %v1821, 32
      %v1874 = vpop.permute.xlu0 %1873
      %1875 = vrot.lane.b32.xlu0 %v1822, 32
      %v1876 = vpop.permute.xlu0 %1875
      %1877 = vrot.lane.b32.xlu0 %v1823, 32
      %v1878 = vpop.permute.xlu0 %1877
      %1879 = vrot.lane.b32.xlu0 %v1824, 32
      %v1880 = vpop.permute.xlu0 %1879
      %1881 = vrot.lane.b32.xlu0 %v1825, 32
      %v1882 = vpop.permute.xlu0 %1881
      %1883 = vrot.lane.b32.xlu0 %v1826, 32
      %v1884 = vpop.permute.xlu0 %1883
      %1885 = vrot.lane.b32.xlu0 %v1827, 32
      %v1886 = vpop.permute.xlu0 %1885
      %1887 = vrot.lane.b32.xlu0 %v1828, 32
      %v1888 = vpop.permute.xlu0 %1887
      %1889 = vrot.lane.b32.xlu0 %v1829, 32
      %v1890 = vpop.permute.xlu0 %1889
      %1891 = vrot.lane.b32.xlu0 %v1830, 32
      %v1892 = vpop.permute.xlu0 %1891
      %1893 = vrot.lane.b32.xlu0 %v1831, 32
      %v1894 = vpop.permute.xlu0 %1893
      %1895 = vrot.lane.b32.xlu0 %v1832, 32
      %v1896 = vpop.permute.xlu0 %1895
      %1897 = vrot.lane.b32.xlu0 %v1833, 32
      %v1898 = vpop.permute.xlu0 %1897
      %1899 = vrot.lane.b32.xlu0 %v1834, 32
      %v1900 = vpop.permute.xlu0 %1899
      %1901 = vrot.lane.b32.xlu0 %v1835, 32
      %v1902 = vpop.permute.xlu0 %1901
      %1903 = vrot.lane.b32.xlu0 %v1836, 32
      %v1904 = vpop.permute.xlu0 %1903
      %1905 = vrot.lane.b32.xlu0 %v1837, 32
      %v1906 = vpop.permute.xlu0 %1905
      %1907 = vrot.lane.b32.xlu0 %v1838, 32
      %v1908 = vpop.permute.xlu0 %1907
      %1909 = vrot.lane.b32.xlu0 %v1839, 32
      %v1910 = vpop.permute.xlu0 %1909
      %1911 = vrot.lane.b32.xlu0 %v1840, 32
      %v1912 = vpop.permute.xlu0 %1911
      %1913 = vrot.lane.b32.xlu0 %v1841, 32
      %v1914 = vpop.permute.xlu0 %1913
      %1915 = vrot.lane.b32.xlu0 %v1842, 32
      %v1916 = vpop.permute.xlu0 %1915
      %1917 = vrot.lane.b32.xlu0 %v1843, 32
      %v1918 = vpop.permute.xlu0 %1917
      %1919 = vrot.lane.b32.xlu0 %v1844, 32
      %v1920 = vpop.permute.xlu0 %1919
      %1921 = vrot.lane.b32.xlu0 %v1845, 32
      %v1922 = vpop.permute.xlu0 %1921
      %1923 = vrot.lane.b32.xlu0 %v1846, 32
      %v1924 = vpop.permute.xlu0 %1923
      %vm1951 = vcmask 326912
      %1952 = vst.msk [vmem:[#allocation4] sm:$0xff] %vm1951, %v1874
      %1953 = vst.msk [vmem:[#allocation4 + $0x10] sm:$0xff] %vm1951, %v1876
      %1954 = vst.msk [vmem:[#allocation4 + $0x20] sm:$0xff] %vm1951, %v1878
      %1955 = vst.msk [vmem:[#allocation4 + $0x30] sm:$0xff] %vm1951, %v1880
      %1956 = vst.msk [vmem:[#allocation4 + $0x40] sm:$0xff] %vm1951, %v1882
      %1957 = vst.msk [vmem:[#allocation4 + $0x50] sm:$0xff] %vm1951, %v1884
      %1958 = vst.msk [vmem:[#allocation4 + $0x60] sm:$0xff] %vm1951, %v1886
      %1959 = vst.msk [vmem:[#allocation4 + $0x70] sm:$0xff] %vm1951, %v1888
      %1960 = vst.msk [vmem:[#allocation4 + $0x80] sm:$0xff] %vm1951, %v1890
      %1961 = vst.msk [vmem:[#allocation4 + $0x90] sm:$0xff] %vm1951, %v1892
      %1962 = vst.msk [vmem:[#allocation4 + $0xa0] sm:$0xff] %vm1951, %v1894
      %1963 = vst.msk [vmem:[#allocation4 + $0xb0] sm:$0xff] %vm1951, %v1896
      %1964 = vst.msk [vmem:[#allocation4 + $0xc0] sm:$0xff] %vm1951, %v1898
      %1965 = vst.msk [vmem:[#allocation4 + $0xd0] sm:$0xff] %vm1951, %v1900
      %1966 = vst.msk [vmem:[#allocation4 + $0xe0] sm:$0xff] %vm1951, %v1902
      %1967 = vst.msk [vmem:[#allocation4 + $0xf0] sm:$0xff] %vm1951, %v1904
      %1968 = vst.msk [vmem:[#allocation4 + $0x100] sm:$0xff] %vm1951, %v1906
      %1969 = vst.msk [vmem:[#allocation4 + $0x110] sm:$0xff] %vm1951, %v1908
      %1970 = vst.msk [vmem:[#allocation4 + $0x120] sm:$0xff] %vm1951, %v1910
      %1971 = vst.msk [vmem:[#allocation4 + $0x130] sm:$0xff] %vm1951, %v1912
      %1972 = vst.msk [vmem:[#allocation4 + $0x140] sm:$0xff] %vm1951, %v1914
      %1973 = vst.msk [vmem:[#allocation4 + $0x150] sm:$0xff] %vm1951, %v1916
      %1974 = vst.msk [vmem:[#allocation4 + $0x160] sm:$0xff] %vm1951, %v1918
      %1975 = vst.msk [vmem:[#allocation4 + $0x170] sm:$0xff] %vm1951, %v1920
      %1976 = vst.msk [vmem:[#allocation4 + $0x180] sm:$0xff] %vm1951, %v1922
      %1977 = vst.msk [vmem:[#allocation4 + $0x190] sm:$0xff] %vm1951, %v1924
      %v1978 = vld [vmem:[%s274 + $0xc] sm:$0xff]
      %v1979 = vld [vmem:[%s274 + $0x14] sm:$0xff]
      %v1980 = vld [vmem:[%s274 + $0x1c] sm:$0xff]
      %v1981 = vld [vmem:[%s274 + $0x24] sm:$0xff]
      %v1982 = vld [vmem:[%s274 + $0x2c] sm:$0xff]
      %v1983 = vld [vmem:[%s274 + $0x34] sm:$0xff]
      %v1984 = vld [vmem:[%s274 + $0x3c] sm:$0xff]
      %v1985 = vld [vmem:[%s274 + $0x44] sm:$0xff]
      %v1986 = vld [vmem:[%s274 + $0x4c] sm:$0xff]
      %v1987 = vld [vmem:[%s274 + $0x54] sm:$0xff]
      %v1988 = vld [vmem:[%s274 + $0x5c] sm:$0xff]
      %v1989 = vld [vmem:[%s274 + $0x64] sm:$0xff]
      %v1990 = vld [vmem:[%s274 + $0x6c] sm:$0xff]
      %v1991 = vld [vmem:[%s274 + $0x74] sm:$0xff]
      %v1992 = vld [vmem:[%s274 + $0x7c] sm:$0xff]
      %v1993 = vld [vmem:[%s274 + $0x84] sm:$0xff]
      %v1994 = vld [vmem:[%s274 + $0x8c] sm:$0xff]
      %v1995 = vld [vmem:[%s274 + $0x94] sm:$0xff]
      %v1996 = vld [vmem:[%s274 + $0x9c] sm:$0xff]
      %v1997 = vld [vmem:[%s274 + $0xa4] sm:$0xff]
      %v1998 = vld [vmem:[%s274 + $0xac] sm:$0xff]
      %v1999 = vld [vmem:[%s274 + $0xb4] sm:$0xff]
      %v2000 = vld [vmem:[%s274 + $0xbc] sm:$0xff]
      %v2001 = vld [vmem:[%s274 + $0xc4] sm:$0xff]
      %v2002 = vld [vmem:[%s274 + $0xcc] sm:$0xff]
      %v2003 = vld [vmem:[%s274 + $0xd4] sm:$0xff]
      %2030 = vrot.lane.b32.xlu0 %v1978, 40
      %v2031 = vpop.permute.xlu0 %2030
      %2032 = vrot.lane.b32.xlu0 %v1979, 40
      %v2033 = vpop.permute.xlu0 %2032
      %2034 = vrot.lane.b32.xlu0 %v1980, 40
      %v2035 = vpop.permute.xlu0 %2034
      %2036 = vrot.lane.b32.xlu0 %v1981, 40
      %v2037 = vpop.permute.xlu0 %2036
      %2038 = vrot.lane.b32.xlu0 %v1982, 40
      %v2039 = vpop.permute.xlu0 %2038
      %2040 = vrot.lane.b32.xlu0 %v1983, 40
      %v2041 = vpop.permute.xlu0 %2040
      %2042 = vrot.lane.b32.xlu0 %v1984, 40
      %v2043 = vpop.permute.xlu0 %2042
      %2044 = vrot.lane.b32.xlu0 %v1985, 40
      %v2045 = vpop.permute.xlu0 %2044
      %2046 = vrot.lane.b32.xlu0 %v1986, 40
      %v2047 = vpop.permute.xlu0 %2046
      %2048 = vrot.lane.b32.xlu0 %v1987, 40
      %v2049 = vpop.permute.xlu0 %2048
      %2050 = vrot.lane.b32.xlu0 %v1988, 40
      %v2051 = vpop.permute.xlu0 %2050
      %2052 = vrot.lane.b32.xlu0 %v1989, 40
      %v2053 = vpop.permute.xlu0 %2052
      %2054 = vrot.lane.b32.xlu0 %v1990, 40
      %v2055 = vpop.permute.xlu0 %2054
      %2056 = vrot.lane.b32.xlu0 %v1991, 40
      %v2057 = vpop.permute.xlu0 %2056
      %2058 = vrot.lane.b32.xlu0 %v1992, 40
      %v2059 = vpop.permute.xlu0 %2058
      %2060 = vrot.lane.b32.xlu0 %v1993, 40
      %v2061 = vpop.permute.xlu0 %2060
      %2062 = vrot.lane.b32.xlu0 %v1994, 40
      %v2063 = vpop.permute.xlu0 %2062
      %2064 = vrot.lane.b32.xlu0 %v1995, 40
      %v2065 = vpop.permute.xlu0 %2064
      %2066 = vrot.lane.b32.xlu0 %v1996, 40
      %v2067 = vpop.permute.xlu0 %2066
      %2068 = vrot.lane.b32.xlu0 %v1997, 40
      %v2069 = vpop.permute.xlu0 %2068
      %2070 = vrot.lane.b32.xlu0 %v1998, 40
      %v2071 = vpop.permute.xlu0 %2070
      %2072 = vrot.lane.b32.xlu0 %v1999, 40
      %v2073 = vpop.permute.xlu0 %2072
      %2074 = vrot.lane.b32.xlu0 %v2000, 40
      %v2075 = vpop.permute.xlu0 %2074
      %2076 = vrot.lane.b32.xlu0 %v2001, 40
      %v2077 = vpop.permute.xlu0 %2076
      %2078 = vrot.lane.b32.xlu0 %v2002, 40
      %v2079 = vpop.permute.xlu0 %2078
      %2080 = vrot.lane.b32.xlu0 %v2003, 40
      %v2081 = vpop.permute.xlu0 %2080
      %vm2108 = vcmask 392512
      %2109 = vst.msk [vmem:[#allocation4] sm:$0xff] %vm2108, %v2031
      %2110 = vst.msk [vmem:[#allocation4 + $0x10] sm:$0xff] %vm2108, %v2033
      %2111 = vst.msk [vmem:[#allocation4 + $0x20] sm:$0xff] %vm2108, %v2035
      %2112 = vst.msk [vmem:[#allocation4 + $0x30] sm:$0xff] %vm2108, %v2037
      %2113 = vst.msk [vmem:[#allocation4 + $0x40] sm:$0xff] %vm2108, %v2039
      %2114 = vst.msk [vmem:[#allocation4 + $0x50] sm:$0xff] %vm2108, %v2041
      %2115 = vst.msk [vmem:[#allocation4 + $0x60] sm:$0xff] %vm2108, %v2043
      %2116 = vst.msk [vmem:[#allocation4 + $0x70] sm:$0xff] %vm2108, %v2045
      %2117 = vst.msk [vmem:[#allocation4 + $0x80] sm:$0xff] %vm2108, %v2047
      %2118 = vst.msk [vmem:[#allocation4 + $0x90] sm:$0xff] %vm2108, %v2049
      %2119 = vst.msk [vmem:[#allocation4 + $0xa0] sm:$0xff] %vm2108, %v2051
      %2120 = vst.msk [vmem:[#allocation4 + $0xb0] sm:$0xff] %vm2108, %v2053
      %2121 = vst.msk [vmem:[#allocation4 + $0xc0] sm:$0xff] %vm2108, %v2055
      %2122 = vst.msk [vmem:[#allocation4 + $0xd0] sm:$0xff] %vm2108, %v2057
      %2123 = vst.msk [vmem:[#allocation4 + $0xe0] sm:$0xff] %vm2108, %v2059
      %2124 = vst.msk [vmem:[#allocation4 + $0xf0] sm:$0xff] %vm2108, %v2061
      %2125 = vst.msk [vmem:[#allocation4 + $0x100] sm:$0xff] %vm2108, %v2063
      %2126 = vst.msk [vmem:[#allocation4 + $0x110] sm:$0xff] %vm2108, %v2065
      %2127 = vst.msk [vmem:[#allocation4 + $0x120] sm:$0xff] %vm2108, %v2067
      %2128 = vst.msk [vmem:[#allocation4 + $0x130] sm:$0xff] %vm2108, %v2069
      %2129 = vst.msk [vmem:[#allocation4 + $0x140] sm:$0xff] %vm2108, %v2071
      %2130 = vst.msk [vmem:[#allocation4 + $0x150] sm:$0xff] %vm2108, %v2073
      %2131 = vst.msk [vmem:[#allocation4 + $0x160] sm:$0xff] %vm2108, %v2075
      %2132 = vst.msk [vmem:[#allocation4 + $0x170] sm:$0xff] %vm2108, %v2077
      %2133 = vst.msk [vmem:[#allocation4 + $0x180] sm:$0xff] %vm2108, %v2079
      %2134 = vst.msk [vmem:[#allocation4 + $0x190] sm:$0xff] %vm2108, %v2081
      %v2135 = vld [vmem:[%s274 + $0x14] sm:$0xff]
      %v2136 = vld [vmem:[%s274 + $0x1c] sm:$0xff]
      %v2137 = vld [vmem:[%s274 + $0x24] sm:$0xff]
      %v2138 = vld [vmem:[%s274 + $0x2c] sm:$0xff]
      %v2139 = vld [vmem:[%s274 + $0x34] sm:$0xff]
      %v2140 = vld [vmem:[%s274 + $0x3c] sm:$0xff]
      %v2141 = vld [vmem:[%s274 + $0x44] sm:$0xff]
      %v2142 = vld [vmem:[%s274 + $0x4c] sm:$0xff]
      %v2143 = vld [vmem:[%s274 + $0x54] sm:$0xff]
      %v2144 = vld [vmem:[%s274 + $0x5c] sm:$0xff]
      %v2145 = vld [vmem:[%s274 + $0x64] sm:$0xff]
      %v2146 = vld [vmem:[%s274 + $0x6c] sm:$0xff]
      %v2147 = vld [vmem:[%s274 + $0x74] sm:$0xff]
      %v2148 = vld [vmem:[%s274 + $0x7c] sm:$0xff]
      %v2149 = vld [vmem:[%s274 + $0x84] sm:$0xff]
      %v2150 = vld [vmem:[%s274 + $0x8c] sm:$0xff]
      %v2151 = vld [vmem:[%s274 + $0x94] sm:$0xff]
      %v2152 = vld [vmem:[%s274 + $0x9c] sm:$0xff]
      %v2153 = vld [vmem:[%s274 + $0xa4] sm:$0xff]
      %v2154 = vld [vmem:[%s274 + $0xac] sm:$0xff]
      %v2155 = vld [vmem:[%s274 + $0xb4] sm:$0xff]
      %v2156 = vld [vmem:[%s274 + $0xbc] sm:$0xff]
      %v2157 = vld [vmem:[%s274 + $0xc4] sm:$0xff]
      %v2158 = vld [vmem:[%s274 + $0xcc] sm:$0xff]
      %v2159 = vld [vmem:[%s274 + $0xd4] sm:$0xff]
      %v2160 = vld [vmem:[%s274 + $0xdc] sm:$0xff]
      %2187 = vrot.lane.b32.xlu0 %v2135, 48
      %v2188 = vpop.permute.xlu0 %2187
      %2189 = vrot.lane.b32.xlu0 %v2136, 48
      %v2190 = vpop.permute.xlu0 %2189
      %2191 = vrot.lane.b32.xlu0 %v2137, 48
      %v2192 = vpop.permute.xlu0 %2191
      %2193 = vrot.lane.b32.xlu0 %v2138, 48
      %v2194 = vpop.permute.xlu0 %2193
      %2195 = vrot.lane.b32.xlu0 %v2139, 48
      %v2196 = vpop.permute.xlu0 %2195
      %2197 = vrot.lane.b32.xlu0 %v2140, 48
      %v2198 = vpop.permute.xlu0 %2197
      %2199 = vrot.lane.b32.xlu0 %v2141, 48
      %v2200 = vpop.permute.xlu0 %2199
      %2201 = vrot.lane.b32.xlu0 %v2142, 48
      %v2202 = vpop.permute.xlu0 %2201
      %2203 = vrot.lane.b32.xlu0 %v2143, 48
      %v2204 = vpop.permute.xlu0 %2203
      %2205 = vrot.lane.b32.xlu0 %v2144, 48
      %v2206 = vpop.permute.xlu0 %2205
      %2207 = vrot.lane.b32.xlu0 %v2145, 48
      %v2208 = vpop.permute.xlu0 %2207
      %2209 = vrot.lane.b32.xlu0 %v2146, 48
      %v2210 = vpop.permute.xlu0 %2209
      %2211 = vrot.lane.b32.xlu0 %v2147, 48
      %v2212 = vpop.permute.xlu0 %2211
      %2213 = vrot.lane.b32.xlu0 %v2148, 48
      %v2214 = vpop.permute.xlu0 %2213
      %2215 = vrot.lane.b32.xlu0 %v2149, 48
      %v2216 = vpop.permute.xlu0 %2215
      %2217 = vrot.lane.b32.xlu0 %v2150, 48
      %v2218 = vpop.permute.xlu0 %2217
      %2219 = vrot.lane.b32.xlu0 %v2151, 48
      %v2220 = vpop.permute.xlu0 %2219
      %2221 = vrot.lane.b32.xlu0 %v2152, 48
      %v2222 = vpop.permute.xlu0 %2221
      %2223 = vrot.lane.b32.xlu0 %v2153, 48
      %v2224 = vpop.permute.xlu0 %2223
      %2225 = vrot.lane.b32.xlu0 %v2154, 48
      %v2226 = vpop.permute.xlu0 %2225
      %2227 = vrot.lane.b32.xlu0 %v2155, 48
      %v2228 = vpop.permute.xlu0 %2227
      %2229 = vrot.lane.b32.xlu0 %v2156, 48
      %v2230 = vpop.permute.xlu0 %2229
      %2231 = vrot.lane.b32.xlu0 %v2157, 48
      %v2232 = vpop.permute.xlu0 %2231
      %2233 = vrot.lane.b32.xlu0 %v2158, 48
      %v2234 = vpop.permute.xlu0 %2233
      %2235 = vrot.lane.b32.xlu0 %v2159, 48
      %v2236 = vpop.permute.xlu0 %2235
      %2237 = vrot.lane.b32.xlu0 %v2160, 48
      %v2238 = vpop.permute.xlu0 %2237
      %vm2265 = vcmask 458112
      %2266 = vst.msk [vmem:[#allocation4] sm:$0xff] %vm2265, %v2188
      %2267 = vst.msk [vmem:[#allocation4 + $0x10] sm:$0xff] %vm2265, %v2190
      %2268 = vst.msk [vmem:[#allocation4 + $0x20] sm:$0xff] %vm2265, %v2192
      %2269 = vst.msk [vmem:[#allocation4 + $0x30] sm:$0xff] %vm2265, %v2194
      %2270 = vst.msk [vmem:[#allocation4 + $0x40] sm:$0xff] %vm2265, %v2196
      %2271 = vst.msk [vmem:[#allocation4 + $0x50] sm:$0xff] %vm2265, %v2198
      %2272 = vst.msk [vmem:[#allocation4 + $0x60] sm:$0xff] %vm2265, %v2200
      %2273 = vst.msk [vmem:[#allocation4 + $0x70] sm:$0xff] %vm2265, %v2202
      %2274 = vst.msk [vmem:[#allocation4 + $0x80] sm:$0xff] %vm2265, %v2204
      %2275 = vst.msk [vmem:[#allocation4 + $0x90] sm:$0xff] %vm2265, %v2206
      %2276 = vst.msk [vmem:[#allocation4 + $0xa0] sm:$0xff] %vm2265, %v2208
      %2277 = vst.msk [vmem:[#allocation4 + $0xb0] sm:$0xff] %vm2265, %v2210
      %2278 = vst.msk [vmem:[#allocation4 + $0xc0] sm:$0xff] %vm2265, %v2212
      %2279 = vst.msk [vmem:[#allocation4 + $0xd0] sm:$0xff] %vm2265, %v2214
      %2280 = vst.msk [vmem:[#allocation4 + $0xe0] sm:$0xff] %vm2265, %v2216
      %2281 = vst.msk [vmem:[#allocation4 + $0xf0] sm:$0xff] %vm2265, %v2218
      %2282 = vst.msk [vmem:[#allocation4 + $0x100] sm:$0xff] %vm2265, %v2220
      %2283 = vst.msk [vmem:[#allocation4 + $0x110] sm:$0xff] %vm2265, %v2222
      %2284 = vst.msk [vmem:[#allocation4 + $0x120] sm:$0xff] %vm2265, %v2224
      %2285 = vst.msk [vmem:[#allocation4 + $0x130] sm:$0xff] %vm2265, %v2226
      %2286 = vst.msk [vmem:[#allocation4 + $0x140] sm:$0xff] %vm2265, %v2228
      %2287 = vst.msk [vmem:[#allocation4 + $0x150] sm:$0xff] %vm2265, %v2230
      %2288 = vst.msk [vmem:[#allocation4 + $0x160] sm:$0xff] %vm2265, %v2232
      %2289 = vst.msk [vmem:[#allocation4 + $0x170] sm:$0xff] %vm2265, %v2234
      %2290 = vst.msk [vmem:[#allocation4 + $0x180] sm:$0xff] %vm2265, %v2236
      %2291 = vst.msk [vmem:[#allocation4 + $0x190] sm:$0xff] %vm2265, %v2238
      %v2292 = vld [vmem:[%s274 + $0x15] sm:$0xff]
      %v2293 = vld [vmem:[%s274 + $0x1d] sm:$0xff]
      %v2294 = vld [vmem:[%s274 + $0x25] sm:$0xff]
      %v2295 = vld [vmem:[%s274 + $0x2d] sm:$0xff]
      %v2296 = vld [vmem:[%s274 + $0x35] sm:$0xff]
      %v2297 = vld [vmem:[%s274 + $0x3d] sm:$0xff]
      %v2298 = vld [vmem:[%s274 + $0x45] sm:$0xff]
      %v2299 = vld [vmem:[%s274 + $0x4d] sm:$0xff]
      %v2300 = vld [vmem:[%s274 + $0x55] sm:$0xff]
      %v2301 = vld [vmem:[%s274 + $0x5d] sm:$0xff]
      %v2302 = vld [vmem:[%s274 + $0x65] sm:$0xff]
      %v2303 = vld [vmem:[%s274 + $0x6d] sm:$0xff]
      %v2304 = vld [vmem:[%s274 + $0x75] sm:$0xff]
      %v2305 = vld [vmem:[%s274 + $0x7d] sm:$0xff]
      %v2306 = vld [vmem:[%s274 + $0x85] sm:$0xff]
      %v2307 = vld [vmem:[%s274 + $0x8d] sm:$0xff]
      %v2308 = vld [vmem:[%s274 + $0x95] sm:$0xff]
      %v2309 = vld [vmem:[%s274 + $0x9d] sm:$0xff]
      %v2310 = vld [vmem:[%s274 + $0xa5] sm:$0xff]
      %v2311 = vld [vmem:[%s274 + $0xad] sm:$0xff]
      %v2312 = vld [vmem:[%s274 + $0xb5] sm:$0xff]
      %v2313 = vld [vmem:[%s274 + $0xbd] sm:$0xff]
      %v2314 = vld [vmem:[%s274 + $0xc5] sm:$0xff]
      %v2315 = vld [vmem:[%s274 + $0xcd] sm:$0xff]
      %v2316 = vld [vmem:[%s274 + $0xd5] sm:$0xff]
      %v2317 = vld [vmem:[%s274 + $0xdd] sm:$0xff]
      %2344 = vrot.lane.b32.xlu0 %v2292, 56
      %v2345 = vpop.permute.xlu0 %2344
      %2346 = vrot.lane.b32.xlu0 %v2293, 56
      %v2347 = vpop.permute.xlu0 %2346
      %2348 = vrot.lane.b32.xlu0 %v2294, 56
      %v2349 = vpop.permute.xlu0 %2348
      %2350 = vrot.lane.b32.xlu0 %v2295, 56
      %v2351 = vpop.permute.xlu0 %2350
      %2352 = vrot.lane.b32.xlu0 %v2296, 56
      %v2353 = vpop.permute.xlu0 %2352
      %2354 = vrot.lane.b32.xlu0 %v2297, 56
      %v2355 = vpop.permute.xlu0 %2354
      %2356 = vrot.lane.b32.xlu0 %v2298, 56
      %v2357 = vpop.permute.xlu0 %2356
      %2358 = vrot.lane.b32.xlu0 %v2299, 56
      %v2359 = vpop.permute.xlu0 %2358
      %2360 = vrot.lane.b32.xlu0 %v2300, 56
      %v2361 = vpop.permute.xlu0 %2360
      %2362 = vrot.lane.b32.xlu0 %v2301, 56
      %v2363 = vpop.permute.xlu0 %2362
      %2364 = vrot.lane.b32.xlu0 %v2302, 56
      %v2365 = vpop.permute.xlu0 %2364
      %2366 = vrot.lane.b32.xlu0 %v2303, 56
      %v2367 = vpop.permute.xlu0 %2366
      %2368 = vrot.lane.b32.xlu0 %v2304, 56
      %v2369 = vpop.permute.xlu0 %2368
      %2370 = vrot.lane.b32.xlu0 %v2305, 56
      %v2371 = vpop.permute.xlu0 %2370
      %2372 = vrot.lane.b32.xlu0 %v2306, 56
      %v2373 = vpop.permute.xlu0 %2372
      %2374 = vrot.lane.b32.xlu0 %v2307, 56
      %v2375 = vpop.permute.xlu0 %2374
      %2376 = vrot.lane.b32.xlu0 %v2308, 56
      %v2377 = vpop.permute.xlu0 %2376
      %2378 = vrot.lane.b32.xlu0 %v2309, 56
      %v2379 = vpop.permute.xlu0 %2378
      %2380 = vrot.lane.b32.xlu0 %v2310, 56
      %v2381 = vpop.permute.xlu0 %2380
      %2382 = vrot.lane.b32.xlu0 %v2311, 56
      %v2383 = vpop.permute.xlu0 %2382
      %2384 = vrot.lane.b32.xlu0 %v2312, 56
      %v2385 = vpop.permute.xlu0 %2384
      %2386 = vrot.lane.b32.xlu0 %v2313, 56
      %v2387 = vpop.permute.xlu0 %2386
      %2388 = vrot.lane.b32.xlu0 %v2314, 56
      %v2389 = vpop.permute.xlu0 %2388
      %2390 = vrot.lane.b32.xlu0 %v2315, 56
      %v2391 = vpop.permute.xlu0 %2390
      %2392 = vrot.lane.b32.xlu0 %v2316, 56
      %v2393 = vpop.permute.xlu0 %2392
      %2394 = vrot.lane.b32.xlu0 %v2317, 56
      %v2395 = vpop.permute.xlu0 %2394
      %vm2422 = vcmask 523712
      %2423 = vst.msk [vmem:[#allocation4] sm:$0xff] %vm2422, %v2345
      %2424 = vst.msk [vmem:[#allocation4 + $0x10] sm:$0xff] %vm2422, %v2347
      %2425 = vst.msk [vmem:[#allocation4 + $0x20] sm:$0xff] %vm2422, %v2349
      %2426 = vst.msk [vmem:[#allocation4 + $0x30] sm:$0xff] %vm2422, %v2351
      %2427 = vst.msk [vmem:[#allocation4 + $0x40] sm:$0xff] %vm2422, %v2353
      %2428 = vst.msk [vmem:[#allocation4 + $0x50] sm:$0xff] %vm2422, %v2355
      %2429 = vst.msk [vmem:[#allocation4 + $0x60] sm:$0xff] %vm2422, %v2357
      %2430 = vst.msk [vmem:[#allocation4 + $0x70] sm:$0xff] %vm2422, %v2359
      %2431 = vst.msk [vmem:[#allocation4 + $0x80] sm:$0xff] %vm2422, %v2361
      %2432 = vst.msk [vmem:[#allocation4 + $0x90] sm:$0xff] %vm2422, %v2363
      %2433 = vst.msk [vmem:[#allocation4 + $0xa0] sm:$0xff] %vm2422, %v2365
      %2434 = vst.msk [vmem:[#allocation4 + $0xb0] sm:$0xff] %vm2422, %v2367
      %2435 = vst.msk [vmem:[#allocation4 + $0xc0] sm:$0xff] %vm2422, %v2369
      %2436 = vst.msk [vmem:[#allocation4 + $0xd0] sm:$0xff] %vm2422, %v2371
      %2437 = vst.msk [vmem:[#allocation4 + $0xe0] sm:$0xff] %vm2422, %v2373
      %2438 = vst.msk [vmem:[#allocation4 + $0xf0] sm:$0xff] %vm2422, %v2375
      %2439 = vst.msk [vmem:[#allocation4 + $0x100] sm:$0xff] %vm2422, %v2377
      %2440 = vst.msk [vmem:[#allocation4 + $0x110] sm:$0xff] %vm2422, %v2379
      %2441 = vst.msk [vmem:[#allocation4 + $0x120] sm:$0xff] %vm2422, %v2381
      %2442 = vst.msk [vmem:[#allocation4 + $0x130] sm:$0xff] %vm2422, %v2383
      %2443 = vst.msk [vmem:[#allocation4 + $0x140] sm:$0xff] %vm2422, %v2385
      %2444 = vst.msk [vmem:[#allocation4 + $0x150] sm:$0xff] %vm2422, %v2387
      %2445 = vst.msk [vmem:[#allocation4 + $0x160] sm:$0xff] %vm2422, %v2389
      %2446 = vst.msk [vmem:[#allocation4 + $0x170] sm:$0xff] %vm2422, %v2391
      %2447 = vst.msk [vmem:[#allocation4 + $0x180] sm:$0xff] %vm2422, %v2393
      %2448 = vst.msk [vmem:[#allocation4 + $0x190] sm:$0xff] %vm2422, %v2395
      %v2449 = vld [vmem:[%s274 + $0x16] sm:$0xff]
      %v2450 = vld [vmem:[%s274 + $0x1e] sm:$0xff]
      %v2451 = vld [vmem:[%s274 + $0x26] sm:$0xff]
      %v2452 = vld [vmem:[%s274 + $0x2e] sm:$0xff]
      %v2453 = vld [vmem:[%s274 + $0x36] sm:$0xff]
      %v2454 = vld [vmem:[%s274 + $0x3e] sm:$0xff]
      %v2455 = vld [vmem:[%s274 + $0x46] sm:$0xff]
      %v2456 = vld [vmem:[%s274 + $0x4e] sm:$0xff]
      %v2457 = vld [vmem:[%s274 + $0x56] sm:$0xff]
      %v2458 = vld [vmem:[%s274 + $0x5e] sm:$0xff]
      %v2459 = vld [vmem:[%s274 + $0x66] sm:$0xff]
      %v2460 = vld [vmem:[%s274 + $0x6e] sm:$0xff]
      %v2461 = vld [vmem:[%s274 + $0x76] sm:$0xff]
      %v2462 = vld [vmem:[%s274 + $0x7e] sm:$0xff]
      %v2463 = vld [vmem:[%s274 + $0x86] sm:$0xff]
      %v2464 = vld [vmem:[%s274 + $0x8e] sm:$0xff]
      %v2465 = vld [vmem:[%s274 + $0x96] sm:$0xff]
      %v2466 = vld [vmem:[%s274 + $0x9e] sm:$0xff]
      %v2467 = vld [vmem:[%s274 + $0xa6] sm:$0xff]
      %v2468 = vld [vmem:[%s274 + $0xae] sm:$0xff]
      %v2469 = vld [vmem:[%s274 + $0xb6] sm:$0xff]
      %v2470 = vld [vmem:[%s274 + $0xbe] sm:$0xff]
      %v2471 = vld [vmem:[%s274 + $0xc6] sm:$0xff]
      %v2472 = vld [vmem:[%s274 + $0xce] sm:$0xff]
      %v2473 = vld [vmem:[%s274 + $0xd6] sm:$0xff]
      %v2474 = vld [vmem:[%s274 + $0xde] sm:$0xff]
      %2501 = vrot.lane.b32.xlu0 %v2449, 64
      %v2502 = vpop.permute.xlu0 %2501
      %2503 = vrot.lane.b32.xlu0 %v2450, 64
      %v2504 = vpop.permute.xlu0 %2503
      %2505 = vrot.lane.b32.xlu0 %v2451, 64
      %v2506 = vpop.permute.xlu0 %2505
      %2507 = vrot.lane.b32.xlu0 %v2452, 64
      %v2508 = vpop.permute.xlu0 %2507
      %2509 = vrot.lane.b32.xlu0 %v2453, 64
      %v2510 = vpop.permute.xlu0 %2509
      %2511 = vrot.lane.b32.xlu0 %v2454, 64
      %v2512 = vpop.permute.xlu0 %2511
      %2513 = vrot.lane.b32.xlu0 %v2455, 64
      %v2514 = vpop.permute.xlu0 %2513
      %2515 = vrot.lane.b32.xlu0 %v2456, 64
      %v2516 = vpop.permute.xlu0 %2515
      %2517 = vrot.lane.b32.xlu0 %v2457, 64
      %v2518 = vpop.permute.xlu0 %2517
      %2519 = vrot.lane.b32.xlu0 %v2458, 64
      %v2520 = vpop.permute.xlu0 %2519
      %2521 = vrot.lane.b32.xlu0 %v2459, 64
      %v2522 = vpop.permute.xlu0 %2521
      %2523 = vrot.lane.b32.xlu0 %v2460, 64
      %v2524 = vpop.permute.xlu0 %2523
      %2525 = vrot.lane.b32.xlu0 %v2461, 64
      %v2526 = vpop.permute.xlu0 %2525
      %2527 = vrot.lane.b32.xlu0 %v2462, 64
      %v2528 = vpop.permute.xlu0 %2527
      %2529 = vrot.lane.b32.xlu0 %v2463, 64
      %v2530 = vpop.permute.xlu0 %2529
      %2531 = vrot.lane.b32.xlu0 %v2464, 64
      %v2532 = vpop.permute.xlu0 %2531
      %2533 = vrot.lane.b32.xlu0 %v2465, 64
      %v2534 = vpop.permute.xlu0 %2533
      %2535 = vrot.lane.b32.xlu0 %v2466, 64
      %v2536 = vpop.permute.xlu0 %2535
      %2537 = vrot.lane.b32.xlu0 %v2467, 64
      %v2538 = vpop.permute.xlu0 %2537
      %2539 = vrot.lane.b32.xlu0 %v2468, 64
      %v2540 = vpop.permute.xlu0 %2539
      %2541 = vrot.lane.b32.xlu0 %v2469, 64
      %v2542 = vpop.permute.xlu0 %2541
      %2543 = vrot.lane.b32.xlu0 %v2470, 64
      %v2544 = vpop.permute.xlu0 %2543
      %2545 = vrot.lane.b32.xlu0 %v2471, 64
      %v2546 = vpop.permute.xlu0 %2545
      %2547 = vrot.lane.b32.xlu0 %v2472, 64
      %v2548 = vpop.permute.xlu0 %2547
      %2549 = vrot.lane.b32.xlu0 %v2473, 64
      %v2550 = vpop.permute.xlu0 %2549
      %2551 = vrot.lane.b32.xlu0 %v2474, 64
      %v2552 = vpop.permute.xlu0 %2551
      %vm2579 = vcmask 589312
      %2580 = vst.msk [vmem:[#allocation4] sm:$0xff] %vm2579, %v2502
      %2581 = vst.msk [vmem:[#allocation4 + $0x10] sm:$0xff] %vm2579, %v2504
      %2582 = vst.msk [vmem:[#allocation4 + $0x20] sm:$0xff] %vm2579, %v2506
      %2583 = vst.msk [vmem:[#allocation4 + $0x30] sm:$0xff] %vm2579, %v2508
      %2584 = vst.msk [vmem:[#allocation4 + $0x40] sm:$0xff] %vm2579, %v2510
      %2585 = vst.msk [vmem:[#allocation4 + $0x50] sm:$0xff] %vm2579, %v2512
      %2586 = vst.msk [vmem:[#allocation4 + $0x60] sm:$0xff] %vm2579, %v2514
      %2587 = vst.msk [vmem:[#allocation4 + $0x70] sm:$0xff] %vm2579, %v2516
      %2588 = vst.msk [vmem:[#allocation4 + $0x80] sm:$0xff] %vm2579, %v2518
      %2589 = vst.msk [vmem:[#allocation4 + $0x90] sm:$0xff] %vm2579, %v2520
      %2590 = vst.msk [vmem:[#allocation4 + $0xa0] sm:$0xff] %vm2579, %v2522
      %2591 = vst.msk [vmem:[#allocation4 + $0xb0] sm:$0xff] %vm2579, %v2524
      %2592 = vst.msk [vmem:[#allocation4 + $0xc0] sm:$0xff] %vm2579, %v2526
      %2593 = vst.msk [vmem:[#allocation4 + $0xd0] sm:$0xff] %vm2579, %v2528
      %2594 = vst.msk [vmem:[#allocation4 + $0xe0] sm:$0xff] %vm2579, %v2530
      %2595 = vst.msk [vmem:[#allocation4 + $0xf0] sm:$0xff] %vm2579, %v2532
      %2596 = vst.msk [vmem:[#allocation4 + $0x100] sm:$0xff] %vm2579, %v2534
      %2597 = vst.msk [vmem:[#allocation4 + $0x110] sm:$0xff] %vm2579, %v2536
      %2598 = vst.msk [vmem:[#allocation4 + $0x120] sm:$0xff] %vm2579, %v2538
      %2599 = vst.msk [vmem:[#allocation4 + $0x130] sm:$0xff] %vm2579, %v2540
      %2600 = vst.msk [vmem:[#allocation4 + $0x140] sm:$0xff] %vm2579, %v2542
      %2601 = vst.msk [vmem:[#allocation4 + $0x150] sm:$0xff] %vm2579, %v2544
      %2602 = vst.msk [vmem:[#allocation4 + $0x160] sm:$0xff] %vm2579, %v2546
      %2603 = vst.msk [vmem:[#allocation4 + $0x170] sm:$0xff] %vm2579, %v2548
      %2604 = vst.msk [vmem:[#allocation4 + $0x180] sm:$0xff] %vm2579, %v2550
      %2605 = vst.msk [vmem:[#allocation4 + $0x190] sm:$0xff] %vm2579, %v2552
      %v2606 = vld [vmem:[#allocation4] sm:$0xff]
      %v2607 = vld [vmem:[#allocation4 + $0x10] sm:$0xff]
      %v2608 = vld [vmem:[#allocation4 + $0x20] sm:$0xff]
      %v2609 = vld [vmem:[#allocation4 + $0x30] sm:$0xff]
      %v2610 = vld [vmem:[#allocation4 + $0x40] sm:$0xff]
      %v2611 = vld [vmem:[#allocation4 + $0x50] sm:$0xff]
      %v2612 = vld [vmem:[#allocation4 + $0x60] sm:$0xff]
      %v2613 = vld [vmem:[#allocation4 + $0x70] sm:$0xff]
      %v2614 = vld [vmem:[#allocation4 + $0x80] sm:$0xff]
      %v2615 = vld [vmem:[#allocation4 + $0x90] sm:$0xff]
      %v2616 = vld [vmem:[#allocation4 + $0xa0] sm:$0xff]
      %v2617 = vld [vmem:[#allocation4 + $0xb0] sm:$0xff]
      %v2618 = vld [vmem:[#allocation4 + $0xc0] sm:$0xff]
      %v2619 = vld [vmem:[#allocation4 + $0xd0] sm:$0xff]
      %v2620 = vld [vmem:[#allocation4 + $0xe0] sm:$0xff]
      %v2621 = vld [vmem:[#allocation4 + $0xf0] sm:$0xff]
      %v2622 = vld [vmem:[#allocation4 + $0x100] sm:$0xff]
      %v2623 = vld [vmem:[#allocation4 + $0x110] sm:$0xff]
      %v2624 = vld [vmem:[#allocation4 + $0x120] sm:$0xff]
      %v2625 = vld [vmem:[#allocation4 + $0x130] sm:$0xff]
      %v2626 = vld [vmem:[#allocation4 + $0x140] sm:$0xff]
      %v2627 = vld [vmem:[#allocation4 + $0x150] sm:$0xff]
      %v2628 = vld [vmem:[#allocation4 + $0x160] sm:$0xff]
      %v2629 = vld [vmem:[#allocation4 + $0x170] sm:$0xff]
      %v2630 = vld [vmem:[#allocation4 + $0x180] sm:$0xff]
      %v2631 = vld [vmem:[#allocation4 + $0x190] sm:$0xff]
      %v2632 = vld [vmem:[%s1] sm:$0xff]
      %v2633 = vld [vmem:[%s1 + $0x8] sm:$0xff]
      %v2634 = vld [vmem:[%s1 + $0x10] sm:$0xff]
      %v2635 = vld [vmem:[%s1 + $0x18] sm:$0xff]
      %v2636 = vld [vmem:[%s1 + $0x20] sm:$0xff]
      %v2637 = vld [vmem:[%s1 + $0x28] sm:$0xff]
      %v2638 = vld [vmem:[%s1 + $0x30] sm:$0xff]
      %v2639 = vld [vmem:[%s1 + $0x38] sm:$0xff]
      %v2640 = vld [vmem:[%s1 + $0x40] sm:$0xff]
      %v2641 = vld [vmem:[%s2] sm:$0x1]
      %v2643 = vlaneseq
      %v2644 = vshrl.u32 %v2643, 7
      %v2645 = vsub.s32 0, %v2644
      %v2646 = vrot.slane %v2641, %v2645
      %vm2648 = vcmask 588800
      %v2650 = vsel %vm2648, %v2606, 0
      %v2653 = vsel %vm2648, %v2607, 0
      %v2656 = vsel %vm2648, %v2608, 0
      %v2659 = vsel %vm2648, %v2609, 0
      %v2662 = vsel %vm2648, %v2610, 0
      %v2665 = vsel %vm2648, %v2611, 0
      %v2668 = vsel %vm2648, %v2612, 0
      %v2671 = vsel %vm2648, %v2613, 0
      %v2674 = vsel %vm2648, %v2614, 0
      %v2677 = vsel %vm2648, %v2615, 0
      %v2680 = vsel %vm2648, %v2616, 0
      %v2683 = vsel %vm2648, %v2617, 0
      %v2686 = vsel %vm2648, %v2618, 0
      %v2689 = vsel %vm2648, %v2619, 0
      %v2692 = vsel %vm2648, %v2620, 0
      %v2695 = vsel %vm2648, %v2621, 0
      %v2698 = vsel %vm2648, %v2622, 0
      %v2701 = vsel %vm2648, %v2623, 0
      %v2704 = vsel %vm2648, %v2624, 0
      %v2707 = vsel %vm2648, %v2625, 0
      %v2710 = vsel %vm2648, %v2626, 0
      %v2713 = vsel %vm2648, %v2627, 0
      %v2716 = vsel %vm2648, %v2628, 0
      %v2719 = vsel %vm2648, %v2629, 0
      %v2722 = vsel %vm2648, %v2630, 0
      %v2725 = vsel %vm2648, %v2631, 0
      %2727 = vmatprep.subr.mxu0 0.0
      %2728 = vmatpush1.msra.mxu0 %v2632
      %2729 = vmatprep.subr.mxu0 0.0
      %2730 = vmatpush1.msra.mxu0 %v2633
      %2731 = vmatprep.subr.mxu0 0.0
      %2732 = vmatpush1.msra.mxu0 %v2634
      %2733 = vmatprep.subr.mxu0 0.0
      %2734 = vmatpush1.msra.mxu0 %v2635
      %2735 = vmatprep.subr.mxu0 0.0
      %2736 = vmatpush1.msra.mxu0 %v2636
      %2737 = vmatprep.subr.mxu0 0.0
      %2738 = vmatpush1.msra.mxu0 %v2637
      %2739 = vmatprep.subr.mxu0 0.0
      %2740 = vmatpush1.msra.mxu0 %v2638
      %2741 = vmatprep.subr.mxu0 0.0
      %2742 = vmatpush1.msra.mxu0 %v2639
      %2743 = vmatprep.subr.mxu0 0.0
      %2744 = vmatpush1.msra.mxu0 %v2640
      %2745 = vmatprep.subr.mxu0 0.0
      %2746 = vmatpush1.msra.mxu0 0.0
      %2747 = vmatprep.subr.mxu0 0.0
      %2748 = vmatpush1.msra.mxu0 0.0
      %2749 = vmatprep.subr.mxu0 0.0
      %2750 = vmatpush1.msra.mxu0 0.0
      %2751 = vmatprep.subr.mxu0 0.0
      %2752 = vmatpush1.msra.mxu0 0.0
      %2753 = vmatprep.subr.mxu0 0.0
      %2754 = vmatpush1.msra.mxu0 0.0
      %2755 = vmatprep.subr.mxu0 0.0
      %2756 = vmatpush1.msra.mxu0 0.0
      %2757 = vmatprep.subr.mxu0 0.0
      %2758 = vmatpush1.msra.mxu0 0.0
      %2759 = vmatprep.subr.mxu0 0.0
      %2760 = vmatpush1.msra.mxu0 0.0
      %2761 = vmatprep.subr.mxu0 0.0
      %2762 = vmatpush1.msra.mxu0 0.0
      %2763 = vmatprep.subr.mxu0 0.0
      %2764 = vmatpush1.msra.mxu0 0.0
      %2765 = vmatprep.subr.mxu0 0.0
      %2766 = vmatpush1.msra.mxu0 0.0
      %2767 = vmatprep.subr.mxu0 0.0
      %2768 = vmatpush1.msra.mxu0 0.0
      %2769 = vmatprep.subr.mxu0 0.0
      %2770 = vmatpush1.msra.mxu0 0.0
      %2771 = vmatprep.subr.mxu0 0.0
      %2772 = vmatpush1.msra.mxu0 0.0
      %2773 = vmatprep.subr.mxu0 0.0
      %2774 = vmatpush1.msra.mxu0 0.0
      %2775 = vmatprep.subr.mxu0 0.0
      %2776 = vmatpush1.msra.mxu0 0.0
      %2777 = vmatprep.subr.mxu0 0.0
      %2778 = vmatpush1.msra.mxu0 0.0
      %2779 = vmatprep.subr.mxu0 0.0
      %2780 = vmatpush1.msra.mxu0 0.0
      %2781 = vmatprep.subr.mxu0 0.0
      %2782 = vmatpush1.msra.mxu0 0.0
      %2783 = vmatprep.subr.mxu0 0.0
      %2784 = vmatpush1.msra.mxu0 0.0
      %2785 = vmatprep.subr.mxu0 0.0
      %2786 = vmatpush1.msra.mxu0 0.0
      %2787 = vmatprep.subr.mxu0 0.0
      %2788 = vmatpush1.msra.mxu0 0.0
      %2789 = vmatprep.subr.mxu0 0.0
      %2790 = vmatpush1.msra.mxu0 0.0
      %2791 = vmatprep.mubr.f32.mxu0 0.0
      %2792 = vmatmul.mubr.f32.gmra.mrb[0].mxu0 %v2650
      %v2793 = vpop.f32.mrb[0].mxu0
      %v2794 = vadd.f32 %v2646, %v2793
      %v2795 = vpop.f32.mrb[0].mxu0
      %2796 = vmatprep.mubr.f32.mxu0 0.0
      %2797 = vmatmul.mubr.f32.gmra.mrb[0].mxu0 %v2653
      %v2798 = vpop.f32.mrb[0].mxu0
      %v2799 = vadd.f32 %v2646, %v2798
      %v2800 = vpop.f32.mrb[0].mxu0
      %2801 = vmatprep.mubr.f32.mxu0 0.0
      %2802 = vmatmul.mubr.f32.gmra.mrb[0].mxu0 %v2656
      %v2803 = vpop.f32.mrb[0].mxu0
      %v2804 = vadd.f32 %v2646, %v2803
      %v2805 = vpop.f32.mrb[0].mxu0
      %2806 = vmatprep.mubr.f32.mxu0 0.0
      %2807 = vmatmul.mubr.f32.gmra.mrb[0].mxu0 %v2659
      %v2808 = vpop.f32.mrb[0].mxu0
      %v2809 = vadd.f32 %v2646, %v2808
      %v2810 = vpop.f32.mrb[0].mxu0
      %2811 = vmatprep.mubr.f32.mxu0 0.0
      %2812 = vmatmul.mubr.f32.gmra.mrb[0].mxu0 %v2662
      %v2813 = vpop.f32.mrb[0].mxu0
      %v2814 = vadd.f32 %v2646, %v2813
      %v2815 = vpop.f32.mrb[0].mxu0
      %2816 = vmatprep.mubr.f32.mxu0 0.0
      %2817 = vmatmul.mubr.f32.gmra.mrb[0].mxu0 %v2665
      %v2818 = vpop.f32.mrb[0].mxu0
      %v2819 = vadd.f32 %v2646, %v2818
      %v2820 = vpop.f32.mrb[0].mxu0
      %2821 = vmatprep.mubr.f32.mxu0 0.0
      %2822 = vmatmul.mubr.f32.gmra.mrb[0].mxu0 %v2668
      %v2823 = vpop.f32.mrb[0].mxu0
      %v2824 = vadd.f32 %v2646, %v2823
      %v2825 = vpop.f32.mrb[0].mxu0
      %2826 = vmatprep.mubr.f32.mxu0 0.0
      %2827 = vmatmul.mubr.f32.gmra.mrb[0].mxu0 %v2671
      %v2828 = vpop.f32.mrb[0].mxu0
      %v2829 = vadd.f32 %v2646, %v2828
      %v2830 = vpop.f32.mrb[0].mxu0
      %2831 = vmatprep.mubr.f32.mxu0 0.0
      %2832 = vmatmul.mubr.f32.gmra.mrb[0].mxu0 %v2674
      %v2833 = vpop.f32.mrb[0].mxu0
      %v2834 = vadd.f32 %v2646, %v2833
      %v2835 = vpop.f32.mrb[0].mxu0
      %2836 = vmatprep.mubr.f32.mxu0 0.0
      %2837 = vmatmul.mubr.f32.gmra.mrb[0].mxu0 %v2677
      %v2838 = vpop.f32.mrb[0].mxu0
      %v2839 = vadd.f32 %v2646, %v2838
      %v2840 = vpop.f32.mrb[0].mxu0
      %2841 = vmatprep.mubr.f32.mxu0 0.0
      %2842 = vmatmul.mubr.f32.gmra.mrb[0].mxu0 %v2680
      %v2843 = vpop.f32.mrb[0].mxu0
      %v2844 = vadd.f32 %v2646, %v2843
      %v2845 = vpop.f32.mrb[0].mxu0
      %2846 = vmatprep.mubr.f32.mxu0 0.0
      %2847 = vmatmul.mubr.f32.gmra.mrb[0].mxu0 %v2683
      %v2848 = vpop.f32.mrb[0].mxu0
      %v2849 = vadd.f32 %v2646, %v2848
      %v2850 = vpop.f32.mrb[0].mxu0
      %2851 = vmatprep.mubr.f32.mxu0 0.0
      %2852 = vmatmul.mubr.f32.gmra.mrb[0].mxu0 %v2686
      %v2853 = vpop.f32.mrb[0].mxu0
      %v2854 = vadd.f32 %v2646, %v2853
      %v2855 = vpop.f32.mrb[0].mxu0
      %2856 = vmatprep.mubr.f32.mxu0 0.0
      %2857 = vmatmul.mubr.f32.gmra.mrb[0].mxu0 %v2689
      %v2858 = vpop.f32.mrb[0].mxu0
      %v2859 = vadd.f32 %v2646, %v2858
      %v2860 = vpop.f32.mrb[0].mxu0
      %2861 = vmatprep.mubr.f32.mxu0 0.0
      %2862 = vmatmul.mubr.f32.gmra.mrb[0].mxu0 %v2692
      %v2863 = vpop.f32.mrb[0].mxu0
      %v2864 = vadd.f32 %v2646, %v2863
      %v2865 = vpop.f32.mrb[0].mxu0
      %2866 = vmatprep.mubr.f32.mxu0 0.0
      %2867 = vmatmul.mubr.f32.gmra.mrb[0].mxu0 %v2695
      %v2868 = vpop.f32.mrb[0].mxu0
      %v2869 = vadd.f32 %v2646, %v2868
      %v2870 = vpop.f32.mrb[0].mxu0
      %2871 = vmatprep.mubr.f32.mxu0 0.0
      %2872 = vmatmul.mubr.f32.gmra.mrb[0].mxu0 %v2698
      %v2873 = vpop.f32.mrb[0].mxu0
      %v2874 = vadd.f32 %v2646, %v2873
      %v2875 = vpop.f32.mrb[0].mxu0
      %2876 = vmatprep.mubr.f32.mxu0 0.0
      %2877 = vmatmul.mubr.f32.gmra.mrb[0].mxu0 %v2701
      %v2878 = vpop.f32.mrb[0].mxu0
      %v2879 = vadd.f32 %v2646, %v2878
      %v2880 = vpop.f32.mrb[0].mxu0
      %2881 = vmatprep.mubr.f32.mxu0 0.0
      %2882 = vmatmul.mubr.f32.gmra.mrb[0].mxu0 %v2704
      %v2883 = vpop.f32.mrb[0].mxu0
      %v2884 = vadd.f32 %v2646, %v2883
      %v2885 = vpop.f32.mrb[0].mxu0
      %2886 = vmatprep.mubr.f32.mxu0 0.0
      %2887 = vmatmul.mubr.f32.gmra.mrb[0].mxu0 %v2707
      %v2888 = vpop.f32.mrb[0].mxu0
      %v2889 = vadd.f32 %v2646, %v2888
      %v2890 = vpop.f32.mrb[0].mxu0
      %2891 = vmatprep.mubr.f32.mxu0 0.0
      %2892 = vmatmul.mubr.f32.gmra.mrb[0].mxu0 %v2710
      %v2893 = vpop.f32.mrb[0].mxu0
      %v2894 = vadd.f32 %v2646, %v2893
      %v2895 = vpop.f32.mrb[0].mxu0
      %2896 = vmatprep.mubr.f32.mxu0 0.0
      %2897 = vmatmul.mubr.f32.gmra.mrb[0].mxu0 %v2713
      %v2898 = vpop.f32.mrb[0].mxu0
      %v2899 = vadd.f32 %v2646, %v2898
      %v2900 = vpop.f32.mrb[0].mxu0
      %2901 = vmatprep.mubr.f32.mxu0 0.0
      %2902 = vmatmul.mubr.f32.gmra.mrb[0].mxu0 %v2716
      %v2903 = vpop.f32.mrb[0].mxu0
      %v2904 = vadd.f32 %v2646, %v2903
      %v2905 = vpop.f32.mrb[0].mxu0
      %2906 = vmatprep.mubr.f32.mxu0 0.0
      %2907 = vmatmul.mubr.f32.gmra.mrb[0].mxu0 %v2719
      %v2908 = vpop.f32.mrb[0].mxu0
      %v2909 = vadd.f32 %v2646, %v2908
      %v2910 = vpop.f32.mrb[0].mxu0
      %2911 = vmatprep.mubr.f32.mxu0 0.0
      %2912 = vmatmul.mubr.f32.gmra.mrb[0].mxu0 %v2722
      %v2913 = vpop.f32.mrb[0].mxu0
      %v2914 = vadd.f32 %v2646, %v2913
      %v2915 = vpop.f32.mrb[0].mxu0
      %2916 = vmatprep.mubr.f32.mxu0 0.0
      %2917 = vmatmul.mubr.f32.gmra.mrb[0].mxu0 %v2725
      %v2918 = vpop.f32.mrb[0].mxu0
      %v2919 = vadd.f32 %v2646, %v2918
      %v2920 = vpop.f32.mrb[0].mxu0
      %2921 = vdwg.mxu0
      %v2922 = vmax.f32 %v2794, 0.0
      %v2923 = vmax.f32 %v2799, 0.0
      %v2924 = vmax.f32 %v2804, 0.0
      %v2925 = vmax.f32 %v2809, 0.0
      %v2926 = vmax.f32 %v2814, 0.0
      %v2927 = vmax.f32 %v2819, 0.0
      %v2928 = vmax.f32 %v2824, 0.0
      %v2929 = vmax.f32 %v2829, 0.0
      %v2930 = vmax.f32 %v2834, 0.0
      %v2931 = vmax.f32 %v2839, 0.0
      %v2932 = vmax.f32 %v2844, 0.0
      %v2933 = vmax.f32 %v2849, 0.0
      %v2934 = vmax.f32 %v2854, 0.0
      %v2935 = vmax.f32 %v2859, 0.0
      %v2936 = vmax.f32 %v2864, 0.0
      %v2937 = vmax.f32 %v2869, 0.0
      %v2938 = vmax.f32 %v2874, 0.0
      %v2939 = vmax.f32 %v2879, 0.0
      %v2940 = vmax.f32 %v2884, 0.0
      %v2941 = vmax.f32 %v2889, 0.0
      %v2942 = vmax.f32 %v2894, 0.0
      %v2943 = vmax.f32 %v2899, 0.0
      %v2944 = vmax.f32 %v2904, 0.0
      %v2945 = vmax.f32 %v2909, 0.0
      %v2946 = vmax.f32 %v2914, 0.0
      %v2947 = vmax.f32 %v2919, 0.0
      %v2948 = vsel %vm1271, %v2922, 0.0
      %v2949 = vsel %vm1272, %v2923, 0.0
      %v2950 = vsel %vm1273, %v2924, 0.0
      %v2951 = vsel %vm1274, %v2925, 0.0
      %v2952 = vsel %vm1275, %v2926, 0.0
      %v2953 = vsel %vm1276, %v2927, 0.0
      %v2954 = vsel %vm1277, %v2928, 0.0
      %v2955 = vsel %vm1278, %v2929, 0.0
      %v2956 = vsel %vm1279, %v2930, 0.0
      %v2957 = vsel %vm1280, %v2931, 0.0
      %v2958 = vsel %vm1281, %v2932, 0.0
      %v2959 = vsel %vm1282, %v2933, 0.0
      %v2960 = vsel %vm1283, %v2934, 0.0
      %v2961 = vsel %vm1284, %v2935, 0.0
      %v2962 = vsel %vm1285, %v2936, 0.0
      %v2963 = vsel %vm1286, %v2937, 0.0
      %v2964 = vsel %vm1287, %v2938, 0.0
      %v2965 = vsel %vm1288, %v2939, 0.0
      %v2966 = vsel %vm1289, %v2940, 0.0
      %v2967 = vsel %vm1290, %v2941, 0.0
      %v2968 = vsel %vm1291, %v2942, 0.0
      %v2969 = vsel %vm1292, %v2943, 0.0
      %v2970 = vsel %vm1293, %v2944, 0.0
      %v2971 = vsel %vm1294, %v2945, 0.0
      %v2972 = vsel %vm1295, %v2946, 0.0
      %v2973 = vsel %vm1296, %v2947, 0.0
      %2974 = vst.msk [vmem:[#allocation2 + $0xb] sm:$0xff] %vm282, %v2948
      %2975 = vst.msk [vmem:[#allocation2 + $0x13] sm:$0xff] %vm282, %v2949
      %2976 = vst.msk [vmem:[#allocation2 + $0x1b] sm:$0xff] %vm282, %v2950
      %2977 = vst.msk [vmem:[#allocation2 + $0x23] sm:$0xff] %vm282, %v2951
      %2978 = vst.msk [vmem:[#allocation2 + $0x2b] sm:$0xff] %vm282, %v2952
      %2979 = vst.msk [vmem:[#allocation2 + $0x33] sm:$0xff] %vm282, %v2953
      %2980 = vst.msk [vmem:[#allocation2 + $0x3b] sm:$0xff] %vm282, %v2954
      %2981 = vst.msk [vmem:[#allocation2 + $0x43] sm:$0xff] %vm282, %v2955
      %2982 = vst.msk [vmem:[#allocation2 + $0x4b] sm:$0xff] %vm282, %v2956
      %2983 = vst.msk [vmem:[#allocation2 + $0x53] sm:$0xff] %vm282, %v2957
      %2984 = vst.msk [vmem:[#allocation2 + $0x5b] sm:$0xff] %vm282, %v2958
      %2985 = vst.msk [vmem:[#allocation2 + $0x63] sm:$0xff] %vm282, %v2959
      %2986 = vst.msk [vmem:[#allocation2 + $0x6b] sm:$0xff] %vm282, %v2960
      %2987 = vst.msk [vmem:[#allocation2 + $0x73] sm:$0xff] %vm282, %v2961
      %2988 = vst.msk [vmem:[#allocation2 + $0x7b] sm:$0xff] %vm282, %v2962
      %2989 = vst.msk [vmem:[#allocation2 + $0x83] sm:$0xff] %vm282, %v2963
      %2990 = vst.msk [vmem:[#allocation2 + $0x8b] sm:$0xff] %vm282, %v2964
      %2991 = vst.msk [vmem:[#allocation2 + $0x93] sm:$0xff] %vm282, %v2965
      %2992 = vst.msk [vmem:[#allocation2 + $0x9b] sm:$0xff] %vm282, %v2966
      %2993 = vst.msk [vmem:[#allocation2 + $0xa3] sm:$0xff] %vm282, %v2967
      %2994 = vst.msk [vmem:[#allocation2 + $0xab] sm:$0xff] %vm282, %v2968
      %2995 = vst.msk [vmem:[#allocation2 + $0xb3] sm:$0xff] %vm282, %v2969
      %2996 = vst.msk [vmem:[#allocation2 + $0xbb] sm:$0xff] %vm282, %v2970
      %2997 = vst.msk [vmem:[#allocation2 + $0xc3] sm:$0xff] %vm282, %v2971
      %2998 = vst.msk [vmem:[#allocation2 + $0xcb] sm:$0xff] %vm282, %v2972
      %2999 = vst.msk [vmem:[#allocation2 + $0xd3] sm:$0xff] %vm282, %v2973
      %v3000 = vld [vmem:[#allocation2] sm:$0xff]
      %v3001 = vld [vmem:[#allocation2 + $0x8] sm:$0xff]
      %v3002 = vld [vmem:[#allocation2 + $0x10] sm:$0xff]
      %v3003 = vld [vmem:[#allocation2 + $0x18] sm:$0xff]
      %v3004 = vld [vmem:[#allocation2 + $0x20] sm:$0xff]
      %v3005 = vld [vmem:[#allocation2 + $0x28] sm:$0xff]
      %v3006 = vld [vmem:[#allocation2 + $0x30] sm:$0xff]
      %v3007 = vld [vmem:[#allocation2 + $0x38] sm:$0xff]
      %v3008 = vld [vmem:[#allocation2 + $0x40] sm:$0xff]
      %v3009 = vld [vmem:[#allocation2 + $0x48] sm:$0xff]
      %v3010 = vld [vmem:[#allocation2 + $0x50] sm:$0xff]
      %v3011 = vld [vmem:[#allocation2 + $0x58] sm:$0xff]
      %v3012 = vld [vmem:[#allocation2 + $0x60] sm:$0xff]
      %v3013 = vld [vmem:[#allocation2 + $0x68] sm:$0xff]
      %v3014 = vld [vmem:[#allocation2 + $0x70] sm:$0xff]
      %v3015 = vld [vmem:[#allocation2 + $0x78] sm:$0xff]
      %v3016 = vld [vmem:[#allocation2 + $0x80] sm:$0xff]
      %v3017 = vld [vmem:[#allocation2 + $0x88] sm:$0xff]
      %v3018 = vld [vmem:[#allocation2 + $0x90] sm:$0xff]
      %v3019 = vld [vmem:[#allocation2 + $0x98] sm:$0xff]
      %v3020 = vld [vmem:[#allocation2 + $0xa0] sm:$0xff]
      %v3021 = vld [vmem:[#allocation2 + $0xa8] sm:$0xff]
      %v3022 = vld [vmem:[#allocation2 + $0xb0] sm:$0xff]
      %v3023 = vld [vmem:[#allocation2 + $0xb8] sm:$0xff]
      %v3024 = vld [vmem:[#allocation2 + $0xc0] sm:$0xff]
      %v3025 = vld [vmem:[#allocation2 + $0xc8] sm:$0xff]
      %3026 = vst.msk [vmem:[#allocation4] sm:$0xff] %vm282, %v3000
      %3027 = vst.msk [vmem:[#allocation4 + $0x10] sm:$0xff] %vm282, %v3001
      %3028 = vst.msk [vmem:[#allocation4 + $0x20] sm:$0xff] %vm282, %v3002
      %3029 = vst.msk [vmem:[#allocation4 + $0x30] sm:$0xff] %vm282, %v3003
      %3030 = vst.msk [vmem:[#allocation4 + $0x40] sm:$0xff] %vm282, %v3004
      %3031 = vst.msk [vmem:[#allocation4 + $0x50] sm:$0xff] %vm282, %v3005
      %3032 = vst.msk [vmem:[#allocation4 + $0x60] sm:$0xff] %vm282, %v3006
      %3033 = vst.msk [vmem:[#allocation4 + $0x70] sm:$0xff] %vm282, %v3007
      %3034 = vst.msk [vmem:[#allocation4 + $0x80] sm:$0xff] %vm282, %v3008
      %3035 = vst.msk [vmem:[#allocation4 + $0x90] sm:$0xff] %vm282, %v3009
      %3036 = vst.msk [vmem:[#allocation4 + $0xa0] sm:$0xff] %vm282, %v3010
      %3037 = vst.msk [vmem:[#allocation4 + $0xb0] sm:$0xff] %vm282, %v3011
      %3038 = vst.msk [vmem:[#allocation4 + $0xc0] sm:$0xff] %vm282, %v3012
      %3039 = vst.msk [vmem:[#allocation4 + $0xd0] sm:$0xff] %vm282, %v3013
      %3040 = vst.msk [vmem:[#allocation4 + $0xe0] sm:$0xff] %vm282, %v3014
      %3041 = vst.msk [vmem:[#allocation4 + $0xf0] sm:$0xff] %vm282, %v3015
      %3042 = vst.msk [vmem:[#allocation4 + $0x100] sm:$0xff] %vm282, %v3016
      %3043 = vst.msk [vmem:[#allocation4 + $0x110] sm:$0xff] %vm282, %v3017
      %3044 = vst.msk [vmem:[#allocation4 + $0x120] sm:$0xff] %vm282, %v3018
      %3045 = vst.msk [vmem:[#allocation4 + $0x130] sm:$0xff] %vm282, %v3019
      %3046 = vst.msk [vmem:[#allocation4 + $0x140] sm:$0xff] %vm282, %v3020
      %3047 = vst.msk [vmem:[#allocation4 + $0x150] sm:$0xff] %vm282, %v3021
      %3048 = vst.msk [vmem:[#allocation4 + $0x160] sm:$0xff] %vm282, %v3022
      %3049 = vst.msk [vmem:[#allocation4 + $0x170] sm:$0xff] %vm282, %v3023
      %3050 = vst.msk [vmem:[#allocation4 + $0x180] sm:$0xff] %vm282, %v3024
      %3051 = vst.msk [vmem:[#allocation4 + $0x190] sm:$0xff] %vm282, %v3025
      %v3052 = vld [vmem:[#allocation2 + $0x1] sm:$0xff]
      %v3053 = vld [vmem:[#allocation2 + $0x9] sm:$0xff]
      %v3054 = vld [vmem:[#allocation2 + $0x11] sm:$0xff]
      %v3055 = vld [vmem:[#allocation2 + $0x19] sm:$0xff]
      %v3056 = vld [vmem:[#allocation2 + $0x21] sm:$0xff]
      %v3057 = vld [vmem:[#allocation2 + $0x29] sm:$0xff]
      %v3058 = vld [vmem:[#allocation2 + $0x31] sm:$0xff]
      %v3059 = vld [vmem:[#allocation2 + $0x39] sm:$0xff]
      %v3060 = vld [vmem:[#allocation2 + $0x41] sm:$0xff]
      %v3061 = vld [vmem:[#allocation2 + $0x49] sm:$0xff]
      %v3062 = vld [vmem:[#allocation2 + $0x51] sm:$0xff]
      %v3063 = vld [vmem:[#allocation2 + $0x59] sm:$0xff]
      %v3064 = vld [vmem:[#allocation2 + $0x61] sm:$0xff]
      %v3065 = vld [vmem:[#allocation2 + $0x69] sm:$0xff]
      %v3066 = vld [vmem:[#allocation2 + $0x71] sm:$0xff]
      %v3067 = vld [vmem:[#allocation2 + $0x79] sm:$0xff]
      %v3068 = vld [vmem:[#allocation2 + $0x81] sm:$0xff]
      %v3069 = vld [vmem:[#allocation2 + $0x89] sm:$0xff]
      %v3070 = vld [vmem:[#allocation2 + $0x91] sm:$0xff]
      %v3071 = vld [vmem:[#allocation2 + $0x99] sm:$0xff]
      %v3072 = vld [vmem:[#allocation2 + $0xa1] sm:$0xff]
      %v3073 = vld [vmem:[#allocation2 + $0xa9] sm:$0xff]
      %v3074 = vld [vmem:[#allocation2 + $0xb1] sm:$0xff]
      %v3075 = vld [vmem:[#allocation2 + $0xb9] sm:$0xff]
      %v3076 = vld [vmem:[#allocation2 + $0xc1] sm:$0xff]
      %v3077 = vld [vmem:[#allocation2 + $0xc9] sm:$0xff]
      %3104 = vrot.lane.b32.xlu0 %v3052, 16
      %v3105 = vpop.permute.xlu0 %3104
      %3106 = vrot.lane.b32.xlu0 %v3053, 16
      %v3107 = vpop.permute.xlu0 %3106
      %3108 = vrot.lane.b32.xlu0 %v3054, 16
      %v3109 = vpop.permute.xlu0 %3108
      %3110 = vrot.lane.b32.xlu0 %v3055, 16
      %v3111 = vpop.permute.xlu0 %3110
      %3112 = vrot.lane.b32.xlu0 %v3056, 16
      %v3113 = vpop.permute.xlu0 %3112
      %3114 = vrot.lane.b32.xlu0 %v3057, 16
      %v3115 = vpop.permute.xlu0 %3114
      %3116 = vrot.lane.b32.xlu0 %v3058, 16
      %v3117 = vpop.permute.xlu0 %3116
      %3118 = vrot.lane.b32.xlu0 %v3059, 16
      %v3119 = vpop.permute.xlu0 %3118
      %3120 = vrot.lane.b32.xlu0 %v3060, 16
      %v3121 = vpop.permute.xlu0 %3120
      %3122 = vrot.lane.b32.xlu0 %v3061, 16
      %v3123 = vpop.permute.xlu0 %3122
      %3124 = vrot.lane.b32.xlu0 %v3062, 16
      %v3125 = vpop.permute.xlu0 %3124
      %3126 = vrot.lane.b32.xlu0 %v3063, 16
      %v3127 = vpop.permute.xlu0 %3126
      %3128 = vrot.lane.b32.xlu0 %v3064, 16
      %v3129 = vpop.permute.xlu0 %3128
      %3130 = vrot.lane.b32.xlu0 %v3065, 16
      %v3131 = vpop.permute.xlu0 %3130
      %3132 = vrot.lane.b32.xlu0 %v3066, 16
      %v3133 = vpop.permute.xlu0 %3132
      %3134 = vrot.lane.b32.xlu0 %v3067, 16
      %v3135 = vpop.permute.xlu0 %3134
      %3136 = vrot.lane.b32.xlu0 %v3068, 16
      %v3137 = vpop.permute.xlu0 %3136
      %3138 = vrot.lane.b32.xlu0 %v3069, 16
      %v3139 = vpop.permute.xlu0 %3138
      %3140 = vrot.lane.b32.xlu0 %v3070, 16
      %v3141 = vpop.permute.xlu0 %3140
      %3142 = vrot.lane.b32.xlu0 %v3071, 16
      %v3143 = vpop.permute.xlu0 %3142
      %3144 = vrot.lane.b32.xlu0 %v3072, 16
      %v3145 = vpop.permute.xlu0 %3144
      %3146 = vrot.lane.b32.xlu0 %v3073, 16
      %v3147 = vpop.permute.xlu0 %3146
      %3148 = vrot.lane.b32.xlu0 %v3074, 16
      %v3149 = vpop.permute.xlu0 %3148
      %3150 = vrot.lane.b32.xlu0 %v3075, 16
      %v3151 = vpop.permute.xlu0 %3150
      %3152 = vrot.lane.b32.xlu0 %v3076, 16
      %v3153 = vpop.permute.xlu0 %3152
      %3154 = vrot.lane.b32.xlu0 %v3077, 16
      %v3155 = vpop.permute.xlu0 %3154
      %vm3182 = vcmask 261248
      %3183 = vst.msk [vmem:[#allocation4] sm:$0xff] %vm3182, %v3105
      %3184 = vst.msk [vmem:[#allocation4 + $0x10] sm:$0xff] %vm3182, %v3107
      %3185 = vst.msk [vmem:[#allocation4 + $0x20] sm:$0xff] %vm3182, %v3109
      %3186 = vst.msk [vmem:[#allocation4 + $0x30] sm:$0xff] %vm3182, %v3111
      %3187 = vst.msk [vmem:[#allocation4 + $0x40] sm:$0xff] %vm3182, %v3113
      %3188 = vst.msk [vmem:[#allocation4 + $0x50] sm:$0xff] %vm3182, %v3115
      %3189 = vst.msk [vmem:[#allocation4 + $0x60] sm:$0xff] %vm3182, %v3117
      %3190 = vst.msk [vmem:[#allocation4 + $0x70] sm:$0xff] %vm3182, %v3119
      %3191 = vst.msk [vmem:[#allocation4 + $0x80] sm:$0xff] %vm3182, %v3121
      %3192 = vst.msk [vmem:[#allocation4 + $0x90] sm:$0xff] %vm3182, %v3123
      %3193 = vst.msk [vmem:[#allocation4 + $0xa0] sm:$0xff] %vm3182, %v3125
      %3194 = vst.msk [vmem:[#allocation4 + $0xb0] sm:$0xff] %vm3182, %v3127
      %3195 = vst.msk [vmem:[#allocation4 + $0xc0] sm:$0xff] %vm3182, %v3129
      %3196 = vst.msk [vmem:[#allocation4 + $0xd0] sm:$0xff] %vm3182, %v3131
      %3197 = vst.msk [vmem:[#allocation4 + $0xe0] sm:$0xff] %vm3182, %v3133
      %3198 = vst.msk [vmem:[#allocation4 + $0xf0] sm:$0xff] %vm3182, %v3135
      %3199 = vst.msk [vmem:[#allocation4 + $0x100] sm:$0xff] %vm3182, %v3137
      %3200 = vst.msk [vmem:[#allocation4 + $0x110] sm:$0xff] %vm3182, %v3139
      %3201 = vst.msk [vmem:[#allocation4 + $0x120] sm:$0xff] %vm3182, %v3141
      %3202 = vst.msk [vmem:[#allocation4 + $0x130] sm:$0xff] %vm3182, %v3143
      %3203 = vst.msk [vmem:[#allocation4 + $0x140] sm:$0xff] %vm3182, %v3145
      %3204 = vst.msk [vmem:[#allocation4 + $0x150] sm:$0xff] %vm3182, %v3147
      %3205 = vst.msk [vmem:[#allocation4 + $0x160] sm:$0xff] %vm3182, %v3149
      %3206 = vst.msk [vmem:[#allocation4 + $0x170] sm:$0xff] %vm3182, %v3151
      %3207 = vst.msk [vmem:[#allocation4 + $0x180] sm:$0xff] %vm3182, %v3153
      %3208 = vst.msk [vmem:[#allocation4 + $0x190] sm:$0xff] %vm3182, %v3155
      %v3209 = vld [vmem:[#allocation2 + $0xa] sm:$0xff]
      %v3210 = vld [vmem:[#allocation2 + $0x12] sm:$0xff]
      %v3211 = vld [vmem:[#allocation2 + $0x1a] sm:$0xff]
      %v3212 = vld [vmem:[#allocation2 + $0x22] sm:$0xff]
      %v3213 = vld [vmem:[#allocation2 + $0x2a] sm:$0xff]
      %v3214 = vld [vmem:[#allocation2 + $0x32] sm:$0xff]
      %v3215 = vld [vmem:[#allocation2 + $0x3a] sm:$0xff]
      %v3216 = vld [vmem:[#allocation2 + $0x42] sm:$0xff]
      %v3217 = vld [vmem:[#allocation2 + $0x4a] sm:$0xff]
      %v3218 = vld [vmem:[#allocation2 + $0x52] sm:$0xff]
      %v3219 = vld [vmem:[#allocation2 + $0x5a] sm:$0xff]
      %v3220 = vld [vmem:[#allocation2 + $0x62] sm:$0xff]
      %v3221 = vld [vmem:[#allocation2 + $0x6a] sm:$0xff]
      %v3222 = vld [vmem:[#allocation2 + $0x72] sm:$0xff]
      %v3223 = vld [vmem:[#allocation2 + $0x7a] sm:$0xff]
      %v3224 = vld [vmem:[#allocation2 + $0x82] sm:$0xff]
      %v3225 = vld [vmem:[#allocation2 + $0x8a] sm:$0xff]
      %v3226 = vld [vmem:[#allocation2 + $0x92] sm:$0xff]
      %v3227 = vld [vmem:[#allocation2 + $0x9a] sm:$0xff]
      %v3228 = vld [vmem:[#allocation2 + $0xa2] sm:$0xff]
      %v3229 = vld [vmem:[#allocation2 + $0xaa] sm:$0xff]
      %v3230 = vld [vmem:[#allocation2 + $0xb2] sm:$0xff]
      %v3231 = vld [vmem:[#allocation2 + $0xba] sm:$0xff]
      %v3232 = vld [vmem:[#allocation2 + $0xc2] sm:$0xff]
      %v3233 = vld [vmem:[#allocation2 + $0xca] sm:$0xff]
      %v3234 = vld [vmem:[#allocation2 + $0xd2] sm:$0xff]
      %3261 = vrot.lane.b32.xlu0 %v3209, 32
      %v3262 = vpop.permute.xlu0 %3261
      %3263 = vrot.lane.b32.xlu0 %v3210, 32
      %v3264 = vpop.permute.xlu0 %3263
      %3265 = vrot.lane.b32.xlu0 %v3211, 32
      %v3266 = vpop.permute.xlu0 %3265
      %3267 = vrot.lane.b32.xlu0 %v3212, 32
      %v3268 = vpop.permute.xlu0 %3267
      %3269 = vrot.lane.b32.xlu0 %v3213, 32
      %v3270 = vpop.permute.xlu0 %3269
      %3271 = vrot.lane.b32.xlu0 %v3214, 32
      %v3272 = vpop.permute.xlu0 %3271
      %3273 = vrot.lane.b32.xlu0 %v3215, 32
      %v3274 = vpop.permute.xlu0 %3273
      %3275 = vrot.lane.b32.xlu0 %v3216, 32
      %v3276 = vpop.permute.xlu0 %3275
      %3277 = vrot.lane.b32.xlu0 %v3217, 32
      %v3278 = vpop.permute.xlu0 %3277
      %3279 = vrot.lane.b32.xlu0 %v3218, 32
      %v3280 = vpop.permute.xlu0 %3279
      %3281 = vrot.lane.b32.xlu0 %v3219, 32
      %v3282 = vpop.permute.xlu0 %3281
      %3283 = vrot.lane.b32.xlu0 %v3220, 32
      %v3284 = vpop.permute.xlu0 %3283
      %3285 = vrot.lane.b32.xlu0 %v3221, 32
      %v3286 = vpop.permute.xlu0 %3285
      %3287 = vrot.lane.b32.xlu0 %v3222, 32
      %v3288 = vpop.permute.xlu0 %3287
      %3289 = vrot.lane.b32.xlu0 %v3223, 32
      %v3290 = vpop.permute.xlu0 %3289
      %3291 = vrot.lane.b32.xlu0 %v3224, 32
      %v3292 = vpop.permute.xlu0 %3291
      %3293 = vrot.lane.b32.xlu0 %v3225, 32
      %v3294 = vpop.permute.xlu0 %3293
      %3295 = vrot.lane.b32.xlu0 %v3226, 32
      %v3296 = vpop.permute.xlu0 %3295
      %3297 = vrot.lane.b32.xlu0 %v3227, 32
      %v3298 = vpop.permute.xlu0 %3297
      %3299 = vrot.lane.b32.xlu0 %v3228, 32
      %v3300 = vpop.permute.xlu0 %3299
      %3301 = vrot.lane.b32.xlu0 %v3229, 32
      %v3302 = vpop.permute.xlu0 %3301
      %3303 = vrot.lane.b32.xlu0 %v3230, 32
      %v3304 = vpop.permute.xlu0 %3303
      %3305 = vrot.lane.b32.xlu0 %v3231, 32
      %v3306 = vpop.permute.xlu0 %3305
      %3307 = vrot.lane.b32.xlu0 %v3232, 32
      %v3308 = vpop.permute.xlu0 %3307
      %3309 = vrot.lane.b32.xlu0 %v3233, 32
      %v3310 = vpop.permute.xlu0 %3309
      %3311 = vrot.lane.b32.xlu0 %v3234, 32
      %v3312 = vpop.permute.xlu0 %3311
      %vm3339 = vcmask 392448
      %3340 = vst.msk [vmem:[#allocation4] sm:$0xff] %vm3339, %v3262
      %3341 = vst.msk [vmem:[#allocation4 + $0x10] sm:$0xff] %vm3339, %v3264
      %3342 = vst.msk [vmem:[#allocation4 + $0x20] sm:$0xff] %vm3339, %v3266
      %3343 = vst.msk [vmem:[#allocation4 + $0x30] sm:$0xff] %vm3339, %v3268
      %3344 = vst.msk [vmem:[#allocation4 + $0x40] sm:$0xff] %vm3339, %v3270
      %3345 = vst.msk [vmem:[#allocation4 + $0x50] sm:$0xff] %vm3339, %v3272
      %3346 = vst.msk [vmem:[#allocation4 + $0x60] sm:$0xff] %vm3339, %v3274
      %3347 = vst.msk [vmem:[#allocation4 + $0x70] sm:$0xff] %vm3339, %v3276
      %3348 = vst.msk [vmem:[#allocation4 + $0x80] sm:$0xff] %vm3339, %v3278
      %3349 = vst.msk [vmem:[#allocation4 + $0x90] sm:$0xff] %vm3339, %v3280
      %3350 = vst.msk [vmem:[#allocation4 + $0xa0] sm:$0xff] %vm3339, %v3282
      %3351 = vst.msk [vmem:[#allocation4 + $0xb0] sm:$0xff] %vm3339, %v3284
      %3352 = vst.msk [vmem:[#allocation4 + $0xc0] sm:$0xff] %vm3339, %v3286
      %3353 = vst.msk [vmem:[#allocation4 + $0xd0] sm:$0xff] %vm3339, %v3288
      %3354 = vst.msk [vmem:[#allocation4 + $0xe0] sm:$0xff] %vm3339, %v3290
      %3355 = vst.msk [vmem:[#allocation4 + $0xf0] sm:$0xff] %vm3339, %v3292
      %3356 = vst.msk [vmem:[#allocation4 + $0x100] sm:$0xff] %vm3339, %v3294
      %3357 = vst.msk [vmem:[#allocation4 + $0x110] sm:$0xff] %vm3339, %v3296
      %3358 = vst.msk [vmem:[#allocation4 + $0x120] sm:$0xff] %vm3339, %v3298
      %3359 = vst.msk [vmem:[#allocation4 + $0x130] sm:$0xff] %vm3339, %v3300
      %3360 = vst.msk [vmem:[#allocation4 + $0x140] sm:$0xff] %vm3339, %v3302
      %3361 = vst.msk [vmem:[#allocation4 + $0x150] sm:$0xff] %vm3339, %v3304
      %3362 = vst.msk [vmem:[#allocation4 + $0x160] sm:$0xff] %vm3339, %v3306
      %3363 = vst.msk [vmem:[#allocation4 + $0x170] sm:$0xff] %vm3339, %v3308
      %3364 = vst.msk [vmem:[#allocation4 + $0x180] sm:$0xff] %vm3339, %v3310
      %3365 = vst.msk [vmem:[#allocation4 + $0x190] sm:$0xff] %vm3339, %v3312
      %v3366 = vld [vmem:[#allocation2 + $0xb] sm:$0xff]
      %v3367 = vld [vmem:[#allocation2 + $0x13] sm:$0xff]
      %v3368 = vld [vmem:[#allocation2 + $0x1b] sm:$0xff]
      %v3369 = vld [vmem:[#allocation2 + $0x23] sm:$0xff]
      %v3370 = vld [vmem:[#allocation2 + $0x2b] sm:$0xff]
      %v3371 = vld [vmem:[#allocation2 + $0x33] sm:$0xff]
      %v3372 = vld [vmem:[#allocation2 + $0x3b] sm:$0xff]
      %v3373 = vld [vmem:[#allocation2 + $0x43] sm:$0xff]
      %v3374 = vld [vmem:[#allocation2 + $0x4b] sm:$0xff]
      %v3375 = vld [vmem:[#allocation2 + $0x53] sm:$0xff]
      %v3376 = vld [vmem:[#allocation2 + $0x5b] sm:$0xff]
      %v3377 = vld [vmem:[#allocation2 + $0x63] sm:$0xff]
      %v3378 = vld [vmem:[#allocation2 + $0x6b] sm:$0xff]
      %v3379 = vld [vmem:[#allocation2 + $0x73] sm:$0xff]
      %v3380 = vld [vmem:[#allocation2 + $0x7b] sm:$0xff]
      %v3381 = vld [vmem:[#allocation2 + $0x83] sm:$0xff]
      %v3382 = vld [vmem:[#allocation2 + $0x8b] sm:$0xff]
      %v3383 = vld [vmem:[#allocation2 + $0x93] sm:$0xff]
      %v3384 = vld [vmem:[#allocation2 + $0x9b] sm:$0xff]
      %v3385 = vld [vmem:[#allocation2 + $0xa3] sm:$0xff]
      %v3386 = vld [vmem:[#allocation2 + $0xab] sm:$0xff]
      %v3387 = vld [vmem:[#allocation2 + $0xb3] sm:$0xff]
      %v3388 = vld [vmem:[#allocation2 + $0xbb] sm:$0xff]
      %v3389 = vld [vmem:[#allocation2 + $0xc3] sm:$0xff]
      %v3390 = vld [vmem:[#allocation2 + $0xcb] sm:$0xff]
      %v3391 = vld [vmem:[#allocation2 + $0xd3] sm:$0xff]
      %3418 = vrot.lane.b32.xlu0 %v3366, 48
      %v3419 = vpop.permute.xlu0 %3418
      %3420 = vrot.lane.b32.xlu0 %v3367, 48
      %v3421 = vpop.permute.xlu0 %3420
      %3422 = vrot.lane.b32.xlu0 %v3368, 48
      %v3423 = vpop.permute.xlu0 %3422
      %3424 = vrot.lane.b32.xlu0 %v3369, 48
      %v3425 = vpop.permute.xlu0 %3424
      %3426 = vrot.lane.b32.xlu0 %v3370, 48
      %v3427 = vpop.permute.xlu0 %3426
      %3428 = vrot.lane.b32.xlu0 %v3371, 48
      %v3429 = vpop.permute.xlu0 %3428
      %3430 = vrot.lane.b32.xlu0 %v3372, 48
      %v3431 = vpop.permute.xlu0 %3430
      %3432 = vrot.lane.b32.xlu0 %v3373, 48
      %v3433 = vpop.permute.xlu0 %3432
      %3434 = vrot.lane.b32.xlu0 %v3374, 48
      %v3435 = vpop.permute.xlu0 %3434
      %3436 = vrot.lane.b32.xlu0 %v3375, 48
      %v3437 = vpop.permute.xlu0 %3436
      %3438 = vrot.lane.b32.xlu0 %v3376, 48
      %v3439 = vpop.permute.xlu0 %3438
      %3440 = vrot.lane.b32.xlu0 %v3377, 48
      %v3441 = vpop.permute.xlu0 %3440
      %3442 = vrot.lane.b32.xlu0 %v3378, 48
      %v3443 = vpop.permute.xlu0 %3442
      %3444 = vrot.lane.b32.xlu0 %v3379, 48
      %v3445 = vpop.permute.xlu0 %3444
      %3446 = vrot.lane.b32.xlu0 %v3380, 48
      %v3447 = vpop.permute.xlu0 %3446
      %3448 = vrot.lane.b32.xlu0 %v3381, 48
      %v3449 = vpop.permute.xlu0 %3448
      %3450 = vrot.lane.b32.xlu0 %v3382, 48
      %v3451 = vpop.permute.xlu0 %3450
      %3452 = vrot.lane.b32.xlu0 %v3383, 48
      %v3453 = vpop.permute.xlu0 %3452
      %3454 = vrot.lane.b32.xlu0 %v3384, 48
      %v3455 = vpop.permute.xlu0 %3454
      %3456 = vrot.lane.b32.xlu0 %v3385, 48
      %v3457 = vpop.permute.xlu0 %3456
      %3458 = vrot.lane.b32.xlu0 %v3386, 48
      %v3459 = vpop.permute.xlu0 %3458
      %3460 = vrot.lane.b32.xlu0 %v3387, 48
      %v3461 = vpop.permute.xlu0 %3460
      %3462 = vrot.lane.b32.xlu0 %v3388, 48
      %v3463 = vpop.permute.xlu0 %3462
      %3464 = vrot.lane.b32.xlu0 %v3389, 48
      %v3465 = vpop.permute.xlu0 %3464
      %3466 = vrot.lane.b32.xlu0 %v3390, 48
      %v3467 = vpop.permute.xlu0 %3466
      %3468 = vrot.lane.b32.xlu0 %v3391, 48
      %v3469 = vpop.permute.xlu0 %3468
      %vm3496 = vcmask 523648
      %3497 = vst.msk [vmem:[#allocation4] sm:$0xff] %vm3496, %v3419
      %3498 = vst.msk [vmem:[#allocation4 + $0x10] sm:$0xff] %vm3496, %v3421
      %3499 = vst.msk [vmem:[#allocation4 + $0x20] sm:$0xff] %vm3496, %v3423
      %3500 = vst.msk [vmem:[#allocation4 + $0x30] sm:$0xff] %vm3496, %v3425
      %3501 = vst.msk [vmem:[#allocation4 + $0x40] sm:$0xff] %vm3496, %v3427
      %3502 = vst.msk [vmem:[#allocation4 + $0x50] sm:$0xff] %vm3496, %v3429
      %3503 = vst.msk [vmem:[#allocation4 + $0x60] sm:$0xff] %vm3496, %v3431
      %3504 = vst.msk [vmem:[#allocation4 + $0x70] sm:$0xff] %vm3496, %v3433
      %3505 = vst.msk [vmem:[#allocation4 + $0x80] sm:$0xff] %vm3496, %v3435
      %3506 = vst.msk [vmem:[#allocation4 + $0x90] sm:$0xff] %vm3496, %v3437
      %3507 = vst.msk [vmem:[#allocation4 + $0xa0] sm:$0xff] %vm3496, %v3439
      %3508 = vst.msk [vmem:[#allocation4 + $0xb0] sm:$0xff] %vm3496, %v3441
      %3509 = vst.msk [vmem:[#allocation4 + $0xc0] sm:$0xff] %vm3496, %v3443
      %3510 = vst.msk [vmem:[#allocation4 + $0xd0] sm:$0xff] %vm3496, %v3445
      %3511 = vst.msk [vmem:[#allocation4 + $0xe0] sm:$0xff] %vm3496, %v3447
      %3512 = vst.msk [vmem:[#allocation4 + $0xf0] sm:$0xff] %vm3496, %v3449
      %3513 = vst.msk [vmem:[#allocation4 + $0x100] sm:$0xff] %vm3496, %v3451
      %3514 = vst.msk [vmem:[#allocation4 + $0x110] sm:$0xff] %vm3496, %v3453
      %3515 = vst.msk [vmem:[#allocation4 + $0x120] sm:$0xff] %vm3496, %v3455
      %3516 = vst.msk [vmem:[#allocation4 + $0x130] sm:$0xff] %vm3496, %v3457
      %3517 = vst.msk [vmem:[#allocation4 + $0x140] sm:$0xff] %vm3496, %v3459
      %3518 = vst.msk [vmem:[#allocation4 + $0x150] sm:$0xff] %vm3496, %v3461
      %3519 = vst.msk [vmem:[#allocation4 + $0x160] sm:$0xff] %vm3496, %v3463
      %3520 = vst.msk [vmem:[#allocation4 + $0x170] sm:$0xff] %vm3496, %v3465
      %3521 = vst.msk [vmem:[#allocation4 + $0x180] sm:$0xff] %vm3496, %v3467
      %3522 = vst.msk [vmem:[#allocation4 + $0x190] sm:$0xff] %vm3496, %v3469
      %v3523 = vld [vmem:[#allocation4] sm:$0xff]
      %v3524 = vld [vmem:[#allocation4 + $0x10] sm:$0xff]
      %v3525 = vld [vmem:[#allocation4 + $0x20] sm:$0xff]
      %v3526 = vld [vmem:[#allocation4 + $0x30] sm:$0xff]
      %v3527 = vld [vmem:[#allocation4 + $0x40] sm:$0xff]
      %v3528 = vld [vmem:[#allocation4 + $0x50] sm:$0xff]
      %v3529 = vld [vmem:[#allocation4 + $0x60] sm:$0xff]
      %v3530 = vld [vmem:[#allocation4 + $0x70] sm:$0xff]
      %v3531 = vld [vmem:[#allocation4 + $0x80] sm:$0xff]
      %v3532 = vld [vmem:[#allocation4 + $0x90] sm:$0xff]
      %v3533 = vld [vmem:[#allocation4 + $0xa0] sm:$0xff]
      %v3534 = vld [vmem:[#allocation4 + $0xb0] sm:$0xff]
      %v3535 = vld [vmem:[#allocation4 + $0xc0] sm:$0xff]
      %v3536 = vld [vmem:[#allocation4 + $0xd0] sm:$0xff]
      %v3537 = vld [vmem:[#allocation4 + $0xe0] sm:$0xff]
      %v3538 = vld [vmem:[#allocation4 + $0xf0] sm:$0xff]
      %v3539 = vld [vmem:[#allocation4 + $0x100] sm:$0xff]
      %v3540 = vld [vmem:[#allocation4 + $0x110] sm:$0xff]
      %v3541 = vld [vmem:[#allocation4 + $0x120] sm:$0xff]
      %v3542 = vld [vmem:[#allocation4 + $0x130] sm:$0xff]
      %v3543 = vld [vmem:[#allocation4 + $0x140] sm:$0xff]
      %v3544 = vld [vmem:[#allocation4 + $0x150] sm:$0xff]
      %v3545 = vld [vmem:[#allocation4 + $0x160] sm:$0xff]
      %v3546 = vld [vmem:[#allocation4 + $0x170] sm:$0xff]
      %v3547 = vld [vmem:[#allocation4 + $0x180] sm:$0xff]
      %v3548 = vld [vmem:[#allocation4 + $0x190] sm:$0xff]
      %v3549 = vld [vmem:[%s3] sm:$0xff]
      %v3550 = vld [vmem:[%s3 + $0x8] sm:$0xff]
      %v3551 = vld [vmem:[%s3 + $0x10] sm:$0xff]
      %v3552 = vld [vmem:[%s3 + $0x18] sm:$0xff]
      %v3553 = vld [vmem:[%s3 + $0x20] sm:$0xff]
      %v3554 = vld [vmem:[%s3 + $0x28] sm:$0xff]
      %v3555 = vld [vmem:[%s3 + $0x30] sm:$0xff]
      %v3556 = vld [vmem:[%s3 + $0x38] sm:$0xff]
      %v3557 = vld [vmem:[%s4] sm:$0x1]
      %v3559 = vlaneseq
      %v3560 = vshrl.u32 %v3559, 7
      %v3561 = vsub.s32 0, %v3560
      %v3562 = vrot.slane %v3557, %v3561
      %vm3564 = vcmask 523264
      %v3566 = vsel %vm3564, %v3523, 0
      %v3569 = vsel %vm3564, %v3524, 0
      %v3572 = vsel %vm3564, %v3525, 0
      %v3575 = vsel %vm3564, %v3526, 0
      %v3578 = vsel %vm3564, %v3527, 0
      %v3581 = vsel %vm3564, %v3528, 0
      %v3584 = vsel %vm3564, %v3529, 0
      %v3587 = vsel %vm3564, %v3530, 0
      %v3590 = vsel %vm3564, %v3531, 0
      %v3593 = vsel %vm3564, %v3532, 0
      %v3596 = vsel %vm3564, %v3533, 0
      %v3599 = vsel %vm3564, %v3534, 0
      %v3602 = vsel %vm3564, %v3535, 0
      %v3605 = vsel %vm3564, %v3536, 0
      %v3608 = vsel %vm3564, %v3537, 0
      %v3611 = vsel %vm3564, %v3538, 0
      %v3614 = vsel %vm3564, %v3539, 0
      %v3617 = vsel %vm3564, %v3540, 0
      %v3620 = vsel %vm3564, %v3541, 0
      %v3623 = vsel %vm3564, %v3542, 0
      %v3626 = vsel %vm3564, %v3543, 0
      %v3629 = vsel %vm3564, %v3544, 0
      %v3632 = vsel %vm3564, %v3545, 0
      %v3635 = vsel %vm3564, %v3546, 0
      %v3638 = vsel %vm3564, %v3547, 0
      %v3641 = vsel %vm3564, %v3548, 0
      %3643 = vmatprep.subr.mxu0 0.0
      %3644 = vmatpush1.msra.mxu0 %v3549
      %3645 = vmatprep.subr.mxu0 0.0
      %3646 = vmatpush1.msra.mxu0 %v3550
      %3647 = vmatprep.subr.mxu0 0.0
      %3648 = vmatpush1.msra.mxu0 %v3551
      %3649 = vmatprep.subr.mxu0 0.0
      %3650 = vmatpush1.msra.mxu0 %v3552
      %3651 = vmatprep.subr.mxu0 0.0
      %3652 = vmatpush1.msra.mxu0 %v3553
      %3653 = vmatprep.subr.mxu0 0.0
      %3654 = vmatpush1.msra.mxu0 %v3554
      %3655 = vmatprep.subr.mxu0 0.0
      %3656 = vmatpush1.msra.mxu0 %v3555
      %3657 = vmatprep.subr.mxu0 0.0
      %3658 = vmatpush1.msra.mxu0 %v3556
      %3659 = vmatprep.subr.mxu0 0.0
      %3660 = vmatpush1.msra.mxu0 0.0
      %3661 = vmatprep.subr.mxu0 0.0
      %3662 = vmatpush1.msra.mxu0 0.0
      %3663 = vmatprep.subr.mxu0 0.0
      %3664 = vmatpush1.msra.mxu0 0.0
      %3665 = vmatprep.subr.mxu0 0.0
      %3666 = vmatpush1.msra.mxu0 0.0
      %3667 = vmatprep.subr.mxu0 0.0
      %3668 = vmatpush1.msra.mxu0 0.0
      %3669 = vmatprep.subr.mxu0 0.0
      %3670 = vmatpush1.msra.mxu0 0.0
      %3671 = vmatprep.subr.mxu0 0.0
      %3672 = vmatpush1.msra.mxu0 0.0
      %3673 = vmatprep.subr.mxu0 0.0
      %3674 = vmatpush1.msra.mxu0 0.0
      %3675 = vmatprep.subr.mxu0 0.0
      %3676 = vmatpush1.msra.mxu0 0.0
      %3677 = vmatprep.subr.mxu0 0.0
      %3678 = vmatpush1.msra.mxu0 0.0
      %3679 = vmatprep.subr.mxu0 0.0
      %3680 = vmatpush1.msra.mxu0 0.0
      %3681 = vmatprep.subr.mxu0 0.0
      %3682 = vmatpush1.msra.mxu0 0.0
      %3683 = vmatprep.subr.mxu0 0.0
      %3684 = vmatpush1.msra.mxu0 0.0
      %3685 = vmatprep.subr.mxu0 0.0
      %3686 = vmatpush1.msra.mxu0 0.0
      %3687 = vmatprep.subr.mxu0 0.0
      %3688 = vmatpush1.msra.mxu0 0.0
      %3689 = vmatprep.subr.mxu0 0.0
      %3690 = vmatpush1.msra.mxu0 0.0
      %3691 = vmatprep.subr.mxu0 0.0
      %3692 = vmatpush1.msra.mxu0 0.0
      %3693 = vmatprep.subr.mxu0 0.0
      %3694 = vmatpush1.msra.mxu0 0.0
      %3695 = vmatprep.subr.mxu0 0.0
      %3696 = vmatpush1.msra.mxu0 0.0
      %3697 = vmatprep.subr.mxu0 0.0
      %3698 = vmatpush1.msra.mxu0 0.0
      %3699 = vmatprep.subr.mxu0 0.0
      %3700 = vmatpush1.msra.mxu0 0.0
      %3701 = vmatprep.subr.mxu0 0.0
      %3702 = vmatpush1.msra.mxu0 0.0
      %3703 = vmatprep.subr.mxu0 0.0
      %3704 = vmatpush1.msra.mxu0 0.0
      %3705 = vmatprep.subr.mxu0 0.0
      %3706 = vmatpush1.msra.mxu0 0.0
      %3707 = vmatprep.mubr.f32.mxu0 0.0
      %3708 = vmatmul.mubr.f32.gmra.mrb[0].mxu0 %v3566
      %v3709 = vpop.f32.mrb[0].mxu0
      %v3710 = vadd.f32 %v3562, %v3709
      %v3711 = vpop.f32.mrb[0].mxu0
      %3712 = vmatprep.mubr.f32.mxu0 0.0
      %3713 = vmatmul.mubr.f32.gmra.mrb[0].mxu0 %v3569
      %v3714 = vpop.f32.mrb[0].mxu0
      %v3715 = vadd.f32 %v3562, %v3714
      %v3716 = vpop.f32.mrb[0].mxu0
      %3717 = vmatprep.mubr.f32.mxu0 0.0
      %3718 = vmatmul.mubr.f32.gmra.mrb[0].mxu0 %v3572
      %v3719 = vpop.f32.mrb[0].mxu0
      %v3720 = vadd.f32 %v3562, %v3719
      %v3721 = vpop.f32.mrb[0].mxu0
      %3722 = vmatprep.mubr.f32.mxu0 0.0
      %3723 = vmatmul.mubr.f32.gmra.mrb[0].mxu0 %v3575
      %v3724 = vpop.f32.mrb[0].mxu0
      %v3725 = vadd.f32 %v3562, %v3724
      %v3726 = vpop.f32.mrb[0].mxu0
      %3727 = vmatprep.mubr.f32.mxu0 0.0
      %3728 = vmatmul.mubr.f32.gmra.mrb[0].mxu0 %v3578
      %v3729 = vpop.f32.mrb[0].mxu0
      %v3730 = vadd.f32 %v3562, %v3729
      %v3731 = vpop.f32.mrb[0].mxu0
      %3732 = vmatprep.mubr.f32.mxu0 0.0
      %3733 = vmatmul.mubr.f32.gmra.mrb[0].mxu0 %v3581
      %v3734 = vpop.f32.mrb[0].mxu0
      %v3735 = vadd.f32 %v3562, %v3734
      %v3736 = vpop.f32.mrb[0].mxu0
      %3737 = vmatprep.mubr.f32.mxu0 0.0
      %3738 = vmatmul.mubr.f32.gmra.mrb[0].mxu0 %v3584
      %v3739 = vpop.f32.mrb[0].mxu0
      %v3740 = vadd.f32 %v3562, %v3739
      %v3741 = vpop.f32.mrb[0].mxu0
      %3742 = vmatprep.mubr.f32.mxu0 0.0
      %3743 = vmatmul.mubr.f32.gmra.mrb[0].mxu0 %v3587
      %v3744 = vpop.f32.mrb[0].mxu0
      %v3745 = vadd.f32 %v3562, %v3744
      %v3746 = vpop.f32.mrb[0].mxu0
      %3747 = vmatprep.mubr.f32.mxu0 0.0
      %3748 = vmatmul.mubr.f32.gmra.mrb[0].mxu0 %v3590
      %v3749 = vpop.f32.mrb[0].mxu0
      %v3750 = vadd.f32 %v3562, %v3749
      %v3751 = vpop.f32.mrb[0].mxu0
      %3752 = vmatprep.mubr.f32.mxu0 0.0
      %3753 = vmatmul.mubr.f32.gmra.mrb[0].mxu0 %v3593
      %v3754 = vpop.f32.mrb[0].mxu0
      %v3755 = vadd.f32 %v3562, %v3754
      %v3756 = vpop.f32.mrb[0].mxu0
      %3757 = vmatprep.mubr.f32.mxu0 0.0
      %3758 = vmatmul.mubr.f32.gmra.mrb[0].mxu0 %v3596
      %v3759 = vpop.f32.mrb[0].mxu0
      %v3760 = vadd.f32 %v3562, %v3759
      %v3761 = vpop.f32.mrb[0].mxu0
      %3762 = vmatprep.mubr.f32.mxu0 0.0
      %3763 = vmatmul.mubr.f32.gmra.mrb[0].mxu0 %v3599
      %v3764 = vpop.f32.mrb[0].mxu0
      %v3765 = vadd.f32 %v3562, %v3764
      %v3766 = vpop.f32.mrb[0].mxu0
      %3767 = vmatprep.mubr.f32.mxu0 0.0
      %3768 = vmatmul.mubr.f32.gmra.mrb[0].mxu0 %v3602
      %v3769 = vpop.f32.mrb[0].mxu0
      %v3770 = vadd.f32 %v3562, %v3769
      %v3771 = vpop.f32.mrb[0].mxu0
      %3772 = vmatprep.mubr.f32.mxu0 0.0
      %3773 = vmatmul.mubr.f32.gmra.mrb[0].mxu0 %v3605
      %v3774 = vpop.f32.mrb[0].mxu0
      %v3775 = vadd.f32 %v3562, %v3774
      %v3776 = vpop.f32.mrb[0].mxu0
      %3777 = vmatprep.mubr.f32.mxu0 0.0
      %3778 = vmatmul.mubr.f32.gmra.mrb[0].mxu0 %v3608
      %v3779 = vpop.f32.mrb[0].mxu0
      %v3780 = vadd.f32 %v3562, %v3779
      %v3781 = vpop.f32.mrb[0].mxu0
      %3782 = vmatprep.mubr.f32.mxu0 0.0
      %3783 = vmatmul.mubr.f32.gmra.mrb[0].mxu0 %v3611
      %v3784 = vpop.f32.mrb[0].mxu0
      %v3785 = vadd.f32 %v3562, %v3784
      %v3786 = vpop.f32.mrb[0].mxu0
      %3787 = vmatprep.mubr.f32.mxu0 0.0
      %3788 = vmatmul.mubr.f32.gmra.mrb[0].mxu0 %v3614
      %v3789 = vpop.f32.mrb[0].mxu0
      %v3790 = vadd.f32 %v3562, %v3789
      %v3791 = vpop.f32.mrb[0].mxu0
      %3792 = vmatprep.mubr.f32.mxu0 0.0
      %3793 = vmatmul.mubr.f32.gmra.mrb[0].mxu0 %v3617
      %v3794 = vpop.f32.mrb[0].mxu0
      %v3795 = vadd.f32 %v3562, %v3794
      %v3796 = vpop.f32.mrb[0].mxu0
      %3797 = vmatprep.mubr.f32.mxu0 0.0
      %3798 = vmatmul.mubr.f32.gmra.mrb[0].mxu0 %v3620
      %v3799 = vpop.f32.mrb[0].mxu0
      %v3800 = vadd.f32 %v3562, %v3799
      %v3801 = vpop.f32.mrb[0].mxu0
      %3802 = vmatprep.mubr.f32.mxu0 0.0
      %3803 = vmatmul.mubr.f32.gmra.mrb[0].mxu0 %v3623
      %v3804 = vpop.f32.mrb[0].mxu0
      %v3805 = vadd.f32 %v3562, %v3804
      %v3806 = vpop.f32.mrb[0].mxu0
      %3807 = vmatprep.mubr.f32.mxu0 0.0
      %3808 = vmatmul.mubr.f32.gmra.mrb[0].mxu0 %v3626
      %v3809 = vpop.f32.mrb[0].mxu0
      %v3810 = vadd.f32 %v3562, %v3809
      %v3811 = vpop.f32.mrb[0].mxu0
      %3812 = vmatprep.mubr.f32.mxu0 0.0
      %3813 = vmatmul.mubr.f32.gmra.mrb[0].mxu0 %v3629
      %v3814 = vpop.f32.mrb[0].mxu0
      %v3815 = vadd.f32 %v3562, %v3814
      %v3816 = vpop.f32.mrb[0].mxu0
      %3817 = vmatprep.mubr.f32.mxu0 0.0
      %3818 = vmatmul.mubr.f32.gmra.mrb[0].mxu0 %v3632
      %v3819 = vpop.f32.mrb[0].mxu0
      %v3820 = vadd.f32 %v3562, %v3819
      %v3821 = vpop.f32.mrb[0].mxu0
      %3822 = vmatprep.mubr.f32.mxu0 0.0
      %3823 = vmatmul.mubr.f32.gmra.mrb[0].mxu0 %v3635
      %v3824 = vpop.f32.mrb[0].mxu0
      %v3825 = vadd.f32 %v3562, %v3824
      %v3826 = vpop.f32.mrb[0].mxu0
      %3827 = vmatprep.mubr.f32.mxu0 0.0
      %3828 = vmatmul.mubr.f32.gmra.mrb[0].mxu0 %v3638
      %v3829 = vpop.f32.mrb[0].mxu0
      %v3830 = vadd.f32 %v3562, %v3829
      %v3831 = vpop.f32.mrb[0].mxu0
      %3832 = vmatprep.mubr.f32.mxu0 0.0
      %3833 = vmatmul.mubr.f32.gmra.mrb[0].mxu0 %v3641
      %v3834 = vpop.f32.mrb[0].mxu0
      %v3835 = vadd.f32 %v3562, %v3834
      %v3836 = vpop.f32.mrb[0].mxu0
      %3837 = vdwg.mxu0
      %v3838 = vmax.f32 %v3710, 0.0
      %v3839 = vmax.f32 %v3715, 0.0
      %v3840 = vmax.f32 %v3720, 0.0
      %v3841 = vmax.f32 %v3725, 0.0
      %v3842 = vmax.f32 %v3730, 0.0
      %v3843 = vmax.f32 %v3735, 0.0
      %v3844 = vmax.f32 %v3740, 0.0
      %v3845 = vmax.f32 %v3745, 0.0
      %v3846 = vmax.f32 %v3750, 0.0
      %v3847 = vmax.f32 %v3755, 0.0
      %v3848 = vmax.f32 %v3760, 0.0
      %v3849 = vmax.f32 %v3765, 0.0
      %v3850 = vmax.f32 %v3770, 0.0
      %v3851 = vmax.f32 %v3775, 0.0
      %v3852 = vmax.f32 %v3780, 0.0
      %v3853 = vmax.f32 %v3785, 0.0
      %v3854 = vmax.f32 %v3790, 0.0
      %v3855 = vmax.f32 %v3795, 0.0
      %v3856 = vmax.f32 %v3800, 0.0
      %v3857 = vmax.f32 %v3805, 0.0
      %v3858 = vmax.f32 %v3810, 0.0
      %v3859 = vmax.f32 %v3815, 0.0
      %v3860 = vmax.f32 %v3820, 0.0
      %v3861 = vmax.f32 %v3825, 0.0
      %v3862 = vmax.f32 %v3830, 0.0
      %v3863 = vmax.f32 %v3835, 0.0
      %v3864 = vsel %vm1271, %v3838, 0.0
      %v3865 = vsel %vm1272, %v3839, 0.0
      %v3866 = vsel %vm1273, %v3840, 0.0
      %v3867 = vsel %vm1274, %v3841, 0.0
      %v3868 = vsel %vm1275, %v3842, 0.0
      %v3869 = vsel %vm1276, %v3843, 0.0
      %v3870 = vsel %vm1277, %v3844, 0.0
      %v3871 = vsel %vm1278, %v3845, 0.0
      %v3872 = vsel %vm1279, %v3846, 0.0
      %v3873 = vsel %vm1280, %v3847, 0.0
      %v3874 = vsel %vm1281, %v3848, 0.0
      %v3875 = vsel %vm1282, %v3849, 0.0
      %v3876 = vsel %vm1283, %v3850, 0.0
      %v3877 = vsel %vm1284, %v3851, 0.0
      %v3878 = vsel %vm1285, %v3852, 0.0
      %v3879 = vsel %vm1286, %v3853, 0.0
      %v3880 = vsel %vm1287, %v3854, 0.0
      %v3881 = vsel %vm1288, %v3855, 0.0
      %v3882 = vsel %vm1289, %v3856, 0.0
      %v3883 = vsel %vm1290, %v3857, 0.0
      %v3884 = vsel %vm1291, %v3858, 0.0
      %v3885 = vsel %vm1292, %v3859, 0.0
      %v3886 = vsel %vm1293, %v3860, 0.0
      %v3887 = vsel %vm1294, %v3861, 0.0
      %v3888 = vsel %vm1295, %v3862, 0.0
      %v3889 = vsel %vm1296, %v3863, 0.0
      %3890 = vst.msk [vmem:[#allocation3 + $0xb] sm:$0xff] %vm282, %v3864
      %3891 = vst.msk [vmem:[#allocation3 + $0x13] sm:$0xff] %vm282, %v3865
      %3892 = vst.msk [vmem:[#allocation3 + $0x1b] sm:$0xff] %vm282, %v3866
      %3893 = vst.msk [vmem:[#allocation3 + $0x23] sm:$0xff] %vm282, %v3867
      %3894 = vst.msk [vmem:[#allocation3 + $0x2b] sm:$0xff] %vm282, %v3868
      %3895 = vst.msk [vmem:[#allocation3 + $0x33] sm:$0xff] %vm282, %v3869
      %3896 = vst.msk [vmem:[#allocation3 + $0x3b] sm:$0xff] %vm282, %v3870
      %3897 = vst.msk [vmem:[#allocation3 + $0x43] sm:$0xff] %vm282, %v3871
      %3898 = vst.msk [vmem:[#allocation3 + $0x4b] sm:$0xff] %vm282, %v3872
      %3899 = vst.msk [vmem:[#allocation3 + $0x53] sm:$0xff] %vm282, %v3873
      %3900 = vst.msk [vmem:[#allocation3 + $0x5b] sm:$0xff] %vm282, %v3874
      %3901 = vst.msk [vmem:[#allocation3 + $0x63] sm:$0xff] %vm282, %v3875
      %3902 = vst.msk [vmem:[#allocation3 + $0x6b] sm:$0xff] %vm282, %v3876
      %3903 = vst.msk [vmem:[#allocation3 + $0x73] sm:$0xff] %vm282, %v3877
      %3904 = vst.msk [vmem:[#allocation3 + $0x7b] sm:$0xff] %vm282, %v3878
      %3905 = vst.msk [vmem:[#allocation3 + $0x83] sm:$0xff] %vm282, %v3879
      %3906 = vst.msk [vmem:[#allocation3 + $0x8b] sm:$0xff] %vm282, %v3880
      %3907 = vst.msk [vmem:[#allocation3 + $0x93] sm:$0xff] %vm282, %v3881
      %3908 = vst.msk [vmem:[#allocation3 + $0x9b] sm:$0xff] %vm282, %v3882
      %3909 = vst.msk [vmem:[#allocation3 + $0xa3] sm:$0xff] %vm282, %v3883
      %3910 = vst.msk [vmem:[#allocation3 + $0xab] sm:$0xff] %vm282, %v3884
      %3911 = vst.msk [vmem:[#allocation3 + $0xb3] sm:$0xff] %vm282, %v3885
      %3912 = vst.msk [vmem:[#allocation3 + $0xbb] sm:$0xff] %vm282, %v3886
      %3913 = vst.msk [vmem:[#allocation3 + $0xc3] sm:$0xff] %vm282, %v3887
      %3914 = vst.msk [vmem:[#allocation3 + $0xcb] sm:$0xff] %vm282, %v3888
      %3915 = vst.msk [vmem:[#allocation3 + $0xd3] sm:$0xff] %vm282, %v3889
      %v3916 = vld [vmem:[#allocation2 + $0x1] sm:$0xff]
      %v3917 = vld [vmem:[#allocation2 + $0x9] sm:$0xff]
      %v3918 = vld [vmem:[#allocation2 + $0x11] sm:$0xff]
      %v3919 = vld [vmem:[#allocation2 + $0x19] sm:$0xff]
      %v3920 = vld [vmem:[#allocation2 + $0x21] sm:$0xff]
      %v3921 = vld [vmem:[#allocation2 + $0x29] sm:$0xff]
      %v3922 = vld [vmem:[#allocation2 + $0x31] sm:$0xff]
      %v3923 = vld [vmem:[#allocation2 + $0x39] sm:$0xff]
      %v3924 = vld [vmem:[#allocation2 + $0x41] sm:$0xff]
      %v3925 = vld [vmem:[#allocation2 + $0x49] sm:$0xff]
      %v3926 = vld [vmem:[#allocation2 + $0x51] sm:$0xff]
      %v3927 = vld [vmem:[#allocation2 + $0x59] sm:$0xff]
      %v3928 = vld [vmem:[#allocation2 + $0x61] sm:$0xff]
      %v3929 = vld [vmem:[#allocation2 + $0x69] sm:$0xff]
      %v3930 = vld [vmem:[#allocation2 + $0x71] sm:$0xff]
      %v3931 = vld [vmem:[#allocation2 + $0x79] sm:$0xff]
      %v3932 = vld [vmem:[#allocation2 + $0x81] sm:$0xff]
      %v3933 = vld [vmem:[#allocation2 + $0x89] sm:$0xff]
      %v3934 = vld [vmem:[#allocation2 + $0x91] sm:$0xff]
      %v3935 = vld [vmem:[#allocation2 + $0x99] sm:$0xff]
      %v3936 = vld [vmem:[#allocation2 + $0xa1] sm:$0xff]
      %v3937 = vld [vmem:[#allocation2 + $0xa9] sm:$0xff]
      %v3938 = vld [vmem:[#allocation2 + $0xb1] sm:$0xff]
      %v3939 = vld [vmem:[#allocation2 + $0xb9] sm:$0xff]
      %v3940 = vld [vmem:[#allocation2 + $0xc1] sm:$0xff]
      %v3941 = vld [vmem:[#allocation2 + $0xc9] sm:$0xff]
      %3942 = vst.msk [vmem:[#allocation4] sm:$0xff] %vm282, %v3916
      %3943 = vst.msk [vmem:[#allocation4 + $0x10] sm:$0xff] %vm282, %v3917
      %3944 = vst.msk [vmem:[#allocation4 + $0x20] sm:$0xff] %vm282, %v3918
      %3945 = vst.msk [vmem:[#allocation4 + $0x30] sm:$0xff] %vm282, %v3919
      %3946 = vst.msk [vmem:[#allocation4 + $0x40] sm:$0xff] %vm282, %v3920
      %3947 = vst.msk [vmem:[#allocation4 + $0x50] sm:$0xff] %vm282, %v3921
      %3948 = vst.msk [vmem:[#allocation4 + $0x60] sm:$0xff] %vm282, %v3922
      %3949 = vst.msk [vmem:[#allocation4 + $0x70] sm:$0xff] %vm282, %v3923
      %3950 = vst.msk [vmem:[#allocation4 + $0x80] sm:$0xff] %vm282, %v3924
      %3951 = vst.msk [vmem:[#allocation4 + $0x90] sm:$0xff] %vm282, %v3925
      %3952 = vst.msk [vmem:[#allocation4 + $0xa0] sm:$0xff] %vm282, %v3926
      %3953 = vst.msk [vmem:[#allocation4 + $0xb0] sm:$0xff] %vm282, %v3927
      %3954 = vst.msk [vmem:[#allocation4 + $0xc0] sm:$0xff] %vm282, %v3928
      %3955 = vst.msk [vmem:[#allocation4 + $0xd0] sm:$0xff] %vm282, %v3929
      %3956 = vst.msk [vmem:[#allocation4 + $0xe0] sm:$0xff] %vm282, %v3930
      %3957 = vst.msk [vmem:[#allocation4 + $0xf0] sm:$0xff] %vm282, %v3931
      %3958 = vst.msk [vmem:[#allocation4 + $0x100] sm:$0xff] %vm282, %v3932
      %3959 = vst.msk [vmem:[#allocation4 + $0x110] sm:$0xff] %vm282, %v3933
      %3960 = vst.msk [vmem:[#allocation4 + $0x120] sm:$0xff] %vm282, %v3934
      %3961 = vst.msk [vmem:[#allocation4 + $0x130] sm:$0xff] %vm282, %v3935
      %3962 = vst.msk [vmem:[#allocation4 + $0x140] sm:$0xff] %vm282, %v3936
      %3963 = vst.msk [vmem:[#allocation4 + $0x150] sm:$0xff] %vm282, %v3937
      %3964 = vst.msk [vmem:[#allocation4 + $0x160] sm:$0xff] %vm282, %v3938
      %3965 = vst.msk [vmem:[#allocation4 + $0x170] sm:$0xff] %vm282, %v3939
      %3966 = vst.msk [vmem:[#allocation4 + $0x180] sm:$0xff] %vm282, %v3940
      %3967 = vst.msk [vmem:[#allocation4 + $0x190] sm:$0xff] %vm282, %v3941
      %v3968 = vld [vmem:[#allocation2 + $0x2] sm:$0xff]
      %v3969 = vld [vmem:[#allocation2 + $0xa] sm:$0xff]
      %v3970 = vld [vmem:[#allocation2 + $0x12] sm:$0xff]
      %v3971 = vld [vmem:[#allocation2 + $0x1a] sm:$0xff]
      %v3972 = vld [vmem:[#allocation2 + $0x22] sm:$0xff]
      %v3973 = vld [vmem:[#allocation2 + $0x2a] sm:$0xff]
      %v3974 = vld [vmem:[#allocation2 + $0x32] sm:$0xff]
      %v3975 = vld [vmem:[#allocation2 + $0x3a] sm:$0xff]
      %v3976 = vld [vmem:[#allocation2 + $0x42] sm:$0xff]
      %v3977 = vld [vmem:[#allocation2 + $0x4a] sm:$0xff]
      %v3978 = vld [vmem:[#allocation2 + $0x52] sm:$0xff]
      %v3979 = vld [vmem:[#allocation2 + $0x5a] sm:$0xff]
      %v3980 = vld [vmem:[#allocation2 + $0x62] sm:$0xff]
      %v3981 = vld [vmem:[#allocation2 + $0x6a] sm:$0xff]
      %v3982 = vld [vmem:[#allocation2 + $0x72] sm:$0xff]
      %v3983 = vld [vmem:[#allocation2 + $0x7a] sm:$0xff]
      %v3984 = vld [vmem:[#allocation2 + $0x82] sm:$0xff]
      %v3985 = vld [vmem:[#allocation2 + $0x8a] sm:$0xff]
      %v3986 = vld [vmem:[#allocation2 + $0x92] sm:$0xff]
      %v3987 = vld [vmem:[#allocation2 + $0x9a] sm:$0xff]
      %v3988 = vld [vmem:[#allocation2 + $0xa2] sm:$0xff]
      %v3989 = vld [vmem:[#allocation2 + $0xaa] sm:$0xff]
      %v3990 = vld [vmem:[#allocation2 + $0xb2] sm:$0xff]
      %v3991 = vld [vmem:[#allocation2 + $0xba] sm:$0xff]
      %v3992 = vld [vmem:[#allocation2 + $0xc2] sm:$0xff]
      %v3993 = vld [vmem:[#allocation2 + $0xca] sm:$0xff]
      %4020 = vrot.lane.b32.xlu0 %v3968, 16
      %v4021 = vpop.permute.xlu0 %4020
      %4022 = vrot.lane.b32.xlu0 %v3969, 16
      %v4023 = vpop.permute.xlu0 %4022
      %4024 = vrot.lane.b32.xlu0 %v3970, 16
      %v4025 = vpop.permute.xlu0 %4024
      %4026 = vrot.lane.b32.xlu0 %v3971, 16
      %v4027 = vpop.permute.xlu0 %4026
      %4028 = vrot.lane.b32.xlu0 %v3972, 16
      %v4029 = vpop.permute.xlu0 %4028
      %4030 = vrot.lane.b32.xlu0 %v3973, 16
      %v4031 = vpop.permute.xlu0 %4030
      %4032 = vrot.lane.b32.xlu0 %v3974, 16
      %v4033 = vpop.permute.xlu0 %4032
      %4034 = vrot.lane.b32.xlu0 %v3975, 16
      %v4035 = vpop.permute.xlu0 %4034
      %4036 = vrot.lane.b32.xlu0 %v3976, 16
      %v4037 = vpop.permute.xlu0 %4036
      %4038 = vrot.lane.b32.xlu0 %v3977, 16
      %v4039 = vpop.permute.xlu0 %4038
      %4040 = vrot.lane.b32.xlu0 %v3978, 16
      %v4041 = vpop.permute.xlu0 %4040
      %4042 = vrot.lane.b32.xlu0 %v3979, 16
      %v4043 = vpop.permute.xlu0 %4042
      %4044 = vrot.lane.b32.xlu0 %v3980, 16
      %v4045 = vpop.permute.xlu0 %4044
      %4046 = vrot.lane.b32.xlu0 %v3981, 16
      %v4047 = vpop.permute.xlu0 %4046
      %4048 = vrot.lane.b32.xlu0 %v3982, 16
      %v4049 = vpop.permute.xlu0 %4048
      %4050 = vrot.lane.b32.xlu0 %v3983, 16
      %v4051 = vpop.permute.xlu0 %4050
      %4052 = vrot.lane.b32.xlu0 %v3984, 16
      %v4053 = vpop.permute.xlu0 %4052
      %4054 = vrot.lane.b32.xlu0 %v3985, 16
      %v4055 = vpop.permute.xlu0 %4054
      %4056 = vrot.lane.b32.xlu0 %v3986, 16
      %v4057 = vpop.permute.xlu0 %4056
      %4058 = vrot.lane.b32.xlu0 %v3987, 16
      %v4059 = vpop.permute.xlu0 %4058
      %4060 = vrot.lane.b32.xlu0 %v3988, 16
      %v4061 = vpop.permute.xlu0 %4060
      %4062 = vrot.lane.b32.xlu0 %v3989, 16
      %v4063 = vpop.permute.xlu0 %4062
      %4064 = vrot.lane.b32.xlu0 %v3990, 16
      %v4065 = vpop.permute.xlu0 %4064
      %4066 = vrot.lane.b32.xlu0 %v3991, 16
      %v4067 = vpop.permute.xlu0 %4066
      %4068 = vrot.lane.b32.xlu0 %v3992, 16
      %v4069 = vpop.permute.xlu0 %4068
      %4070 = vrot.lane.b32.xlu0 %v3993, 16
      %v4071 = vpop.permute.xlu0 %4070
      %4098 = vst.msk [vmem:[#allocation4] sm:$0xff] %vm3182, %v4021
      %4099 = vst.msk [vmem:[#allocation4 + $0x10] sm:$0xff] %vm3182, %v4023
      %4100 = vst.msk [vmem:[#allocation4 + $0x20] sm:$0xff] %vm3182, %v4025
      %4101 = vst.msk [vmem:[#allocation4 + $0x30] sm:$0xff] %vm3182, %v4027
      %4102 = vst.msk [vmem:[#allocation4 + $0x40] sm:$0xff] %vm3182, %v4029
      %4103 = vst.msk [vmem:[#allocation4 + $0x50] sm:$0xff] %vm3182, %v4031
      %4104 = vst.msk [vmem:[#allocation4 + $0x60] sm:$0xff] %vm3182, %v4033
      %4105 = vst.msk [vmem:[#allocation4 + $0x70] sm:$0xff] %vm3182, %v4035
      %4106 = vst.msk [vmem:[#allocation4 + $0x80] sm:$0xff] %vm3182, %v4037
      %4107 = vst.msk [vmem:[#allocation4 + $0x90] sm:$0xff] %vm3182, %v4039
      %4108 = vst.msk [vmem:[#allocation4 + $0xa0] sm:$0xff] %vm3182, %v4041
      %4109 = vst.msk [vmem:[#allocation4 + $0xb0] sm:$0xff] %vm3182, %v4043
      %4110 = vst.msk [vmem:[#allocation4 + $0xc0] sm:$0xff] %vm3182, %v4045
      %4111 = vst.msk [vmem:[#allocation4 + $0xd0] sm:$0xff] %vm3182, %v4047
      %4112 = vst.msk [vmem:[#allocation4 + $0xe0] sm:$0xff] %vm3182, %v4049
      %4113 = vst.msk [vmem:[#allocation4 + $0xf0] sm:$0xff] %vm3182, %v4051
      %4114 = vst.msk [vmem:[#allocation4 + $0x100] sm:$0xff] %vm3182, %v4053
      %4115 = vst.msk [vmem:[#allocation4 + $0x110] sm:$0xff] %vm3182, %v4055
      %4116 = vst.msk [vmem:[#allocation4 + $0x120] sm:$0xff] %vm3182, %v4057
      %4117 = vst.msk [vmem:[#allocation4 + $0x130] sm:$0xff] %vm3182, %v4059
      %4118 = vst.msk [vmem:[#allocation4 + $0x140] sm:$0xff] %vm3182, %v4061
      %4119 = vst.msk [vmem:[#allocation4 + $0x150] sm:$0xff] %vm3182, %v4063
      %4120 = vst.msk [vmem:[#allocation4 + $0x160] sm:$0xff] %vm3182, %v4065
      %4121 = vst.msk [vmem:[#allocation4 + $0x170] sm:$0xff] %vm3182, %v4067
      %4122 = vst.msk [vmem:[#allocation4 + $0x180] sm:$0xff] %vm3182, %v4069
      %4123 = vst.msk [vmem:[#allocation4 + $0x190] sm:$0xff] %vm3182, %v4071
      %v4124 = vld [vmem:[#allocation2 + $0xb] sm:$0xff]
      %v4125 = vld [vmem:[#allocation2 + $0x13] sm:$0xff]
      %v4126 = vld [vmem:[#allocation2 + $0x1b] sm:$0xff]
      %v4127 = vld [vmem:[#allocation2 + $0x23] sm:$0xff]
      %v4128 = vld [vmem:[#allocation2 + $0x2b] sm:$0xff]
      %v4129 = vld [vmem:[#allocation2 + $0x33] sm:$0xff]
      %v4130 = vld [vmem:[#allocation2 + $0x3b] sm:$0xff]
      %v4131 = vld [vmem:[#allocation2 + $0x43] sm:$0xff]
      %v4132 = vld [vmem:[#allocation2 + $0x4b] sm:$0xff]
      %v4133 = vld [vmem:[#allocation2 + $0x53] sm:$0xff]
      %v4134 = vld [vmem:[#allocation2 + $0x5b] sm:$0xff]
      %v4135 = vld [vmem:[#allocation2 + $0x63] sm:$0xff]
      %v4136 = vld [vmem:[#allocation2 + $0x6b] sm:$0xff]
      %v4137 = vld [vmem:[#allocation2 + $0x73] sm:$0xff]
      %v4138 = vld [vmem:[#allocation2 + $0x7b] sm:$0xff]
      %v4139 = vld [vmem:[#allocation2 + $0x83] sm:$0xff]
      %v4140 = vld [vmem:[#allocation2 + $0x8b] sm:$0xff]
      %v4141 = vld [vmem:[#allocation2 + $0x93] sm:$0xff]
      %v4142 = vld [vmem:[#allocation2 + $0x9b] sm:$0xff]
      %v4143 = vld [vmem:[#allocation2 + $0xa3] sm:$0xff]
      %v4144 = vld [vmem:[#allocation2 + $0xab] sm:$0xff]
      %v4145 = vld [vmem:[#allocation2 + $0xb3] sm:$0xff]
      %v4146 = vld [vmem:[#allocation2 + $0xbb] sm:$0xff]
      %v4147 = vld [vmem:[#allocation2 + $0xc3] sm:$0xff]
      %v4148 = vld [vmem:[#allocation2 + $0xcb] sm:$0xff]
      %v4149 = vld [vmem:[#allocation2 + $0xd3] sm:$0xff]
      %4176 = vrot.lane.b32.xlu0 %v4124, 32
      %v4177 = vpop.permute.xlu0 %4176
      %4178 = vrot.lane.b32.xlu0 %v4125, 32
      %v4179 = vpop.permute.xlu0 %4178
      %4180 = vrot.lane.b32.xlu0 %v4126, 32
      %v4181 = vpop.permute.xlu0 %4180
      %4182 = vrot.lane.b32.xlu0 %v4127, 32
      %v4183 = vpop.permute.xlu0 %4182
      %4184 = vrot.lane.b32.xlu0 %v4128, 32
      %v4185 = vpop.permute.xlu0 %4184
      %4186 = vrot.lane.b32.xlu0 %v4129, 32
      %v4187 = vpop.permute.xlu0 %4186
      %4188 = vrot.lane.b32.xlu0 %v4130, 32
      %v4189 = vpop.permute.xlu0 %4188
      %4190 = vrot.lane.b32.xlu0 %v4131, 32
      %v4191 = vpop.permute.xlu0 %4190
      %4192 = vrot.lane.b32.xlu0 %v4132, 32
      %v4193 = vpop.permute.xlu0 %4192
      %4194 = vrot.lane.b32.xlu0 %v4133, 32
      %v4195 = vpop.permute.xlu0 %4194
      %4196 = vrot.lane.b32.xlu0 %v4134, 32
      %v4197 = vpop.permute.xlu0 %4196
      %4198 = vrot.lane.b32.xlu0 %v4135, 32
      %v4199 = vpop.permute.xlu0 %4198
      %4200 = vrot.lane.b32.xlu0 %v4136, 32
      %v4201 = vpop.permute.xlu0 %4200
      %4202 = vrot.lane.b32.xlu0 %v4137, 32
      %v4203 = vpop.permute.xlu0 %4202
      %4204 = vrot.lane.b32.xlu0 %v4138, 32
      %v4205 = vpop.permute.xlu0 %4204
      %4206 = vrot.lane.b32.xlu0 %v4139, 32
      %v4207 = vpop.permute.xlu0 %4206
      %4208 = vrot.lane.b32.xlu0 %v4140, 32
      %v4209 = vpop.permute.xlu0 %4208
      %4210 = vrot.lane.b32.xlu0 %v4141, 32
      %v4211 = vpop.permute.xlu0 %4210
      %4212 = vrot.lane.b32.xlu0 %v4142, 32
      %v4213 = vpop.permute.xlu0 %4212
      %4214 = vrot.lane.b32.xlu0 %v4143, 32
      %v4215 = vpop.permute.xlu0 %4214
      %4216 = vrot.lane.b32.xlu0 %v4144, 32
      %v4217 = vpop.permute.xlu0 %4216
      %4218 = vrot.lane.b32.xlu0 %v4145, 32
      %v4219 = vpop.permute.xlu0 %4218
      %4220 = vrot.lane.b32.xlu0 %v4146, 32
      %v4221 = vpop.permute.xlu0 %4220
      %4222 = vrot.lane.b32.xlu0 %v4147, 32
      %v4223 = vpop.permute.xlu0 %4222
      %4224 = vrot.lane.b32.xlu0 %v4148, 32
      %v4225 = vpop.permute.xlu0 %4224
      %4226 = vrot.lane.b32.xlu0 %v4149, 32
      %v4227 = vpop.permute.xlu0 %4226
      %4254 = vst.msk [vmem:[#allocation4] sm:$0xff] %vm3339, %v4177
      %4255 = vst.msk [vmem:[#allocation4 + $0x10] sm:$0xff] %vm3339, %v4179
      %4256 = vst.msk [vmem:[#allocation4 + $0x20] sm:$0xff] %vm3339, %v4181
      %4257 = vst.msk [vmem:[#allocation4 + $0x30] sm:$0xff] %vm3339, %v4183
      %4258 = vst.msk [vmem:[#allocation4 + $0x40] sm:$0xff] %vm3339, %v4185
      %4259 = vst.msk [vmem:[#allocation4 + $0x50] sm:$0xff] %vm3339, %v4187
      %4260 = vst.msk [vmem:[#allocation4 + $0x60] sm:$0xff] %vm3339, %v4189
      %4261 = vst.msk [vmem:[#allocation4 + $0x70] sm:$0xff] %vm3339, %v4191
      %4262 = vst.msk [vmem:[#allocation4 + $0x80] sm:$0xff] %vm3339, %v4193
      %4263 = vst.msk [vmem:[#allocation4 + $0x90] sm:$0xff] %vm3339, %v4195
      %4264 = vst.msk [vmem:[#allocation4 + $0xa0] sm:$0xff] %vm3339, %v4197
      %4265 = vst.msk [vmem:[#allocation4 + $0xb0] sm:$0xff] %vm3339, %v4199
      %4266 = vst.msk [vmem:[#allocation4 + $0xc0] sm:$0xff] %vm3339, %v4201
      %4267 = vst.msk [vmem:[#allocation4 + $0xd0] sm:$0xff] %vm3339, %v4203
      %4268 = vst.msk [vmem:[#allocation4 + $0xe0] sm:$0xff] %vm3339, %v4205
      %4269 = vst.msk [vmem:[#allocation4 + $0xf0] sm:$0xff] %vm3339, %v4207
      %4270 = vst.msk [vmem:[#allocation4 + $0x100] sm:$0xff] %vm3339, %v4209
      %4271 = vst.msk [vmem:[#allocation4 + $0x110] sm:$0xff] %vm3339, %v4211
      %4272 = vst.msk [vmem:[#allocation4 + $0x120] sm:$0xff] %vm3339, %v4213
      %4273 = vst.msk [vmem:[#allocation4 + $0x130] sm:$0xff] %vm3339, %v4215
      %4274 = vst.msk [vmem:[#allocation4 + $0x140] sm:$0xff] %vm3339, %v4217
      %4275 = vst.msk [vmem:[#allocation4 + $0x150] sm:$0xff] %vm3339, %v4219
      %4276 = vst.msk [vmem:[#allocation4 + $0x160] sm:$0xff] %vm3339, %v4221
      %4277 = vst.msk [vmem:[#allocation4 + $0x170] sm:$0xff] %vm3339, %v4223
      %4278 = vst.msk [vmem:[#allocation4 + $0x180] sm:$0xff] %vm3339, %v4225
      %4279 = vst.msk [vmem:[#allocation4 + $0x190] sm:$0xff] %vm3339, %v4227
      %v4280 = vld [vmem:[#allocation2 + $0xc] sm:$0xff]
      %v4281 = vld [vmem:[#allocation2 + $0x14] sm:$0xff]
      %v4282 = vld [vmem:[#allocation2 + $0x1c] sm:$0xff]
      %v4283 = vld [vmem:[#allocation2 + $0x24] sm:$0xff]
      %v4284 = vld [vmem:[#allocation2 + $0x2c] sm:$0xff]
      %v4285 = vld [vmem:[#allocation2 + $0x34] sm:$0xff]
      %v4286 = vld [vmem:[#allocation2 + $0x3c] sm:$0xff]
      %v4287 = vld [vmem:[#allocation2 + $0x44] sm:$0xff]
      %v4288 = vld [vmem:[#allocation2 + $0x4c] sm:$0xff]
      %v4289 = vld [vmem:[#allocation2 + $0x54] sm:$0xff]
      %v4290 = vld [vmem:[#allocation2 + $0x5c] sm:$0xff]
      %v4291 = vld [vmem:[#allocation2 + $0x64] sm:$0xff]
      %v4292 = vld [vmem:[#allocation2 + $0x6c] sm:$0xff]
      %v4293 = vld [vmem:[#allocation2 + $0x74] sm:$0xff]
      %v4294 = vld [vmem:[#allocation2 + $0x7c] sm:$0xff]
      %v4295 = vld [vmem:[#allocation2 + $0x84] sm:$0xff]
      %v4296 = vld [vmem:[#allocation2 + $0x8c] sm:$0xff]
      %v4297 = vld [vmem:[#allocation2 + $0x94] sm:$0xff]
      %v4298 = vld [vmem:[#allocation2 + $0x9c] sm:$0xff]
      %v4299 = vld [vmem:[#allocation2 + $0xa4] sm:$0xff]
      %v4300 = vld [vmem:[#allocation2 + $0xac] sm:$0xff]
      %v4301 = vld [vmem:[#allocation2 + $0xb4] sm:$0xff]
      %v4302 = vld [vmem:[#allocation2 + $0xbc] sm:$0xff]
      %v4303 = vld [vmem:[#allocation2 + $0xc4] sm:$0xff]
      %v4304 = vld [vmem:[#allocation2 + $0xcc] sm:$0xff]
      %v4305 = vld [vmem:[#allocation2 + $0xd4] sm:$0xff]
      %4332 = vrot.lane.b32.xlu0 %v4280, 48
      %v4333 = vpop.permute.xlu0 %4332
      %4334 = vrot.lane.b32.xlu0 %v4281, 48
      %v4335 = vpop.permute.xlu0 %4334
      %4336 = vrot.lane.b32.xlu0 %v4282, 48
      %v4337 = vpop.permute.xlu0 %4336
      %4338 = vrot.lane.b32.xlu0 %v4283, 48
      %v4339 = vpop.permute.xlu0 %4338
      %4340 = vrot.lane.b32.xlu0 %v4284, 48
      %v4341 = vpop.permute.xlu0 %4340
      %4342 = vrot.lane.b32.xlu0 %v4285, 48
      %v4343 = vpop.permute.xlu0 %4342
      %4344 = vrot.lane.b32.xlu0 %v4286, 48
      %v4345 = vpop.permute.xlu0 %4344
      %4346 = vrot.lane.b32.xlu0 %v4287, 48
      %v4347 = vpop.permute.xlu0 %4346
      %4348 = vrot.lane.b32.xlu0 %v4288, 48
      %v4349 = vpop.permute.xlu0 %4348
      %4350 = vrot.lane.b32.xlu0 %v4289, 48
      %v4351 = vpop.permute.xlu0 %4350
      %4352 = vrot.lane.b32.xlu0 %v4290, 48
      %v4353 = vpop.permute.xlu0 %4352
      %4354 = vrot.lane.b32.xlu0 %v4291, 48
      %v4355 = vpop.permute.xlu0 %4354
      %4356 = vrot.lane.b32.xlu0 %v4292, 48
      %v4357 = vpop.permute.xlu0 %4356
      %4358 = vrot.lane.b32.xlu0 %v4293, 48
      %v4359 = vpop.permute.xlu0 %4358
      %4360 = vrot.lane.b32.xlu0 %v4294, 48
      %v4361 = vpop.permute.xlu0 %4360
      %4362 = vrot.lane.b32.xlu0 %v4295, 48
      %v4363 = vpop.permute.xlu0 %4362
      %4364 = vrot.lane.b32.xlu0 %v4296, 48
      %v4365 = vpop.permute.xlu0 %4364
      %4366 = vrot.lane.b32.xlu0 %v4297, 48
      %v4367 = vpop.permute.xlu0 %4366
      %4368 = vrot.lane.b32.xlu0 %v4298, 48
      %v4369 = vpop.permute.xlu0 %4368
      %4370 = vrot.lane.b32.xlu0 %v4299, 48
      %v4371 = vpop.permute.xlu0 %4370
      %4372 = vrot.lane.b32.xlu0 %v4300, 48
      %v4373 = vpop.permute.xlu0 %4372
      %4374 = vrot.lane.b32.xlu0 %v4301, 48
      %v4375 = vpop.permute.xlu0 %4374
      %4376 = vrot.lane.b32.xlu0 %v4302, 48
      %v4377 = vpop.permute.xlu0 %4376
      %4378 = vrot.lane.b32.xlu0 %v4303, 48
      %v4379 = vpop.permute.xlu0 %4378
      %4380 = vrot.lane.b32.xlu0 %v4304, 48
      %v4381 = vpop.permute.xlu0 %4380
      %4382 = vrot.lane.b32.xlu0 %v4305, 48
      %v4383 = vpop.permute.xlu0 %4382
      %4410 = vst.msk [vmem:[#allocation4] sm:$0xff] %vm3496, %v4333
      %4411 = vst.msk [vmem:[#allocation4 + $0x10] sm:$0xff] %vm3496, %v4335
      %4412 = vst.msk [vmem:[#allocation4 + $0x20] sm:$0xff] %vm3496, %v4337
      %4413 = vst.msk [vmem:[#allocation4 + $0x30] sm:$0xff] %vm3496, %v4339
      %4414 = vst.msk [vmem:[#allocation4 + $0x40] sm:$0xff] %vm3496, %v4341
      %4415 = vst.msk [vmem:[#allocation4 + $0x50] sm:$0xff] %vm3496, %v4343
      %4416 = vst.msk [vmem:[#allocation4 + $0x60] sm:$0xff] %vm3496, %v4345
      %4417 = vst.msk [vmem:[#allocation4 + $0x70] sm:$0xff] %vm3496, %v4347
      %4418 = vst.msk [vmem:[#allocation4 + $0x80] sm:$0xff] %vm3496, %v4349
      %4419 = vst.msk [vmem:[#allocation4 + $0x90] sm:$0xff] %vm3496, %v4351
      %4420 = vst.msk [vmem:[#allocation4 + $0xa0] sm:$0xff] %vm3496, %v4353
      %4421 = vst.msk [vmem:[#allocation4 + $0xb0] sm:$0xff] %vm3496, %v4355
      %4422 = vst.msk [vmem:[#allocation4 + $0xc0] sm:$0xff] %vm3496, %v4357
      %4423 = vst.msk [vmem:[#allocation4 + $0xd0] sm:$0xff] %vm3496, %v4359
      %4424 = vst.msk [vmem:[#allocation4 + $0xe0] sm:$0xff] %vm3496, %v4361
      %4425 = vst.msk [vmem:[#allocation4 + $0xf0] sm:$0xff] %vm3496, %v4363
      %4426 = vst.msk [vmem:[#allocation4 + $0x100] sm:$0xff] %vm3496, %v4365
      %4427 = vst.msk [vmem:[#allocation4 + $0x110] sm:$0xff] %vm3496, %v4367
      %4428 = vst.msk [vmem:[#allocation4 + $0x120] sm:$0xff] %vm3496, %v4369
      %4429 = vst.msk [vmem:[#allocation4 + $0x130] sm:$0xff] %vm3496, %v4371
      %4430 = vst.msk [vmem:[#allocation4 + $0x140] sm:$0xff] %vm3496, %v4373
      %4431 = vst.msk [vmem:[#allocation4 + $0x150] sm:$0xff] %vm3496, %v4375
      %4432 = vst.msk [vmem:[#allocation4 + $0x160] sm:$0xff] %vm3496, %v4377
      %4433 = vst.msk [vmem:[#allocation4 + $0x170] sm:$0xff] %vm3496, %v4379
      %4434 = vst.msk [vmem:[#allocation4 + $0x180] sm:$0xff] %vm3496, %v4381
      %4435 = vst.msk [vmem:[#allocation4 + $0x190] sm:$0xff] %vm3496, %v4383
      %v4436 = vld [vmem:[#allocation4] sm:$0xff]
      %v4437 = vld [vmem:[#allocation4 + $0x10] sm:$0xff]
      %v4438 = vld [vmem:[#allocation4 + $0x20] sm:$0xff]
      %v4439 = vld [vmem:[#allocation4 + $0x30] sm:$0xff]
      %v4440 = vld [vmem:[#allocation4 + $0x40] sm:$0xff]
      %v4441 = vld [vmem:[#allocation4 + $0x50] sm:$0xff]
      %v4442 = vld [vmem:[#allocation4 + $0x60] sm:$0xff]
      %v4443 = vld [vmem:[#allocation4 + $0x70] sm:$0xff]
      %v4444 = vld [vmem:[#allocation4 + $0x80] sm:$0xff]
      %v4445 = vld [vmem:[#allocation4 + $0x90] sm:$0xff]
      %v4446 = vld [vmem:[#allocation4 + $0xa0] sm:$0xff]
      %v4447 = vld [vmem:[#allocation4 + $0xb0] sm:$0xff]
      %v4448 = vld [vmem:[#allocation4 + $0xc0] sm:$0xff]
      %v4449 = vld [vmem:[#allocation4 + $0xd0] sm:$0xff]
      %v4450 = vld [vmem:[#allocation4 + $0xe0] sm:$0xff]
      %v4451 = vld [vmem:[#allocation4 + $0xf0] sm:$0xff]
      %v4452 = vld [vmem:[#allocation4 + $0x100] sm:$0xff]
      %v4453 = vld [vmem:[#allocation4 + $0x110] sm:$0xff]
      %v4454 = vld [vmem:[#allocation4 + $0x120] sm:$0xff]
      %v4455 = vld [vmem:[#allocation4 + $0x130] sm:$0xff]
      %v4456 = vld [vmem:[#allocation4 + $0x140] sm:$0xff]
      %v4457 = vld [vmem:[#allocation4 + $0x150] sm:$0xff]
      %v4458 = vld [vmem:[#allocation4 + $0x160] sm:$0xff]
      %v4459 = vld [vmem:[#allocation4 + $0x170] sm:$0xff]
      %v4460 = vld [vmem:[#allocation4 + $0x180] sm:$0xff]
      %v4461 = vld [vmem:[#allocation4 + $0x190] sm:$0xff]
      %s4462 = scalar_lea.vmem %s3, 64
      %v4463 = vld [vmem:[%s4462] sm:$0xff]
      %v4464 = vld [vmem:[%s4462 + $0x8] sm:$0xff]
      %v4465 = vld [vmem:[%s4462 + $0x10] sm:$0xff]
      %v4466 = vld [vmem:[%s4462 + $0x18] sm:$0xff]
      %v4467 = vld [vmem:[%s4462 + $0x20] sm:$0xff]
      %v4468 = vld [vmem:[%s4462 + $0x28] sm:$0xff]
      %v4469 = vld [vmem:[%s4462 + $0x30] sm:$0xff]
      %v4470 = vld [vmem:[%s4462 + $0x38] sm:$0xff]
      %v4471 = vld [vmem:[%s4] sm:$0x1]
      %v4473 = vlaneseq
      %v4474 = vshrl.u32 %v4473, 7
      %v4475 = vsub.s32 0, %v4474
      %v4476 = vrot.slane %v4471, %v4475
      %v4479 = vsel %vm3564, %v4436, 0
      %v4482 = vsel %vm3564, %v4437, 0
      %v4485 = vsel %vm3564, %v4438, 0
      %v4488 = vsel %vm3564, %v4439, 0
      %v4491 = vsel %vm3564, %v4440, 0
      %v4494 = vsel %vm3564, %v4441, 0
      %v4497 = vsel %vm3564, %v4442, 0
      %v4500 = vsel %vm3564, %v4443, 0
      %v4503 = vsel %vm3564, %v4444, 0
      %v4506 = vsel %vm3564, %v4445, 0
      %v4509 = vsel %vm3564, %v4446, 0
      %v4512 = vsel %vm3564, %v4447, 0
      %v4515 = vsel %vm3564, %v4448, 0
      %v4518 = vsel %vm3564, %v4449, 0
      %v4521 = vsel %vm3564, %v4450, 0
      %v4524 = vsel %vm3564, %v4451, 0
      %v4527 = vsel %vm3564, %v4452, 0
      %v4530 = vsel %vm3564, %v4453, 0
      %v4533 = vsel %vm3564, %v4454, 0
      %v4536 = vsel %vm3564, %v4455, 0
      %v4539 = vsel %vm3564, %v4456, 0
      %v4542 = vsel %vm3564, %v4457, 0
      %v4545 = vsel %vm3564, %v4458, 0
      %v4548 = vsel %vm3564, %v4459, 0
      %v4551 = vsel %vm3564, %v4460, 0
      %v4554 = vsel %vm3564, %v4461, 0
      %4556 = vmatprep.subr.mxu0 0.0
      %4557 = vmatpush1.msra.mxu0 %v4463
      %4558 = vmatprep.subr.mxu0 0.0
      %4559 = vmatpush1.msra.mxu0 %v4464
      %4560 = vmatprep.subr.mxu0 0.0
      %4561 = vmatpush1.msra.mxu0 %v4465
      %4562 = vmatprep.subr.mxu0 0.0
      %4563 = vmatpush1.msra.mxu0 %v4466
      %4564 = vmatprep.subr.mxu0 0.0
      %4565 = vmatpush1.msra.mxu0 %v4467
      %4566 = vmatprep.subr.mxu0 0.0
      %4567 = vmatpush1.msra.mxu0 %v4468
      %4568 = vmatprep.subr.mxu0 0.0
      %4569 = vmatpush1.msra.mxu0 %v4469
      %4570 = vmatprep.subr.mxu0 0.0
      %4571 = vmatpush1.msra.mxu0 %v4470
      %4572 = vmatprep.subr.mxu0 0.0
      %4573 = vmatpush1.msra.mxu0 0.0
      %4574 = vmatprep.subr.mxu0 0.0
      %4575 = vmatpush1.msra.mxu0 0.0
      %4576 = vmatprep.subr.mxu0 0.0
      %4577 = vmatpush1.msra.mxu0 0.0
      %4578 = vmatprep.subr.mxu0 0.0
      %4579 = vmatpush1.msra.mxu0 0.0
      %4580 = vmatprep.subr.mxu0 0.0
      %4581 = vmatpush1.msra.mxu0 0.0
      %4582 = vmatprep.subr.mxu0 0.0
      %4583 = vmatpush1.msra.mxu0 0.0
      %4584 = vmatprep.subr.mxu0 0.0
      %4585 = vmatpush1.msra.mxu0 0.0
      %4586 = vmatprep.subr.mxu0 0.0
      %4587 = vmatpush1.msra.mxu0 0.0
      %4588 = vmatprep.subr.mxu0 0.0
      %4589 = vmatpush1.msra.mxu0 0.0
      %4590 = vmatprep.subr.mxu0 0.0
      %4591 = vmatpush1.msra.mxu0 0.0
      %4592 = vmatprep.subr.mxu0 0.0
      %4593 = vmatpush1.msra.mxu0 0.0
      %4594 = vmatprep.subr.mxu0 0.0
      %4595 = vmatpush1.msra.mxu0 0.0
      %4596 = vmatprep.subr.mxu0 0.0
      %4597 = vmatpush1.msra.mxu0 0.0
      %4598 = vmatprep.subr.mxu0 0.0
      %4599 = vmatpush1.msra.mxu0 0.0
      %4600 = vmatprep.subr.mxu0 0.0
      %4601 = vmatpush1.msra.mxu0 0.0
      %4602 = vmatprep.subr.mxu0 0.0
      %4603 = vmatpush1.msra.mxu0 0.0
      %4604 = vmatprep.subr.mxu0 0.0
      %4605 = vmatpush1.msra.mxu0 0.0
      %4606 = vmatprep.subr.mxu0 0.0
      %4607 = vmatpush1.msra.mxu0 0.0
      %4608 = vmatprep.subr.mxu0 0.0
      %4609 = vmatpush1.msra.mxu0 0.0
      %4610 = vmatprep.subr.mxu0 0.0
      %4611 = vmatpush1.msra.mxu0 0.0
      %4612 = vmatprep.subr.mxu0 0.0
      %4613 = vmatpush1.msra.mxu0 0.0
      %4614 = vmatprep.subr.mxu0 0.0
      %4615 = vmatpush1.msra.mxu0 0.0
      %4616 = vmatprep.subr.mxu0 0.0
      %4617 = vmatpush1.msra.mxu0 0.0
      %4618 = vmatprep.subr.mxu0 0.0
      %4619 = vmatpush1.msra.mxu0 0.0
      %4620 = vmatprep.mubr.f32.mxu0 0.0
      %4621 = vmatmul.mubr.f32.gmra.mrb[0].mxu0 %v4479
      %v4622 = vpop.f32.mrb[0].mxu0
      %v4623 = vadd.f32 %v4476, %v4622
      %v4624 = vpop.f32.mrb[0].mxu0
      %4625 = vmatprep.mubr.f32.mxu0 0.0
      %4626 = vmatmul.mubr.f32.gmra.mrb[0].mxu0 %v4482
      %v4627 = vpop.f32.mrb[0].mxu0
      %v4628 = vadd.f32 %v4476, %v4627
      %v4629 = vpop.f32.mrb[0].mxu0
      %4630 = vmatprep.mubr.f32.mxu0 0.0
      %4631 = vmatmul.mubr.f32.gmra.mrb[0].mxu0 %v4485
      %v4632 = vpop.f32.mrb[0].mxu0
      %v4633 = vadd.f32 %v4476, %v4632
      %v4634 = vpop.f32.mrb[0].mxu0
      %4635 = vmatprep.mubr.f32.mxu0 0.0
      %4636 = vmatmul.mubr.f32.gmra.mrb[0].mxu0 %v4488
      %v4637 = vpop.f32.mrb[0].mxu0
      %v4638 = vadd.f32 %v4476, %v4637
      %v4639 = vpop.f32.mrb[0].mxu0
      %4640 = vmatprep.mubr.f32.mxu0 0.0
      %4641 = vmatmul.mubr.f32.gmra.mrb[0].mxu0 %v4491
      %v4642 = vpop.f32.mrb[0].mxu0
      %v4643 = vadd.f32 %v4476, %v4642
      %v4644 = vpop.f32.mrb[0].mxu0
      %4645 = vmatprep.mubr.f32.mxu0 0.0
      %4646 = vmatmul.mubr.f32.gmra.mrb[0].mxu0 %v4494
      %v4647 = vpop.f32.mrb[0].mxu0
      %v4648 = vadd.f32 %v4476, %v4647
      %v4649 = vpop.f32.mrb[0].mxu0
      %4650 = vmatprep.mubr.f32.mxu0 0.0
      %4651 = vmatmul.mubr.f32.gmra.mrb[0].mxu0 %v4497
      %v4652 = vpop.f32.mrb[0].mxu0
      %v4653 = vadd.f32 %v4476, %v4652
      %v4654 = vpop.f32.mrb[0].mxu0
      %4655 = vmatprep.mubr.f32.mxu0 0.0
      %4656 = vmatmul.mubr.f32.gmra.mrb[0].mxu0 %v4500
      %v4657 = vpop.f32.mrb[0].mxu0
      %v4658 = vadd.f32 %v4476, %v4657
      %v4659 = vpop.f32.mrb[0].mxu0
      %4660 = vmatprep.mubr.f32.mxu0 0.0
      %4661 = vmatmul.mubr.f32.gmra.mrb[0].mxu0 %v4503
      %v4662 = vpop.f32.mrb[0].mxu0
      %v4663 = vadd.f32 %v4476, %v4662
      %v4664 = vpop.f32.mrb[0].mxu0
      %4665 = vmatprep.mubr.f32.mxu0 0.0
      %4666 = vmatmul.mubr.f32.gmra.mrb[0].mxu0 %v4506
      %v4667 = vpop.f32.mrb[0].mxu0
      %v4668 = vadd.f32 %v4476, %v4667
      %v4669 = vpop.f32.mrb[0].mxu0
      %4670 = vmatprep.mubr.f32.mxu0 0.0
      %4671 = vmatmul.mubr.f32.gmra.mrb[0].mxu0 %v4509
      %v4672 = vpop.f32.mrb[0].mxu0
      %v4673 = vadd.f32 %v4476, %v4672
      %v4674 = vpop.f32.mrb[0].mxu0
      %4675 = vmatprep.mubr.f32.mxu0 0.0
      %4676 = vmatmul.mubr.f32.gmra.mrb[0].mxu0 %v4512
      %v4677 = vpop.f32.mrb[0].mxu0
      %v4678 = vadd.f32 %v4476, %v4677
      %v4679 = vpop.f32.mrb[0].mxu0
      %4680 = vmatprep.mubr.f32.mxu0 0.0
      %4681 = vmatmul.mubr.f32.gmra.mrb[0].mxu0 %v4515
      %v4682 = vpop.f32.mrb[0].mxu0
      %v4683 = vadd.f32 %v4476, %v4682
      %v4684 = vpop.f32.mrb[0].mxu0
      %4685 = vmatprep.mubr.f32.mxu0 0.0
      %4686 = vmatmul.mubr.f32.gmra.mrb[0].mxu0 %v4518
      %v4687 = vpop.f32.mrb[0].mxu0
      %v4688 = vadd.f32 %v4476, %v4687
      %v4689 = vpop.f32.mrb[0].mxu0
      %4690 = vmatprep.mubr.f32.mxu0 0.0
      %4691 = vmatmul.mubr.f32.gmra.mrb[0].mxu0 %v4521
      %v4692 = vpop.f32.mrb[0].mxu0
      %v4693 = vadd.f32 %v4476, %v4692
      %v4694 = vpop.f32.mrb[0].mxu0
      %4695 = vmatprep.mubr.f32.mxu0 0.0
      %4696 = vmatmul.mubr.f32.gmra.mrb[0].mxu0 %v4524
      %v4697 = vpop.f32.mrb[0].mxu0
      %v4698 = vadd.f32 %v4476, %v4697
      %v4699 = vpop.f32.mrb[0].mxu0
      %4700 = vmatprep.mubr.f32.mxu0 0.0
      %4701 = vmatmul.mubr.f32.gmra.mrb[0].mxu0 %v4527
      %v4702 = vpop.f32.mrb[0].mxu0
      %v4703 = vadd.f32 %v4476, %v4702
      %v4704 = vpop.f32.mrb[0].mxu0
      %4705 = vmatprep.mubr.f32.mxu0 0.0
      %4706 = vmatmul.mubr.f32.gmra.mrb[0].mxu0 %v4530
      %v4707 = vpop.f32.mrb[0].mxu0
      %v4708 = vadd.f32 %v4476, %v4707
      %v4709 = vpop.f32.mrb[0].mxu0
      %4710 = vmatprep.mubr.f32.mxu0 0.0
      %4711 = vmatmul.mubr.f32.gmra.mrb[0].mxu0 %v4533
      %v4712 = vpop.f32.mrb[0].mxu0
      %v4713 = vadd.f32 %v4476, %v4712
      %v4714 = vpop.f32.mrb[0].mxu0
      %4715 = vmatprep.mubr.f32.mxu0 0.0
      %4716 = vmatmul.mubr.f32.gmra.mrb[0].mxu0 %v4536
      %v4717 = vpop.f32.mrb[0].mxu0
      %v4718 = vadd.f32 %v4476, %v4717
      %v4719 = vpop.f32.mrb[0].mxu0
      %4720 = vmatprep.mubr.f32.mxu0 0.0
      %4721 = vmatmul.mubr.f32.gmra.mrb[0].mxu0 %v4539
      %v4722 = vpop.f32.mrb[0].mxu0
      %v4723 = vadd.f32 %v4476, %v4722
      %v4724 = vpop.f32.mrb[0].mxu0
      %4725 = vmatprep.mubr.f32.mxu0 0.0
      %4726 = vmatmul.mubr.f32.gmra.mrb[0].mxu0 %v4542
      %v4727 = vpop.f32.mrb[0].mxu0
      %v4728 = vadd.f32 %v4476, %v4727
      %v4729 = vpop.f32.mrb[0].mxu0
      %4730 = vmatprep.mubr.f32.mxu0 0.0
      %4731 = vmatmul.mubr.f32.gmra.mrb[0].mxu0 %v4545
      %v4732 = vpop.f32.mrb[0].mxu0
      %v4733 = vadd.f32 %v4476, %v4732
      %v4734 = vpop.f32.mrb[0].mxu0
      %4735 = vmatprep.mubr.f32.mxu0 0.0
      %4736 = vmatmul.mubr.f32.gmra.mrb[0].mxu0 %v4548
      %v4737 = vpop.f32.mrb[0].mxu0
      %v4738 = vadd.f32 %v4476, %v4737
      %v4739 = vpop.f32.mrb[0].mxu0
      %4740 = vmatprep.mubr.f32.mxu0 0.0
      %4741 = vmatmul.mubr.f32.gmra.mrb[0].mxu0 %v4551
      %v4742 = vpop.f32.mrb[0].mxu0
      %v4743 = vadd.f32 %v4476, %v4742
      %v4744 = vpop.f32.mrb[0].mxu0
      %4745 = vmatprep.mubr.f32.mxu0 0.0
      %4746 = vmatmul.mubr.f32.gmra.mrb[0].mxu0 %v4554
      %v4747 = vpop.f32.mrb[0].mxu0
      %v4748 = vadd.f32 %v4476, %v4747
      %v4749 = vpop.f32.mrb[0].mxu0
      %4750 = vdwg.mxu0
      %v4751 = vmax.f32 %v4623, 0.0
      %v4752 = vmax.f32 %v4628, 0.0
      %v4753 = vmax.f32 %v4633, 0.0
      %v4754 = vmax.f32 %v4638, 0.0
      %v4755 = vmax.f32 %v4643, 0.0
      %v4756 = vmax.f32 %v4648, 0.0
      %v4757 = vmax.f32 %v4653, 0.0
      %v4758 = vmax.f32 %v4658, 0.0
      %v4759 = vmax.f32 %v4663, 0.0
      %v4760 = vmax.f32 %v4668, 0.0
      %v4761 = vmax.f32 %v4673, 0.0
      %v4762 = vmax.f32 %v4678, 0.0
      %v4763 = vmax.f32 %v4683, 0.0
      %v4764 = vmax.f32 %v4688, 0.0
      %v4765 = vmax.f32 %v4693, 0.0
      %v4766 = vmax.f32 %v4698, 0.0
      %v4767 = vmax.f32 %v4703, 0.0
      %v4768 = vmax.f32 %v4708, 0.0
      %v4769 = vmax.f32 %v4713, 0.0
      %v4770 = vmax.f32 %v4718, 0.0
      %v4771 = vmax.f32 %v4723, 0.0
      %v4772 = vmax.f32 %v4728, 0.0
      %v4773 = vmax.f32 %v4733, 0.0
      %v4774 = vmax.f32 %v4738, 0.0
      %v4775 = vmax.f32 %v4743, 0.0
      %v4776 = vmax.f32 %v4748, 0.0
      %v4777 = vsel %vm1271, %v4751, 0.0
      %v4778 = vsel %vm1272, %v4752, 0.0
      %v4779 = vsel %vm1273, %v4753, 0.0
      %v4780 = vsel %vm1274, %v4754, 0.0
      %v4781 = vsel %vm1275, %v4755, 0.0
      %v4782 = vsel %vm1276, %v4756, 0.0
      %v4783 = vsel %vm1277, %v4757, 0.0
      %v4784 = vsel %vm1278, %v4758, 0.0
      %v4785 = vsel %vm1279, %v4759, 0.0
      %v4786 = vsel %vm1280, %v4760, 0.0
      %v4787 = vsel %vm1281, %v4761, 0.0
      %v4788 = vsel %vm1282, %v4762, 0.0
      %v4789 = vsel %vm1283, %v4763, 0.0
      %v4790 = vsel %vm1284, %v4764, 0.0
      %v4791 = vsel %vm1285, %v4765, 0.0
      %v4792 = vsel %vm1286, %v4766, 0.0
      %v4793 = vsel %vm1287, %v4767, 0.0
      %v4794 = vsel %vm1288, %v4768, 0.0
      %v4795 = vsel %vm1289, %v4769, 0.0
      %v4796 = vsel %vm1290, %v4770, 0.0
      %v4797 = vsel %vm1291, %v4771, 0.0
      %v4798 = vsel %vm1292, %v4772, 0.0
      %v4799 = vsel %vm1293, %v4773, 0.0
      %v4800 = vsel %vm1294, %v4774, 0.0
      %v4801 = vsel %vm1295, %v4775, 0.0
      %v4802 = vsel %vm1296, %v4776, 0.0
      %4803 = vst.msk [vmem:[%s293 + $0xb] sm:$0xff] %vm282, %v4777
      %4804 = vst.msk [vmem:[%s293 + $0x13] sm:$0xff] %vm282, %v4778
      %4805 = vst.msk [vmem:[%s293 + $0x1b] sm:$0xff] %vm282, %v4779
      %4806 = vst.msk [vmem:[%s293 + $0x23] sm:$0xff] %vm282, %v4780
      %4807 = vst.msk [vmem:[%s293 + $0x2b] sm:$0xff] %vm282, %v4781
      %4808 = vst.msk [vmem:[%s293 + $0x33] sm:$0xff] %vm282, %v4782
      %4809 = vst.msk [vmem:[%s293 + $0x3b] sm:$0xff] %vm282, %v4783
      %4810 = vst.msk [vmem:[%s293 + $0x43] sm:$0xff] %vm282, %v4784
      %4811 = vst.msk [vmem:[%s293 + $0x4b] sm:$0xff] %vm282, %v4785
      %4812 = vst.msk [vmem:[%s293 + $0x53] sm:$0xff] %vm282, %v4786
      %4813 = vst.msk [vmem:[%s293 + $0x5b] sm:$0xff] %vm282, %v4787
      %4814 = vst.msk [vmem:[%s293 + $0x63] sm:$0xff] %vm282, %v4788
      %4815 = vst.msk [vmem:[%s293 + $0x6b] sm:$0xff] %vm282, %v4789
      %4816 = vst.msk [vmem:[%s293 + $0x73] sm:$0xff] %vm282, %v4790
      %4817 = vst.msk [vmem:[%s293 + $0x7b] sm:$0xff] %vm282, %v4791
      %4818 = vst.msk [vmem:[%s293 + $0x83] sm:$0xff] %vm282, %v4792
      %4819 = vst.msk [vmem:[%s293 + $0x8b] sm:$0xff] %vm282, %v4793
      %4820 = vst.msk [vmem:[%s293 + $0x93] sm:$0xff] %vm282, %v4794
      %4821 = vst.msk [vmem:[%s293 + $0x9b] sm:$0xff] %vm282, %v4795
      %4822 = vst.msk [vmem:[%s293 + $0xa3] sm:$0xff] %vm282, %v4796
      %4823 = vst.msk [vmem:[%s293 + $0xab] sm:$0xff] %vm282, %v4797
      %4824 = vst.msk [vmem:[%s293 + $0xb3] sm:$0xff] %vm282, %v4798
      %4825 = vst.msk [vmem:[%s293 + $0xbb] sm:$0xff] %vm282, %v4799
      %4826 = vst.msk [vmem:[%s293 + $0xc3] sm:$0xff] %vm282, %v4800
      %4827 = vst.msk [vmem:[%s293 + $0xcb] sm:$0xff] %vm282, %v4801
      %4828 = vst.msk [vmem:[%s293 + $0xd3] sm:$0xff] %vm282, %v4802
      %v4829 = vld [vmem:[#allocation2 + $0xa] sm:$0xff]
      %v4830 = vld [vmem:[#allocation2 + $0x12] sm:$0xff]
      %v4831 = vld [vmem:[#allocation2 + $0x1a] sm:$0xff]
      %v4832 = vld [vmem:[#allocation2 + $0x22] sm:$0xff]
      %v4833 = vld [vmem:[#allocation2 + $0x2a] sm:$0xff]
      %v4834 = vld [vmem:[#allocation2 + $0x32] sm:$0xff]
      %v4835 = vld [vmem:[#allocation2 + $0x3a] sm:$0xff]
      %v4836 = vld [vmem:[#allocation2 + $0x42] sm:$0xff]
      %v4837 = vld [vmem:[#allocation2 + $0x4a] sm:$0xff]
      %v4838 = vld [vmem:[#allocation2 + $0x52] sm:$0xff]
      %v4839 = vld [vmem:[#allocation2 + $0x5a] sm:$0xff]
      %v4840 = vld [vmem:[#allocation2 + $0x62] sm:$0xff]
      %v4841 = vld [vmem:[#allocation2 + $0x6a] sm:$0xff]
      %v4842 = vld [vmem:[#allocation2 + $0x72] sm:$0xff]
      %v4843 = vld [vmem:[#allocation2 + $0x7a] sm:$0xff]
      %v4844 = vld [vmem:[#allocation2 + $0x82] sm:$0xff]
      %v4845 = vld [vmem:[#allocation2 + $0x8a] sm:$0xff]
      %v4846 = vld [vmem:[#allocation2 + $0x92] sm:$0xff]
      %v4847 = vld [vmem:[#allocation2 + $0x9a] sm:$0xff]
      %v4848 = vld [vmem:[#allocation2 + $0xa2] sm:$0xff]
      %v4849 = vld [vmem:[#allocation2 + $0xaa] sm:$0xff]
      %v4850 = vld [vmem:[#allocation2 + $0xb2] sm:$0xff]
      %v4851 = vld [vmem:[#allocation2 + $0xba] sm:$0xff]
      %v4852 = vld [vmem:[#allocation2 + $0xc2] sm:$0xff]
      %v4853 = vld [vmem:[#allocation2 + $0xca] sm:$0xff]
      %v4854 = vld [vmem:[#allocation2 + $0xd2] sm:$0xff]
      %4855 = vst.msk [vmem:[#allocation4] sm:$0xff] %vm282, %v4829
      %4856 = vst.msk [vmem:[#allocation4 + $0x10] sm:$0xff] %vm282, %v4830
      %4857 = vst.msk [vmem:[#allocation4 + $0x20] sm:$0xff] %vm282, %v4831
      %4858 = vst.msk [vmem:[#allocation4 + $0x30] sm:$0xff] %vm282, %v4832
      %4859 = vst.msk [vmem:[#allocation4 + $0x40] sm:$0xff] %vm282, %v4833
      %4860 = vst.msk [vmem:[#allocation4 + $0x50] sm:$0xff] %vm282, %v4834
      %4861 = vst.msk [vmem:[#allocation4 + $0x60] sm:$0xff] %vm282, %v4835
      %4862 = vst.msk [vmem:[#allocation4 + $0x70] sm:$0xff] %vm282, %v4836
      %4863 = vst.msk [vmem:[#allocation4 + $0x80] sm:$0xff] %vm282, %v4837
      %4864 = vst.msk [vmem:[#allocation4 + $0x90] sm:$0xff] %vm282, %v4838
      %4865 = vst.msk [vmem:[#allocation4 + $0xa0] sm:$0xff] %vm282, %v4839
      %4866 = vst.msk [vmem:[#allocation4 + $0xb0] sm:$0xff] %vm282, %v4840
      %4867 = vst.msk [vmem:[#allocation4 + $0xc0] sm:$0xff] %vm282, %v4841
      %4868 = vst.msk [vmem:[#allocation4 + $0xd0] sm:$0xff] %vm282, %v4842
      %4869 = vst.msk [vmem:[#allocation4 + $0xe0] sm:$0xff] %vm282, %v4843
      %4870 = vst.msk [vmem:[#allocation4 + $0xf0] sm:$0xff] %vm282, %v4844
      %4871 = vst.msk [vmem:[#allocation4 + $0x100] sm:$0xff] %vm282, %v4845
      %4872 = vst.msk [vmem:[#allocation4 + $0x110] sm:$0xff] %vm282, %v4846
      %4873 = vst.msk [vmem:[#allocation4 + $0x120] sm:$0xff] %vm282, %v4847
      %4874 = vst.msk [vmem:[#allocation4 + $0x130] sm:$0xff] %vm282, %v4848
      %4875 = vst.msk [vmem:[#allocation4 + $0x140] sm:$0xff] %vm282, %v4849
      %4876 = vst.msk [vmem:[#allocation4 + $0x150] sm:$0xff] %vm282, %v4850
      %4877 = vst.msk [vmem:[#allocation4 + $0x160] sm:$0xff] %vm282, %v4851
      %4878 = vst.msk [vmem:[#allocation4 + $0x170] sm:$0xff] %vm282, %v4852
      %4879 = vst.msk [vmem:[#allocation4 + $0x180] sm:$0xff] %vm282, %v4853
      %4880 = vst.msk [vmem:[#allocation4 + $0x190] sm:$0xff] %vm282, %v4854
      %v4881 = vld [vmem:[#allocation2 + $0xb] sm:$0xff]
      %v4882 = vld [vmem:[#allocation2 + $0x13] sm:$0xff]
      %v4883 = vld [vmem:[#allocation2 + $0x1b] sm:$0xff]
      %v4884 = vld [vmem:[#allocation2 + $0x23] sm:$0xff]
      %v4885 = vld [vmem:[#allocation2 + $0x2b] sm:$0xff]
      %v4886 = vld [vmem:[#allocation2 + $0x33] sm:$0xff]
      %v4887 = vld [vmem:[#allocation2 + $0x3b] sm:$0xff]
      %v4888 = vld [vmem:[#allocation2 + $0x43] sm:$0xff]
      %v4889 = vld [vmem:[#allocation2 + $0x4b] sm:$0xff]
      %v4890 = vld [vmem:[#allocation2 + $0x53] sm:$0xff]
      %v4891 = vld [vmem:[#allocation2 + $0x5b] sm:$0xff]
      %v4892 = vld [vmem:[#allocation2 + $0x63] sm:$0xff]
      %v4893 = vld [vmem:[#allocation2 + $0x6b] sm:$0xff]
      %v4894 = vld [vmem:[#allocation2 + $0x73] sm:$0xff]
      %v4895 = vld [vmem:[#allocation2 + $0x7b] sm:$0xff]
      %v4896 = vld [vmem:[#allocation2 + $0x83] sm:$0xff]
      %v4897 = vld [vmem:[#allocation2 + $0x8b] sm:$0xff]
      %v4898 = vld [vmem:[#allocation2 + $0x93] sm:$0xff]
      %v4899 = vld [vmem:[#allocation2 + $0x9b] sm:$0xff]
      %v4900 = vld [vmem:[#allocation2 + $0xa3] sm:$0xff]
      %v4901 = vld [vmem:[#allocation2 + $0xab] sm:$0xff]
      %v4902 = vld [vmem:[#allocation2 + $0xb3] sm:$0xff]
      %v4903 = vld [vmem:[#allocation2 + $0xbb] sm:$0xff]
      %v4904 = vld [vmem:[#allocation2 + $0xc3] sm:$0xff]
      %v4905 = vld [vmem:[#allocation2 + $0xcb] sm:$0xff]
      %v4906 = vld [vmem:[#allocation2 + $0xd3] sm:$0xff]
      %4933 = vrot.lane.b32.xlu0 %v4881, 16
      %v4934 = vpop.permute.xlu0 %4933
      %4935 = vrot.lane.b32.xlu0 %v4882, 16
      %v4936 = vpop.permute.xlu0 %4935
      %4937 = vrot.lane.b32.xlu0 %v4883, 16
      %v4938 = vpop.permute.xlu0 %4937
      %4939 = vrot.lane.b32.xlu0 %v4884, 16
      %v4940 = vpop.permute.xlu0 %4939
      %4941 = vrot.lane.b32.xlu0 %v4885, 16
      %v4942 = vpop.permute.xlu0 %4941
      %4943 = vrot.lane.b32.xlu0 %v4886, 16
      %v4944 = vpop.permute.xlu0 %4943
      %4945 = vrot.lane.b32.xlu0 %v4887, 16
      %v4946 = vpop.permute.xlu0 %4945
      %4947 = vrot.lane.b32.xlu0 %v4888, 16
      %v4948 = vpop.permute.xlu0 %4947
      %4949 = vrot.lane.b32.xlu0 %v4889, 16
      %v4950 = vpop.permute.xlu0 %4949
      %4951 = vrot.lane.b32.xlu0 %v4890, 16
      %v4952 = vpop.permute.xlu0 %4951
      %4953 = vrot.lane.b32.xlu0 %v4891, 16
      %v4954 = vpop.permute.xlu0 %4953
      %4955 = vrot.lane.b32.xlu0 %v4892, 16
      %v4956 = vpop.permute.xlu0 %4955
      %4957 = vrot.lane.b32.xlu0 %v4893, 16
      %v4958 = vpop.permute.xlu0 %4957
      %4959 = vrot.lane.b32.xlu0 %v4894, 16
      %v4960 = vpop.permute.xlu0 %4959
      %4961 = vrot.lane.b32.xlu0 %v4895, 16
      %v4962 = vpop.permute.xlu0 %4961
      %4963 = vrot.lane.b32.xlu0 %v4896, 16
      %v4964 = vpop.permute.xlu0 %4963
      %4965 = vrot.lane.b32.xlu0 %v4897, 16
      %v4966 = vpop.permute.xlu0 %4965
      %4967 = vrot.lane.b32.xlu0 %v4898, 16
      %v4968 = vpop.permute.xlu0 %4967
      %4969 = vrot.lane.b32.xlu0 %v4899, 16
      %v4970 = vpop.permute.xlu0 %4969
      %4971 = vrot.lane.b32.xlu0 %v4900, 16
      %v4972 = vpop.permute.xlu0 %4971
      %4973 = vrot.lane.b32.xlu0 %v4901, 16
      %v4974 = vpop.permute.xlu0 %4973
      %4975 = vrot.lane.b32.xlu0 %v4902, 16
      %v4976 = vpop.permute.xlu0 %4975
      %4977 = vrot.lane.b32.xlu0 %v4903, 16
      %v4978 = vpop.permute.xlu0 %4977
      %4979 = vrot.lane.b32.xlu0 %v4904, 16
      %v4980 = vpop.permute.xlu0 %4979
      %4981 = vrot.lane.b32.xlu0 %v4905, 16
      %v4982 = vpop.permute.xlu0 %4981
      %4983 = vrot.lane.b32.xlu0 %v4906, 16
      %v4984 = vpop.permute.xlu0 %4983
      %5011 = vst.msk [vmem:[#allocation4] sm:$0xff] %vm3182, %v4934
      %5012 = vst.msk [vmem:[#allocation4 + $0x10] sm:$0xff] %vm3182, %v4936
      %5013 = vst.msk [vmem:[#allocation4 + $0x20] sm:$0xff] %vm3182, %v4938
      %5014 = vst.msk [vmem:[#allocation4 + $0x30] sm:$0xff] %vm3182, %v4940
      %5015 = vst.msk [vmem:[#allocation4 + $0x40] sm:$0xff] %vm3182, %v4942
      %5016 = vst.msk [vmem:[#allocation4 + $0x50] sm:$0xff] %vm3182, %v4944
      %5017 = vst.msk [vmem:[#allocation4 + $0x60] sm:$0xff] %vm3182, %v4946
      %5018 = vst.msk [vmem:[#allocation4 + $0x70] sm:$0xff] %vm3182, %v4948
      %5019 = vst.msk [vmem:[#allocation4 + $0x80] sm:$0xff] %vm3182, %v4950
      %5020 = vst.msk [vmem:[#allocation4 + $0x90] sm:$0xff] %vm3182, %v4952
      %5021 = vst.msk [vmem:[#allocation4 + $0xa0] sm:$0xff] %vm3182, %v4954
      %5022 = vst.msk [vmem:[#allocation4 + $0xb0] sm:$0xff] %vm3182, %v4956
      %5023 = vst.msk [vmem:[#allocation4 + $0xc0] sm:$0xff] %vm3182, %v4958
      %5024 = vst.msk [vmem:[#allocation4 + $0xd0] sm:$0xff] %vm3182, %v4960
      %5025 = vst.msk [vmem:[#allocation4 + $0xe0] sm:$0xff] %vm3182, %v4962
      %5026 = vst.msk [vmem:[#allocation4 + $0xf0] sm:$0xff] %vm3182, %v4964
      %5027 = vst.msk [vmem:[#allocation4 + $0x100] sm:$0xff] %vm3182, %v4966
      %5028 = vst.msk [vmem:[#allocation4 + $0x110] sm:$0xff] %vm3182, %v4968
      %5029 = vst.msk [vmem:[#allocation4 + $0x120] sm:$0xff] %vm3182, %v4970
      %5030 = vst.msk [vmem:[#allocation4 + $0x130] sm:$0xff] %vm3182, %v4972
      %5031 = vst.msk [vmem:[#allocation4 + $0x140] sm:$0xff] %vm3182, %v4974
      %5032 = vst.msk [vmem:[#allocation4 + $0x150] sm:$0xff] %vm3182, %v4976
      %5033 = vst.msk [vmem:[#allocation4 + $0x160] sm:$0xff] %vm3182, %v4978
      %5034 = vst.msk [vmem:[#allocation4 + $0x170] sm:$0xff] %vm3182, %v4980
      %5035 = vst.msk [vmem:[#allocation4 + $0x180] sm:$0xff] %vm3182, %v4982
      %5036 = vst.msk [vmem:[#allocation4 + $0x190] sm:$0xff] %vm3182, %v4984
      %v5037 = vld [vmem:[#allocation2 + $0x14] sm:$0xff]
      %v5038 = vld [vmem:[#allocation2 + $0x1c] sm:$0xff]
      %v5039 = vld [vmem:[#allocation2 + $0x24] sm:$0xff]
      %v5040 = vld [vmem:[#allocation2 + $0x2c] sm:$0xff]
      %v5041 = vld [vmem:[#allocation2 + $0x34] sm:$0xff]
      %v5042 = vld [vmem:[#allocation2 + $0x3c] sm:$0xff]
      %v5043 = vld [vmem:[#allocation2 + $0x44] sm:$0xff]
      %v5044 = vld [vmem:[#allocation2 + $0x4c] sm:$0xff]
      %v5045 = vld [vmem:[#allocation2 + $0x54] sm:$0xff]
      %v5046 = vld [vmem:[#allocation2 + $0x5c] sm:$0xff]
      %v5047 = vld [vmem:[#allocation2 + $0x64] sm:$0xff]
      %v5048 = vld [vmem:[#allocation2 + $0x6c] sm:$0xff]
      %v5049 = vld [vmem:[#allocation2 + $0x74] sm:$0xff]
      %v5050 = vld [vmem:[#allocation2 + $0x7c] sm:$0xff]
      %v5051 = vld [vmem:[#allocation2 + $0x84] sm:$0xff]
      %v5052 = vld [vmem:[#allocation2 + $0x8c] sm:$0xff]
      %v5053 = vld [vmem:[#allocation2 + $0x94] sm:$0xff]
      %v5054 = vld [vmem:[#allocation2 + $0x9c] sm:$0xff]
      %v5055 = vld [vmem:[#allocation2 + $0xa4] sm:$0xff]
      %v5056 = vld [vmem:[#allocation2 + $0xac] sm:$0xff]
      %v5057 = vld [vmem:[#allocation2 + $0xb4] sm:$0xff]
      %v5058 = vld [vmem:[#allocation2 + $0xbc] sm:$0xff]
      %v5059 = vld [vmem:[#allocation2 + $0xc4] sm:$0xff]
      %v5060 = vld [vmem:[#allocation2 + $0xcc] sm:$0xff]
      %v5061 = vld [vmem:[#allocation2 + $0xd4] sm:$0xff]
      %v5062 = vld [vmem:[#allocation2 + $0xdc] sm:$0xff]
      %5089 = vrot.lane.b32.xlu0 %v5037, 32
      %v5090 = vpop.permute.xlu0 %5089
      %5091 = vrot.lane.b32.xlu0 %v5038, 32
      %v5092 = vpop.permute.xlu0 %5091
      %5093 = vrot.lane.b32.xlu0 %v5039, 32
      %v5094 = vpop.permute.xlu0 %5093
      %5095 = vrot.lane.b32.xlu0 %v5040, 32
      %v5096 = vpop.permute.xlu0 %5095
      %5097 = vrot.lane.b32.xlu0 %v5041, 32
      %v5098 = vpop.permute.xlu0 %5097
      %5099 = vrot.lane.b32.xlu0 %v5042, 32
      %v5100 = vpop.permute.xlu0 %5099
      %5101 = vrot.lane.b32.xlu0 %v5043, 32
      %v5102 = vpop.permute.xlu0 %5101
      %5103 = vrot.lane.b32.xlu0 %v5044, 32
      %v5104 = vpop.permute.xlu0 %5103
      %5105 = vrot.lane.b32.xlu0 %v5045, 32
      %v5106 = vpop.permute.xlu0 %5105
      %5107 = vrot.lane.b32.xlu0 %v5046, 32
      %v5108 = vpop.permute.xlu0 %5107
      %5109 = vrot.lane.b32.xlu0 %v5047, 32
      %v5110 = vpop.permute.xlu0 %5109
      %5111 = vrot.lane.b32.xlu0 %v5048, 32
      %v5112 = vpop.permute.xlu0 %5111
      %5113 = vrot.lane.b32.xlu0 %v5049, 32
      %v5114 = vpop.permute.xlu0 %5113
      %5115 = vrot.lane.b32.xlu0 %v5050, 32
      %v5116 = vpop.permute.xlu0 %5115
      %5117 = vrot.lane.b32.xlu0 %v5051, 32
      %v5118 = vpop.permute.xlu0 %5117
      %5119 = vrot.lane.b32.xlu0 %v5052, 32
      %v5120 = vpop.permute.xlu0 %5119
      %5121 = vrot.lane.b32.xlu0 %v5053, 32
      %v5122 = vpop.permute.xlu0 %5121
      %5123 = vrot.lane.b32.xlu0 %v5054, 32
      %v5124 = vpop.permute.xlu0 %5123
      %5125 = vrot.lane.b32.xlu0 %v5055, 32
      %v5126 = vpop.permute.xlu0 %5125
      %5127 = vrot.lane.b32.xlu0 %v5056, 32
      %v5128 = vpop.permute.xlu0 %5127
      %5129 = vrot.lane.b32.xlu0 %v5057, 32
      %v5130 = vpop.permute.xlu0 %5129
      %5131 = vrot.lane.b32.xlu0 %v5058, 32
      %v5132 = vpop.permute.xlu0 %5131
      %5133 = vrot.lane.b32.xlu0 %v5059, 32
      %v5134 = vpop.permute.xlu0 %5133
      %5135 = vrot.lane.b32.xlu0 %v5060, 32
      %v5136 = vpop.permute.xlu0 %5135
      %5137 = vrot.lane.b32.xlu0 %v5061, 32
      %v5138 = vpop.permute.xlu0 %5137
      %5139 = vrot.lane.b32.xlu0 %v5062, 32
      %v5140 = vpop.permute.xlu0 %5139
      %5167 = vst.msk [vmem:[#allocation4] sm:$0xff] %vm3339, %v5090
      %5168 = vst.msk [vmem:[#allocation4 + $0x10] sm:$0xff] %vm3339, %v5092
      %5169 = vst.msk [vmem:[#allocation4 + $0x20] sm:$0xff] %vm3339, %v5094
      %5170 = vst.msk [vmem:[#allocation4 + $0x30] sm:$0xff] %vm3339, %v5096
      %5171 = vst.msk [vmem:[#allocation4 + $0x40] sm:$0xff] %vm3339, %v5098
      %5172 = vst.msk [vmem:[#allocation4 + $0x50] sm:$0xff] %vm3339, %v5100
      %5173 = vst.msk [vmem:[#allocation4 + $0x60] sm:$0xff] %vm3339, %v5102
      %5174 = vst.msk [vmem:[#allocation4 + $0x70] sm:$0xff] %vm3339, %v5104
      %5175 = vst.msk [vmem:[#allocation4 + $0x80] sm:$0xff] %vm3339, %v5106
      %5176 = vst.msk [vmem:[#allocation4 + $0x90] sm:$0xff] %vm3339, %v5108
      %5177 = vst.msk [vmem:[#allocation4 + $0xa0] sm:$0xff] %vm3339, %v5110
      %5178 = vst.msk [vmem:[#allocation4 + $0xb0] sm:$0xff] %vm3339, %v5112
      %5179 = vst.msk [vmem:[#allocation4 + $0xc0] sm:$0xff] %vm3339, %v5114
      %5180 = vst.msk [vmem:[#allocation4 + $0xd0] sm:$0xff] %vm3339, %v5116
      %5181 = vst.msk [vmem:[#allocation4 + $0xe0] sm:$0xff] %vm3339, %v5118
      %5182 = vst.msk [vmem:[#allocation4 + $0xf0] sm:$0xff] %vm3339, %v5120
      %5183 = vst.msk [vmem:[#allocation4 + $0x100] sm:$0xff] %vm3339, %v5122
      %5184 = vst.msk [vmem:[#allocation4 + $0x110] sm:$0xff] %vm3339, %v5124
      %5185 = vst.msk [vmem:[#allocation4 + $0x120] sm:$0xff] %vm3339, %v5126
      %5186 = vst.msk [vmem:[#allocation4 + $0x130] sm:$0xff] %vm3339, %v5128
      %5187 = vst.msk [vmem:[#allocation4 + $0x140] sm:$0xff] %vm3339, %v5130
      %5188 = vst.msk [vmem:[#allocation4 + $0x150] sm:$0xff] %vm3339, %v5132
      %5189 = vst.msk [vmem:[#allocation4 + $0x160] sm:$0xff] %vm3339, %v5134
      %5190 = vst.msk [vmem:[#allocation4 + $0x170] sm:$0xff] %vm3339, %v5136
      %5191 = vst.msk [vmem:[#allocation4 + $0x180] sm:$0xff] %vm3339, %v5138
      %5192 = vst.msk [vmem:[#allocation4 + $0x190] sm:$0xff] %vm3339, %v5140
      %v5193 = vld [vmem:[#allocation2 + $0x15] sm:$0xff]
      %v5194 = vld [vmem:[#allocation2 + $0x1d] sm:$0xff]
      %v5195 = vld [vmem:[#allocation2 + $0x25] sm:$0xff]
      %v5196 = vld [vmem:[#allocation2 + $0x2d] sm:$0xff]
      %v5197 = vld [vmem:[#allocation2 + $0x35] sm:$0xff]
      %v5198 = vld [vmem:[#allocation2 + $0x3d] sm:$0xff]
      %v5199 = vld [vmem:[#allocation2 + $0x45] sm:$0xff]
      %v5200 = vld [vmem:[#allocation2 + $0x4d] sm:$0xff]
      %v5201 = vld [vmem:[#allocation2 + $0x55] sm:$0xff]
      %v5202 = vld [vmem:[#allocation2 + $0x5d] sm:$0xff]
      %v5203 = vld [vmem:[#allocation2 + $0x65] sm:$0xff]
      %v5204 = vld [vmem:[#allocation2 + $0x6d] sm:$0xff]
      %v5205 = vld [vmem:[#allocation2 + $0x75] sm:$0xff]
      %v5206 = vld [vmem:[#allocation2 + $0x7d] sm:$0xff]
      %v5207 = vld [vmem:[#allocation2 + $0x85] sm:$0xff]
      %v5208 = vld [vmem:[#allocation2 + $0x8d] sm:$0xff]
      %v5209 = vld [vmem:[#allocation2 + $0x95] sm:$0xff]
      %v5210 = vld [vmem:[#allocation2 + $0x9d] sm:$0xff]
      %v5211 = vld [vmem:[#allocation2 + $0xa5] sm:$0xff]
      %v5212 = vld [vmem:[#allocation2 + $0xad] sm:$0xff]
      %v5213 = vld [vmem:[#allocation2 + $0xb5] sm:$0xff]
      %v5214 = vld [vmem:[#allocation2 + $0xbd] sm:$0xff]
      %v5215 = vld [vmem:[#allocation2 + $0xc5] sm:$0xff]
      %v5216 = vld [vmem:[#allocation2 + $0xcd] sm:$0xff]
      %v5217 = vld [vmem:[#allocation2 + $0xd5] sm:$0xff]
      %v5218 = vld [vmem:[#allocation2 + $0xdd] sm:$0xff]
      %5245 = vrot.lane.b32.xlu0 %v5193, 48
      %v5246 = vpop.permute.xlu0 %5245
      %5247 = vrot.lane.b32.xlu0 %v5194, 48
      %v5248 = vpop.permute.xlu0 %5247
      %5249 = vrot.lane.b32.xlu0 %v5195, 48
      %v5250 = vpop.permute.xlu0 %5249
      %5251 = vrot.lane.b32.xlu0 %v5196, 48
      %v5252 = vpop.permute.xlu0 %5251
      %5253 = vrot.lane.b32.xlu0 %v5197, 48
      %v5254 = vpop.permute.xlu0 %5253
      %5255 = vrot.lane.b32.xlu0 %v5198, 48
      %v5256 = vpop.permute.xlu0 %5255
      %5257 = vrot.lane.b32.xlu0 %v5199, 48
      %v5258 = vpop.permute.xlu0 %5257
      %5259 = vrot.lane.b32.xlu0 %v5200, 48
      %v5260 = vpop.permute.xlu0 %5259
      %5261 = vrot.lane.b32.xlu0 %v5201, 48
      %v5262 = vpop.permute.xlu0 %5261
      %5263 = vrot.lane.b32.xlu0 %v5202, 48
      %v5264 = vpop.permute.xlu0 %5263
      %5265 = vrot.lane.b32.xlu0 %v5203, 48
      %v5266 = vpop.permute.xlu0 %5265
      %5267 = vrot.lane.b32.xlu0 %v5204, 48
      %v5268 = vpop.permute.xlu0 %5267
      %5269 = vrot.lane.b32.xlu0 %v5205, 48
      %v5270 = vpop.permute.xlu0 %5269
      %5271 = vrot.lane.b32.xlu0 %v5206, 48
      %v5272 = vpop.permute.xlu0 %5271
      %5273 = vrot.lane.b32.xlu0 %v5207, 48
      %v5274 = vpop.permute.xlu0 %5273
      %5275 = vrot.lane.b32.xlu0 %v5208, 48
      %v5276 = vpop.permute.xlu0 %5275
      %5277 = vrot.lane.b32.xlu0 %v5209, 48
      %v5278 = vpop.permute.xlu0 %5277
      %5279 = vrot.lane.b32.xlu0 %v5210, 48
      %v5280 = vpop.permute.xlu0 %5279
      %5281 = vrot.lane.b32.xlu0 %v5211, 48
      %v5282 = vpop.permute.xlu0 %5281
      %5283 = vrot.lane.b32.xlu0 %v5212, 48
      %v5284 = vpop.permute.xlu0 %5283
      %5285 = vrot.lane.b32.xlu0 %v5213, 48
      %v5286 = vpop.permute.xlu0 %5285
      %5287 = vrot.lane.b32.xlu0 %v5214, 48
      %v5288 = vpop.permute.xlu0 %5287
      %5289 = vrot.lane.b32.xlu0 %v5215, 48
      %v5290 = vpop.permute.xlu0 %5289
      %5291 = vrot.lane.b32.xlu0 %v5216, 48
      %v5292 = vpop.permute.xlu0 %5291
      %5293 = vrot.lane.b32.xlu0 %v5217, 48
      %v5294 = vpop.permute.xlu0 %5293
      %5295 = vrot.lane.b32.xlu0 %v5218, 48
      %v5296 = vpop.permute.xlu0 %5295
      %5323 = vst.msk [vmem:[#allocation4] sm:$0xff] %vm3496, %v5246
      %5324 = vst.msk [vmem:[#allocation4 + $0x10] sm:$0xff] %vm3496, %v5248
      %5325 = vst.msk [vmem:[#allocation4 + $0x20] sm:$0xff] %vm3496, %v5250
      %5326 = vst.msk [vmem:[#allocation4 + $0x30] sm:$0xff] %vm3496, %v5252
      %5327 = vst.msk [vmem:[#allocation4 + $0x40] sm:$0xff] %vm3496, %v5254
      %5328 = vst.msk [vmem:[#allocation4 + $0x50] sm:$0xff] %vm3496, %v5256
      %5329 = vst.msk [vmem:[#allocation4 + $0x60] sm:$0xff] %vm3496, %v5258
      %5330 = vst.msk [vmem:[#allocation4 + $0x70] sm:$0xff] %vm3496, %v5260
      %5331 = vst.msk [vmem:[#allocation4 + $0x80] sm:$0xff] %vm3496, %v5262
      %5332 = vst.msk [vmem:[#allocation4 + $0x90] sm:$0xff] %vm3496, %v5264
      %5333 = vst.msk [vmem:[#allocation4 + $0xa0] sm:$0xff] %vm3496, %v5266
      %5334 = vst.msk [vmem:[#allocation4 + $0xb0] sm:$0xff] %vm3496, %v5268
      %5335 = vst.msk [vmem:[#allocation4 + $0xc0] sm:$0xff] %vm3496, %v5270
      %5336 = vst.msk [vmem:[#allocation4 + $0xd0] sm:$0xff] %vm3496, %v5272
      %5337 = vst.msk [vmem:[#allocation4 + $0xe0] sm:$0xff] %vm3496, %v5274
      %5338 = vst.msk [vmem:[#allocation4 + $0xf0] sm:$0xff] %vm3496, %v5276
      %5339 = vst.msk [vmem:[#allocation4 + $0x100] sm:$0xff] %vm3496, %v5278
      %5340 = vst.msk [vmem:[#allocation4 + $0x110] sm:$0xff] %vm3496, %v5280
      %5341 = vst.msk [vmem:[#allocation4 + $0x120] sm:$0xff] %vm3496, %v5282
      %5342 = vst.msk [vmem:[#allocation4 + $0x130] sm:$0xff] %vm3496, %v5284
      %5343 = vst.msk [vmem:[#allocation4 + $0x140] sm:$0xff] %vm3496, %v5286
      %5344 = vst.msk [vmem:[#allocation4 + $0x150] sm:$0xff] %vm3496, %v5288
      %5345 = vst.msk [vmem:[#allocation4 + $0x160] sm:$0xff] %vm3496, %v5290
      %5346 = vst.msk [vmem:[#allocation4 + $0x170] sm:$0xff] %vm3496, %v5292
      %5347 = vst.msk [vmem:[#allocation4 + $0x180] sm:$0xff] %vm3496, %v5294
      %5348 = vst.msk [vmem:[#allocation4 + $0x190] sm:$0xff] %vm3496, %v5296
      %v5349 = vld [vmem:[#allocation4] sm:$0xff]
      %v5350 = vld [vmem:[#allocation4 + $0x10] sm:$0xff]
      %v5351 = vld [vmem:[#allocation4 + $0x20] sm:$0xff]
      %v5352 = vld [vmem:[#allocation4 + $0x30] sm:$0xff]
      %v5353 = vld [vmem:[#allocation4 + $0x40] sm:$0xff]
      %v5354 = vld [vmem:[#allocation4 + $0x50] sm:$0xff]
      %v5355 = vld [vmem:[#allocation4 + $0x60] sm:$0xff]
      %v5356 = vld [vmem:[#allocation4 + $0x70] sm:$0xff]
      %v5357 = vld [vmem:[#allocation4 + $0x80] sm:$0xff]
      %v5358 = vld [vmem:[#allocation4 + $0x90] sm:$0xff]
      %v5359 = vld [vmem:[#allocation4 + $0xa0] sm:$0xff]
      %v5360 = vld [vmem:[#allocation4 + $0xb0] sm:$0xff]
      %v5361 = vld [vmem:[#allocation4 + $0xc0] sm:$0xff]
      %v5362 = vld [vmem:[#allocation4 + $0xd0] sm:$0xff]
      %v5363 = vld [vmem:[#allocation4 + $0xe0] sm:$0xff]
      %v5364 = vld [vmem:[#allocation4 + $0xf0] sm:$0xff]
      %v5365 = vld [vmem:[#allocation4 + $0x100] sm:$0xff]
      %v5366 = vld [vmem:[#allocation4 + $0x110] sm:$0xff]
      %v5367 = vld [vmem:[#allocation4 + $0x120] sm:$0xff]
      %v5368 = vld [vmem:[#allocation4 + $0x130] sm:$0xff]
      %v5369 = vld [vmem:[#allocation4 + $0x140] sm:$0xff]
      %v5370 = vld [vmem:[#allocation4 + $0x150] sm:$0xff]
      %v5371 = vld [vmem:[#allocation4 + $0x160] sm:$0xff]
      %v5372 = vld [vmem:[#allocation4 + $0x170] sm:$0xff]
      %v5373 = vld [vmem:[#allocation4 + $0x180] sm:$0xff]
      %v5374 = vld [vmem:[#allocation4 + $0x190] sm:$0xff]
      %s5375 = scalar_lea.vmem %s3, 128
      %v5376 = vld [vmem:[%s5375] sm:$0xff]
      %v5377 = vld [vmem:[%s5375 + $0x8] sm:$0xff]
      %v5378 = vld [vmem:[%s5375 + $0x10] sm:$0xff]
      %v5379 = vld [vmem:[%s5375 + $0x18] sm:$0xff]
      %v5380 = vld [vmem:[%s5375 + $0x20] sm:$0xff]
      %v5381 = vld [vmem:[%s5375 + $0x28] sm:$0xff]
      %v5382 = vld [vmem:[%s5375 + $0x30] sm:$0xff]
      %v5383 = vld [vmem:[%s5375 + $0x38] sm:$0xff]
      %v5384 = vld [vmem:[%s4] sm:$0x1]
      %v5386 = vlaneseq
      %v5387 = vshrl.u32 %v5386, 7
      %v5388 = vsub.s32 0, %v5387
      %v5389 = vrot.slane %v5384, %v5388
      %v5392 = vsel %vm3564, %v5349, 0
      %v5395 = vsel %vm3564, %v5350, 0
      %v5398 = vsel %vm3564, %v5351, 0
      %v5401 = vsel %vm3564, %v5352, 0
      %v5404 = vsel %vm3564, %v5353, 0
      %v5407 = vsel %vm3564, %v5354, 0
      %v5410 = vsel %vm3564, %v5355, 0
      %v5413 = vsel %vm3564, %v5356, 0
      %v5416 = vsel %vm3564, %v5357, 0
      %v5419 = vsel %vm3564, %v5358, 0
      %v5422 = vsel %vm3564, %v5359, 0
      %v5425 = vsel %vm3564, %v5360, 0
      %v5428 = vsel %vm3564, %v5361, 0
      %v5431 = vsel %vm3564, %v5362, 0
      %v5434 = vsel %vm3564, %v5363, 0
      %v5437 = vsel %vm3564, %v5364, 0
      %v5440 = vsel %vm3564, %v5365, 0
      %v5443 = vsel %vm3564, %v5366, 0
      %v5446 = vsel %vm3564, %v5367, 0
      %v5449 = vsel %vm3564, %v5368, 0
      %v5452 = vsel %vm3564, %v5369, 0
      %v5455 = vsel %vm3564, %v5370, 0
      %v5458 = vsel %vm3564, %v5371, 0
      %v5461 = vsel %vm3564, %v5372, 0
      %v5464 = vsel %vm3564, %v5373, 0
      %v5467 = vsel %vm3564, %v5374, 0
      %5469 = vmatprep.subr.mxu0 0.0
      %5470 = vmatpush1.msra.mxu0 %v5376
      %5471 = vmatprep.subr.mxu0 0.0
      %5472 = vmatpush1.msra.mxu0 %v5377
      %5473 = vmatprep.subr.mxu0 0.0
      %5474 = vmatpush1.msra.mxu0 %v5378
      %5475 = vmatprep.subr.mxu0 0.0
      %5476 = vmatpush1.msra.mxu0 %v5379
      %5477 = vmatprep.subr.mxu0 0.0
      %5478 = vmatpush1.msra.mxu0 %v5380
      %5479 = vmatprep.subr.mxu0 0.0
      %5480 = vmatpush1.msra.mxu0 %v5381
      %5481 = vmatprep.subr.mxu0 0.0
      %5482 = vmatpush1.msra.mxu0 %v5382
      %5483 = vmatprep.subr.mxu0 0.0
      %5484 = vmatpush1.msra.mxu0 %v5383
      %5485 = vmatprep.subr.mxu0 0.0
      %5486 = vmatpush1.msra.mxu0 0.0
      %5487 = vmatprep.subr.mxu0 0.0
      %5488 = vmatpush1.msra.mxu0 0.0
      %5489 = vmatprep.subr.mxu0 0.0
      %5490 = vmatpush1.msra.mxu0 0.0
      %5491 = vmatprep.subr.mxu0 0.0
      %5492 = vmatpush1.msra.mxu0 0.0
      %5493 = vmatprep.subr.mxu0 0.0
      %5494 = vmatpush1.msra.mxu0 0.0
      %5495 = vmatprep.subr.mxu0 0.0
      %5496 = vmatpush1.msra.mxu0 0.0
      %5497 = vmatprep.subr.mxu0 0.0
      %5498 = vmatpush1.msra.mxu0 0.0
      %5499 = vmatprep.subr.mxu0 0.0
      %5500 = vmatpush1.msra.mxu0 0.0
      %5501 = vmatprep.subr.mxu0 0.0
      %5502 = vmatpush1.msra.mxu0 0.0
      %5503 = vmatprep.subr.mxu0 0.0
      %5504 = vmatpush1.msra.mxu0 0.0
      %5505 = vmatprep.subr.mxu0 0.0
      %5506 = vmatpush1.msra.mxu0 0.0
      %5507 = vmatprep.subr.mxu0 0.0
      %5508 = vmatpush1.msra.mxu0 0.0
      %5509 = vmatprep.subr.mxu0 0.0
      %5510 = vmatpush1.msra.mxu0 0.0
      %5511 = vmatprep.subr.mxu0 0.0
      %5512 = vmatpush1.msra.mxu0 0.0
      %5513 = vmatprep.subr.mxu0 0.0
      %5514 = vmatpush1.msra.mxu0 0.0
      %5515 = vmatprep.subr.mxu0 0.0
      %5516 = vmatpush1.msra.mxu0 0.0
      %5517 = vmatprep.subr.mxu0 0.0
      %5518 = vmatpush1.msra.mxu0 0.0
      %5519 = vmatprep.subr.mxu0 0.0
      %5520 = vmatpush1.msra.mxu0 0.0
      %5521 = vmatprep.subr.mxu0 0.0
      %5522 = vmatpush1.msra.mxu0 0.0
      %5523 = vmatprep.subr.mxu0 0.0
      %5524 = vmatpush1.msra.mxu0 0.0
      %5525 = vmatprep.subr.mxu0 0.0
      %5526 = vmatpush1.msra.mxu0 0.0
      %5527 = vmatprep.subr.mxu0 0.0
      %5528 = vmatpush1.msra.mxu0 0.0
      %5529 = vmatprep.subr.mxu0 0.0
      %5530 = vmatpush1.msra.mxu0 0.0
      %5531 = vmatprep.subr.mxu0 0.0
      %5532 = vmatpush1.msra.mxu0 0.0
      %5533 = vmatprep.mubr.f32.mxu0 0.0
      %5534 = vmatmul.mubr.f32.gmra.mrb[0].mxu0 %v5392
      %v5535 = vpop.f32.mrb[0].mxu0
      %v5536 = vadd.f32 %v5389, %v5535
      %v5537 = vpop.f32.mrb[0].mxu0
      %5538 = vmatprep.mubr.f32.mxu0 0.0
      %5539 = vmatmul.mubr.f32.gmra.mrb[0].mxu0 %v5395
      %v5540 = vpop.f32.mrb[0].mxu0
      %v5541 = vadd.f32 %v5389, %v5540
      %v5542 = vpop.f32.mrb[0].mxu0
      %5543 = vmatprep.mubr.f32.mxu0 0.0
      %5544 = vmatmul.mubr.f32.gmra.mrb[0].mxu0 %v5398
      %v5545 = vpop.f32.mrb[0].mxu0
      %v5546 = vadd.f32 %v5389, %v5545
      %v5547 = vpop.f32.mrb[0].mxu0
      %5548 = vmatprep.mubr.f32.mxu0 0.0
      %5549 = vmatmul.mubr.f32.gmra.mrb[0].mxu0 %v5401
      %v5550 = vpop.f32.mrb[0].mxu0
      %v5551 = vadd.f32 %v5389, %v5550
      %v5552 = vpop.f32.mrb[0].mxu0
      %5553 = vmatprep.mubr.f32.mxu0 0.0
      %5554 = vmatmul.mubr.f32.gmra.mrb[0].mxu0 %v5404
      %v5555 = vpop.f32.mrb[0].mxu0
      %v5556 = vadd.f32 %v5389, %v5555
      %v5557 = vpop.f32.mrb[0].mxu0
      %5558 = vmatprep.mubr.f32.mxu0 0.0
      %5559 = vmatmul.mubr.f32.gmra.mrb[0].mxu0 %v5407
      %v5560 = vpop.f32.mrb[0].mxu0
      %v5561 = vadd.f32 %v5389, %v5560
      %v5562 = vpop.f32.mrb[0].mxu0
      %5563 = vmatprep.mubr.f32.mxu0 0.0
      %5564 = vmatmul.mubr.f32.gmra.mrb[0].mxu0 %v5410
      %v5565 = vpop.f32.mrb[0].mxu0
      %v5566 = vadd.f32 %v5389, %v5565
      %v5567 = vpop.f32.mrb[0].mxu0
      %5568 = vmatprep.mubr.f32.mxu0 0.0
      %5569 = vmatmul.mubr.f32.gmra.mrb[0].mxu0 %v5413
      %v5570 = vpop.f32.mrb[0].mxu0
      %v5571 = vadd.f32 %v5389, %v5570
      %v5572 = vpop.f32.mrb[0].mxu0
      %5573 = vmatprep.mubr.f32.mxu0 0.0
      %5574 = vmatmul.mubr.f32.gmra.mrb[0].mxu0 %v5416
      %v5575 = vpop.f32.mrb[0].mxu0
      %v5576 = vadd.f32 %v5389, %v5575
      %v5577 = vpop.f32.mrb[0].mxu0
      %5578 = vmatprep.mubr.f32.mxu0 0.0
      %5579 = vmatmul.mubr.f32.gmra.mrb[0].mxu0 %v5419
      %v5580 = vpop.f32.mrb[0].mxu0
      %v5581 = vadd.f32 %v5389, %v5580
      %v5582 = vpop.f32.mrb[0].mxu0
      %5583 = vmatprep.mubr.f32.mxu0 0.0
      %5584 = vmatmul.mubr.f32.gmra.mrb[0].mxu0 %v5422
      %v5585 = vpop.f32.mrb[0].mxu0
      %v5586 = vadd.f32 %v5389, %v5585
      %v5587 = vpop.f32.mrb[0].mxu0
      %5588 = vmatprep.mubr.f32.mxu0 0.0
      %5589 = vmatmul.mubr.f32.gmra.mrb[0].mxu0 %v5425
      %v5590 = vpop.f32.mrb[0].mxu0
      %v5591 = vadd.f32 %v5389, %v5590
      %v5592 = vpop.f32.mrb[0].mxu0
      %5593 = vmatprep.mubr.f32.mxu0 0.0
      %5594 = vmatmul.mubr.f32.gmra.mrb[0].mxu0 %v5428
      %v5595 = vpop.f32.mrb[0].mxu0
      %v5596 = vadd.f32 %v5389, %v5595
      %v5597 = vpop.f32.mrb[0].mxu0
      %5598 = vmatprep.mubr.f32.mxu0 0.0
      %5599 = vmatmul.mubr.f32.gmra.mrb[0].mxu0 %v5431
      %v5600 = vpop.f32.mrb[0].mxu0
      %v5601 = vadd.f32 %v5389, %v5600
      %v5602 = vpop.f32.mrb[0].mxu0
      %5603 = vmatprep.mubr.f32.mxu0 0.0
      %5604 = vmatmul.mubr.f32.gmra.mrb[0].mxu0 %v5434
      %v5605 = vpop.f32.mrb[0].mxu0
      %v5606 = vadd.f32 %v5389, %v5605
      %v5607 = vpop.f32.mrb[0].mxu0
      %5608 = vmatprep.mubr.f32.mxu0 0.0
      %5609 = vmatmul.mubr.f32.gmra.mrb[0].mxu0 %v5437
      %v5610 = vpop.f32.mrb[0].mxu0
      %v5611 = vadd.f32 %v5389, %v5610
      %v5612 = vpop.f32.mrb[0].mxu0
      %5613 = vmatprep.mubr.f32.mxu0 0.0
      %5614 = vmatmul.mubr.f32.gmra.mrb[0].mxu0 %v5440
      %v5615 = vpop.f32.mrb[0].mxu0
      %v5616 = vadd.f32 %v5389, %v5615
      %v5617 = vpop.f32.mrb[0].mxu0
      %5618 = vmatprep.mubr.f32.mxu0 0.0
      %5619 = vmatmul.mubr.f32.gmra.mrb[0].mxu0 %v5443
      %v5620 = vpop.f32.mrb[0].mxu0
      %v5621 = vadd.f32 %v5389, %v5620
      %v5622 = vpop.f32.mrb[0].mxu0
      %5623 = vmatprep.mubr.f32.mxu0 0.0
      %5624 = vmatmul.mubr.f32.gmra.mrb[0].mxu0 %v5446
      %v5625 = vpop.f32.mrb[0].mxu0
      %v5626 = vadd.f32 %v5389, %v5625
      %v5627 = vpop.f32.mrb[0].mxu0
      %5628 = vmatprep.mubr.f32.mxu0 0.0
      %5629 = vmatmul.mubr.f32.gmra.mrb[0].mxu0 %v5449
      %v5630 = vpop.f32.mrb[0].mxu0
      %v5631 = vadd.f32 %v5389, %v5630
      %v5632 = vpop.f32.mrb[0].mxu0
      %5633 = vmatprep.mubr.f32.mxu0 0.0
      %5634 = vmatmul.mubr.f32.gmra.mrb[0].mxu0 %v5452
      %v5635 = vpop.f32.mrb[0].mxu0
      %v5636 = vadd.f32 %v5389, %v5635
      %v5637 = vpop.f32.mrb[0].mxu0
      %5638 = vmatprep.mubr.f32.mxu0 0.0
      %5639 = vmatmul.mubr.f32.gmra.mrb[0].mxu0 %v5455
      %v5640 = vpop.f32.mrb[0].mxu0
      %v5641 = vadd.f32 %v5389, %v5640
      %v5642 = vpop.f32.mrb[0].mxu0
      %5643 = vmatprep.mubr.f32.mxu0 0.0
      %5644 = vmatmul.mubr.f32.gmra.mrb[0].mxu0 %v5458
      %v5645 = vpop.f32.mrb[0].mxu0
      %v5646 = vadd.f32 %v5389, %v5645
      %v5647 = vpop.f32.mrb[0].mxu0
      %5648 = vmatprep.mubr.f32.mxu0 0.0
      %5649 = vmatmul.mubr.f32.gmra.mrb[0].mxu0 %v5461
      %v5650 = vpop.f32.mrb[0].mxu0
      %v5651 = vadd.f32 %v5389, %v5650
      %v5652 = vpop.f32.mrb[0].mxu0
      %5653 = vmatprep.mubr.f32.mxu0 0.0
      %5654 = vmatmul.mubr.f32.gmra.mrb[0].mxu0 %v5464
      %v5655 = vpop.f32.mrb[0].mxu0
      %v5656 = vadd.f32 %v5389, %v5655
      %v5657 = vpop.f32.mrb[0].mxu0
      %5658 = vmatprep.mubr.f32.mxu0 0.0
      %5659 = vmatmul.mubr.f32.gmra.mrb[0].mxu0 %v5467
      %v5660 = vpop.f32.mrb[0].mxu0
      %v5661 = vadd.f32 %v5389, %v5660
      %v5662 = vpop.f32.mrb[0].mxu0
      %5663 = vdwg.mxu0
      %v5664 = vmax.f32 %v5536, 0.0
      %v5665 = vmax.f32 %v5541, 0.0
      %v5666 = vmax.f32 %v5546, 0.0
      %v5667 = vmax.f32 %v5551, 0.0
      %v5668 = vmax.f32 %v5556, 0.0
      %v5669 = vmax.f32 %v5561, 0.0
      %v5670 = vmax.f32 %v5566, 0.0
      %v5671 = vmax.f32 %v5571, 0.0
      %v5672 = vmax.f32 %v5576, 0.0
      %v5673 = vmax.f32 %v5581, 0.0
      %v5674 = vmax.f32 %v5586, 0.0
      %v5675 = vmax.f32 %v5591, 0.0
      %v5676 = vmax.f32 %v5596, 0.0
      %v5677 = vmax.f32 %v5601, 0.0
      %v5678 = vmax.f32 %v5606, 0.0
      %v5679 = vmax.f32 %v5611, 0.0
      %v5680 = vmax.f32 %v5616, 0.0
      %v5681 = vmax.f32 %v5621, 0.0
      %v5682 = vmax.f32 %v5626, 0.0
      %v5683 = vmax.f32 %v5631, 0.0
      %v5684 = vmax.f32 %v5636, 0.0
      %v5685 = vmax.f32 %v5641, 0.0
      %v5686 = vmax.f32 %v5646, 0.0
      %v5687 = vmax.f32 %v5651, 0.0
      %v5688 = vmax.f32 %v5656, 0.0
      %v5689 = vmax.f32 %v5661, 0.0
      %v5690 = vsel %vm1271, %v5664, 0.0
      %v5691 = vsel %vm1272, %v5665, 0.0
      %v5692 = vsel %vm1273, %v5666, 0.0
      %v5693 = vsel %vm1274, %v5667, 0.0
      %v5694 = vsel %vm1275, %v5668, 0.0
      %v5695 = vsel %vm1276, %v5669, 0.0
      %v5696 = vsel %vm1277, %v5670, 0.0
      %v5697 = vsel %vm1278, %v5671, 0.0
      %v5698 = vsel %vm1279, %v5672, 0.0
      %v5699 = vsel %vm1280, %v5673, 0.0
      %v5700 = vsel %vm1281, %v5674, 0.0
      %v5701 = vsel %vm1282, %v5675, 0.0
      %v5702 = vsel %vm1283, %v5676, 0.0
      %v5703 = vsel %vm1284, %v5677, 0.0
      %v5704 = vsel %vm1285, %v5678, 0.0
      %v5705 = vsel %vm1286, %v5679, 0.0
      %v5706 = vsel %vm1287, %v5680, 0.0
      %v5707 = vsel %vm1288, %v5681, 0.0
      %v5708 = vsel %vm1289, %v5682, 0.0
      %v5709 = vsel %vm1290, %v5683, 0.0
      %v5710 = vsel %vm1291, %v5684, 0.0
      %v5711 = vsel %vm1292, %v5685, 0.0
      %v5712 = vsel %vm1293, %v5686, 0.0
      %v5713 = vsel %vm1294, %v5687, 0.0
      %v5714 = vsel %vm1295, %v5688, 0.0
      %v5715 = vsel %vm1296, %v5689, 0.0
      %5716 = vst.msk [vmem:[%s298 + $0xb] sm:$0xff] %vm282, %v5690
      %5717 = vst.msk [vmem:[%s298 + $0x13] sm:$0xff] %vm282, %v5691
      %5718 = vst.msk [vmem:[%s298 + $0x1b] sm:$0xff] %vm282, %v5692
      %5719 = vst.msk [vmem:[%s298 + $0x23] sm:$0xff] %vm282, %v5693
      %5720 = vst.msk [vmem:[%s298 + $0x2b] sm:$0xff] %vm282, %v5694
      %5721 = vst.msk [vmem:[%s298 + $0x33] sm:$0xff] %vm282, %v5695
      %5722 = vst.msk [vmem:[%s298 + $0x3b] sm:$0xff] %vm282, %v5696
      %5723 = vst.msk [vmem:[%s298 + $0x43] sm:$0xff] %vm282, %v5697
      %5724 = vst.msk [vmem:[%s298 + $0x4b] sm:$0xff] %vm282, %v5698
      %5725 = vst.msk [vmem:[%s298 + $0x53] sm:$0xff] %vm282, %v5699
      %5726 = vst.msk [vmem:[%s298 + $0x5b] sm:$0xff] %vm282, %v5700
      %5727 = vst.msk [vmem:[%s298 + $0x63] sm:$0xff] %vm282, %v5701
      %5728 = vst.msk [vmem:[%s298 + $0x6b] sm:$0xff] %vm282, %v5702
      %5729 = vst.msk [vmem:[%s298 + $0x73] sm:$0xff] %vm282, %v5703
      %5730 = vst.msk [vmem:[%s298 + $0x7b] sm:$0xff] %vm282, %v5704
      %5731 = vst.msk [vmem:[%s298 + $0x83] sm:$0xff] %vm282, %v5705
      %5732 = vst.msk [vmem:[%s298 + $0x8b] sm:$0xff] %vm282, %v5706
      %5733 = vst.msk [vmem:[%s298 + $0x93] sm:$0xff] %vm282, %v5707
      %5734 = vst.msk [vmem:[%s298 + $0x9b] sm:$0xff] %vm282, %v5708
      %5735 = vst.msk [vmem:[%s298 + $0xa3] sm:$0xff] %vm282, %v5709
      %5736 = vst.msk [vmem:[%s298 + $0xab] sm:$0xff] %vm282, %v5710
      %5737 = vst.msk [vmem:[%s298 + $0xb3] sm:$0xff] %vm282, %v5711
      %5738 = vst.msk [vmem:[%s298 + $0xbb] sm:$0xff] %vm282, %v5712
      %5739 = vst.msk [vmem:[%s298 + $0xc3] sm:$0xff] %vm282, %v5713
      %5740 = vst.msk [vmem:[%s298 + $0xcb] sm:$0xff] %vm282, %v5714
      %5741 = vst.msk [vmem:[%s298 + $0xd3] sm:$0xff] %vm282, %v5715
      %v5742 = vld [vmem:[#allocation2 + $0xb] sm:$0xff]
      %v5743 = vld [vmem:[#allocation2 + $0x13] sm:$0xff]
      %v5744 = vld [vmem:[#allocation2 + $0x1b] sm:$0xff]
      %v5745 = vld [vmem:[#allocation2 + $0x23] sm:$0xff]
      %v5746 = vld [vmem:[#allocation2 + $0x2b] sm:$0xff]
      %v5747 = vld [vmem:[#allocation2 + $0x33] sm:$0xff]
      %v5748 = vld [vmem:[#allocation2 + $0x3b] sm:$0xff]
      %v5749 = vld [vmem:[#allocation2 + $0x43] sm:$0xff]
      %v5750 = vld [vmem:[#allocation2 + $0x4b] sm:$0xff]
      %v5751 = vld [vmem:[#allocation2 + $0x53] sm:$0xff]
      %v5752 = vld [vmem:[#allocation2 + $0x5b] sm:$0xff]
      %v5753 = vld [vmem:[#allocation2 + $0x63] sm:$0xff]
      %v5754 = vld [vmem:[#allocation2 + $0x6b] sm:$0xff]
      %v5755 = vld [vmem:[#allocation2 + $0x73] sm:$0xff]
      %v5756 = vld [vmem:[#allocation2 + $0x7b] sm:$0xff]
      %v5757 = vld [vmem:[#allocation2 + $0x83] sm:$0xff]
      %v5758 = vld [vmem:[#allocation2 + $0x8b] sm:$0xff]
      %v5759 = vld [vmem:[#allocation2 + $0x93] sm:$0xff]
      %v5760 = vld [vmem:[#allocation2 + $0x9b] sm:$0xff]
      %v5761 = vld [vmem:[#allocation2 + $0xa3] sm:$0xff]
      %v5762 = vld [vmem:[#allocation2 + $0xab] sm:$0xff]
      %v5763 = vld [vmem:[#allocation2 + $0xb3] sm:$0xff]
      %v5764 = vld [vmem:[#allocation2 + $0xbb] sm:$0xff]
      %v5765 = vld [vmem:[#allocation2 + $0xc3] sm:$0xff]
      %v5766 = vld [vmem:[#allocation2 + $0xcb] sm:$0xff]
      %v5767 = vld [vmem:[#allocation2 + $0xd3] sm:$0xff]
      %5768 = vst.msk [vmem:[#allocation4] sm:$0xff] %vm282, %v5742
      %5769 = vst.msk [vmem:[#allocation4 + $0x10] sm:$0xff] %vm282, %v5743
      %5770 = vst.msk [vmem:[#allocation4 + $0x20] sm:$0xff] %vm282, %v5744
      %5771 = vst.msk [vmem:[#allocation4 + $0x30] sm:$0xff] %vm282, %v5745
      %5772 = vst.msk [vmem:[#allocation4 + $0x40] sm:$0xff] %vm282, %v5746
      %5773 = vst.msk [vmem:[#allocation4 + $0x50] sm:$0xff] %vm282, %v5747
      %5774 = vst.msk [vmem:[#allocation4 + $0x60] sm:$0xff] %vm282, %v5748
      %5775 = vst.msk [vmem:[#allocation4 + $0x70] sm:$0xff] %vm282, %v5749
      %5776 = vst.msk [vmem:[#allocation4 + $0x80] sm:$0xff] %vm282, %v5750
      %5777 = vst.msk [vmem:[#allocation4 + $0x90] sm:$0xff] %vm282, %v5751
      %5778 = vst.msk [vmem:[#allocation4 + $0xa0] sm:$0xff] %vm282, %v5752
      %5779 = vst.msk [vmem:[#allocation4 + $0xb0] sm:$0xff] %vm282, %v5753
      %5780 = vst.msk [vmem:[#allocation4 + $0xc0] sm:$0xff] %vm282, %v5754
      %5781 = vst.msk [vmem:[#allocation4 + $0xd0] sm:$0xff] %vm282, %v5755
      %5782 = vst.msk [vmem:[#allocation4 + $0xe0] sm:$0xff] %vm282, %v5756
      %5783 = vst.msk [vmem:[#allocation4 + $0xf0] sm:$0xff] %vm282, %v5757
      %5784 = vst.msk [vmem:[#allocation4 + $0x100] sm:$0xff] %vm282, %v5758
      %5785 = vst.msk [vmem:[#allocation4 + $0x110] sm:$0xff] %vm282, %v5759
      %5786 = vst.msk [vmem:[#allocation4 + $0x120] sm:$0xff] %vm282, %v5760
      %5787 = vst.msk [vmem:[#allocation4 + $0x130] sm:$0xff] %vm282, %v5761
      %5788 = vst.msk [vmem:[#allocation4 + $0x140] sm:$0xff] %vm282, %v5762
      %5789 = vst.msk [vmem:[#allocation4 + $0x150] sm:$0xff] %vm282, %v5763
      %5790 = vst.msk [vmem:[#allocation4 + $0x160] sm:$0xff] %vm282, %v5764
      %5791 = vst.msk [vmem:[#allocation4 + $0x170] sm:$0xff] %vm282, %v5765
      %5792 = vst.msk [vmem:[#allocation4 + $0x180] sm:$0xff] %vm282, %v5766
      %5793 = vst.msk [vmem:[#allocation4 + $0x190] sm:$0xff] %vm282, %v5767
      %v5794 = vld [vmem:[#allocation2 + $0xc] sm:$0xff]
      %v5795 = vld [vmem:[#allocation2 + $0x14] sm:$0xff]
      %v5796 = vld [vmem:[#allocation2 + $0x1c] sm:$0xff]
      %v5797 = vld [vmem:[#allocation2 + $0x24] sm:$0xff]
      %v5798 = vld [vmem:[#allocation2 + $0x2c] sm:$0xff]
      %v5799 = vld [vmem:[#allocation2 + $0x34] sm:$0xff]
      %v5800 = vld [vmem:[#allocation2 + $0x3c] sm:$0xff]
      %v5801 = vld [vmem:[#allocation2 + $0x44] sm:$0xff]
      %v5802 = vld [vmem:[#allocation2 + $0x4c] sm:$0xff]
      %v5803 = vld [vmem:[#allocation2 + $0x54] sm:$0xff]
      %v5804 = vld [vmem:[#allocation2 + $0x5c] sm:$0xff]
      %v5805 = vld [vmem:[#allocation2 + $0x64] sm:$0xff]
      %v5806 = vld [vmem:[#allocation2 + $0x6c] sm:$0xff]
      %v5807 = vld [vmem:[#allocation2 + $0x74] sm:$0xff]
      %v5808 = vld [vmem:[#allocation2 + $0x7c] sm:$0xff]
      %v5809 = vld [vmem:[#allocation2 + $0x84] sm:$0xff]
      %v5810 = vld [vmem:[#allocation2 + $0x8c] sm:$0xff]
      %v5811 = vld [vmem:[#allocation2 + $0x94] sm:$0xff]
      %v5812 = vld [vmem:[#allocation2 + $0x9c] sm:$0xff]
      %v5813 = vld [vmem:[#allocation2 + $0xa4] sm:$0xff]
      %v5814 = vld [vmem:[#allocation2 + $0xac] sm:$0xff]
      %v5815 = vld [vmem:[#allocation2 + $0xb4] sm:$0xff]
      %v5816 = vld [vmem:[#allocation2 + $0xbc] sm:$0xff]
      %v5817 = vld [vmem:[#allocation2 + $0xc4] sm:$0xff]
      %v5818 = vld [vmem:[#allocation2 + $0xcc] sm:$0xff]
      %v5819 = vld [vmem:[#allocation2 + $0xd4] sm:$0xff]
      %5846 = vrot.lane.b32.xlu0 %v5794, 16
      %v5847 = vpop.permute.xlu0 %5846
      %5848 = vrot.lane.b32.xlu0 %v5795, 16
      %v5849 = vpop.permute.xlu0 %5848
      %5850 = vrot.lane.b32.xlu0 %v5796, 16
      %v5851 = vpop.permute.xlu0 %5850
      %5852 = vrot.lane.b32.xlu0 %v5797, 16
      %v5853 = vpop.permute.xlu0 %5852
      %5854 = vrot.lane.b32.xlu0 %v5798, 16
      %v5855 = vpop.permute.xlu0 %5854
      %5856 = vrot.lane.b32.xlu0 %v5799, 16
      %v5857 = vpop.permute.xlu0 %5856
      %5858 = vrot.lane.b32.xlu0 %v5800, 16
      %v5859 = vpop.permute.xlu0 %5858
      %5860 = vrot.lane.b32.xlu0 %v5801, 16
      %v5861 = vpop.permute.xlu0 %5860
      %5862 = vrot.lane.b32.xlu0 %v5802, 16
      %v5863 = vpop.permute.xlu0 %5862
      %5864 = vrot.lane.b32.xlu0 %v5803, 16
      %v5865 = vpop.permute.xlu0 %5864
      %5866 = vrot.lane.b32.xlu0 %v5804, 16
      %v5867 = vpop.permute.xlu0 %5866
      %5868 = vrot.lane.b32.xlu0 %v5805, 16
      %v5869 = vpop.permute.xlu0 %5868
      %5870 = vrot.lane.b32.xlu0 %v5806, 16
      %v5871 = vpop.permute.xlu0 %5870
      %5872 = vrot.lane.b32.xlu0 %v5807, 16
      %v5873 = vpop.permute.xlu0 %5872
      %5874 = vrot.lane.b32.xlu0 %v5808, 16
      %v5875 = vpop.permute.xlu0 %5874
      %5876 = vrot.lane.b32.xlu0 %v5809, 16
      %v5877 = vpop.permute.xlu0 %5876
      %5878 = vrot.lane.b32.xlu0 %v5810, 16
      %v5879 = vpop.permute.xlu0 %5878
      %5880 = vrot.lane.b32.xlu0 %v5811, 16
      %v5881 = vpop.permute.xlu0 %5880
      %5882 = vrot.lane.b32.xlu0 %v5812, 16
      %v5883 = vpop.permute.xlu0 %5882
      %5884 = vrot.lane.b32.xlu0 %v5813, 16
      %v5885 = vpop.permute.xlu0 %5884
      %5886 = vrot.lane.b32.xlu0 %v5814, 16
      %v5887 = vpop.permute.xlu0 %5886
      %5888 = vrot.lane.b32.xlu0 %v5815, 16
      %v5889 = vpop.permute.xlu0 %5888
      %5890 = vrot.lane.b32.xlu0 %v5816, 16
      %v5891 = vpop.permute.xlu0 %5890
      %5892 = vrot.lane.b32.xlu0 %v5817, 16
      %v5893 = vpop.permute.xlu0 %5892
      %5894 = vrot.lane.b32.xlu0 %v5818, 16
      %v5895 = vpop.permute.xlu0 %5894
      %5896 = vrot.lane.b32.xlu0 %v5819, 16
      %v5897 = vpop.permute.xlu0 %5896
      %5924 = vst.msk [vmem:[#allocation4] sm:$0xff] %vm3182, %v5847
      %5925 = vst.msk [vmem:[#allocation4 + $0x10] sm:$0xff] %vm3182, %v5849
      %5926 = vst.msk [vmem:[#allocation4 + $0x20] sm:$0xff] %vm3182, %v5851
      %5927 = vst.msk [vmem:[#allocation4 + $0x30] sm:$0xff] %vm3182, %v5853
      %5928 = vst.msk [vmem:[#allocation4 + $0x40] sm:$0xff] %vm3182, %v5855
      %5929 = vst.msk [vmem:[#allocation4 + $0x50] sm:$0xff] %vm3182, %v5857
      %5930 = vst.msk [vmem:[#allocation4 + $0x60] sm:$0xff] %vm3182, %v5859
      %5931 = vst.msk [vmem:[#allocation4 + $0x70] sm:$0xff] %vm3182, %v5861
      %5932 = vst.msk [vmem:[#allocation4 + $0x80] sm:$0xff] %vm3182, %v5863
      %5933 = vst.msk [vmem:[#allocation4 + $0x90] sm:$0xff] %vm3182, %v5865
      %5934 = vst.msk [vmem:[#allocation4 + $0xa0] sm:$0xff] %vm3182, %v5867
      %5935 = vst.msk [vmem:[#allocation4 + $0xb0] sm:$0xff] %vm3182, %v5869
      %5936 = vst.msk [vmem:[#allocation4 + $0xc0] sm:$0xff] %vm3182, %v5871
      %5937 = vst.msk [vmem:[#allocation4 + $0xd0] sm:$0xff] %vm3182, %v5873
      %5938 = vst.msk [vmem:[#allocation4 + $0xe0] sm:$0xff] %vm3182, %v5875
      %5939 = vst.msk [vmem:[#allocation4 + $0xf0] sm:$0xff] %vm3182, %v5877
      %5940 = vst.msk [vmem:[#allocation4 + $0x100] sm:$0xff] %vm3182, %v5879
      %5941 = vst.msk [vmem:[#allocation4 + $0x110] sm:$0xff] %vm3182, %v5881
      %5942 = vst.msk [vmem:[#allocation4 + $0x120] sm:$0xff] %vm3182, %v5883
      %5943 = vst.msk [vmem:[#allocation4 + $0x130] sm:$0xff] %vm3182, %v5885
      %5944 = vst.msk [vmem:[#allocation4 + $0x140] sm:$0xff] %vm3182, %v5887
      %5945 = vst.msk [vmem:[#allocation4 + $0x150] sm:$0xff] %vm3182, %v5889
      %5946 = vst.msk [vmem:[#allocation4 + $0x160] sm:$0xff] %vm3182, %v5891
      %5947 = vst.msk [vmem:[#allocation4 + $0x170] sm:$0xff] %vm3182, %v5893
      %5948 = vst.msk [vmem:[#allocation4 + $0x180] sm:$0xff] %vm3182, %v5895
      %5949 = vst.msk [vmem:[#allocation4 + $0x190] sm:$0xff] %vm3182, %v5897
      %v5950 = vld [vmem:[#allocation2 + $0x15] sm:$0xff]
      %v5951 = vld [vmem:[#allocation2 + $0x1d] sm:$0xff]
      %v5952 = vld [vmem:[#allocation2 + $0x25] sm:$0xff]
      %v5953 = vld [vmem:[#allocation2 + $0x2d] sm:$0xff]
      %v5954 = vld [vmem:[#allocation2 + $0x35] sm:$0xff]
      %v5955 = vld [vmem:[#allocation2 + $0x3d] sm:$0xff]
      %v5956 = vld [vmem:[#allocation2 + $0x45] sm:$0xff]
      %v5957 = vld [vmem:[#allocation2 + $0x4d] sm:$0xff]
      %v5958 = vld [vmem:[#allocation2 + $0x55] sm:$0xff]
      %v5959 = vld [vmem:[#allocation2 + $0x5d] sm:$0xff]
      %v5960 = vld [vmem:[#allocation2 + $0x65] sm:$0xff]
      %v5961 = vld [vmem:[#allocation2 + $0x6d] sm:$0xff]
      %v5962 = vld [vmem:[#allocation2 + $0x75] sm:$0xff]
      %v5963 = vld [vmem:[#allocation2 + $0x7d] sm:$0xff]
      %v5964 = vld [vmem:[#allocation2 + $0x85] sm:$0xff]
      %v5965 = vld [vmem:[#allocation2 + $0x8d] sm:$0xff]
      %v5966 = vld [vmem:[#allocation2 + $0x95] sm:$0xff]
      %v5967 = vld [vmem:[#allocation2 + $0x9d] sm:$0xff]
      %v5968 = vld [vmem:[#allocation2 + $0xa5] sm:$0xff]
      %v5969 = vld [vmem:[#allocation2 + $0xad] sm:$0xff]
      %v5970 = vld [vmem:[#allocation2 + $0xb5] sm:$0xff]
      %v5971 = vld [vmem:[#allocation2 + $0xbd] sm:$0xff]
      %v5972 = vld [vmem:[#allocation2 + $0xc5] sm:$0xff]
      %v5973 = vld [vmem:[#allocation2 + $0xcd] sm:$0xff]
      %v5974 = vld [vmem:[#allocation2 + $0xd5] sm:$0xff]
      %v5975 = vld [vmem:[#allocation2 + $0xdd] sm:$0xff]
      %6002 = vrot.lane.b32.xlu0 %v5950, 32
      %v6003 = vpop.permute.xlu0 %6002
      %6004 = vrot.lane.b32.xlu0 %v5951, 32
      %v6005 = vpop.permute.xlu0 %6004
      %6006 = vrot.lane.b32.xlu0 %v5952, 32
      %v6007 = vpop.permute.xlu0 %6006
      %6008 = vrot.lane.b32.xlu0 %v5953, 32
      %v6009 = vpop.permute.xlu0 %6008
      %6010 = vrot.lane.b32.xlu0 %v5954, 32
      %v6011 = vpop.permute.xlu0 %6010
      %6012 = vrot.lane.b32.xlu0 %v5955, 32
      %v6013 = vpop.permute.xlu0 %6012
      %6014 = vrot.lane.b32.xlu0 %v5956, 32
      %v6015 = vpop.permute.xlu0 %6014
      %6016 = vrot.lane.b32.xlu0 %v5957, 32
      %v6017 = vpop.permute.xlu0 %6016
      %6018 = vrot.lane.b32.xlu0 %v5958, 32
      %v6019 = vpop.permute.xlu0 %6018
      %6020 = vrot.lane.b32.xlu0 %v5959, 32
      %v6021 = vpop.permute.xlu0 %6020
      %6022 = vrot.lane.b32.xlu0 %v5960, 32
      %v6023 = vpop.permute.xlu0 %6022
      %6024 = vrot.lane.b32.xlu0 %v5961, 32
      %v6025 = vpop.permute.xlu0 %6024
      %6026 = vrot.lane.b32.xlu0 %v5962, 32
      %v6027 = vpop.permute.xlu0 %6026
      %6028 = vrot.lane.b32.xlu0 %v5963, 32
      %v6029 = vpop.permute.xlu0 %6028
      %6030 = vrot.lane.b32.xlu0 %v5964, 32
      %v6031 = vpop.permute.xlu0 %6030
      %6032 = vrot.lane.b32.xlu0 %v5965, 32
      %v6033 = vpop.permute.xlu0 %6032
      %6034 = vrot.lane.b32.xlu0 %v5966, 32
      %v6035 = vpop.permute.xlu0 %6034
      %6036 = vrot.lane.b32.xlu0 %v5967, 32
      %v6037 = vpop.permute.xlu0 %6036
      %6038 = vrot.lane.b32.xlu0 %v5968, 32
      %v6039 = vpop.permute.xlu0 %6038
      %6040 = vrot.lane.b32.xlu0 %v5969, 32
      %v6041 = vpop.permute.xlu0 %6040
      %6042 = vrot.lane.b32.xlu0 %v5970, 32
      %v6043 = vpop.permute.xlu0 %6042
      %6044 = vrot.lane.b32.xlu0 %v5971, 32
      %v6045 = vpop.permute.xlu0 %6044
      %6046 = vrot.lane.b32.xlu0 %v5972, 32
      %v6047 = vpop.permute.xlu0 %6046
      %6048 = vrot.lane.b32.xlu0 %v5973, 32
      %v6049 = vpop.permute.xlu0 %6048
      %6050 = vrot.lane.b32.xlu0 %v5974, 32
      %v6051 = vpop.permute.xlu0 %6050
      %6052 = vrot.lane.b32.xlu0 %v5975, 32
      %v6053 = vpop.permute.xlu0 %6052
      %6080 = vst.msk [vmem:[#allocation4] sm:$0xff] %vm3339, %v6003
      %6081 = vst.msk [vmem:[#allocation4 + $0x10] sm:$0xff] %vm3339, %v6005
      %6082 = vst.msk [vmem:[#allocation4 + $0x20] sm:$0xff] %vm3339, %v6007
      %6083 = vst.msk [vmem:[#allocation4 + $0x30] sm:$0xff] %vm3339, %v6009
      %6084 = vst.msk [vmem:[#allocation4 + $0x40] sm:$0xff] %vm3339, %v6011
      %6085 = vst.msk [vmem:[#allocation4 + $0x50] sm:$0xff] %vm3339, %v6013
      %6086 = vst.msk [vmem:[#allocation4 + $0x60] sm:$0xff] %vm3339, %v6015
      %6087 = vst.msk [vmem:[#allocation4 + $0x70] sm:$0xff] %vm3339, %v6017
      %6088 = vst.msk [vmem:[#allocation4 + $0x80] sm:$0xff] %vm3339, %v6019
      %6089 = vst.msk [vmem:[#allocation4 + $0x90] sm:$0xff] %vm3339, %v6021
      %6090 = vst.msk [vmem:[#allocation4 + $0xa0] sm:$0xff] %vm3339, %v6023
      %6091 = vst.msk [vmem:[#allocation4 + $0xb0] sm:$0xff] %vm3339, %v6025
      %6092 = vst.msk [vmem:[#allocation4 + $0xc0] sm:$0xff] %vm3339, %v6027
      %6093 = vst.msk [vmem:[#allocation4 + $0xd0] sm:$0xff] %vm3339, %v6029
      %6094 = vst.msk [vmem:[#allocation4 + $0xe0] sm:$0xff] %vm3339, %v6031
      %6095 = vst.msk [vmem:[#allocation4 + $0xf0] sm:$0xff] %vm3339, %v6033
      %6096 = vst.msk [vmem:[#allocation4 + $0x100] sm:$0xff] %vm3339, %v6035
      %6097 = vst.msk [vmem:[#allocation4 + $0x110] sm:$0xff] %vm3339, %v6037
      %6098 = vst.msk [vmem:[#allocation4 + $0x120] sm:$0xff] %vm3339, %v6039
      %6099 = vst.msk [vmem:[#allocation4 + $0x130] sm:$0xff] %vm3339, %v6041
      %6100 = vst.msk [vmem:[#allocation4 + $0x140] sm:$0xff] %vm3339, %v6043
      %6101 = vst.msk [vmem:[#allocation4 + $0x150] sm:$0xff] %vm3339, %v6045
      %6102 = vst.msk [vmem:[#allocation4 + $0x160] sm:$0xff] %vm3339, %v6047
      %6103 = vst.msk [vmem:[#allocation4 + $0x170] sm:$0xff] %vm3339, %v6049
      %6104 = vst.msk [vmem:[#allocation4 + $0x180] sm:$0xff] %vm3339, %v6051
      %6105 = vst.msk [vmem:[#allocation4 + $0x190] sm:$0xff] %vm3339, %v6053
      %v6106 = vld [vmem:[#allocation2 + $0x16] sm:$0xff]
      %v6107 = vld [vmem:[#allocation2 + $0x1e] sm:$0xff]
      %v6108 = vld [vmem:[#allocation2 + $0x26] sm:$0xff]
      %v6109 = vld [vmem:[#allocation2 + $0x2e] sm:$0xff]
      %v6110 = vld [vmem:[#allocation2 + $0x36] sm:$0xff]
      %v6111 = vld [vmem:[#allocation2 + $0x3e] sm:$0xff]
      %v6112 = vld [vmem:[#allocation2 + $0x46] sm:$0xff]
      %v6113 = vld [vmem:[#allocation2 + $0x4e] sm:$0xff]
      %v6114 = vld [vmem:[#allocation2 + $0x56] sm:$0xff]
      %v6115 = vld [vmem:[#allocation2 + $0x5e] sm:$0xff]
      %v6116 = vld [vmem:[#allocation2 + $0x66] sm:$0xff]
      %v6117 = vld [vmem:[#allocation2 + $0x6e] sm:$0xff]
      %v6118 = vld [vmem:[#allocation2 + $0x76] sm:$0xff]
      %v6119 = vld [vmem:[#allocation2 + $0x7e] sm:$0xff]
      %v6120 = vld [vmem:[#allocation2 + $0x86] sm:$0xff]
      %v6121 = vld [vmem:[#allocation2 + $0x8e] sm:$0xff]
      %v6122 = vld [vmem:[#allocation2 + $0x96] sm:$0xff]
      %v6123 = vld [vmem:[#allocation2 + $0x9e] sm:$0xff]
      %v6124 = vld [vmem:[#allocation2 + $0xa6] sm:$0xff]
      %v6125 = vld [vmem:[#allocation2 + $0xae] sm:$0xff]
      %v6126 = vld [vmem:[#allocation2 + $0xb6] sm:$0xff]
      %v6127 = vld [vmem:[#allocation2 + $0xbe] sm:$0xff]
      %v6128 = vld [vmem:[#allocation2 + $0xc6] sm:$0xff]
      %v6129 = vld [vmem:[#allocation2 + $0xce] sm:$0xff]
      %v6130 = vld [vmem:[#allocation2 + $0xd6] sm:$0xff]
      %v6131 = vld [vmem:[#allocation2 + $0xde] sm:$0xff]
      %6158 = vrot.lane.b32.xlu0 %v6106, 48
      %v6159 = vpop.permute.xlu0 %6158
      %6160 = vrot.lane.b32.xlu0 %v6107, 48
      %v6161 = vpop.permute.xlu0 %6160
      %6162 = vrot.lane.b32.xlu0 %v6108, 48
      %v6163 = vpop.permute.xlu0 %6162
      %6164 = vrot.lane.b32.xlu0 %v6109, 48
      %v6165 = vpop.permute.xlu0 %6164
      %6166 = vrot.lane.b32.xlu0 %v6110, 48
      %v6167 = vpop.permute.xlu0 %6166
      %6168 = vrot.lane.b32.xlu0 %v6111, 48
      %v6169 = vpop.permute.xlu0 %6168
      %6170 = vrot.lane.b32.xlu0 %v6112, 48
      %v6171 = vpop.permute.xlu0 %6170
      %6172 = vrot.lane.b32.xlu0 %v6113, 48
      %v6173 = vpop.permute.xlu0 %6172
      %6174 = vrot.lane.b32.xlu0 %v6114, 48
      %v6175 = vpop.permute.xlu0 %6174
      %6176 = vrot.lane.b32.xlu0 %v6115, 48
      %v6177 = vpop.permute.xlu0 %6176
      %6178 = vrot.lane.b32.xlu0 %v6116, 48
      %v6179 = vpop.permute.xlu0 %6178
      %6180 = vrot.lane.b32.xlu0 %v6117, 48
      %v6181 = vpop.permute.xlu0 %6180
      %6182 = vrot.lane.b32.xlu0 %v6118, 48
      %v6183 = vpop.permute.xlu0 %6182
      %6184 = vrot.lane.b32.xlu0 %v6119, 48
      %v6185 = vpop.permute.xlu0 %6184
      %6186 = vrot.lane.b32.xlu0 %v6120, 48
      %v6187 = vpop.permute.xlu0 %6186
      %6188 = vrot.lane.b32.xlu0 %v6121, 48
      %v6189 = vpop.permute.xlu0 %6188
      %6190 = vrot.lane.b32.xlu0 %v6122, 48
      %v6191 = vpop.permute.xlu0 %6190
      %6192 = vrot.lane.b32.xlu0 %v6123, 48
      %v6193 = vpop.permute.xlu0 %6192
      %6194 = vrot.lane.b32.xlu0 %v6124, 48
      %v6195 = vpop.permute.xlu0 %6194
      %6196 = vrot.lane.b32.xlu0 %v6125, 48
      %v6197 = vpop.permute.xlu0 %6196
      %6198 = vrot.lane.b32.xlu0 %v6126, 48
      %v6199 = vpop.permute.xlu0 %6198
      %6200 = vrot.lane.b32.xlu0 %v6127, 48
      %v6201 = vpop.permute.xlu0 %6200
      %6202 = vrot.lane.b32.xlu0 %v6128, 48
      %v6203 = vpop.permute.xlu0 %6202
      %6204 = vrot.lane.b32.xlu0 %v6129, 48
      %v6205 = vpop.permute.xlu0 %6204
      %6206 = vrot.lane.b32.xlu0 %v6130, 48
      %v6207 = vpop.permute.xlu0 %6206
      %6208 = vrot.lane.b32.xlu0 %v6131, 48
      %v6209 = vpop.permute.xlu0 %6208
      %6236 = vst.msk [vmem:[#allocation4] sm:$0xff] %vm3496, %v6159
      %6237 = vst.msk [vmem:[#allocation4 + $0x10] sm:$0xff] %vm3496, %v6161
      %6238 = vst.msk [vmem:[#allocation4 + $0x20] sm:$0xff] %vm3496, %v6163
      %6239 = vst.msk [vmem:[#allocation4 + $0x30] sm:$0xff] %vm3496, %v6165
      %6240 = vst.msk [vmem:[#allocation4 + $0x40] sm:$0xff] %vm3496, %v6167
      %6241 = vst.msk [vmem:[#allocation4 + $0x50] sm:$0xff] %vm3496, %v6169
      %6242 = vst.msk [vmem:[#allocation4 + $0x60] sm:$0xff] %vm3496, %v6171
      %6243 = vst.msk [vmem:[#allocation4 + $0x70] sm:$0xff] %vm3496, %v6173
      %6244 = vst.msk [vmem:[#allocation4 + $0x80] sm:$0xff] %vm3496, %v6175
      %6245 = vst.msk [vmem:[#allocation4 + $0x90] sm:$0xff] %vm3496, %v6177
      %6246 = vst.msk [vmem:[#allocation4 + $0xa0] sm:$0xff] %vm3496, %v6179
      %6247 = vst.msk [vmem:[#allocation4 + $0xb0] sm:$0xff] %vm3496, %v6181
      %6248 = vst.msk [vmem:[#allocation4 + $0xc0] sm:$0xff] %vm3496, %v6183
      %6249 = vst.msk [vmem:[#allocation4 + $0xd0] sm:$0xff] %vm3496, %v6185
      %6250 = vst.msk [vmem:[#allocation4 + $0xe0] sm:$0xff] %vm3496, %v6187
      %6251 = vst.msk [vmem:[#allocation4 + $0xf0] sm:$0xff] %vm3496, %v6189
      %6252 = vst.msk [vmem:[#allocation4 + $0x100] sm:$0xff] %vm3496, %v6191
      %6253 = vst.msk [vmem:[#allocation4 + $0x110] sm:$0xff] %vm3496, %v6193
      %6254 = vst.msk [vmem:[#allocation4 + $0x120] sm:$0xff] %vm3496, %v6195
      %6255 = vst.msk [vmem:[#allocation4 + $0x130] sm:$0xff] %vm3496, %v6197
      %6256 = vst.msk [vmem:[#allocation4 + $0x140] sm:$0xff] %vm3496, %v6199
      %6257 = vst.msk [vmem:[#allocation4 + $0x150] sm:$0xff] %vm3496, %v6201
      %6258 = vst.msk [vmem:[#allocation4 + $0x160] sm:$0xff] %vm3496, %v6203
      %6259 = vst.msk [vmem:[#allocation4 + $0x170] sm:$0xff] %vm3496, %v6205
      %6260 = vst.msk [vmem:[#allocation4 + $0x180] sm:$0xff] %vm3496, %v6207
      %6261 = vst.msk [vmem:[#allocation4 + $0x190] sm:$0xff] %vm3496, %v6209
      %v6262 = vld [vmem:[#allocation4] sm:$0xff]
      %v6263 = vld [vmem:[#allocation4 + $0x10] sm:$0xff]
      %v6264 = vld [vmem:[#allocation4 + $0x20] sm:$0xff]
      %v6265 = vld [vmem:[#allocation4 + $0x30] sm:$0xff]
      %v6266 = vld [vmem:[#allocation4 + $0x40] sm:$0xff]
      %v6267 = vld [vmem:[#allocation4 + $0x50] sm:$0xff]
      %v6268 = vld [vmem:[#allocation4 + $0x60] sm:$0xff]
      %v6269 = vld [vmem:[#allocation4 + $0x70] sm:$0xff]
      %v6270 = vld [vmem:[#allocation4 + $0x80] sm:$0xff]
      %v6271 = vld [vmem:[#allocation4 + $0x90] sm:$0xff]
      %v6272 = vld [vmem:[#allocation4 + $0xa0] sm:$0xff]
      %v6273 = vld [vmem:[#allocation4 + $0xb0] sm:$0xff]
      %v6274 = vld [vmem:[#allocation4 + $0xc0] sm:$0xff]
      %v6275 = vld [vmem:[#allocation4 + $0xd0] sm:$0xff]
      %v6276 = vld [vmem:[#allocation4 + $0xe0] sm:$0xff]
      %v6277 = vld [vmem:[#allocation4 + $0xf0] sm:$0xff]
      %v6278 = vld [vmem:[#allocation4 + $0x100] sm:$0xff]
      %v6279 = vld [vmem:[#allocation4 + $0x110] sm:$0xff]
      %v6280 = vld [vmem:[#allocation4 + $0x120] sm:$0xff]
      %v6281 = vld [vmem:[#allocation4 + $0x130] sm:$0xff]
      %v6282 = vld [vmem:[#allocation4 + $0x140] sm:$0xff]
      %v6283 = vld [vmem:[#allocation4 + $0x150] sm:$0xff]
      %v6284 = vld [vmem:[#allocation4 + $0x160] sm:$0xff]
      %v6285 = vld [vmem:[#allocation4 + $0x170] sm:$0xff]
      %v6286 = vld [vmem:[#allocation4 + $0x180] sm:$0xff]
      %v6287 = vld [vmem:[#allocation4 + $0x190] sm:$0xff]
      %s6288 = scalar_lea.vmem %s3, 192
      %v6289 = vld [vmem:[%s6288] sm:$0xff]
      %v6290 = vld [vmem:[%s6288 + $0x8] sm:$0xff]
      %v6291 = vld [vmem:[%s6288 + $0x10] sm:$0xff]
      %v6292 = vld [vmem:[%s6288 + $0x18] sm:$0xff]
      %v6293 = vld [vmem:[%s6288 + $0x20] sm:$0xff]
      %v6294 = vld [vmem:[%s6288 + $0x28] sm:$0xff]
      %v6295 = vld [vmem:[%s6288 + $0x30] sm:$0xff]
      %v6296 = vld [vmem:[%s6288 + $0x38] sm:$0xff]
      %v6297 = vld [vmem:[%s4] sm:$0x1]
      %v6299 = vlaneseq
      %v6300 = vshrl.u32 %v6299, 7
      %v6301 = vsub.s32 0, %v6300
      %v6302 = vrot.slane %v6297, %v6301
      %v6305 = vsel %vm3564, %v6262, 0
      %v6308 = vsel %vm3564, %v6263, 0
      %v6311 = vsel %vm3564, %v6264, 0
      %v6314 = vsel %vm3564, %v6265, 0
      %v6317 = vsel %vm3564, %v6266, 0
      %v6320 = vsel %vm3564, %v6267, 0
      %v6323 = vsel %vm3564, %v6268, 0
      %v6326 = vsel %vm3564, %v6269, 0
      %v6329 = vsel %vm3564, %v6270, 0
      %v6332 = vsel %vm3564, %v6271, 0
      %v6335 = vsel %vm3564, %v6272, 0
      %v6338 = vsel %vm3564, %v6273, 0
      %v6341 = vsel %vm3564, %v6274, 0
      %v6344 = vsel %vm3564, %v6275, 0
      %v6347 = vsel %vm3564, %v6276, 0
      %v6350 = vsel %vm3564, %v6277, 0
      %v6353 = vsel %vm3564, %v6278, 0
      %v6356 = vsel %vm3564, %v6279, 0
      %v6359 = vsel %vm3564, %v6280, 0
      %v6362 = vsel %vm3564, %v6281, 0
      %v6365 = vsel %vm3564, %v6282, 0
      %v6368 = vsel %vm3564, %v6283, 0
      %v6371 = vsel %vm3564, %v6284, 0
      %v6374 = vsel %vm3564, %v6285, 0
      %v6377 = vsel %vm3564, %v6286, 0
      %v6380 = vsel %vm3564, %v6287, 0
      %6382 = vmatprep.subr.mxu0 0.0
      %6383 = vmatpush1.msra.mxu0 %v6289
      %6384 = vmatprep.subr.mxu0 0.0
      %6385 = vmatpush1.msra.mxu0 %v6290
      %6386 = vmatprep.subr.mxu0 0.0
      %6387 = vmatpush1.msra.mxu0 %v6291
      %6388 = vmatprep.subr.mxu0 0.0
      %6389 = vmatpush1.msra.mxu0 %v6292
      %6390 = vmatprep.subr.mxu0 0.0
      %6391 = vmatpush1.msra.mxu0 %v6293
      %6392 = vmatprep.subr.mxu0 0.0
      %6393 = vmatpush1.msra.mxu0 %v6294
      %6394 = vmatprep.subr.mxu0 0.0
      %6395 = vmatpush1.msra.mxu0 %v6295
      %6396 = vmatprep.subr.mxu0 0.0
      %6397 = vmatpush1.msra.mxu0 %v6296
      %6398 = vmatprep.subr.mxu0 0.0
      %6399 = vmatpush1.msra.mxu0 0.0
      %6400 = vmatprep.subr.mxu0 0.0
      %6401 = vmatpush1.msra.mxu0 0.0
      %6402 = vmatprep.subr.mxu0 0.0
      %6403 = vmatpush1.msra.mxu0 0.0
      %6404 = vmatprep.subr.mxu0 0.0
      %6405 = vmatpush1.msra.mxu0 0.0
      %6406 = vmatprep.subr.mxu0 0.0
      %6407 = vmatpush1.msra.mxu0 0.0
      %6408 = vmatprep.subr.mxu0 0.0
      %6409 = vmatpush1.msra.mxu0 0.0
      %6410 = vmatprep.subr.mxu0 0.0
      %6411 = vmatpush1.msra.mxu0 0.0
      %6412 = vmatprep.subr.mxu0 0.0
      %6413 = vmatpush1.msra.mxu0 0.0
      %6414 = vmatprep.subr.mxu0 0.0
      %6415 = vmatpush1.msra.mxu0 0.0
      %6416 = vmatprep.subr.mxu0 0.0
      %6417 = vmatpush1.msra.mxu0 0.0
      %6418 = vmatprep.subr.mxu0 0.0
      %6419 = vmatpush1.msra.mxu0 0.0
      %6420 = vmatprep.subr.mxu0 0.0
      %6421 = vmatpush1.msra.mxu0 0.0
      %6422 = vmatprep.subr.mxu0 0.0
      %6423 = vmatpush1.msra.mxu0 0.0
      %6424 = vmatprep.subr.mxu0 0.0
      %6425 = vmatpush1.msra.mxu0 0.0
      %6426 = vmatprep.subr.mxu0 0.0
      %6427 = vmatpush1.msra.mxu0 0.0
      %6428 = vmatprep.subr.mxu0 0.0
      %6429 = vmatpush1.msra.mxu0 0.0
      %6430 = vmatprep.subr.mxu0 0.0
      %6431 = vmatpush1.msra.mxu0 0.0
      %6432 = vmatprep.subr.mxu0 0.0
      %6433 = vmatpush1.msra.mxu0 0.0
      %6434 = vmatprep.subr.mxu0 0.0
      %6435 = vmatpush1.msra.mxu0 0.0
      %6436 = vmatprep.subr.mxu0 0.0
      %6437 = vmatpush1.msra.mxu0 0.0
      %6438 = vmatprep.subr.mxu0 0.0
      %6439 = vmatpush1.msra.mxu0 0.0
      %6440 = vmatprep.subr.mxu0 0.0
      %6441 = vmatpush1.msra.mxu0 0.0
      %6442 = vmatprep.subr.mxu0 0.0
      %6443 = vmatpush1.msra.mxu0 0.0
      %6444 = vmatprep.subr.mxu0 0.0
      %6445 = vmatpush1.msra.mxu0 0.0
      %6446 = vmatprep.mubr.f32.mxu0 0.0
      %6447 = vmatmul.mubr.f32.gmra.mrb[0].mxu0 %v6305
      %v6448 = vpop.f32.mrb[0].mxu0
      %v6449 = vadd.f32 %v6302, %v6448
      %v6450 = vpop.f32.mrb[0].mxu0
      %6451 = vmatprep.mubr.f32.mxu0 0.0
      %6452 = vmatmul.mubr.f32.gmra.mrb[0].mxu0 %v6308
      %v6453 = vpop.f32.mrb[0].mxu0
      %v6454 = vadd.f32 %v6302, %v6453
      %v6455 = vpop.f32.mrb[0].mxu0
      %6456 = vmatprep.mubr.f32.mxu0 0.0
      %6457 = vmatmul.mubr.f32.gmra.mrb[0].mxu0 %v6311
      %v6458 = vpop.f32.mrb[0].mxu0
      %v6459 = vadd.f32 %v6302, %v6458
      %v6460 = vpop.f32.mrb[0].mxu0
      %6461 = vmatprep.mubr.f32.mxu0 0.0
      %6462 = vmatmul.mubr.f32.gmra.mrb[0].mxu0 %v6314
      %v6463 = vpop.f32.mrb[0].mxu0
      %v6464 = vadd.f32 %v6302, %v6463
      %v6465 = vpop.f32.mrb[0].mxu0
      %6466 = vmatprep.mubr.f32.mxu0 0.0
      %6467 = vmatmul.mubr.f32.gmra.mrb[0].mxu0 %v6317
      %v6468 = vpop.f32.mrb[0].mxu0
      %v6469 = vadd.f32 %v6302, %v6468
      %v6470 = vpop.f32.mrb[0].mxu0
      %6471 = vmatprep.mubr.f32.mxu0 0.0
      %6472 = vmatmul.mubr.f32.gmra.mrb[0].mxu0 %v6320
      %v6473 = vpop.f32.mrb[0].mxu0
      %v6474 = vadd.f32 %v6302, %v6473
      %v6475 = vpop.f32.mrb[0].mxu0
      %6476 = vmatprep.mubr.f32.mxu0 0.0
      %6477 = vmatmul.mubr.f32.gmra.mrb[0].mxu0 %v6323
      %v6478 = vpop.f32.mrb[0].mxu0
      %v6479 = vadd.f32 %v6302, %v6478
      %v6480 = vpop.f32.mrb[0].mxu0
      %6481 = vmatprep.mubr.f32.mxu0 0.0
      %6482 = vmatmul.mubr.f32.gmra.mrb[0].mxu0 %v6326
      %v6483 = vpop.f32.mrb[0].mxu0
      %v6484 = vadd.f32 %v6302, %v6483
      %v6485 = vpop.f32.mrb[0].mxu0
      %6486 = vmatprep.mubr.f32.mxu0 0.0
      %6487 = vmatmul.mubr.f32.gmra.mrb[0].mxu0 %v6329
      %v6488 = vpop.f32.mrb[0].mxu0
      %v6489 = vadd.f32 %v6302, %v6488
      %v6490 = vpop.f32.mrb[0].mxu0
      %6491 = vmatprep.mubr.f32.mxu0 0.0
      %6492 = vmatmul.mubr.f32.gmra.mrb[0].mxu0 %v6332
      %v6493 = vpop.f32.mrb[0].mxu0
      %v6494 = vadd.f32 %v6302, %v6493
      %v6495 = vpop.f32.mrb[0].mxu0
      %6496 = vmatprep.mubr.f32.mxu0 0.0
      %6497 = vmatmul.mubr.f32.gmra.mrb[0].mxu0 %v6335
      %v6498 = vpop.f32.mrb[0].mxu0
      %v6499 = vadd.f32 %v6302, %v6498
      %v6500 = vpop.f32.mrb[0].mxu0
      %6501 = vmatprep.mubr.f32.mxu0 0.0
      %6502 = vmatmul.mubr.f32.gmra.mrb[0].mxu0 %v6338
      %v6503 = vpop.f32.mrb[0].mxu0
      %v6504 = vadd.f32 %v6302, %v6503
      %v6505 = vpop.f32.mrb[0].mxu0
      %6506 = vmatprep.mubr.f32.mxu0 0.0
      %6507 = vmatmul.mubr.f32.gmra.mrb[0].mxu0 %v6341
      %v6508 = vpop.f32.mrb[0].mxu0
      %v6509 = vadd.f32 %v6302, %v6508
      %v6510 = vpop.f32.mrb[0].mxu0
      %6511 = vmatprep.mubr.f32.mxu0 0.0
      %6512 = vmatmul.mubr.f32.gmra.mrb[0].mxu0 %v6344
      %v6513 = vpop.f32.mrb[0].mxu0
      %v6514 = vadd.f32 %v6302, %v6513
      %v6515 = vpop.f32.mrb[0].mxu0
      %6516 = vmatprep.mubr.f32.mxu0 0.0
      %6517 = vmatmul.mubr.f32.gmra.mrb[0].mxu0 %v6347
      %v6518 = vpop.f32.mrb[0].mxu0
      %v6519 = vadd.f32 %v6302, %v6518
      %v6520 = vpop.f32.mrb[0].mxu0
      %6521 = vmatprep.mubr.f32.mxu0 0.0
      %6522 = vmatmul.mubr.f32.gmra.mrb[0].mxu0 %v6350
      %v6523 = vpop.f32.mrb[0].mxu0
      %v6524 = vadd.f32 %v6302, %v6523
      %v6525 = vpop.f32.mrb[0].mxu0
      %6526 = vmatprep.mubr.f32.mxu0 0.0
      %6527 = vmatmul.mubr.f32.gmra.mrb[0].mxu0 %v6353
      %v6528 = vpop.f32.mrb[0].mxu0
      %v6529 = vadd.f32 %v6302, %v6528
      %v6530 = vpop.f32.mrb[0].mxu0
      %6531 = vmatprep.mubr.f32.mxu0 0.0
      %6532 = vmatmul.mubr.f32.gmra.mrb[0].mxu0 %v6356
      %v6533 = vpop.f32.mrb[0].mxu0
      %v6534 = vadd.f32 %v6302, %v6533
      %v6535 = vpop.f32.mrb[0].mxu0
      %6536 = vmatprep.mubr.f32.mxu0 0.0
      %6537 = vmatmul.mubr.f32.gmra.mrb[0].mxu0 %v6359
      %v6538 = vpop.f32.mrb[0].mxu0
      %v6539 = vadd.f32 %v6302, %v6538
      %v6540 = vpop.f32.mrb[0].mxu0
      %6541 = vmatprep.mubr.f32.mxu0 0.0
      %6542 = vmatmul.mubr.f32.gmra.mrb[0].mxu0 %v6362
      %v6543 = vpop.f32.mrb[0].mxu0
      %v6544 = vadd.f32 %v6302, %v6543
      %v6545 = vpop.f32.mrb[0].mxu0
      %6546 = vmatprep.mubr.f32.mxu0 0.0
      %6547 = vmatmul.mubr.f32.gmra.mrb[0].mxu0 %v6365
      %v6548 = vpop.f32.mrb[0].mxu0
      %v6549 = vadd.f32 %v6302, %v6548
      %v6550 = vpop.f32.mrb[0].mxu0
      %6551 = vmatprep.mubr.f32.mxu0 0.0
      %6552 = vmatmul.mubr.f32.gmra.mrb[0].mxu0 %v6368
      %v6553 = vpop.f32.mrb[0].mxu0
      %v6554 = vadd.f32 %v6302, %v6553
      %v6555 = vpop.f32.mrb[0].mxu0
      %6556 = vmatprep.mubr.f32.mxu0 0.0
      %6557 = vmatmul.mubr.f32.gmra.mrb[0].mxu0 %v6371
      %v6558 = vpop.f32.mrb[0].mxu0
      %v6559 = vadd.f32 %v6302, %v6558
      %v6560 = vpop.f32.mrb[0].mxu0
      %6561 = vmatprep.mubr.f32.mxu0 0.0
      %6562 = vmatmul.mubr.f32.gmra.mrb[0].mxu0 %v6374
      %v6563 = vpop.f32.mrb[0].mxu0
      %v6564 = vadd.f32 %v6302, %v6563
      %v6565 = vpop.f32.mrb[0].mxu0
      %6566 = vmatprep.mubr.f32.mxu0 0.0
      %6567 = vmatmul.mubr.f32.gmra.mrb[0].mxu0 %v6377
      %v6568 = vpop.f32.mrb[0].mxu0
      %v6569 = vadd.f32 %v6302, %v6568
      %v6570 = vpop.f32.mrb[0].mxu0
      %6571 = vmatprep.mubr.f32.mxu0 0.0
      %6572 = vmatmul.mubr.f32.gmra.mrb[0].mxu0 %v6380
      %v6573 = vpop.f32.mrb[0].mxu0
      %v6574 = vadd.f32 %v6302, %v6573
      %v6575 = vpop.f32.mrb[0].mxu0
      %6576 = vdwg.mxu0
      %v6577 = vmax.f32 %v6449, 0.0
      %v6578 = vmax.f32 %v6454, 0.0
      %v6579 = vmax.f32 %v6459, 0.0
      %v6580 = vmax.f32 %v6464, 0.0
      %v6581 = vmax.f32 %v6469, 0.0
      %v6582 = vmax.f32 %v6474, 0.0
      %v6583 = vmax.f32 %v6479, 0.0
      %v6584 = vmax.f32 %v6484, 0.0
      %v6585 = vmax.f32 %v6489, 0.0
      %v6586 = vmax.f32 %v6494, 0.0
      %v6587 = vmax.f32 %v6499, 0.0
      %v6588 = vmax.f32 %v6504, 0.0
      %v6589 = vmax.f32 %v6509, 0.0
      %v6590 = vmax.f32 %v6514, 0.0
      %v6591 = vmax.f32 %v6519, 0.0
      %v6592 = vmax.f32 %v6524, 0.0
      %v6593 = vmax.f32 %v6529, 0.0
      %v6594 = vmax.f32 %v6534, 0.0
      %v6595 = vmax.f32 %v6539, 0.0
      %v6596 = vmax.f32 %v6544, 0.0
      %v6597 = vmax.f32 %v6549, 0.0
      %v6598 = vmax.f32 %v6554, 0.0
      %v6599 = vmax.f32 %v6559, 0.0
      %v6600 = vmax.f32 %v6564, 0.0
      %v6601 = vmax.f32 %v6569, 0.0
      %v6602 = vmax.f32 %v6574, 0.0
      %v6603 = vsel %vm1271, %v6577, 0.0
      %v6604 = vsel %vm1272, %v6578, 0.0
      %v6605 = vsel %vm1273, %v6579, 0.0
      %v6606 = vsel %vm1274, %v6580, 0.0
      %v6607 = vsel %vm1275, %v6581, 0.0
      %v6608 = vsel %vm1276, %v6582, 0.0
      %v6609 = vsel %vm1277, %v6583, 0.0
      %v6610 = vsel %vm1278, %v6584, 0.0
      %v6611 = vsel %vm1279, %v6585, 0.0
      %v6612 = vsel %vm1280, %v6586, 0.0
      %v6613 = vsel %vm1281, %v6587, 0.0
      %v6614 = vsel %vm1282, %v6588, 0.0
      %v6615 = vsel %vm1283, %v6589, 0.0
      %v6616 = vsel %vm1284, %v6590, 0.0
      %v6617 = vsel %vm1285, %v6591, 0.0
      %v6618 = vsel %vm1286, %v6592, 0.0
      %v6619 = vsel %vm1287, %v6593, 0.0
      %v6620 = vsel %vm1288, %v6594, 0.0
      %v6621 = vsel %vm1289, %v6595, 0.0
      %v6622 = vsel %vm1290, %v6596, 0.0
      %v6623 = vsel %vm1291, %v6597, 0.0
      %v6624 = vsel %vm1292, %v6598, 0.0
      %v6625 = vsel %vm1293, %v6599, 0.0
      %v6626 = vsel %vm1294, %v6600, 0.0
      %v6627 = vsel %vm1295, %v6601, 0.0
      %v6628 = vsel %vm1296, %v6602, 0.0
      %6629 = vst.msk [vmem:[%s303 + $0xb] sm:$0xff] %vm282, %v6603
      %6630 = vst.msk [vmem:[%s303 + $0x13] sm:$0xff] %vm282, %v6604
      %6631 = vst.msk [vmem:[%s303 + $0x1b] sm:$0xff] %vm282, %v6605
      %6632 = vst.msk [vmem:[%s303 + $0x23] sm:$0xff] %vm282, %v6606
      %6633 = vst.msk [vmem:[%s303 + $0x2b] sm:$0xff] %vm282, %v6607
      %6634 = vst.msk [vmem:[%s303 + $0x33] sm:$0xff] %vm282, %v6608
      %6635 = vst.msk [vmem:[%s303 + $0x3b] sm:$0xff] %vm282, %v6609
      %6636 = vst.msk [vmem:[%s303 + $0x43] sm:$0xff] %vm282, %v6610
      %6637 = vst.msk [vmem:[%s303 + $0x4b] sm:$0xff] %vm282, %v6611
      %6638 = vst.msk [vmem:[%s303 + $0x53] sm:$0xff] %vm282, %v6612
      %6639 = vst.msk [vmem:[%s303 + $0x5b] sm:$0xff] %vm282, %v6613
      %6640 = vst.msk [vmem:[%s303 + $0x63] sm:$0xff] %vm282, %v6614
      %6641 = vst.msk [vmem:[%s303 + $0x6b] sm:$0xff] %vm282, %v6615
      %6642 = vst.msk [vmem:[%s303 + $0x73] sm:$0xff] %vm282, %v6616
      %6643 = vst.msk [vmem:[%s303 + $0x7b] sm:$0xff] %vm282, %v6617
      %6644 = vst.msk [vmem:[%s303 + $0x83] sm:$0xff] %vm282, %v6618
      %6645 = vst.msk [vmem:[%s303 + $0x8b] sm:$0xff] %vm282, %v6619
      %6646 = vst.msk [vmem:[%s303 + $0x93] sm:$0xff] %vm282, %v6620
      %6647 = vst.msk [vmem:[%s303 + $0x9b] sm:$0xff] %vm282, %v6621
      %6648 = vst.msk [vmem:[%s303 + $0xa3] sm:$0xff] %vm282, %v6622
      %6649 = vst.msk [vmem:[%s303 + $0xab] sm:$0xff] %vm282, %v6623
      %6650 = vst.msk [vmem:[%s303 + $0xb3] sm:$0xff] %vm282, %v6624
      %6651 = vst.msk [vmem:[%s303 + $0xbb] sm:$0xff] %vm282, %v6625
      %6652 = vst.msk [vmem:[%s303 + $0xc3] sm:$0xff] %vm282, %v6626
      %6653 = vst.msk [vmem:[%s303 + $0xcb] sm:$0xff] %vm282, %v6627
      %6654 = vst.msk [vmem:[%s303 + $0xd3] sm:$0xff] %vm282, %v6628
      %v6655 = vld [vmem:[#allocation3 + $0xb] sm:$0xff]
      %v6656 = vld [vmem:[#allocation3 + $0x13] sm:$0xff]
      %v6657 = vld [vmem:[#allocation3 + $0x1b] sm:$0xff]
      %v6658 = vld [vmem:[#allocation3 + $0x23] sm:$0xff]
      %v6659 = vld [vmem:[#allocation3 + $0x2b] sm:$0xff]
      %v6660 = vld [vmem:[#allocation3 + $0x33] sm:$0xff]
      %v6661 = vld [vmem:[#allocation3 + $0x3b] sm:$0xff]
      %v6662 = vld [vmem:[#allocation3 + $0x43] sm:$0xff]
      %v6663 = vld [vmem:[#allocation3 + $0x4b] sm:$0xff]
      %v6664 = vld [vmem:[#allocation3 + $0x53] sm:$0xff]
      %v6665 = vld [vmem:[#allocation3 + $0x5b] sm:$0xff]
      %v6666 = vld [vmem:[#allocation3 + $0x63] sm:$0xff]
      %v6667 = vld [vmem:[#allocation3 + $0x6b] sm:$0xff]
      %v6668 = vld [vmem:[#allocation3 + $0x73] sm:$0xff]
      %v6669 = vld [vmem:[#allocation3 + $0x7b] sm:$0xff]
      %v6670 = vld [vmem:[#allocation3 + $0x83] sm:$0xff]
      %v6671 = vld [vmem:[#allocation3 + $0x8b] sm:$0xff]
      %v6672 = vld [vmem:[#allocation3 + $0x93] sm:$0xff]
      %v6673 = vld [vmem:[#allocation3 + $0x9b] sm:$0xff]
      %v6674 = vld [vmem:[#allocation3 + $0xa3] sm:$0xff]
      %v6675 = vld [vmem:[#allocation3 + $0xab] sm:$0xff]
      %v6676 = vld [vmem:[#allocation3 + $0xb3] sm:$0xff]
      %v6677 = vld [vmem:[#allocation3 + $0xbb] sm:$0xff]
      %v6678 = vld [vmem:[#allocation3 + $0xc3] sm:$0xff]
      %v6679 = vld [vmem:[#allocation3 + $0xcb] sm:$0xff]
      %v6680 = vld [vmem:[#allocation3 + $0xd3] sm:$0xff]
      %6681 = vst.msk [vmem:[#allocation4] sm:$0xff] %vm282, %v6655
      %6682 = vst.msk [vmem:[#allocation4 + $0x10] sm:$0xff] %vm282, %v6656
      %6683 = vst.msk [vmem:[#allocation4 + $0x20] sm:$0xff] %vm282, %v6657
      %6684 = vst.msk [vmem:[#allocation4 + $0x30] sm:$0xff] %vm282, %v6658
      %6685 = vst.msk [vmem:[#allocation4 + $0x40] sm:$0xff] %vm282, %v6659
      %6686 = vst.msk [vmem:[#allocation4 + $0x50] sm:$0xff] %vm282, %v6660
      %6687 = vst.msk [vmem:[#allocation4 + $0x60] sm:$0xff] %vm282, %v6661
      %6688 = vst.msk [vmem:[#allocation4 + $0x70] sm:$0xff] %vm282, %v6662
      %6689 = vst.msk [vmem:[#allocation4 + $0x80] sm:$0xff] %vm282, %v6663
      %6690 = vst.msk [vmem:[#allocation4 + $0x90] sm:$0xff] %vm282, %v6664
      %6691 = vst.msk [vmem:[#allocation4 + $0xa0] sm:$0xff] %vm282, %v6665
      %6692 = vst.msk [vmem:[#allocation4 + $0xb0] sm:$0xff] %vm282, %v6666
      %6693 = vst.msk [vmem:[#allocation4 + $0xc0] sm:$0xff] %vm282, %v6667
      %6694 = vst.msk [vmem:[#allocation4 + $0xd0] sm:$0xff] %vm282, %v6668
      %6695 = vst.msk [vmem:[#allocation4 + $0xe0] sm:$0xff] %vm282, %v6669
      %6696 = vst.msk [vmem:[#allocation4 + $0xf0] sm:$0xff] %vm282, %v6670
      %6697 = vst.msk [vmem:[#allocation4 + $0x100] sm:$0xff] %vm282, %v6671
      %6698 = vst.msk [vmem:[#allocation4 + $0x110] sm:$0xff] %vm282, %v6672
      %6699 = vst.msk [vmem:[#allocation4 + $0x120] sm:$0xff] %vm282, %v6673
      %6700 = vst.msk [vmem:[#allocation4 + $0x130] sm:$0xff] %vm282, %v6674
      %6701 = vst.msk [vmem:[#allocation4 + $0x140] sm:$0xff] %vm282, %v6675
      %6702 = vst.msk [vmem:[#allocation4 + $0x150] sm:$0xff] %vm282, %v6676
      %6703 = vst.msk [vmem:[#allocation4 + $0x160] sm:$0xff] %vm282, %v6677
      %6704 = vst.msk [vmem:[#allocation4 + $0x170] sm:$0xff] %vm282, %v6678
      %6705 = vst.msk [vmem:[#allocation4 + $0x180] sm:$0xff] %vm282, %v6679
      %6706 = vst.msk [vmem:[#allocation4 + $0x190] sm:$0xff] %vm282, %v6680
      %v6707 = vld [vmem:[%s293 + $0xb] sm:$0xff]
      %v6708 = vld [vmem:[%s293 + $0x13] sm:$0xff]
      %v6709 = vld [vmem:[%s293 + $0x1b] sm:$0xff]
      %v6710 = vld [vmem:[%s293 + $0x23] sm:$0xff]
      %v6711 = vld [vmem:[%s293 + $0x2b] sm:$0xff]
      %v6712 = vld [vmem:[%s293 + $0x33] sm:$0xff]
      %v6713 = vld [vmem:[%s293 + $0x3b] sm:$0xff]
      %v6714 = vld [vmem:[%s293 + $0x43] sm:$0xff]
      %v6715 = vld [vmem:[%s293 + $0x4b] sm:$0xff]
      %v6716 = vld [vmem:[%s293 + $0x53] sm:$0xff]
      %v6717 = vld [vmem:[%s293 + $0x5b] sm:$0xff]
      %v6718 = vld [vmem:[%s293 + $0x63] sm:$0xff]
      %v6719 = vld [vmem:[%s293 + $0x6b] sm:$0xff]
      %v6720 = vld [vmem:[%s293 + $0x73] sm:$0xff]
      %v6721 = vld [vmem:[%s293 + $0x7b] sm:$0xff]
      %v6722 = vld [vmem:[%s293 + $0x83] sm:$0xff]
      %v6723 = vld [vmem:[%s293 + $0x8b] sm:$0xff]
      %v6724 = vld [vmem:[%s293 + $0x93] sm:$0xff]
      %v6725 = vld [vmem:[%s293 + $0x9b] sm:$0xff]
      %v6726 = vld [vmem:[%s293 + $0xa3] sm:$0xff]
      %v6727 = vld [vmem:[%s293 + $0xab] sm:$0xff]
      %v6728 = vld [vmem:[%s293 + $0xb3] sm:$0xff]
      %v6729 = vld [vmem:[%s293 + $0xbb] sm:$0xff]
      %v6730 = vld [vmem:[%s293 + $0xc3] sm:$0xff]
      %v6731 = vld [vmem:[%s293 + $0xcb] sm:$0xff]
      %v6732 = vld [vmem:[%s293 + $0xd3] sm:$0xff]
      %6759 = vrot.lane.b32.xlu0 %v6707, 16
      %v6760 = vpop.permute.xlu0 %6759
      %6761 = vrot.lane.b32.xlu0 %v6708, 16
      %v6762 = vpop.permute.xlu0 %6761
      %6763 = vrot.lane.b32.xlu0 %v6709, 16
      %v6764 = vpop.permute.xlu0 %6763
      %6765 = vrot.lane.b32.xlu0 %v6710, 16
      %v6766 = vpop.permute.xlu0 %6765
      %6767 = vrot.lane.b32.xlu0 %v6711, 16
      %v6768 = vpop.permute.xlu0 %6767
      %6769 = vrot.lane.b32.xlu0 %v6712, 16
      %v6770 = vpop.permute.xlu0 %6769
      %6771 = vrot.lane.b32.xlu0 %v6713, 16
      %v6772 = vpop.permute.xlu0 %6771
      %6773 = vrot.lane.b32.xlu0 %v6714, 16
      %v6774 = vpop.permute.xlu0 %6773
      %6775 = vrot.lane.b32.xlu0 %v6715, 16
      %v6776 = vpop.permute.xlu0 %6775
      %6777 = vrot.lane.b32.xlu0 %v6716, 16
      %v6778 = vpop.permute.xlu0 %6777
      %6779 = vrot.lane.b32.xlu0 %v6717, 16
      %v6780 = vpop.permute.xlu0 %6779
      %6781 = vrot.lane.b32.xlu0 %v6718, 16
      %v6782 = vpop.permute.xlu0 %6781
      %6783 = vrot.lane.b32.xlu0 %v6719, 16
      %v6784 = vpop.permute.xlu0 %6783
      %6785 = vrot.lane.b32.xlu0 %v6720, 16
      %v6786 = vpop.permute.xlu0 %6785
      %6787 = vrot.lane.b32.xlu0 %v6721, 16
      %v6788 = vpop.permute.xlu0 %6787
      %6789 = vrot.lane.b32.xlu0 %v6722, 16
      %v6790 = vpop.permute.xlu0 %6789
      %6791 = vrot.lane.b32.xlu0 %v6723, 16
      %v6792 = vpop.permute.xlu0 %6791
      %6793 = vrot.lane.b32.xlu0 %v6724, 16
      %v6794 = vpop.permute.xlu0 %6793
      %6795 = vrot.lane.b32.xlu0 %v6725, 16
      %v6796 = vpop.permute.xlu0 %6795
      %6797 = vrot.lane.b32.xlu0 %v6726, 16
      %v6798 = vpop.permute.xlu0 %6797
      %6799 = vrot.lane.b32.xlu0 %v6727, 16
      %v6800 = vpop.permute.xlu0 %6799
      %6801 = vrot.lane.b32.xlu0 %v6728, 16
      %v6802 = vpop.permute.xlu0 %6801
      %6803 = vrot.lane.b32.xlu0 %v6729, 16
      %v6804 = vpop.permute.xlu0 %6803
      %6805 = vrot.lane.b32.xlu0 %v6730, 16
      %v6806 = vpop.permute.xlu0 %6805
      %6807 = vrot.lane.b32.xlu0 %v6731, 16
      %v6808 = vpop.permute.xlu0 %6807
      %6809 = vrot.lane.b32.xlu0 %v6732, 16
      %v6810 = vpop.permute.xlu0 %6809
      %6837 = vst.msk [vmem:[#allocation4] sm:$0xff] %vm3182, %v6760
      %6838 = vst.msk [vmem:[#allocation4 + $0x10] sm:$0xff] %vm3182, %v6762
      %6839 = vst.msk [vmem:[#allocation4 + $0x20] sm:$0xff] %vm3182, %v6764
      %6840 = vst.msk [vmem:[#allocation4 + $0x30] sm:$0xff] %vm3182, %v6766
      %6841 = vst.msk [vmem:[#allocation4 + $0x40] sm:$0xff] %vm3182, %v6768
      %6842 = vst.msk [vmem:[#allocation4 + $0x50] sm:$0xff] %vm3182, %v6770
      %6843 = vst.msk [vmem:[#allocation4 + $0x60] sm:$0xff] %vm3182, %v6772
      %6844 = vst.msk [vmem:[#allocation4 + $0x70] sm:$0xff] %vm3182, %v6774
      %6845 = vst.msk [vmem:[#allocation4 + $0x80] sm:$0xff] %vm3182, %v6776
      %6846 = vst.msk [vmem:[#allocation4 + $0x90] sm:$0xff] %vm3182, %v6778
      %6847 = vst.msk [vmem:[#allocation4 + $0xa0] sm:$0xff] %vm3182, %v6780
      %6848 = vst.msk [vmem:[#allocation4 + $0xb0] sm:$0xff] %vm3182, %v6782
      %6849 = vst.msk [vmem:[#allocation4 + $0xc0] sm:$0xff] %vm3182, %v6784
      %6850 = vst.msk [vmem:[#allocation4 + $0xd0] sm:$0xff] %vm3182, %v6786
      %6851 = vst.msk [vmem:[#allocation4 + $0xe0] sm:$0xff] %vm3182, %v6788
      %6852 = vst.msk [vmem:[#allocation4 + $0xf0] sm:$0xff] %vm3182, %v6790
      %6853 = vst.msk [vmem:[#allocation4 + $0x100] sm:$0xff] %vm3182, %v6792
      %6854 = vst.msk [vmem:[#allocation4 + $0x110] sm:$0xff] %vm3182, %v6794
      %6855 = vst.msk [vmem:[#allocation4 + $0x120] sm:$0xff] %vm3182, %v6796
      %6856 = vst.msk [vmem:[#allocation4 + $0x130] sm:$0xff] %vm3182, %v6798
      %6857 = vst.msk [vmem:[#allocation4 + $0x140] sm:$0xff] %vm3182, %v6800
      %6858 = vst.msk [vmem:[#allocation4 + $0x150] sm:$0xff] %vm3182, %v6802
      %6859 = vst.msk [vmem:[#allocation4 + $0x160] sm:$0xff] %vm3182, %v6804
      %6860 = vst.msk [vmem:[#allocation4 + $0x170] sm:$0xff] %vm3182, %v6806
      %6861 = vst.msk [vmem:[#allocation4 + $0x180] sm:$0xff] %vm3182, %v6808
      %6862 = vst.msk [vmem:[#allocation4 + $0x190] sm:$0xff] %vm3182, %v6810
      %v6863 = vld [vmem:[%s293 + $0xa] sm:$0xff]
      %v6864 = vld [vmem:[%s293 + $0x12] sm:$0xff]
      %v6865 = vld [vmem:[%s293 + $0x1a] sm:$0xff]
      %v6866 = vld [vmem:[%s293 + $0x22] sm:$0xff]
      %v6867 = vld [vmem:[%s293 + $0x2a] sm:$0xff]
      %v6868 = vld [vmem:[%s293 + $0x32] sm:$0xff]
      %v6869 = vld [vmem:[%s293 + $0x3a] sm:$0xff]
      %v6870 = vld [vmem:[%s293 + $0x42] sm:$0xff]
      %v6871 = vld [vmem:[%s293 + $0x4a] sm:$0xff]
      %v6872 = vld [vmem:[%s293 + $0x52] sm:$0xff]
      %v6873 = vld [vmem:[%s293 + $0x5a] sm:$0xff]
      %v6874 = vld [vmem:[%s293 + $0x62] sm:$0xff]
      %v6875 = vld [vmem:[%s293 + $0x6a] sm:$0xff]
      %v6876 = vld [vmem:[%s293 + $0x72] sm:$0xff]
      %v6877 = vld [vmem:[%s293 + $0x7a] sm:$0xff]
      %v6878 = vld [vmem:[%s293 + $0x82] sm:$0xff]
      %v6879 = vld [vmem:[%s293 + $0x8a] sm:$0xff]
      %v6880 = vld [vmem:[%s293 + $0x92] sm:$0xff]
      %v6881 = vld [vmem:[%s293 + $0x9a] sm:$0xff]
      %v6882 = vld [vmem:[%s293 + $0xa2] sm:$0xff]
      %v6883 = vld [vmem:[%s293 + $0xaa] sm:$0xff]
      %v6884 = vld [vmem:[%s293 + $0xb2] sm:$0xff]
      %v6885 = vld [vmem:[%s293 + $0xba] sm:$0xff]
      %v6886 = vld [vmem:[%s293 + $0xc2] sm:$0xff]
      %v6887 = vld [vmem:[%s293 + $0xca] sm:$0xff]
      %v6888 = vld [vmem:[%s293 + $0xd2] sm:$0xff]
      %6915 = vrot.lane.b32.xlu0 %v6863, 32
      %v6916 = vpop.permute.xlu0 %6915
      %6917 = vrot.lane.b32.xlu0 %v6864, 32
      %v6918 = vpop.permute.xlu0 %6917
      %6919 = vrot.lane.b32.xlu0 %v6865, 32
      %v6920 = vpop.permute.xlu0 %6919
      %6921 = vrot.lane.b32.xlu0 %v6866, 32
      %v6922 = vpop.permute.xlu0 %6921
      %6923 = vrot.lane.b32.xlu0 %v6867, 32
      %v6924 = vpop.permute.xlu0 %6923
      %6925 = vrot.lane.b32.xlu0 %v6868, 32
      %v6926 = vpop.permute.xlu0 %6925
      %6927 = vrot.lane.b32.xlu0 %v6869, 32
      %v6928 = vpop.permute.xlu0 %6927
      %6929 = vrot.lane.b32.xlu0 %v6870, 32
      %v6930 = vpop.permute.xlu0 %6929
      %6931 = vrot.lane.b32.xlu0 %v6871, 32
      %v6932 = vpop.permute.xlu0 %6931
      %6933 = vrot.lane.b32.xlu0 %v6872, 32
      %v6934 = vpop.permute.xlu0 %6933
      %6935 = vrot.lane.b32.xlu0 %v6873, 32
      %v6936 = vpop.permute.xlu0 %6935
      %6937 = vrot.lane.b32.xlu0 %v6874, 32
      %v6938 = vpop.permute.xlu0 %6937
      %6939 = vrot.lane.b32.xlu0 %v6875, 32
      %v6940 = vpop.permute.xlu0 %6939
      %6941 = vrot.lane.b32.xlu0 %v6876, 32
      %v6942 = vpop.permute.xlu0 %6941
      %6943 = vrot.lane.b32.xlu0 %v6877, 32
      %v6944 = vpop.permute.xlu0 %6943
      %6945 = vrot.lane.b32.xlu0 %v6878, 32
      %v6946 = vpop.permute.xlu0 %6945
      %6947 = vrot.lane.b32.xlu0 %v6879, 32
      %v6948 = vpop.permute.xlu0 %6947
      %6949 = vrot.lane.b32.xlu0 %v6880, 32
      %v6950 = vpop.permute.xlu0 %6949
      %6951 = vrot.lane.b32.xlu0 %v6881, 32
      %v6952 = vpop.permute.xlu0 %6951
      %6953 = vrot.lane.b32.xlu0 %v6882, 32
      %v6954 = vpop.permute.xlu0 %6953
      %6955 = vrot.lane.b32.xlu0 %v6883, 32
      %v6956 = vpop.permute.xlu0 %6955
      %6957 = vrot.lane.b32.xlu0 %v6884, 32
      %v6958 = vpop.permute.xlu0 %6957
      %6959 = vrot.lane.b32.xlu0 %v6885, 32
      %v6960 = vpop.permute.xlu0 %6959
      %6961 = vrot.lane.b32.xlu0 %v6886, 32
      %v6962 = vpop.permute.xlu0 %6961
      %6963 = vrot.lane.b32.xlu0 %v6887, 32
      %v6964 = vpop.permute.xlu0 %6963
      %6965 = vrot.lane.b32.xlu0 %v6888, 32
      %v6966 = vpop.permute.xlu0 %6965
      %6993 = vst.msk [vmem:[#allocation4] sm:$0xff] %vm3339, %v6916
      %6994 = vst.msk [vmem:[#allocation4 + $0x10] sm:$0xff] %vm3339, %v6918
      %6995 = vst.msk [vmem:[#allocation4 + $0x20] sm:$0xff] %vm3339, %v6920
      %6996 = vst.msk [vmem:[#allocation4 + $0x30] sm:$0xff] %vm3339, %v6922
      %6997 = vst.msk [vmem:[#allocation4 + $0x40] sm:$0xff] %vm3339, %v6924
      %6998 = vst.msk [vmem:[#allocation4 + $0x50] sm:$0xff] %vm3339, %v6926
      %6999 = vst.msk [vmem:[#allocation4 + $0x60] sm:$0xff] %vm3339, %v6928
      %7000 = vst.msk [vmem:[#allocation4 + $0x70] sm:$0xff] %vm3339, %v6930
      %7001 = vst.msk [vmem:[#allocation4 + $0x80] sm:$0xff] %vm3339, %v6932
      %7002 = vst.msk [vmem:[#allocation4 + $0x90] sm:$0xff] %vm3339, %v6934
      %7003 = vst.msk [vmem:[#allocation4 + $0xa0] sm:$0xff] %vm3339, %v6936
      %7004 = vst.msk [vmem:[#allocation4 + $0xb0] sm:$0xff] %vm3339, %v6938
      %7005 = vst.msk [vmem:[#allocation4 + $0xc0] sm:$0xff] %vm3339, %v6940
      %7006 = vst.msk [vmem:[#allocation4 + $0xd0] sm:$0xff] %vm3339, %v6942
      %7007 = vst.msk [vmem:[#allocation4 + $0xe0] sm:$0xff] %vm3339, %v6944
      %7008 = vst.msk [vmem:[#allocation4 + $0xf0] sm:$0xff] %vm3339, %v6946
      %7009 = vst.msk [vmem:[#allocation4 + $0x100] sm:$0xff] %vm3339, %v6948
      %7010 = vst.msk [vmem:[#allocation4 + $0x110] sm:$0xff] %vm3339, %v6950
      %7011 = vst.msk [vmem:[#allocation4 + $0x120] sm:$0xff] %vm3339, %v6952
      %7012 = vst.msk [vmem:[#allocation4 + $0x130] sm:$0xff] %vm3339, %v6954
      %7013 = vst.msk [vmem:[#allocation4 + $0x140] sm:$0xff] %vm3339, %v6956
      %7014 = vst.msk [vmem:[#allocation4 + $0x150] sm:$0xff] %vm3339, %v6958
      %7015 = vst.msk [vmem:[#allocation4 + $0x160] sm:$0xff] %vm3339, %v6960
      %7016 = vst.msk [vmem:[#allocation4 + $0x170] sm:$0xff] %vm3339, %v6962
      %7017 = vst.msk [vmem:[#allocation4 + $0x180] sm:$0xff] %vm3339, %v6964
      %7018 = vst.msk [vmem:[#allocation4 + $0x190] sm:$0xff] %vm3339, %v6966
      %v7019 = vld [vmem:[#allocation3 + $0xc] sm:$0xff]
      %v7020 = vld [vmem:[#allocation3 + $0x14] sm:$0xff]
      %v7021 = vld [vmem:[#allocation3 + $0x1c] sm:$0xff]
      %v7022 = vld [vmem:[#allocation3 + $0x24] sm:$0xff]
      %v7023 = vld [vmem:[#allocation3 + $0x2c] sm:$0xff]
      %v7024 = vld [vmem:[#allocation3 + $0x34] sm:$0xff]
      %v7025 = vld [vmem:[#allocation3 + $0x3c] sm:$0xff]
      %v7026 = vld [vmem:[#allocation3 + $0x44] sm:$0xff]
      %v7027 = vld [vmem:[#allocation3 + $0x4c] sm:$0xff]
      %v7028 = vld [vmem:[#allocation3 + $0x54] sm:$0xff]
      %v7029 = vld [vmem:[#allocation3 + $0x5c] sm:$0xff]
      %v7030 = vld [vmem:[#allocation3 + $0x64] sm:$0xff]
      %v7031 = vld [vmem:[#allocation3 + $0x6c] sm:$0xff]
      %v7032 = vld [vmem:[#allocation3 + $0x74] sm:$0xff]
      %v7033 = vld [vmem:[#allocation3 + $0x7c] sm:$0xff]
      %v7034 = vld [vmem:[#allocation3 + $0x84] sm:$0xff]
      %v7035 = vld [vmem:[#allocation3 + $0x8c] sm:$0xff]
      %v7036 = vld [vmem:[#allocation3 + $0x94] sm:$0xff]
      %v7037 = vld [vmem:[#allocation3 + $0x9c] sm:$0xff]
      %v7038 = vld [vmem:[#allocation3 + $0xa4] sm:$0xff]
      %v7039 = vld [vmem:[#allocation3 + $0xac] sm:$0xff]
      %v7040 = vld [vmem:[#allocation3 + $0xb4] sm:$0xff]
      %v7041 = vld [vmem:[#allocation3 + $0xbc] sm:$0xff]
      %v7042 = vld [vmem:[#allocation3 + $0xc4] sm:$0xff]
      %v7043 = vld [vmem:[#allocation3 + $0xcc] sm:$0xff]
      %v7044 = vld [vmem:[#allocation3 + $0xd4] sm:$0xff]
      %7071 = vrot.lane.b32.xlu0 %v7019, 48
      %v7072 = vpop.permute.xlu0 %7071
      %7073 = vrot.lane.b32.xlu0 %v7020, 48
      %v7074 = vpop.permute.xlu0 %7073
      %7075 = vrot.lane.b32.xlu0 %v7021, 48
      %v7076 = vpop.permute.xlu0 %7075
      %7077 = vrot.lane.b32.xlu0 %v7022, 48
      %v7078 = vpop.permute.xlu0 %7077
      %7079 = vrot.lane.b32.xlu0 %v7023, 48
      %v7080 = vpop.permute.xlu0 %7079
      %7081 = vrot.lane.b32.xlu0 %v7024, 48
      %v7082 = vpop.permute.xlu0 %7081
      %7083 = vrot.lane.b32.xlu0 %v7025, 48
      %v7084 = vpop.permute.xlu0 %7083
      %7085 = vrot.lane.b32.xlu0 %v7026, 48
      %v7086 = vpop.permute.xlu0 %7085
      %7087 = vrot.lane.b32.xlu0 %v7027, 48
      %v7088 = vpop.permute.xlu0 %7087
      %7089 = vrot.lane.b32.xlu0 %v7028, 48
      %v7090 = vpop.permute.xlu0 %7089
      %7091 = vrot.lane.b32.xlu0 %v7029, 48
      %v7092 = vpop.permute.xlu0 %7091
      %7093 = vrot.lane.b32.xlu0 %v7030, 48
      %v7094 = vpop.permute.xlu0 %7093
      %7095 = vrot.lane.b32.xlu0 %v7031, 48
      %v7096 = vpop.permute.xlu0 %7095
      %7097 = vrot.lane.b32.xlu0 %v7032, 48
      %v7098 = vpop.permute.xlu0 %7097
      %7099 = vrot.lane.b32.xlu0 %v7033, 48
      %v7100 = vpop.permute.xlu0 %7099
      %7101 = vrot.lane.b32.xlu0 %v7034, 48
      %v7102 = vpop.permute.xlu0 %7101
      %7103 = vrot.lane.b32.xlu0 %v7035, 48
      %v7104 = vpop.permute.xlu0 %7103
      %7105 = vrot.lane.b32.xlu0 %v7036, 48
      %v7106 = vpop.permute.xlu0 %7105
      %7107 = vrot.lane.b32.xlu0 %v7037, 48
      %v7108 = vpop.permute.xlu0 %7107
      %7109 = vrot.lane.b32.xlu0 %v7038, 48
      %v7110 = vpop.permute.xlu0 %7109
      %7111 = vrot.lane.b32.xlu0 %v7039, 48
      %v7112 = vpop.permute.xlu0 %7111
      %7113 = vrot.lane.b32.xlu0 %v7040, 48
      %v7114 = vpop.permute.xlu0 %7113
      %7115 = vrot.lane.b32.xlu0 %v7041, 48
      %v7116 = vpop.permute.xlu0 %7115
      %7117 = vrot.lane.b32.xlu0 %v7042, 48
      %v7118 = vpop.permute.xlu0 %7117
      %7119 = vrot.lane.b32.xlu0 %v7043, 48
      %v7120 = vpop.permute.xlu0 %7119
      %7121 = vrot.lane.b32.xlu0 %v7044, 48
      %v7122 = vpop.permute.xlu0 %7121
      %7149 = vst.msk [vmem:[#allocation4] sm:$0xff] %vm3496, %v7072
      %7150 = vst.msk [vmem:[#allocation4 + $0x10] sm:$0xff] %vm3496, %v7074
      %7151 = vst.msk [vmem:[#allocation4 + $0x20] sm:$0xff] %vm3496, %v7076
      %7152 = vst.msk [vmem:[#allocation4 + $0x30] sm:$0xff] %vm3496, %v7078
      %7153 = vst.msk [vmem:[#allocation4 + $0x40] sm:$0xff] %vm3496, %v7080
      %7154 = vst.msk [vmem:[#allocation4 + $0x50] sm:$0xff] %vm3496, %v7082
      %7155 = vst.msk [vmem:[#allocation4 + $0x60] sm:$0xff] %vm3496, %v7084
      %7156 = vst.msk [vmem:[#allocation4 + $0x70] sm:$0xff] %vm3496, %v7086
      %7157 = vst.msk [vmem:[#allocation4 + $0x80] sm:$0xff] %vm3496, %v7088
      %7158 = vst.msk [vmem:[#allocation4 + $0x90] sm:$0xff] %vm3496, %v7090
      %7159 = vst.msk [vmem:[#allocation4 + $0xa0] sm:$0xff] %vm3496, %v7092
      %7160 = vst.msk [vmem:[#allocation4 + $0xb0] sm:$0xff] %vm3496, %v7094
      %7161 = vst.msk [vmem:[#allocation4 + $0xc0] sm:$0xff] %vm3496, %v7096
      %7162 = vst.msk [vmem:[#allocation4 + $0xd0] sm:$0xff] %vm3496, %v7098
      %7163 = vst.msk [vmem:[#allocation4 + $0xe0] sm:$0xff] %vm3496, %v7100
      %7164 = vst.msk [vmem:[#allocation4 + $0xf0] sm:$0xff] %vm3496, %v7102
      %7165 = vst.msk [vmem:[#allocation4 + $0x100] sm:$0xff] %vm3496, %v7104
      %7166 = vst.msk [vmem:[#allocation4 + $0x110] sm:$0xff] %vm3496, %v7106
      %7167 = vst.msk [vmem:[#allocation4 + $0x120] sm:$0xff] %vm3496, %v7108
      %7168 = vst.msk [vmem:[#allocation4 + $0x130] sm:$0xff] %vm3496, %v7110
      %7169 = vst.msk [vmem:[#allocation4 + $0x140] sm:$0xff] %vm3496, %v7112
      %7170 = vst.msk [vmem:[#allocation4 + $0x150] sm:$0xff] %vm3496, %v7114
      %7171 = vst.msk [vmem:[#allocation4 + $0x160] sm:$0xff] %vm3496, %v7116
      %7172 = vst.msk [vmem:[#allocation4 + $0x170] sm:$0xff] %vm3496, %v7118
      %7173 = vst.msk [vmem:[#allocation4 + $0x180] sm:$0xff] %vm3496, %v7120
      %7174 = vst.msk [vmem:[#allocation4 + $0x190] sm:$0xff] %vm3496, %v7122
      %v7175 = vld [vmem:[%s298 + $0xb] sm:$0xff]
      %v7176 = vld [vmem:[%s298 + $0x13] sm:$0xff]
      %v7177 = vld [vmem:[%s298 + $0x1b] sm:$0xff]
      %v7178 = vld [vmem:[%s298 + $0x23] sm:$0xff]
      %v7179 = vld [vmem:[%s298 + $0x2b] sm:$0xff]
      %v7180 = vld [vmem:[%s298 + $0x33] sm:$0xff]
      %v7181 = vld [vmem:[%s298 + $0x3b] sm:$0xff]
      %v7182 = vld [vmem:[%s298 + $0x43] sm:$0xff]
      %v7183 = vld [vmem:[%s298 + $0x4b] sm:$0xff]
      %v7184 = vld [vmem:[%s298 + $0x53] sm:$0xff]
      %v7185 = vld [vmem:[%s298 + $0x5b] sm:$0xff]
      %v7186 = vld [vmem:[%s298 + $0x63] sm:$0xff]
      %v7187 = vld [vmem:[%s298 + $0x6b] sm:$0xff]
      %v7188 = vld [vmem:[%s298 + $0x73] sm:$0xff]
      %v7189 = vld [vmem:[%s298 + $0x7b] sm:$0xff]
      %v7190 = vld [vmem:[%s298 + $0x83] sm:$0xff]
      %v7191 = vld [vmem:[%s298 + $0x8b] sm:$0xff]
      %v7192 = vld [vmem:[%s298 + $0x93] sm:$0xff]
      %v7193 = vld [vmem:[%s298 + $0x9b] sm:$0xff]
      %v7194 = vld [vmem:[%s298 + $0xa3] sm:$0xff]
      %v7195 = vld [vmem:[%s298 + $0xab] sm:$0xff]
      %v7196 = vld [vmem:[%s298 + $0xb3] sm:$0xff]
      %v7197 = vld [vmem:[%s298 + $0xbb] sm:$0xff]
      %v7198 = vld [vmem:[%s298 + $0xc3] sm:$0xff]
      %v7199 = vld [vmem:[%s298 + $0xcb] sm:$0xff]
      %v7200 = vld [vmem:[%s298 + $0xd3] sm:$0xff]
      %7227 = vrot.lane.b32.xlu0 %v7175, 64
      %v7228 = vpop.permute.xlu0 %7227
      %7229 = vrot.lane.b32.xlu0 %v7176, 64
      %v7230 = vpop.permute.xlu0 %7229
      %7231 = vrot.lane.b32.xlu0 %v7177, 64
      %v7232 = vpop.permute.xlu0 %7231
      %7233 = vrot.lane.b32.xlu0 %v7178, 64
      %v7234 = vpop.permute.xlu0 %7233
      %7235 = vrot.lane.b32.xlu0 %v7179, 64
      %v7236 = vpop.permute.xlu0 %7235
      %7237 = vrot.lane.b32.xlu0 %v7180, 64
      %v7238 = vpop.permute.xlu0 %7237
      %7239 = vrot.lane.b32.xlu0 %v7181, 64
      %v7240 = vpop.permute.xlu0 %7239
      %7241 = vrot.lane.b32.xlu0 %v7182, 64
      %v7242 = vpop.permute.xlu0 %7241
      %7243 = vrot.lane.b32.xlu0 %v7183, 64
      %v7244 = vpop.permute.xlu0 %7243
      %7245 = vrot.lane.b32.xlu0 %v7184, 64
      %v7246 = vpop.permute.xlu0 %7245
      %7247 = vrot.lane.b32.xlu0 %v7185, 64
      %v7248 = vpop.permute.xlu0 %7247
      %7249 = vrot.lane.b32.xlu0 %v7186, 64
      %v7250 = vpop.permute.xlu0 %7249
      %7251 = vrot.lane.b32.xlu0 %v7187, 64
      %v7252 = vpop.permute.xlu0 %7251
      %7253 = vrot.lane.b32.xlu0 %v7188, 64
      %v7254 = vpop.permute.xlu0 %7253
      %7255 = vrot.lane.b32.xlu0 %v7189, 64
      %v7256 = vpop.permute.xlu0 %7255
      %7257 = vrot.lane.b32.xlu0 %v7190, 64
      %v7258 = vpop.permute.xlu0 %7257
      %7259 = vrot.lane.b32.xlu0 %v7191, 64
      %v7260 = vpop.permute.xlu0 %7259
      %7261 = vrot.lane.b32.xlu0 %v7192, 64
      %v7262 = vpop.permute.xlu0 %7261
      %7263 = vrot.lane.b32.xlu0 %v7193, 64
      %v7264 = vpop.permute.xlu0 %7263
      %7265 = vrot.lane.b32.xlu0 %v7194, 64
      %v7266 = vpop.permute.xlu0 %7265
      %7267 = vrot.lane.b32.xlu0 %v7195, 64
      %v7268 = vpop.permute.xlu0 %7267
      %7269 = vrot.lane.b32.xlu0 %v7196, 64
      %v7270 = vpop.permute.xlu0 %7269
      %7271 = vrot.lane.b32.xlu0 %v7197, 64
      %v7272 = vpop.permute.xlu0 %7271
      %7273 = vrot.lane.b32.xlu0 %v7198, 64
      %v7274 = vpop.permute.xlu0 %7273
      %7275 = vrot.lane.b32.xlu0 %v7199, 64
      %v7276 = vpop.permute.xlu0 %7275
      %7277 = vrot.lane.b32.xlu0 %v7200, 64
      %v7278 = vpop.permute.xlu0 %7277
      %vm7305 = vcmask 654848
      %7306 = vst.msk [vmem:[#allocation4] sm:$0xff] %vm7305, %v7228
      %7307 = vst.msk [vmem:[#allocation4 + $0x10] sm:$0xff] %vm7305, %v7230
      %7308 = vst.msk [vmem:[#allocation4 + $0x20] sm:$0xff] %vm7305, %v7232
      %7309 = vst.msk [vmem:[#allocation4 + $0x30] sm:$0xff] %vm7305, %v7234
      %7310 = vst.msk [vmem:[#allocation4 + $0x40] sm:$0xff] %vm7305, %v7236
      %7311 = vst.msk [vmem:[#allocation4 + $0x50] sm:$0xff] %vm7305, %v7238
      %7312 = vst.msk [vmem:[#allocation4 + $0x60] sm:$0xff] %vm7305, %v7240
      %7313 = vst.msk [vmem:[#allocation4 + $0x70] sm:$0xff] %vm7305, %v7242
      %7314 = vst.msk [vmem:[#allocation4 + $0x80] sm:$0xff] %vm7305, %v7244
      %7315 = vst.msk [vmem:[#allocation4 + $0x90] sm:$0xff] %vm7305, %v7246
      %7316 = vst.msk [vmem:[#allocation4 + $0xa0] sm:$0xff] %vm7305, %v7248
      %7317 = vst.msk [vmem:[#allocation4 + $0xb0] sm:$0xff] %vm7305, %v7250
      %7318 = vst.msk [vmem:[#allocation4 + $0xc0] sm:$0xff] %vm7305, %v7252
      %7319 = vst.msk [vmem:[#allocation4 + $0xd0] sm:$0xff] %vm7305, %v7254
      %7320 = vst.msk [vmem:[#allocation4 + $0xe0] sm:$0xff] %vm7305, %v7256
      %7321 = vst.msk [vmem:[#allocation4 + $0xf0] sm:$0xff] %vm7305, %v7258
      %7322 = vst.msk [vmem:[#allocation4 + $0x100] sm:$0xff] %vm7305, %v7260
      %7323 = vst.msk [vmem:[#allocation4 + $0x110] sm:$0xff] %vm7305, %v7262
      %7324 = vst.msk [vmem:[#allocation4 + $0x120] sm:$0xff] %vm7305, %v7264
      %7325 = vst.msk [vmem:[#allocation4 + $0x130] sm:$0xff] %vm7305, %v7266
      %7326 = vst.msk [vmem:[#allocation4 + $0x140] sm:$0xff] %vm7305, %v7268
      %7327 = vst.msk [vmem:[#allocation4 + $0x150] sm:$0xff] %vm7305, %v7270
      %7328 = vst.msk [vmem:[#allocation4 + $0x160] sm:$0xff] %vm7305, %v7272
      %7329 = vst.msk [vmem:[#allocation4 + $0x170] sm:$0xff] %vm7305, %v7274
      %7330 = vst.msk [vmem:[#allocation4 + $0x180] sm:$0xff] %vm7305, %v7276
      %7331 = vst.msk [vmem:[#allocation4 + $0x190] sm:$0xff] %vm7305, %v7278
      %v7332 = vld [vmem:[%s303 + $0xb] sm:$0xff]
      %v7333 = vld [vmem:[%s303 + $0x13] sm:$0xff]
      %v7334 = vld [vmem:[%s303 + $0x1b] sm:$0xff]
      %v7335 = vld [vmem:[%s303 + $0x23] sm:$0xff]
      %v7336 = vld [vmem:[%s303 + $0x2b] sm:$0xff]
      %v7337 = vld [vmem:[%s303 + $0x33] sm:$0xff]
      %v7338 = vld [vmem:[%s303 + $0x3b] sm:$0xff]
      %v7339 = vld [vmem:[%s303 + $0x43] sm:$0xff]
      %v7340 = vld [vmem:[%s303 + $0x4b] sm:$0xff]
      %v7341 = vld [vmem:[%s303 + $0x53] sm:$0xff]
      %v7342 = vld [vmem:[%s303 + $0x5b] sm:$0xff]
      %v7343 = vld [vmem:[%s303 + $0x63] sm:$0xff]
      %v7344 = vld [vmem:[%s303 + $0x6b] sm:$0xff]
      %v7345 = vld [vmem:[%s303 + $0x73] sm:$0xff]
      %v7346 = vld [vmem:[%s303 + $0x7b] sm:$0xff]
      %v7347 = vld [vmem:[%s303 + $0x83] sm:$0xff]
      %v7348 = vld [vmem:[%s303 + $0x8b] sm:$0xff]
      %v7349 = vld [vmem:[%s303 + $0x93] sm:$0xff]
      %v7350 = vld [vmem:[%s303 + $0x9b] sm:$0xff]
      %v7351 = vld [vmem:[%s303 + $0xa3] sm:$0xff]
      %v7352 = vld [vmem:[%s303 + $0xab] sm:$0xff]
      %v7353 = vld [vmem:[%s303 + $0xb3] sm:$0xff]
      %v7354 = vld [vmem:[%s303 + $0xbb] sm:$0xff]
      %v7355 = vld [vmem:[%s303 + $0xc3] sm:$0xff]
      %v7356 = vld [vmem:[%s303 + $0xcb] sm:$0xff]
      %v7357 = vld [vmem:[%s303 + $0xd3] sm:$0xff]
      %7384 = vrot.lane.b32.xlu0 %v7332, 80
      %v7385 = vpop.permute.xlu0 %7384
      %7386 = vrot.lane.b32.xlu0 %v7333, 80
      %v7387 = vpop.permute.xlu0 %7386
      %7388 = vrot.lane.b32.xlu0 %v7334, 80
      %v7389 = vpop.permute.xlu0 %7388
      %7390 = vrot.lane.b32.xlu0 %v7335, 80
      %v7391 = vpop.permute.xlu0 %7390
      %7392 = vrot.lane.b32.xlu0 %v7336, 80
      %v7393 = vpop.permute.xlu0 %7392
      %7394 = vrot.lane.b32.xlu0 %v7337, 80
      %v7395 = vpop.permute.xlu0 %7394
      %7396 = vrot.lane.b32.xlu0 %v7338, 80
      %v7397 = vpop.permute.xlu0 %7396
      %7398 = vrot.lane.b32.xlu0 %v7339, 80
      %v7399 = vpop.permute.xlu0 %7398
      %7400 = vrot.lane.b32.xlu0 %v7340, 80
      %v7401 = vpop.permute.xlu0 %7400
      %7402 = vrot.lane.b32.xlu0 %v7341, 80
      %v7403 = vpop.permute.xlu0 %7402
      %7404 = vrot.lane.b32.xlu0 %v7342, 80
      %v7405 = vpop.permute.xlu0 %7404
      %7406 = vrot.lane.b32.xlu0 %v7343, 80
      %v7407 = vpop.permute.xlu0 %7406
      %7408 = vrot.lane.b32.xlu0 %v7344, 80
      %v7409 = vpop.permute.xlu0 %7408
      %7410 = vrot.lane.b32.xlu0 %v7345, 80
      %v7411 = vpop.permute.xlu0 %7410
      %7412 = vrot.lane.b32.xlu0 %v7346, 80
      %v7413 = vpop.permute.xlu0 %7412
      %7414 = vrot.lane.b32.xlu0 %v7347, 80
      %v7415 = vpop.permute.xlu0 %7414
      %7416 = vrot.lane.b32.xlu0 %v7348, 80
      %v7417 = vpop.permute.xlu0 %7416
      %7418 = vrot.lane.b32.xlu0 %v7349, 80
      %v7419 = vpop.permute.xlu0 %7418
      %7420 = vrot.lane.b32.xlu0 %v7350, 80
      %v7421 = vpop.permute.xlu0 %7420
      %7422 = vrot.lane.b32.xlu0 %v7351, 80
      %v7423 = vpop.permute.xlu0 %7422
      %7424 = vrot.lane.b32.xlu0 %v7352, 80
      %v7425 = vpop.permute.xlu0 %7424
      %7426 = vrot.lane.b32.xlu0 %v7353, 80
      %v7427 = vpop.permute.xlu0 %7426
      %7428 = vrot.lane.b32.xlu0 %v7354, 80
      %v7429 = vpop.permute.xlu0 %7428
      %7430 = vrot.lane.b32.xlu0 %v7355, 80
      %v7431 = vpop.permute.xlu0 %7430
      %7432 = vrot.lane.b32.xlu0 %v7356, 80
      %v7433 = vpop.permute.xlu0 %7432
      %7434 = vrot.lane.b32.xlu0 %v7357, 80
      %v7435 = vpop.permute.xlu0 %7434
      %vm7462 = vcmask 786048
      %7463 = vst.msk [vmem:[#allocation4] sm:$0xff] %vm7462, %v7385
      %7464 = vst.msk [vmem:[#allocation4 + $0x10] sm:$0xff] %vm7462, %v7387
      %7465 = vst.msk [vmem:[#allocation4 + $0x20] sm:$0xff] %vm7462, %v7389
      %7466 = vst.msk [vmem:[#allocation4 + $0x30] sm:$0xff] %vm7462, %v7391
      %7467 = vst.msk [vmem:[#allocation4 + $0x40] sm:$0xff] %vm7462, %v7393
      %7468 = vst.msk [vmem:[#allocation4 + $0x50] sm:$0xff] %vm7462, %v7395
      %7469 = vst.msk [vmem:[#allocation4 + $0x60] sm:$0xff] %vm7462, %v7397
      %7470 = vst.msk [vmem:[#allocation4 + $0x70] sm:$0xff] %vm7462, %v7399
      %7471 = vst.msk [vmem:[#allocation4 + $0x80] sm:$0xff] %vm7462, %v7401
      %7472 = vst.msk [vmem:[#allocation4 + $0x90] sm:$0xff] %vm7462, %v7403
      %7473 = vst.msk [vmem:[#allocation4 + $0xa0] sm:$0xff] %vm7462, %v7405
      %7474 = vst.msk [vmem:[#allocation4 + $0xb0] sm:$0xff] %vm7462, %v7407
      %7475 = vst.msk [vmem:[#allocation4 + $0xc0] sm:$0xff] %vm7462, %v7409
      %7476 = vst.msk [vmem:[#allocation4 + $0xd0] sm:$0xff] %vm7462, %v7411
      %7477 = vst.msk [vmem:[#allocation4 + $0xe0] sm:$0xff] %vm7462, %v7413
      %7478 = vst.msk [vmem:[#allocation4 + $0xf0] sm:$0xff] %vm7462, %v7415
      %7479 = vst.msk [vmem:[#allocation4 + $0x100] sm:$0xff] %vm7462, %v7417
      %7480 = vst.msk [vmem:[#allocation4 + $0x110] sm:$0xff] %vm7462, %v7419
      %7481 = vst.msk [vmem:[#allocation4 + $0x120] sm:$0xff] %vm7462, %v7421
      %7482 = vst.msk [vmem:[#allocation4 + $0x130] sm:$0xff] %vm7462, %v7423
      %7483 = vst.msk [vmem:[#allocation4 + $0x140] sm:$0xff] %vm7462, %v7425
      %7484 = vst.msk [vmem:[#allocation4 + $0x150] sm:$0xff] %vm7462, %v7427
      %7485 = vst.msk [vmem:[#allocation4 + $0x160] sm:$0xff] %vm7462, %v7429
      %7486 = vst.msk [vmem:[#allocation4 + $0x170] sm:$0xff] %vm7462, %v7431
      %7487 = vst.msk [vmem:[#allocation4 + $0x180] sm:$0xff] %vm7462, %v7433
      %7488 = vst.msk [vmem:[#allocation4 + $0x190] sm:$0xff] %vm7462, %v7435
      %v7489 = vld [vmem:[%s303 + $0xa] sm:$0xff]
      %v7490 = vld [vmem:[%s303 + $0x12] sm:$0xff]
      %v7491 = vld [vmem:[%s303 + $0x1a] sm:$0xff]
      %v7492 = vld [vmem:[%s303 + $0x22] sm:$0xff]
      %v7493 = vld [vmem:[%s303 + $0x2a] sm:$0xff]
      %v7494 = vld [vmem:[%s303 + $0x32] sm:$0xff]
      %v7495 = vld [vmem:[%s303 + $0x3a] sm:$0xff]
      %v7496 = vld [vmem:[%s303 + $0x42] sm:$0xff]
      %v7497 = vld [vmem:[%s303 + $0x4a] sm:$0xff]
      %v7498 = vld [vmem:[%s303 + $0x52] sm:$0xff]
      %v7499 = vld [vmem:[%s303 + $0x5a] sm:$0xff]
      %v7500 = vld [vmem:[%s303 + $0x62] sm:$0xff]
      %v7501 = vld [vmem:[%s303 + $0x6a] sm:$0xff]
      %v7502 = vld [vmem:[%s303 + $0x72] sm:$0xff]
      %v7503 = vld [vmem:[%s303 + $0x7a] sm:$0xff]
      %v7504 = vld [vmem:[%s303 + $0x82] sm:$0xff]
      %v7505 = vld [vmem:[%s303 + $0x8a] sm:$0xff]
      %v7506 = vld [vmem:[%s303 + $0x92] sm:$0xff]
      %v7507 = vld [vmem:[%s303 + $0x9a] sm:$0xff]
      %v7508 = vld [vmem:[%s303 + $0xa2] sm:$0xff]
      %v7509 = vld [vmem:[%s303 + $0xaa] sm:$0xff]
      %v7510 = vld [vmem:[%s303 + $0xb2] sm:$0xff]
      %v7511 = vld [vmem:[%s303 + $0xba] sm:$0xff]
      %v7512 = vld [vmem:[%s303 + $0xc2] sm:$0xff]
      %v7513 = vld [vmem:[%s303 + $0xca] sm:$0xff]
      %v7514 = vld [vmem:[%s303 + $0xd2] sm:$0xff]
      %7541 = vrot.lane.b32.xlu0 %v7489, 96
      %v7542 = vpop.permute.xlu0 %7541
      %7543 = vrot.lane.b32.xlu0 %v7490, 96
      %v7544 = vpop.permute.xlu0 %7543
      %7545 = vrot.lane.b32.xlu0 %v7491, 96
      %v7546 = vpop.permute.xlu0 %7545
      %7547 = vrot.lane.b32.xlu0 %v7492, 96
      %v7548 = vpop.permute.xlu0 %7547
      %7549 = vrot.lane.b32.xlu0 %v7493, 96
      %v7550 = vpop.permute.xlu0 %7549
      %7551 = vrot.lane.b32.xlu0 %v7494, 96
      %v7552 = vpop.permute.xlu0 %7551
      %7553 = vrot.lane.b32.xlu0 %v7495, 96
      %v7554 = vpop.permute.xlu0 %7553
      %7555 = vrot.lane.b32.xlu0 %v7496, 96
      %v7556 = vpop.permute.xlu0 %7555
      %7557 = vrot.lane.b32.xlu0 %v7497, 96
      %v7558 = vpop.permute.xlu0 %7557
      %7559 = vrot.lane.b32.xlu0 %v7498, 96
      %v7560 = vpop.permute.xlu0 %7559
      %7561 = vrot.lane.b32.xlu0 %v7499, 96
      %v7562 = vpop.permute.xlu0 %7561
      %7563 = vrot.lane.b32.xlu0 %v7500, 96
      %v7564 = vpop.permute.xlu0 %7563
      %7565 = vrot.lane.b32.xlu0 %v7501, 96
      %v7566 = vpop.permute.xlu0 %7565
      %7567 = vrot.lane.b32.xlu0 %v7502, 96
      %v7568 = vpop.permute.xlu0 %7567
      %7569 = vrot.lane.b32.xlu0 %v7503, 96
      %v7570 = vpop.permute.xlu0 %7569
      %7571 = vrot.lane.b32.xlu0 %v7504, 96
      %v7572 = vpop.permute.xlu0 %7571
      %7573 = vrot.lane.b32.xlu0 %v7505, 96
      %v7574 = vpop.permute.xlu0 %7573
      %7575 = vrot.lane.b32.xlu0 %v7506, 96
      %v7576 = vpop.permute.xlu0 %7575
      %7577 = vrot.lane.b32.xlu0 %v7507, 96
      %v7578 = vpop.permute.xlu0 %7577
      %7579 = vrot.lane.b32.xlu0 %v7508, 96
      %v7580 = vpop.permute.xlu0 %7579
      %7581 = vrot.lane.b32.xlu0 %v7509, 96
      %v7582 = vpop.permute.xlu0 %7581
      %7583 = vrot.lane.b32.xlu0 %v7510, 96
      %v7584 = vpop.permute.xlu0 %7583
      %7585 = vrot.lane.b32.xlu0 %v7511, 96
      %v7586 = vpop.permute.xlu0 %7585
      %7587 = vrot.lane.b32.xlu0 %v7512, 96
      %v7588 = vpop.permute.xlu0 %7587
      %7589 = vrot.lane.b32.xlu0 %v7513, 96
      %v7590 = vpop.permute.xlu0 %7589
      %7591 = vrot.lane.b32.xlu0 %v7514, 96
      %v7592 = vpop.permute.xlu0 %7591
      %vm7619 = vcmask 917248
      %7620 = vst.msk [vmem:[#allocation4] sm:$0xff] %vm7619, %v7542
      %7621 = vst.msk [vmem:[#allocation4 + $0x10] sm:$0xff] %vm7619, %v7544
      %7622 = vst.msk [vmem:[#allocation4 + $0x20] sm:$0xff] %vm7619, %v7546
      %7623 = vst.msk [vmem:[#allocation4 + $0x30] sm:$0xff] %vm7619, %v7548
      %7624 = vst.msk [vmem:[#allocation4 + $0x40] sm:$0xff] %vm7619, %v7550
      %7625 = vst.msk [vmem:[#allocation4 + $0x50] sm:$0xff] %vm7619, %v7552
      %7626 = vst.msk [vmem:[#allocation4 + $0x60] sm:$0xff] %vm7619, %v7554
      %7627 = vst.msk [vmem:[#allocation4 + $0x70] sm:$0xff] %vm7619, %v7556
      %7628 = vst.msk [vmem:[#allocation4 + $0x80] sm:$0xff] %vm7619, %v7558
      %7629 = vst.msk [vmem:[#allocation4 + $0x90] sm:$0xff] %vm7619, %v7560
      %7630 = vst.msk [vmem:[#allocation4 + $0xa0] sm:$0xff] %vm7619, %v7562
      %7631 = vst.msk [vmem:[#allocation4 + $0xb0] sm:$0xff] %vm7619, %v7564
      %7632 = vst.msk [vmem:[#allocation4 + $0xc0] sm:$0xff] %vm7619, %v7566
      %7633 = vst.msk [vmem:[#allocation4 + $0xd0] sm:$0xff] %vm7619, %v7568
      %7634 = vst.msk [vmem:[#allocation4 + $0xe0] sm:$0xff] %vm7619, %v7570
      %7635 = vst.msk [vmem:[#allocation4 + $0xf0] sm:$0xff] %vm7619, %v7572
      %7636 = vst.msk [vmem:[#allocation4 + $0x100] sm:$0xff] %vm7619, %v7574
      %7637 = vst.msk [vmem:[#allocation4 + $0x110] sm:$0xff] %vm7619, %v7576
      %7638 = vst.msk [vmem:[#allocation4 + $0x120] sm:$0xff] %vm7619, %v7578
      %7639 = vst.msk [vmem:[#allocation4 + $0x130] sm:$0xff] %vm7619, %v7580
      %7640 = vst.msk [vmem:[#allocation4 + $0x140] sm:$0xff] %vm7619, %v7582
      %7641 = vst.msk [vmem:[#allocation4 + $0x150] sm:$0xff] %vm7619, %v7584
      %7642 = vst.msk [vmem:[#allocation4 + $0x160] sm:$0xff] %vm7619, %v7586
      %7643 = vst.msk [vmem:[#allocation4 + $0x170] sm:$0xff] %vm7619, %v7588
      %7644 = vst.msk [vmem:[#allocation4 + $0x180] sm:$0xff] %vm7619, %v7590
      %7645 = vst.msk [vmem:[#allocation4 + $0x190] sm:$0xff] %vm7619, %v7592
      %v7646 = vld [vmem:[%s298 + $0xc] sm:$0xff]
      %v7647 = vld [vmem:[%s298 + $0x14] sm:$0xff]
      %v7648 = vld [vmem:[%s298 + $0x1c] sm:$0xff]
      %v7649 = vld [vmem:[%s298 + $0x24] sm:$0xff]
      %v7650 = vld [vmem:[%s298 + $0x2c] sm:$0xff]
      %v7651 = vld [vmem:[%s298 + $0x34] sm:$0xff]
      %v7652 = vld [vmem:[%s298 + $0x3c] sm:$0xff]
      %v7653 = vld [vmem:[%s298 + $0x44] sm:$0xff]
      %v7654 = vld [vmem:[%s298 + $0x4c] sm:$0xff]
      %v7655 = vld [vmem:[%s298 + $0x54] sm:$0xff]
      %v7656 = vld [vmem:[%s298 + $0x5c] sm:$0xff]
      %v7657 = vld [vmem:[%s298 + $0x64] sm:$0xff]
      %v7658 = vld [vmem:[%s298 + $0x6c] sm:$0xff]
      %v7659 = vld [vmem:[%s298 + $0x74] sm:$0xff]
      %v7660 = vld [vmem:[%s298 + $0x7c] sm:$0xff]
      %v7661 = vld [vmem:[%s298 + $0x84] sm:$0xff]
      %v7662 = vld [vmem:[%s298 + $0x8c] sm:$0xff]
      %v7663 = vld [vmem:[%s298 + $0x94] sm:$0xff]
      %v7664 = vld [vmem:[%s298 + $0x9c] sm:$0xff]
      %v7665 = vld [vmem:[%s298 + $0xa4] sm:$0xff]
      %v7666 = vld [vmem:[%s298 + $0xac] sm:$0xff]
      %v7667 = vld [vmem:[%s298 + $0xb4] sm:$0xff]
      %v7668 = vld [vmem:[%s298 + $0xbc] sm:$0xff]
      %v7669 = vld [vmem:[%s298 + $0xc4] sm:$0xff]
      %v7670 = vld [vmem:[%s298 + $0xcc] sm:$0xff]
      %v7671 = vld [vmem:[%s298 + $0xd4] sm:$0xff]
      %7698 = vrot.lane.b32.xlu0 %v7646, 112
      %v7699 = vpop.permute.xlu0 %7698
      %7700 = vrot.lane.b32.xlu0 %v7647, 112
      %v7701 = vpop.permute.xlu0 %7700
      %7702 = vrot.lane.b32.xlu0 %v7648, 112
      %v7703 = vpop.permute.xlu0 %7702
      %7704 = vrot.lane.b32.xlu0 %v7649, 112
      %v7705 = vpop.permute.xlu0 %7704
      %7706 = vrot.lane.b32.xlu0 %v7650, 112
      %v7707 = vpop.permute.xlu0 %7706
      %7708 = vrot.lane.b32.xlu0 %v7651, 112
      %v7709 = vpop.permute.xlu0 %7708
      %7710 = vrot.lane.b32.xlu0 %v7652, 112
      %v7711 = vpop.permute.xlu0 %7710
      %7712 = vrot.lane.b32.xlu0 %v7653, 112
      %v7713 = vpop.permute.xlu0 %7712
      %7714 = vrot.lane.b32.xlu0 %v7654, 112
      %v7715 = vpop.permute.xlu0 %7714
      %7716 = vrot.lane.b32.xlu0 %v7655, 112
      %v7717 = vpop.permute.xlu0 %7716
      %7718 = vrot.lane.b32.xlu0 %v7656, 112
      %v7719 = vpop.permute.xlu0 %7718
      %7720 = vrot.lane.b32.xlu0 %v7657, 112
      %v7721 = vpop.permute.xlu0 %7720
      %7722 = vrot.lane.b32.xlu0 %v7658, 112
      %v7723 = vpop.permute.xlu0 %7722
      %7724 = vrot.lane.b32.xlu0 %v7659, 112
      %v7725 = vpop.permute.xlu0 %7724
      %7726 = vrot.lane.b32.xlu0 %v7660, 112
      %v7727 = vpop.permute.xlu0 %7726
      %7728 = vrot.lane.b32.xlu0 %v7661, 112
      %v7729 = vpop.permute.xlu0 %7728
      %7730 = vrot.lane.b32.xlu0 %v7662, 112
      %v7731 = vpop.permute.xlu0 %7730
      %7732 = vrot.lane.b32.xlu0 %v7663, 112
      %v7733 = vpop.permute.xlu0 %7732
      %7734 = vrot.lane.b32.xlu0 %v7664, 112
      %v7735 = vpop.permute.xlu0 %7734
      %7736 = vrot.lane.b32.xlu0 %v7665, 112
      %v7737 = vpop.permute.xlu0 %7736
      %7738 = vrot.lane.b32.xlu0 %v7666, 112
      %v7739 = vpop.permute.xlu0 %7738
      %7740 = vrot.lane.b32.xlu0 %v7667, 112
      %v7741 = vpop.permute.xlu0 %7740
      %7742 = vrot.lane.b32.xlu0 %v7668, 112
      %v7743 = vpop.permute.xlu0 %7742
      %7744 = vrot.lane.b32.xlu0 %v7669, 112
      %v7745 = vpop.permute.xlu0 %7744
      %7746 = vrot.lane.b32.xlu0 %v7670, 112
      %v7747 = vpop.permute.xlu0 %7746
      %7748 = vrot.lane.b32.xlu0 %v7671, 112
      %v7749 = vpop.permute.xlu0 %7748
      %vm7776 = vcmask 1048448
      %7777 = vst.msk [vmem:[#allocation4] sm:$0xff] %vm7776, %v7699
      %7778 = vst.msk [vmem:[#allocation4 + $0x10] sm:$0xff] %vm7776, %v7701
      %7779 = vst.msk [vmem:[#allocation4 + $0x20] sm:$0xff] %vm7776, %v7703
      %7780 = vst.msk [vmem:[#allocation4 + $0x30] sm:$0xff] %vm7776, %v7705
      %7781 = vst.msk [vmem:[#allocation4 + $0x40] sm:$0xff] %vm7776, %v7707
      %7782 = vst.msk [vmem:[#allocation4 + $0x50] sm:$0xff] %vm7776, %v7709
      %7783 = vst.msk [vmem:[#allocation4 + $0x60] sm:$0xff] %vm7776, %v7711
      %7784 = vst.msk [vmem:[#allocation4 + $0x70] sm:$0xff] %vm7776, %v7713
      %7785 = vst.msk [vmem:[#allocation4 + $0x80] sm:$0xff] %vm7776, %v7715
      %7786 = vst.msk [vmem:[#allocation4 + $0x90] sm:$0xff] %vm7776, %v7717
      %7787 = vst.msk [vmem:[#allocation4 + $0xa0] sm:$0xff] %vm7776, %v7719
      %7788 = vst.msk [vmem:[#allocation4 + $0xb0] sm:$0xff] %vm7776, %v7721
      %7789 = vst.msk [vmem:[#allocation4 + $0xc0] sm:$0xff] %vm7776, %v7723
      %7790 = vst.msk [vmem:[#allocation4 + $0xd0] sm:$0xff] %vm7776, %v7725
      %7791 = vst.msk [vmem:[#allocation4 + $0xe0] sm:$0xff] %vm7776, %v7727
      %7792 = vst.msk [vmem:[#allocation4 + $0xf0] sm:$0xff] %vm7776, %v7729
      %7793 = vst.msk [vmem:[#allocation4 + $0x100] sm:$0xff] %vm7776, %v7731
      %7794 = vst.msk [vmem:[#allocation4 + $0x110] sm:$0xff] %vm7776, %v7733
      %7795 = vst.msk [vmem:[#allocation4 + $0x120] sm:$0xff] %vm7776, %v7735
      %7796 = vst.msk [vmem:[#allocation4 + $0x130] sm:$0xff] %vm7776, %v7737
      %7797 = vst.msk [vmem:[#allocation4 + $0x140] sm:$0xff] %vm7776, %v7739
      %7798 = vst.msk [vmem:[#allocation4 + $0x150] sm:$0xff] %vm7776, %v7741
      %7799 = vst.msk [vmem:[#allocation4 + $0x160] sm:$0xff] %vm7776, %v7743
      %7800 = vst.msk [vmem:[#allocation4 + $0x170] sm:$0xff] %vm7776, %v7745
      %7801 = vst.msk [vmem:[#allocation4 + $0x180] sm:$0xff] %vm7776, %v7747
      %7802 = vst.msk [vmem:[#allocation4 + $0x190] sm:$0xff] %vm7776, %v7749
      %v7803 = vld [vmem:[%s298 + $0x1] sm:$0xff]
      %v7804 = vld [vmem:[%s298 + $0x9] sm:$0xff]
      %v7805 = vld [vmem:[%s298 + $0x11] sm:$0xff]
      %v7806 = vld [vmem:[%s298 + $0x19] sm:$0xff]
      %v7807 = vld [vmem:[%s298 + $0x21] sm:$0xff]
      %v7808 = vld [vmem:[%s298 + $0x29] sm:$0xff]
      %v7809 = vld [vmem:[%s298 + $0x31] sm:$0xff]
      %v7810 = vld [vmem:[%s298 + $0x39] sm:$0xff]
      %v7811 = vld [vmem:[%s298 + $0x41] sm:$0xff]
      %v7812 = vld [vmem:[%s298 + $0x49] sm:$0xff]
      %v7813 = vld [vmem:[%s298 + $0x51] sm:$0xff]
      %v7814 = vld [vmem:[%s298 + $0x59] sm:$0xff]
      %v7815 = vld [vmem:[%s298 + $0x61] sm:$0xff]
      %v7816 = vld [vmem:[%s298 + $0x69] sm:$0xff]
      %v7817 = vld [vmem:[%s298 + $0x71] sm:$0xff]
      %v7818 = vld [vmem:[%s298 + $0x79] sm:$0xff]
      %v7819 = vld [vmem:[%s298 + $0x81] sm:$0xff]
      %v7820 = vld [vmem:[%s298 + $0x89] sm:$0xff]
      %v7821 = vld [vmem:[%s298 + $0x91] sm:$0xff]
      %v7822 = vld [vmem:[%s298 + $0x99] sm:$0xff]
      %v7823 = vld [vmem:[%s298 + $0xa1] sm:$0xff]
      %v7824 = vld [vmem:[%s298 + $0xa9] sm:$0xff]
      %v7825 = vld [vmem:[%s298 + $0xb1] sm:$0xff]
      %v7826 = vld [vmem:[%s298 + $0xb9] sm:$0xff]
      %v7827 = vld [vmem:[%s298 + $0xc1] sm:$0xff]
      %v7828 = vld [vmem:[%s298 + $0xc9] sm:$0xff]
      %7829 = vst.msk [vmem:[#allocation4 + $0x8] sm:$0xff] %vm282, %v7803
      %7830 = vst.msk [vmem:[#allocation4 + $0x18] sm:$0xff] %vm282, %v7804
      %7831 = vst.msk [vmem:[#allocation4 + $0x28] sm:$0xff] %vm282, %v7805
      %7832 = vst.msk [vmem:[#allocation4 + $0x38] sm:$0xff] %vm282, %v7806
      %7833 = vst.msk [vmem:[#allocation4 + $0x48] sm:$0xff] %vm282, %v7807
      %7834 = vst.msk [vmem:[#allocation4 + $0x58] sm:$0xff] %vm282, %v7808
      %7835 = vst.msk [vmem:[#allocation4 + $0x68] sm:$0xff] %vm282, %v7809
      %7836 = vst.msk [vmem:[#allocation4 + $0x78] sm:$0xff] %vm282, %v7810
      %7837 = vst.msk [vmem:[#allocation4 + $0x88] sm:$0xff] %vm282, %v7811
      %7838 = vst.msk [vmem:[#allocation4 + $0x98] sm:$0xff] %vm282, %v7812
      %7839 = vst.msk [vmem:[#allocation4 + $0xa8] sm:$0xff] %vm282, %v7813
      %7840 = vst.msk [vmem:[#allocation4 + $0xb8] sm:$0xff] %vm282, %v7814
      %7841 = vst.msk [vmem:[#allocation4 + $0xc8] sm:$0xff] %vm282, %v7815
      %7842 = vst.msk [vmem:[#allocation4 + $0xd8] sm:$0xff] %vm282, %v7816
      %7843 = vst.msk [vmem:[#allocation4 + $0xe8] sm:$0xff] %vm282, %v7817
      %7844 = vst.msk [vmem:[#allocation4 + $0xf8] sm:$0xff] %vm282, %v7818
      %7845 = vst.msk [vmem:[#allocation4 + $0x108] sm:$0xff] %vm282, %v7819
      %7846 = vst.msk [vmem:[#allocation4 + $0x118] sm:$0xff] %vm282, %v7820
      %7847 = vst.msk [vmem:[#allocation4 + $0x128] sm:$0xff] %vm282, %v7821
      %7848 = vst.msk [vmem:[#allocation4 + $0x138] sm:$0xff] %vm282, %v7822
      %7849 = vst.msk [vmem:[#allocation4 + $0x148] sm:$0xff] %vm282, %v7823
      %7850 = vst.msk [vmem:[#allocation4 + $0x158] sm:$0xff] %vm282, %v7824
      %7851 = vst.msk [vmem:[#allocation4 + $0x168] sm:$0xff] %vm282, %v7825
      %7852 = vst.msk [vmem:[#allocation4 + $0x178] sm:$0xff] %vm282, %v7826
      %7853 = vst.msk [vmem:[#allocation4 + $0x188] sm:$0xff] %vm282, %v7827
      %7854 = vst.msk [vmem:[#allocation4 + $0x198] sm:$0xff] %vm282, %v7828
      %v7855 = vld [vmem:[%s303 + $0x1] sm:$0xff]
      %v7856 = vld [vmem:[%s303 + $0x9] sm:$0xff]
      %v7857 = vld [vmem:[%s303 + $0x11] sm:$0xff]
      %v7858 = vld [vmem:[%s303 + $0x19] sm:$0xff]
      %v7859 = vld [vmem:[%s303 + $0x21] sm:$0xff]
      %v7860 = vld [vmem:[%s303 + $0x29] sm:$0xff]
      %v7861 = vld [vmem:[%s303 + $0x31] sm:$0xff]
      %v7862 = vld [vmem:[%s303 + $0x39] sm:$0xff]
      %v7863 = vld [vmem:[%s303 + $0x41] sm:$0xff]
      %v7864 = vld [vmem:[%s303 + $0x49] sm:$0xff]
      %v7865 = vld [vmem:[%s303 + $0x51] sm:$0xff]
      %v7866 = vld [vmem:[%s303 + $0x59] sm:$0xff]
      %v7867 = vld [vmem:[%s303 + $0x61] sm:$0xff]
      %v7868 = vld [vmem:[%s303 + $0x69] sm:$0xff]
      %v7869 = vld [vmem:[%s303 + $0x71] sm:$0xff]
      %v7870 = vld [vmem:[%s303 + $0x79] sm:$0xff]
      %v7871 = vld [vmem:[%s303 + $0x81] sm:$0xff]
      %v7872 = vld [vmem:[%s303 + $0x89] sm:$0xff]
      %v7873 = vld [vmem:[%s303 + $0x91] sm:$0xff]
      %v7874 = vld [vmem:[%s303 + $0x99] sm:$0xff]
      %v7875 = vld [vmem:[%s303 + $0xa1] sm:$0xff]
      %v7876 = vld [vmem:[%s303 + $0xa9] sm:$0xff]
      %v7877 = vld [vmem:[%s303 + $0xb1] sm:$0xff]
      %v7878 = vld [vmem:[%s303 + $0xb9] sm:$0xff]
      %v7879 = vld [vmem:[%s303 + $0xc1] sm:$0xff]
      %v7880 = vld [vmem:[%s303 + $0xc9] sm:$0xff]
      %7907 = vrot.lane.b32.xlu0 %v7855, 16
      %v7908 = vpop.permute.xlu0 %7907
      %7909 = vrot.lane.b32.xlu0 %v7856, 16
      %v7910 = vpop.permute.xlu0 %7909
      %7911 = vrot.lane.b32.xlu0 %v7857, 16
      %v7912 = vpop.permute.xlu0 %7911
      %7913 = vrot.lane.b32.xlu0 %v7858, 16
      %v7914 = vpop.permute.xlu0 %7913
      %7915 = vrot.lane.b32.xlu0 %v7859, 16
      %v7916 = vpop.permute.xlu0 %7915
      %7917 = vrot.lane.b32.xlu0 %v7860, 16
      %v7918 = vpop.permute.xlu0 %7917
      %7919 = vrot.lane.b32.xlu0 %v7861, 16
      %v7920 = vpop.permute.xlu0 %7919
      %7921 = vrot.lane.b32.xlu0 %v7862, 16
      %v7922 = vpop.permute.xlu0 %7921
      %7923 = vrot.lane.b32.xlu0 %v7863, 16
      %v7924 = vpop.permute.xlu0 %7923
      %7925 = vrot.lane.b32.xlu0 %v7864, 16
      %v7926 = vpop.permute.xlu0 %7925
      %7927 = vrot.lane.b32.xlu0 %v7865, 16
      %v7928 = vpop.permute.xlu0 %7927
      %7929 = vrot.lane.b32.xlu0 %v7866, 16
      %v7930 = vpop.permute.xlu0 %7929
      %7931 = vrot.lane.b32.xlu0 %v7867, 16
      %v7932 = vpop.permute.xlu0 %7931
      %7933 = vrot.lane.b32.xlu0 %v7868, 16
      %v7934 = vpop.permute.xlu0 %7933
      %7935 = vrot.lane.b32.xlu0 %v7869, 16
      %v7936 = vpop.permute.xlu0 %7935
      %7937 = vrot.lane.b32.xlu0 %v7870, 16
      %v7938 = vpop.permute.xlu0 %7937
      %7939 = vrot.lane.b32.xlu0 %v7871, 16
      %v7940 = vpop.permute.xlu0 %7939
      %7941 = vrot.lane.b32.xlu0 %v7872, 16
      %v7942 = vpop.permute.xlu0 %7941
      %7943 = vrot.lane.b32.xlu0 %v7873, 16
      %v7944 = vpop.permute.xlu0 %7943
      %7945 = vrot.lane.b32.xlu0 %v7874, 16
      %v7946 = vpop.permute.xlu0 %7945
      %7947 = vrot.lane.b32.xlu0 %v7875, 16
      %v7948 = vpop.permute.xlu0 %7947
      %7949 = vrot.lane.b32.xlu0 %v7876, 16
      %v7950 = vpop.permute.xlu0 %7949
      %7951 = vrot.lane.b32.xlu0 %v7877, 16
      %v7952 = vpop.permute.xlu0 %7951
      %7953 = vrot.lane.b32.xlu0 %v7878, 16
      %v7954 = vpop.permute.xlu0 %7953
      %7955 = vrot.lane.b32.xlu0 %v7879, 16
      %v7956 = vpop.permute.xlu0 %7955
      %7957 = vrot.lane.b32.xlu0 %v7880, 16
      %v7958 = vpop.permute.xlu0 %7957
      %7985 = vst.msk [vmem:[#allocation4 + $0x8] sm:$0xff] %vm3182, %v7908
      %7986 = vst.msk [vmem:[#allocation4 + $0x18] sm:$0xff] %vm3182, %v7910
      %7987 = vst.msk [vmem:[#allocation4 + $0x28] sm:$0xff] %vm3182, %v7912
      %7988 = vst.msk [vmem:[#allocation4 + $0x38] sm:$0xff] %vm3182, %v7914
      %7989 = vst.msk [vmem:[#allocation4 + $0x48] sm:$0xff] %vm3182, %v7916
      %7990 = vst.msk [vmem:[#allocation4 + $0x58] sm:$0xff] %vm3182, %v7918
      %7991 = vst.msk [vmem:[#allocation4 + $0x68] sm:$0xff] %vm3182, %v7920
      %7992 = vst.msk [vmem:[#allocation4 + $0x78] sm:$0xff] %vm3182, %v7922
      %7993 = vst.msk [vmem:[#allocation4 + $0x88] sm:$0xff] %vm3182, %v7924
      %7994 = vst.msk [vmem:[#allocation4 + $0x98] sm:$0xff] %vm3182, %v7926
      %7995 = vst.msk [vmem:[#allocation4 + $0xa8] sm:$0xff] %vm3182, %v7928
      %7996 = vst.msk [vmem:[#allocation4 + $0xb8] sm:$0xff] %vm3182, %v7930
      %7997 = vst.msk [vmem:[#allocation4 + $0xc8] sm:$0xff] %vm3182, %v7932
      %7998 = vst.msk [vmem:[#allocation4 + $0xd8] sm:$0xff] %vm3182, %v7934
      %7999 = vst.msk [vmem:[#allocation4 + $0xe8] sm:$0xff] %vm3182, %v7936
      %8000 = vst.msk [vmem:[#allocation4 + $0xf8] sm:$0xff] %vm3182, %v7938
      %8001 = vst.msk [vmem:[#allocation4 + $0x108] sm:$0xff] %vm3182, %v7940
      %8002 = vst.msk [vmem:[#allocation4 + $0x118] sm:$0xff] %vm3182, %v7942
      %8003 = vst.msk [vmem:[#allocation4 + $0x128] sm:$0xff] %vm3182, %v7944
      %8004 = vst.msk [vmem:[#allocation4 + $0x138] sm:$0xff] %vm3182, %v7946
      %8005 = vst.msk [vmem:[#allocation4 + $0x148] sm:$0xff] %vm3182, %v7948
      %8006 = vst.msk [vmem:[#allocation4 + $0x158] sm:$0xff] %vm3182, %v7950
      %8007 = vst.msk [vmem:[#allocation4 + $0x168] sm:$0xff] %vm3182, %v7952
      %8008 = vst.msk [vmem:[#allocation4 + $0x178] sm:$0xff] %vm3182, %v7954
      %8009 = vst.msk [vmem:[#allocation4 + $0x188] sm:$0xff] %vm3182, %v7956
      %8010 = vst.msk [vmem:[#allocation4 + $0x198] sm:$0xff] %vm3182, %v7958
      %v8011 = vld [vmem:[%s303] sm:$0xff]
      %v8012 = vld [vmem:[%s303 + $0x8] sm:$0xff]
      %v8013 = vld [vmem:[%s303 + $0x10] sm:$0xff]
      %v8014 = vld [vmem:[%s303 + $0x18] sm:$0xff]
      %v8015 = vld [vmem:[%s303 + $0x20] sm:$0xff]
      %v8016 = vld [vmem:[%s303 + $0x28] sm:$0xff]
      %v8017 = vld [vmem:[%s303 + $0x30] sm:$0xff]
      %v8018 = vld [vmem:[%s303 + $0x38] sm:$0xff]
      %v8019 = vld [vmem:[%s303 + $0x40] sm:$0xff]
      %v8020 = vld [vmem:[%s303 + $0x48] sm:$0xff]
      %v8021 = vld [vmem:[%s303 + $0x50] sm:$0xff]
      %v8022 = vld [vmem:[%s303 + $0x58] sm:$0xff]
      %v8023 = vld [vmem:[%s303 + $0x60] sm:$0xff]
      %v8024 = vld [vmem:[%s303 + $0x68] sm:$0xff]
      %v8025 = vld [vmem:[%s303 + $0x70] sm:$0xff]
      %v8026 = vld [vmem:[%s303 + $0x78] sm:$0xff]
      %v8027 = vld [vmem:[%s303 + $0x80] sm:$0xff]
      %v8028 = vld [vmem:[%s303 + $0x88] sm:$0xff]
      %v8029 = vld [vmem:[%s303 + $0x90] sm:$0xff]
      %v8030 = vld [vmem:[%s303 + $0x98] sm:$0xff]
      %v8031 = vld [vmem:[%s303 + $0xa0] sm:$0xff]
      %v8032 = vld [vmem:[%s303 + $0xa8] sm:$0xff]
      %v8033 = vld [vmem:[%s303 + $0xb0] sm:$0xff]
      %v8034 = vld [vmem:[%s303 + $0xb8] sm:$0xff]
      %v8035 = vld [vmem:[%s303 + $0xc0] sm:$0xff]
      %v8036 = vld [vmem:[%s303 + $0xc8] sm:$0xff]
      %8063 = vrot.lane.b32.xlu0 %v8011, 32
      %v8064 = vpop.permute.xlu0 %8063
      %8065 = vrot.lane.b32.xlu0 %v8012, 32
      %v8066 = vpop.permute.xlu0 %8065
      %8067 = vrot.lane.b32.xlu0 %v8013, 32
      %v8068 = vpop.permute.xlu0 %8067
      %8069 = vrot.lane.b32.xlu0 %v8014, 32
      %v8070 = vpop.permute.xlu0 %8069
      %8071 = vrot.lane.b32.xlu0 %v8015, 32
      %v8072 = vpop.permute.xlu0 %8071
      %8073 = vrot.lane.b32.xlu0 %v8016, 32
      %v8074 = vpop.permute.xlu0 %8073
      %8075 = vrot.lane.b32.xlu0 %v8017, 32
      %v8076 = vpop.permute.xlu0 %8075
      %8077 = vrot.lane.b32.xlu0 %v8018, 32
      %v8078 = vpop.permute.xlu0 %8077
      %8079 = vrot.lane.b32.xlu0 %v8019, 32
      %v8080 = vpop.permute.xlu0 %8079
      %8081 = vrot.lane.b32.xlu0 %v8020, 32
      %v8082 = vpop.permute.xlu0 %8081
      %8083 = vrot.lane.b32.xlu0 %v8021, 32
      %v8084 = vpop.permute.xlu0 %8083
      %8085 = vrot.lane.b32.xlu0 %v8022, 32
      %v8086 = vpop.permute.xlu0 %8085
      %8087 = vrot.lane.b32.xlu0 %v8023, 32
      %v8088 = vpop.permute.xlu0 %8087
      %8089 = vrot.lane.b32.xlu0 %v8024, 32
      %v8090 = vpop.permute.xlu0 %8089
      %8091 = vrot.lane.b32.xlu0 %v8025, 32
      %v8092 = vpop.permute.xlu0 %8091
      %8093 = vrot.lane.b32.xlu0 %v8026, 32
      %v8094 = vpop.permute.xlu0 %8093
      %8095 = vrot.lane.b32.xlu0 %v8027, 32
      %v8096 = vpop.permute.xlu0 %8095
      %8097 = vrot.lane.b32.xlu0 %v8028, 32
      %v8098 = vpop.permute.xlu0 %8097
      %8099 = vrot.lane.b32.xlu0 %v8029, 32
      %v8100 = vpop.permute.xlu0 %8099
      %8101 = vrot.lane.b32.xlu0 %v8030, 32
      %v8102 = vpop.permute.xlu0 %8101
      %8103 = vrot.lane.b32.xlu0 %v8031, 32
      %v8104 = vpop.permute.xlu0 %8103
      %8105 = vrot.lane.b32.xlu0 %v8032, 32
      %v8106 = vpop.permute.xlu0 %8105
      %8107 = vrot.lane.b32.xlu0 %v8033, 32
      %v8108 = vpop.permute.xlu0 %8107
      %8109 = vrot.lane.b32.xlu0 %v8034, 32
      %v8110 = vpop.permute.xlu0 %8109
      %8111 = vrot.lane.b32.xlu0 %v8035, 32
      %v8112 = vpop.permute.xlu0 %8111
      %8113 = vrot.lane.b32.xlu0 %v8036, 32
      %v8114 = vpop.permute.xlu0 %8113
      %8141 = vst.msk [vmem:[#allocation4 + $0x8] sm:$0xff] %vm3339, %v8064
      %8142 = vst.msk [vmem:[#allocation4 + $0x18] sm:$0xff] %vm3339, %v8066
      %8143 = vst.msk [vmem:[#allocation4 + $0x28] sm:$0xff] %vm3339, %v8068
      %8144 = vst.msk [vmem:[#allocation4 + $0x38] sm:$0xff] %vm3339, %v8070
      %8145 = vst.msk [vmem:[#allocation4 + $0x48] sm:$0xff] %vm3339, %v8072
      %8146 = vst.msk [vmem:[#allocation4 + $0x58] sm:$0xff] %vm3339, %v8074
      %8147 = vst.msk [vmem:[#allocation4 + $0x68] sm:$0xff] %vm3339, %v8076
      %8148 = vst.msk [vmem:[#allocation4 + $0x78] sm:$0xff] %vm3339, %v8078
      %8149 = vst.msk [vmem:[#allocation4 + $0x88] sm:$0xff] %vm3339, %v8080
      %8150 = vst.msk [vmem:[#allocation4 + $0x98] sm:$0xff] %vm3339, %v8082
      %8151 = vst.msk [vmem:[#allocation4 + $0xa8] sm:$0xff] %vm3339, %v8084
      %8152 = vst.msk [vmem:[#allocation4 + $0xb8] sm:$0xff] %vm3339, %v8086
      %8153 = vst.msk [vmem:[#allocation4 + $0xc8] sm:$0xff] %vm3339, %v8088
      %8154 = vst.msk [vmem:[#allocation4 + $0xd8] sm:$0xff] %vm3339, %v8090
      %8155 = vst.msk [vmem:[#allocation4 + $0xe8] sm:$0xff] %vm3339, %v8092
      %8156 = vst.msk [vmem:[#allocation4 + $0xf8] sm:$0xff] %vm3339, %v8094
      %8157 = vst.msk [vmem:[#allocation4 + $0x108] sm:$0xff] %vm3339, %v8096
      %8158 = vst.msk [vmem:[#allocation4 + $0x118] sm:$0xff] %vm3339, %v8098
      %8159 = vst.msk [vmem:[#allocation4 + $0x128] sm:$0xff] %vm3339, %v8100
      %8160 = vst.msk [vmem:[#allocation4 + $0x138] sm:$0xff] %vm3339, %v8102
      %8161 = vst.msk [vmem:[#allocation4 + $0x148] sm:$0xff] %vm3339, %v8104
      %8162 = vst.msk [vmem:[#allocation4 + $0x158] sm:$0xff] %vm3339, %v8106
      %8163 = vst.msk [vmem:[#allocation4 + $0x168] sm:$0xff] %vm3339, %v8108
      %8164 = vst.msk [vmem:[#allocation4 + $0x178] sm:$0xff] %vm3339, %v8110
      %8165 = vst.msk [vmem:[#allocation4 + $0x188] sm:$0xff] %vm3339, %v8112
      %8166 = vst.msk [vmem:[#allocation4 + $0x198] sm:$0xff] %vm3339, %v8114
      %v8167 = vld [vmem:[%s298 + $0x2] sm:$0xff]
      %v8168 = vld [vmem:[%s298 + $0xa] sm:$0xff]
      %v8169 = vld [vmem:[%s298 + $0x12] sm:$0xff]
      %v8170 = vld [vmem:[%s298 + $0x1a] sm:$0xff]
      %v8171 = vld [vmem:[%s298 + $0x22] sm:$0xff]
      %v8172 = vld [vmem:[%s298 + $0x2a] sm:$0xff]
      %v8173 = vld [vmem:[%s298 + $0x32] sm:$0xff]
      %v8174 = vld [vmem:[%s298 + $0x3a] sm:$0xff]
      %v8175 = vld [vmem:[%s298 + $0x42] sm:$0xff]
      %v8176 = vld [vmem:[%s298 + $0x4a] sm:$0xff]
      %v8177 = vld [vmem:[%s298 + $0x52] sm:$0xff]
      %v8178 = vld [vmem:[%s298 + $0x5a] sm:$0xff]
      %v8179 = vld [vmem:[%s298 + $0x62] sm:$0xff]
      %v8180 = vld [vmem:[%s298 + $0x6a] sm:$0xff]
      %v8181 = vld [vmem:[%s298 + $0x72] sm:$0xff]
      %v8182 = vld [vmem:[%s298 + $0x7a] sm:$0xff]
      %v8183 = vld [vmem:[%s298 + $0x82] sm:$0xff]
      %v8184 = vld [vmem:[%s298 + $0x8a] sm:$0xff]
      %v8185 = vld [vmem:[%s298 + $0x92] sm:$0xff]
      %v8186 = vld [vmem:[%s298 + $0x9a] sm:$0xff]
      %v8187 = vld [vmem:[%s298 + $0xa2] sm:$0xff]
      %v8188 = vld [vmem:[%s298 + $0xaa] sm:$0xff]
      %v8189 = vld [vmem:[%s298 + $0xb2] sm:$0xff]
      %v8190 = vld [vmem:[%s298 + $0xba] sm:$0xff]
      %v8191 = vld [vmem:[%s298 + $0xc2] sm:$0xff]
      %v8192 = vld [vmem:[%s298 + $0xca] sm:$0xff]
      %8219 = vrot.lane.b32.xlu0 %v8167, 48
      %v8220 = vpop.permute.xlu0 %8219
      %8221 = vrot.lane.b32.xlu0 %v8168, 48
      %v8222 = vpop.permute.xlu0 %8221
      %8223 = vrot.lane.b32.xlu0 %v8169, 48
      %v8224 = vpop.permute.xlu0 %8223
      %8225 = vrot.lane.b32.xlu0 %v8170, 48
      %v8226 = vpop.permute.xlu0 %8225
      %8227 = vrot.lane.b32.xlu0 %v8171, 48
      %v8228 = vpop.permute.xlu0 %8227
      %8229 = vrot.lane.b32.xlu0 %v8172, 48
      %v8230 = vpop.permute.xlu0 %8229
      %8231 = vrot.lane.b32.xlu0 %v8173, 48
      %v8232 = vpop.permute.xlu0 %8231
      %8233 = vrot.lane.b32.xlu0 %v8174, 48
      %v8234 = vpop.permute.xlu0 %8233
      %8235 = vrot.lane.b32.xlu0 %v8175, 48
      %v8236 = vpop.permute.xlu0 %8235
      %8237 = vrot.lane.b32.xlu0 %v8176, 48
      %v8238 = vpop.permute.xlu0 %8237
      %8239 = vrot.lane.b32.xlu0 %v8177, 48
      %v8240 = vpop.permute.xlu0 %8239
      %8241 = vrot.lane.b32.xlu0 %v8178, 48
      %v8242 = vpop.permute.xlu0 %8241
      %8243 = vrot.lane.b32.xlu0 %v8179, 48
      %v8244 = vpop.permute.xlu0 %8243
      %8245 = vrot.lane.b32.xlu0 %v8180, 48
      %v8246 = vpop.permute.xlu0 %8245
      %8247 = vrot.lane.b32.xlu0 %v8181, 48
      %v8248 = vpop.permute.xlu0 %8247
      %8249 = vrot.lane.b32.xlu0 %v8182, 48
      %v8250 = vpop.permute.xlu0 %8249
      %8251 = vrot.lane.b32.xlu0 %v8183, 48
      %v8252 = vpop.permute.xlu0 %8251
      %8253 = vrot.lane.b32.xlu0 %v8184, 48
      %v8254 = vpop.permute.xlu0 %8253
      %8255 = vrot.lane.b32.xlu0 %v8185, 48
      %v8256 = vpop.permute.xlu0 %8255
      %8257 = vrot.lane.b32.xlu0 %v8186, 48
      %v8258 = vpop.permute.xlu0 %8257
      %8259 = vrot.lane.b32.xlu0 %v8187, 48
      %v8260 = vpop.permute.xlu0 %8259
      %8261 = vrot.lane.b32.xlu0 %v8188, 48
      %v8262 = vpop.permute.xlu0 %8261
      %8263 = vrot.lane.b32.xlu0 %v8189, 48
      %v8264 = vpop.permute.xlu0 %8263
      %8265 = vrot.lane.b32.xlu0 %v8190, 48
      %v8266 = vpop.permute.xlu0 %8265
      %8267 = vrot.lane.b32.xlu0 %v8191, 48
      %v8268 = vpop.permute.xlu0 %8267
      %8269 = vrot.lane.b32.xlu0 %v8192, 48
      %v8270 = vpop.permute.xlu0 %8269
      %8297 = vst.msk [vmem:[#allocation4 + $0x8] sm:$0xff] %vm3496, %v8220
      %8298 = vst.msk [vmem:[#allocation4 + $0x18] sm:$0xff] %vm3496, %v8222
      %8299 = vst.msk [vmem:[#allocation4 + $0x28] sm:$0xff] %vm3496, %v8224
      %8300 = vst.msk [vmem:[#allocation4 + $0x38] sm:$0xff] %vm3496, %v8226
      %8301 = vst.msk [vmem:[#allocation4 + $0x48] sm:$0xff] %vm3496, %v8228
      %8302 = vst.msk [vmem:[#allocation4 + $0x58] sm:$0xff] %vm3496, %v8230
      %8303 = vst.msk [vmem:[#allocation4 + $0x68] sm:$0xff] %vm3496, %v8232
      %8304 = vst.msk [vmem:[#allocation4 + $0x78] sm:$0xff] %vm3496, %v8234
      %8305 = vst.msk [vmem:[#allocation4 + $0x88] sm:$0xff] %vm3496, %v8236
      %8306 = vst.msk [vmem:[#allocation4 + $0x98] sm:$0xff] %vm3496, %v8238
      %8307 = vst.msk [vmem:[#allocation4 + $0xa8] sm:$0xff] %vm3496, %v8240
      %8308 = vst.msk [vmem:[#allocation4 + $0xb8] sm:$0xff] %vm3496, %v8242
      %8309 = vst.msk [vmem:[#allocation4 + $0xc8] sm:$0xff] %vm3496, %v8244
      %8310 = vst.msk [vmem:[#allocation4 + $0xd8] sm:$0xff] %vm3496, %v8246
      %8311 = vst.msk [vmem:[#allocation4 + $0xe8] sm:$0xff] %vm3496, %v8248
      %8312 = vst.msk [vmem:[#allocation4 + $0xf8] sm:$0xff] %vm3496, %v8250
      %8313 = vst.msk [vmem:[#allocation4 + $0x108] sm:$0xff] %vm3496, %v8252
      %8314 = vst.msk [vmem:[#allocation4 + $0x118] sm:$0xff] %vm3496, %v8254
      %8315 = vst.msk [vmem:[#allocation4 + $0x128] sm:$0xff] %vm3496, %v8256
      %8316 = vst.msk [vmem:[#allocation4 + $0x138] sm:$0xff] %vm3496, %v8258
      %8317 = vst.msk [vmem:[#allocation4 + $0x148] sm:$0xff] %vm3496, %v8260
      %8318 = vst.msk [vmem:[#allocation4 + $0x158] sm:$0xff] %vm3496, %v8262
      %8319 = vst.msk [vmem:[#allocation4 + $0x168] sm:$0xff] %vm3496, %v8264
      %8320 = vst.msk [vmem:[#allocation4 + $0x178] sm:$0xff] %vm3496, %v8266
      %8321 = vst.msk [vmem:[#allocation4 + $0x188] sm:$0xff] %vm3496, %v8268
      %8322 = vst.msk [vmem:[#allocation4 + $0x198] sm:$0xff] %vm3496, %v8270
      %v8323 = vld [vmem:[#allocation3 + $0x15] sm:$0xff]
      %v8324 = vld [vmem:[#allocation3 + $0x1d] sm:$0xff]
      %v8325 = vld [vmem:[#allocation3 + $0x25] sm:$0xff]
      %v8326 = vld [vmem:[#allocation3 + $0x2d] sm:$0xff]
      %v8327 = vld [vmem:[#allocation3 + $0x35] sm:$0xff]
      %v8328 = vld [vmem:[#allocation3 + $0x3d] sm:$0xff]
      %v8329 = vld [vmem:[#allocation3 + $0x45] sm:$0xff]
      %v8330 = vld [vmem:[#allocation3 + $0x4d] sm:$0xff]
      %v8331 = vld [vmem:[#allocation3 + $0x55] sm:$0xff]
      %v8332 = vld [vmem:[#allocation3 + $0x5d] sm:$0xff]
      %v8333 = vld [vmem:[#allocation3 + $0x65] sm:$0xff]
      %v8334 = vld [vmem:[#allocation3 + $0x6d] sm:$0xff]
      %v8335 = vld [vmem:[#allocation3 + $0x75] sm:$0xff]
      %v8336 = vld [vmem:[#allocation3 + $0x7d] sm:$0xff]
      %v8337 = vld [vmem:[#allocation3 + $0x85] sm:$0xff]
      %v8338 = vld [vmem:[#allocation3 + $0x8d] sm:$0xff]
      %v8339 = vld [vmem:[#allocation3 + $0x95] sm:$0xff]
      %v8340 = vld [vmem:[#allocation3 + $0x9d] sm:$0xff]
      %v8341 = vld [vmem:[#allocation3 + $0xa5] sm:$0xff]
      %v8342 = vld [vmem:[#allocation3 + $0xad] sm:$0xff]
      %v8343 = vld [vmem:[#allocation3 + $0xb5] sm:$0xff]
      %v8344 = vld [vmem:[#allocation3 + $0xbd] sm:$0xff]
      %v8345 = vld [vmem:[#allocation3 + $0xc5] sm:$0xff]
      %v8346 = vld [vmem:[#allocation3 + $0xcd] sm:$0xff]
      %v8347 = vld [vmem:[#allocation3 + $0xd5] sm:$0xff]
      %v8348 = vld [vmem:[#allocation3 + $0xdd] sm:$0xff]
      %8375 = vrot.lane.b32.xlu0 %v8323, 64
      %v8376 = vpop.permute.xlu0 %8375
      %8377 = vrot.lane.b32.xlu0 %v8324, 64
      %v8378 = vpop.permute.xlu0 %8377
      %8379 = vrot.lane.b32.xlu0 %v8325, 64
      %v8380 = vpop.permute.xlu0 %8379
      %8381 = vrot.lane.b32.xlu0 %v8326, 64
      %v8382 = vpop.permute.xlu0 %8381
      %8383 = vrot.lane.b32.xlu0 %v8327, 64
      %v8384 = vpop.permute.xlu0 %8383
      %8385 = vrot.lane.b32.xlu0 %v8328, 64
      %v8386 = vpop.permute.xlu0 %8385
      %8387 = vrot.lane.b32.xlu0 %v8329, 64
      %v8388 = vpop.permute.xlu0 %8387
      %8389 = vrot.lane.b32.xlu0 %v8330, 64
      %v8390 = vpop.permute.xlu0 %8389
      %8391 = vrot.lane.b32.xlu0 %v8331, 64
      %v8392 = vpop.permute.xlu0 %8391
      %8393 = vrot.lane.b32.xlu0 %v8332, 64
      %v8394 = vpop.permute.xlu0 %8393
      %8395 = vrot.lane.b32.xlu0 %v8333, 64
      %v8396 = vpop.permute.xlu0 %8395
      %8397 = vrot.lane.b32.xlu0 %v8334, 64
      %v8398 = vpop.permute.xlu0 %8397
      %8399 = vrot.lane.b32.xlu0 %v8335, 64
      %v8400 = vpop.permute.xlu0 %8399
      %8401 = vrot.lane.b32.xlu0 %v8336, 64
      %v8402 = vpop.permute.xlu0 %8401
      %8403 = vrot.lane.b32.xlu0 %v8337, 64
      %v8404 = vpop.permute.xlu0 %8403
      %8405 = vrot.lane.b32.xlu0 %v8338, 64
      %v8406 = vpop.permute.xlu0 %8405
      %8407 = vrot.lane.b32.xlu0 %v8339, 64
      %v8408 = vpop.permute.xlu0 %8407
      %8409 = vrot.lane.b32.xlu0 %v8340, 64
      %v8410 = vpop.permute.xlu0 %8409
      %8411 = vrot.lane.b32.xlu0 %v8341, 64
      %v8412 = vpop.permute.xlu0 %8411
      %8413 = vrot.lane.b32.xlu0 %v8342, 64
      %v8414 = vpop.permute.xlu0 %8413
      %8415 = vrot.lane.b32.xlu0 %v8343, 64
      %v8416 = vpop.permute.xlu0 %8415
      %8417 = vrot.lane.b32.xlu0 %v8344, 64
      %v8418 = vpop.permute.xlu0 %8417
      %8419 = vrot.lane.b32.xlu0 %v8345, 64
      %v8420 = vpop.permute.xlu0 %8419
      %8421 = vrot.lane.b32.xlu0 %v8346, 64
      %v8422 = vpop.permute.xlu0 %8421
      %8423 = vrot.lane.b32.xlu0 %v8347, 64
      %v8424 = vpop.permute.xlu0 %8423
      %8425 = vrot.lane.b32.xlu0 %v8348, 64
      %v8426 = vpop.permute.xlu0 %8425
      %8453 = vst.msk [vmem:[#allocation4 + $0x8] sm:$0xff] %vm7305, %v8376
      %8454 = vst.msk [vmem:[#allocation4 + $0x18] sm:$0xff] %vm7305, %v8378
      %8455 = vst.msk [vmem:[#allocation4 + $0x28] sm:$0xff] %vm7305, %v8380
      %8456 = vst.msk [vmem:[#allocation4 + $0x38] sm:$0xff] %vm7305, %v8382
      %8457 = vst.msk [vmem:[#allocation4 + $0x48] sm:$0xff] %vm7305, %v8384
      %8458 = vst.msk [vmem:[#allocation4 + $0x58] sm:$0xff] %vm7305, %v8386
      %8459 = vst.msk [vmem:[#allocation4 + $0x68] sm:$0xff] %vm7305, %v8388
      %8460 = vst.msk [vmem:[#allocation4 + $0x78] sm:$0xff] %vm7305, %v8390
      %8461 = vst.msk [vmem:[#allocation4 + $0x88] sm:$0xff] %vm7305, %v8392
      %8462 = vst.msk [vmem:[#allocation4 + $0x98] sm:$0xff] %vm7305, %v8394
      %8463 = vst.msk [vmem:[#allocation4 + $0xa8] sm:$0xff] %vm7305, %v8396
      %8464 = vst.msk [vmem:[#allocation4 + $0xb8] sm:$0xff] %vm7305, %v8398
      %8465 = vst.msk [vmem:[#allocation4 + $0xc8] sm:$0xff] %vm7305, %v8400
      %8466 = vst.msk [vmem:[#allocation4 + $0xd8] sm:$0xff] %vm7305, %v8402
      %8467 = vst.msk [vmem:[#allocation4 + $0xe8] sm:$0xff] %vm7305, %v8404
      %8468 = vst.msk [vmem:[#allocation4 + $0xf8] sm:$0xff] %vm7305, %v8406
      %8469 = vst.msk [vmem:[#allocation4 + $0x108] sm:$0xff] %vm7305, %v8408
      %8470 = vst.msk [vmem:[#allocation4 + $0x118] sm:$0xff] %vm7305, %v8410
      %8471 = vst.msk [vmem:[#allocation4 + $0x128] sm:$0xff] %vm7305, %v8412
      %8472 = vst.msk [vmem:[#allocation4 + $0x138] sm:$0xff] %vm7305, %v8414
      %8473 = vst.msk [vmem:[#allocation4 + $0x148] sm:$0xff] %vm7305, %v8416
      %8474 = vst.msk [vmem:[#allocation4 + $0x158] sm:$0xff] %vm7305, %v8418
      %8475 = vst.msk [vmem:[#allocation4 + $0x168] sm:$0xff] %vm7305, %v8420
      %8476 = vst.msk [vmem:[#allocation4 + $0x178] sm:$0xff] %vm7305, %v8422
      %8477 = vst.msk [vmem:[#allocation4 + $0x188] sm:$0xff] %vm7305, %v8424
      %8478 = vst.msk [vmem:[#allocation4 + $0x198] sm:$0xff] %vm7305, %v8426
      %v8479 = vld [vmem:[%s293 + $0x15] sm:$0xff]
      %v8480 = vld [vmem:[%s293 + $0x1d] sm:$0xff]
      %v8481 = vld [vmem:[%s293 + $0x25] sm:$0xff]
      %v8482 = vld [vmem:[%s293 + $0x2d] sm:$0xff]
      %v8483 = vld [vmem:[%s293 + $0x35] sm:$0xff]
      %v8484 = vld [vmem:[%s293 + $0x3d] sm:$0xff]
      %v8485 = vld [vmem:[%s293 + $0x45] sm:$0xff]
      %v8486 = vld [vmem:[%s293 + $0x4d] sm:$0xff]
      %v8487 = vld [vmem:[%s293 + $0x55] sm:$0xff]
      %v8488 = vld [vmem:[%s293 + $0x5d] sm:$0xff]
      %v8489 = vld [vmem:[%s293 + $0x65] sm:$0xff]
      %v8490 = vld [vmem:[%s293 + $0x6d] sm:$0xff]
      %v8491 = vld [vmem:[%s293 + $0x75] sm:$0xff]
      %v8492 = vld [vmem:[%s293 + $0x7d] sm:$0xff]
      %v8493 = vld [vmem:[%s293 + $0x85] sm:$0xff]
      %v8494 = vld [vmem:[%s293 + $0x8d] sm:$0xff]
      %v8495 = vld [vmem:[%s293 + $0x95] sm:$0xff]
      %v8496 = vld [vmem:[%s293 + $0x9d] sm:$0xff]
      %v8497 = vld [vmem:[%s293 + $0xa5] sm:$0xff]
      %v8498 = vld [vmem:[%s293 + $0xad] sm:$0xff]
      %v8499 = vld [vmem:[%s293 + $0xb5] sm:$0xff]
      %v8500 = vld [vmem:[%s293 + $0xbd] sm:$0xff]
      %v8501 = vld [vmem:[%s293 + $0xc5] sm:$0xff]
      %v8502 = vld [vmem:[%s293 + $0xcd] sm:$0xff]
      %v8503 = vld [vmem:[%s293 + $0xd5] sm:$0xff]
      %v8504 = vld [vmem:[%s293 + $0xdd] sm:$0xff]
      %8531 = vrot.lane.b32.xlu0 %v8479, 80
      %v8532 = vpop.permute.xlu0 %8531
      %8533 = vrot.lane.b32.xlu0 %v8480, 80
      %v8534 = vpop.permute.xlu0 %8533
      %8535 = vrot.lane.b32.xlu0 %v8481, 80
      %v8536 = vpop.permute.xlu0 %8535
      %8537 = vrot.lane.b32.xlu0 %v8482, 80
      %v8538 = vpop.permute.xlu0 %8537
      %8539 = vrot.lane.b32.xlu0 %v8483, 80
      %v8540 = vpop.permute.xlu0 %8539
      %8541 = vrot.lane.b32.xlu0 %v8484, 80
      %v8542 = vpop.permute.xlu0 %8541
      %8543 = vrot.lane.b32.xlu0 %v8485, 80
      %v8544 = vpop.permute.xlu0 %8543
      %8545 = vrot.lane.b32.xlu0 %v8486, 80
      %v8546 = vpop.permute.xlu0 %8545
      %8547 = vrot.lane.b32.xlu0 %v8487, 80
      %v8548 = vpop.permute.xlu0 %8547
      %8549 = vrot.lane.b32.xlu0 %v8488, 80
      %v8550 = vpop.permute.xlu0 %8549
      %8551 = vrot.lane.b32.xlu0 %v8489, 80
      %v8552 = vpop.permute.xlu0 %8551
      %8553 = vrot.lane.b32.xlu0 %v8490, 80
      %v8554 = vpop.permute.xlu0 %8553
      %8555 = vrot.lane.b32.xlu0 %v8491, 80
      %v8556 = vpop.permute.xlu0 %8555
      %8557 = vrot.lane.b32.xlu0 %v8492, 80
      %v8558 = vpop.permute.xlu0 %8557
      %8559 = vrot.lane.b32.xlu0 %v8493, 80
      %v8560 = vpop.permute.xlu0 %8559
      %8561 = vrot.lane.b32.xlu0 %v8494, 80
      %v8562 = vpop.permute.xlu0 %8561
      %8563 = vrot.lane.b32.xlu0 %v8495, 80
      %v8564 = vpop.permute.xlu0 %8563
      %8565 = vrot.lane.b32.xlu0 %v8496, 80
      %v8566 = vpop.permute.xlu0 %8565
      %8567 = vrot.lane.b32.xlu0 %v8497, 80
      %v8568 = vpop.permute.xlu0 %8567
      %8569 = vrot.lane.b32.xlu0 %v8498, 80
      %v8570 = vpop.permute.xlu0 %8569
      %8571 = vrot.lane.b32.xlu0 %v8499, 80
      %v8572 = vpop.permute.xlu0 %8571
      %8573 = vrot.lane.b32.xlu0 %v8500, 80
      %v8574 = vpop.permute.xlu0 %8573
      %8575 = vrot.lane.b32.xlu0 %v8501, 80
      %v8576 = vpop.permute.xlu0 %8575
      %8577 = vrot.lane.b32.xlu0 %v8502, 80
      %v8578 = vpop.permute.xlu0 %8577
      %8579 = vrot.lane.b32.xlu0 %v8503, 80
      %v8580 = vpop.permute.xlu0 %8579
      %8581 = vrot.lane.b32.xlu0 %v8504, 80
      %v8582 = vpop.permute.xlu0 %8581
      %8609 = vst.msk [vmem:[#allocation4 + $0x8] sm:$0xff] %vm7462, %v8532
      %8610 = vst.msk [vmem:[#allocation4 + $0x18] sm:$0xff] %vm7462, %v8534
      %8611 = vst.msk [vmem:[#allocation4 + $0x28] sm:$0xff] %vm7462, %v8536
      %8612 = vst.msk [vmem:[#allocation4 + $0x38] sm:$0xff] %vm7462, %v8538
      %8613 = vst.msk [vmem:[#allocation4 + $0x48] sm:$0xff] %vm7462, %v8540
      %8614 = vst.msk [vmem:[#allocation4 + $0x58] sm:$0xff] %vm7462, %v8542
      %8615 = vst.msk [vmem:[#allocation4 + $0x68] sm:$0xff] %vm7462, %v8544
      %8616 = vst.msk [vmem:[#allocation4 + $0x78] sm:$0xff] %vm7462, %v8546
      %8617 = vst.msk [vmem:[#allocation4 + $0x88] sm:$0xff] %vm7462, %v8548
      %8618 = vst.msk [vmem:[#allocation4 + $0x98] sm:$0xff] %vm7462, %v8550
      %8619 = vst.msk [vmem:[#allocation4 + $0xa8] sm:$0xff] %vm7462, %v8552
      %8620 = vst.msk [vmem:[#allocation4 + $0xb8] sm:$0xff] %vm7462, %v8554
      %8621 = vst.msk [vmem:[#allocation4 + $0xc8] sm:$0xff] %vm7462, %v8556
      %8622 = vst.msk [vmem:[#allocation4 + $0xd8] sm:$0xff] %vm7462, %v8558
      %8623 = vst.msk [vmem:[#allocation4 + $0xe8] sm:$0xff] %vm7462, %v8560
      %8624 = vst.msk [vmem:[#allocation4 + $0xf8] sm:$0xff] %vm7462, %v8562
      %8625 = vst.msk [vmem:[#allocation4 + $0x108] sm:$0xff] %vm7462, %v8564
      %8626 = vst.msk [vmem:[#allocation4 + $0x118] sm:$0xff] %vm7462, %v8566
      %8627 = vst.msk [vmem:[#allocation4 + $0x128] sm:$0xff] %vm7462, %v8568
      %8628 = vst.msk [vmem:[#allocation4 + $0x138] sm:$0xff] %vm7462, %v8570
      %8629 = vst.msk [vmem:[#allocation4 + $0x148] sm:$0xff] %vm7462, %v8572
      %8630 = vst.msk [vmem:[#allocation4 + $0x158] sm:$0xff] %vm7462, %v8574
      %8631 = vst.msk [vmem:[#allocation4 + $0x168] sm:$0xff] %vm7462, %v8576
      %8632 = vst.msk [vmem:[#allocation4 + $0x178] sm:$0xff] %vm7462, %v8578
      %8633 = vst.msk [vmem:[#allocation4 + $0x188] sm:$0xff] %vm7462, %v8580
      %8634 = vst.msk [vmem:[#allocation4 + $0x198] sm:$0xff] %vm7462, %v8582
      %v8635 = vld [vmem:[%s293 + $0x14] sm:$0xff]
      %v8636 = vld [vmem:[%s293 + $0x1c] sm:$0xff]
      %v8637 = vld [vmem:[%s293 + $0x24] sm:$0xff]
      %v8638 = vld [vmem:[%s293 + $0x2c] sm:$0xff]
      %v8639 = vld [vmem:[%s293 + $0x34] sm:$0xff]
      %v8640 = vld [vmem:[%s293 + $0x3c] sm:$0xff]
      %v8641 = vld [vmem:[%s293 + $0x44] sm:$0xff]
      %v8642 = vld [vmem:[%s293 + $0x4c] sm:$0xff]
      %v8643 = vld [vmem:[%s293 + $0x54] sm:$0xff]
      %v8644 = vld [vmem:[%s293 + $0x5c] sm:$0xff]
      %v8645 = vld [vmem:[%s293 + $0x64] sm:$0xff]
      %v8646 = vld [vmem:[%s293 + $0x6c] sm:$0xff]
      %v8647 = vld [vmem:[%s293 + $0x74] sm:$0xff]
      %v8648 = vld [vmem:[%s293 + $0x7c] sm:$0xff]
      %v8649 = vld [vmem:[%s293 + $0x84] sm:$0xff]
      %v8650 = vld [vmem:[%s293 + $0x8c] sm:$0xff]
      %v8651 = vld [vmem:[%s293 + $0x94] sm:$0xff]
      %v8652 = vld [vmem:[%s293 + $0x9c] sm:$0xff]
      %v8653 = vld [vmem:[%s293 + $0xa4] sm:$0xff]
      %v8654 = vld [vmem:[%s293 + $0xac] sm:$0xff]
      %v8655 = vld [vmem:[%s293 + $0xb4] sm:$0xff]
      %v8656 = vld [vmem:[%s293 + $0xbc] sm:$0xff]
      %v8657 = vld [vmem:[%s293 + $0xc4] sm:$0xff]
      %v8658 = vld [vmem:[%s293 + $0xcc] sm:$0xff]
      %v8659 = vld [vmem:[%s293 + $0xd4] sm:$0xff]
      %v8660 = vld [vmem:[%s293 + $0xdc] sm:$0xff]
      %8687 = vrot.lane.b32.xlu0 %v8635, 96
      %v8688 = vpop.permute.xlu0 %8687
      %8689 = vrot.lane.b32.xlu0 %v8636, 96
      %v8690 = vpop.permute.xlu0 %8689
      %8691 = vrot.lane.b32.xlu0 %v8637, 96
      %v8692 = vpop.permute.xlu0 %8691
      %8693 = vrot.lane.b32.xlu0 %v8638, 96
      %v8694 = vpop.permute.xlu0 %8693
      %8695 = vrot.lane.b32.xlu0 %v8639, 96
      %v8696 = vpop.permute.xlu0 %8695
      %8697 = vrot.lane.b32.xlu0 %v8640, 96
      %v8698 = vpop.permute.xlu0 %8697
      %8699 = vrot.lane.b32.xlu0 %v8641, 96
      %v8700 = vpop.permute.xlu0 %8699
      %8701 = vrot.lane.b32.xlu0 %v8642, 96
      %v8702 = vpop.permute.xlu0 %8701
      %8703 = vrot.lane.b32.xlu0 %v8643, 96
      %v8704 = vpop.permute.xlu0 %8703
      %8705 = vrot.lane.b32.xlu0 %v8644, 96
      %v8706 = vpop.permute.xlu0 %8705
      %8707 = vrot.lane.b32.xlu0 %v8645, 96
      %v8708 = vpop.permute.xlu0 %8707
      %8709 = vrot.lane.b32.xlu0 %v8646, 96
      %v8710 = vpop.permute.xlu0 %8709
      %8711 = vrot.lane.b32.xlu0 %v8647, 96
      %v8712 = vpop.permute.xlu0 %8711
      %8713 = vrot.lane.b32.xlu0 %v8648, 96
      %v8714 = vpop.permute.xlu0 %8713
      %8715 = vrot.lane.b32.xlu0 %v8649, 96
      %v8716 = vpop.permute.xlu0 %8715
      %8717 = vrot.lane.b32.xlu0 %v8650, 96
      %v8718 = vpop.permute.xlu0 %8717
      %8719 = vrot.lane.b32.xlu0 %v8651, 96
      %v8720 = vpop.permute.xlu0 %8719
      %8721 = vrot.lane.b32.xlu0 %v8652, 96
      %v8722 = vpop.permute.xlu0 %8721
      %8723 = vrot.lane.b32.xlu0 %v8653, 96
      %v8724 = vpop.permute.xlu0 %8723
      %8725 = vrot.lane.b32.xlu0 %v8654, 96
      %v8726 = vpop.permute.xlu0 %8725
      %8727 = vrot.lane.b32.xlu0 %v8655, 96
      %v8728 = vpop.permute.xlu0 %8727
      %8729 = vrot.lane.b32.xlu0 %v8656, 96
      %v8730 = vpop.permute.xlu0 %8729
      %8731 = vrot.lane.b32.xlu0 %v8657, 96
      %v8732 = vpop.permute.xlu0 %8731
      %8733 = vrot.lane.b32.xlu0 %v8658, 96
      %v8734 = vpop.permute.xlu0 %8733
      %8735 = vrot.lane.b32.xlu0 %v8659, 96
      %v8736 = vpop.permute.xlu0 %8735
      %8737 = vrot.lane.b32.xlu0 %v8660, 96
      %v8738 = vpop.permute.xlu0 %8737
      %8765 = vst.msk [vmem:[#allocation4 + $0x8] sm:$0xff] %vm7619, %v8688
      %8766 = vst.msk [vmem:[#allocation4 + $0x18] sm:$0xff] %vm7619, %v8690
      %8767 = vst.msk [vmem:[#allocation4 + $0x28] sm:$0xff] %vm7619, %v8692
      %8768 = vst.msk [vmem:[#allocation4 + $0x38] sm:$0xff] %vm7619, %v8694
      %8769 = vst.msk [vmem:[#allocation4 + $0x48] sm:$0xff] %vm7619, %v8696
      %8770 = vst.msk [vmem:[#allocation4 + $0x58] sm:$0xff] %vm7619, %v8698
      %8771 = vst.msk [vmem:[#allocation4 + $0x68] sm:$0xff] %vm7619, %v8700
      %8772 = vst.msk [vmem:[#allocation4 + $0x78] sm:$0xff] %vm7619, %v8702
      %8773 = vst.msk [vmem:[#allocation4 + $0x88] sm:$0xff] %vm7619, %v8704
      %8774 = vst.msk [vmem:[#allocation4 + $0x98] sm:$0xff] %vm7619, %v8706
      %8775 = vst.msk [vmem:[#allocation4 + $0xa8] sm:$0xff] %vm7619, %v8708
      %8776 = vst.msk [vmem:[#allocation4 + $0xb8] sm:$0xff] %vm7619, %v8710
      %8777 = vst.msk [vmem:[#allocation4 + $0xc8] sm:$0xff] %vm7619, %v8712
      %8778 = vst.msk [vmem:[#allocation4 + $0xd8] sm:$0xff] %vm7619, %v8714
      %8779 = vst.msk [vmem:[#allocation4 + $0xe8] sm:$0xff] %vm7619, %v8716
      %8780 = vst.msk [vmem:[#allocation4 + $0xf8] sm:$0xff] %vm7619, %v8718
      %8781 = vst.msk [vmem:[#allocation4 + $0x108] sm:$0xff] %vm7619, %v8720
      %8782 = vst.msk [vmem:[#allocation4 + $0x118] sm:$0xff] %vm7619, %v8722
      %8783 = vst.msk [vmem:[#allocation4 + $0x128] sm:$0xff] %vm7619, %v8724
      %8784 = vst.msk [vmem:[#allocation4 + $0x138] sm:$0xff] %vm7619, %v8726
      %8785 = vst.msk [vmem:[#allocation4 + $0x148] sm:$0xff] %vm7619, %v8728
      %8786 = vst.msk [vmem:[#allocation4 + $0x158] sm:$0xff] %vm7619, %v8730
      %8787 = vst.msk [vmem:[#allocation4 + $0x168] sm:$0xff] %vm7619, %v8732
      %8788 = vst.msk [vmem:[#allocation4 + $0x178] sm:$0xff] %vm7619, %v8734
      %8789 = vst.msk [vmem:[#allocation4 + $0x188] sm:$0xff] %vm7619, %v8736
      %8790 = vst.msk [vmem:[#allocation4 + $0x198] sm:$0xff] %vm7619, %v8738
      %v8791 = vld [vmem:[#allocation3 + $0x16] sm:$0xff]
      %v8792 = vld [vmem:[#allocation3 + $0x1e] sm:$0xff]
      %v8793 = vld [vmem:[#allocation3 + $0x26] sm:$0xff]
      %v8794 = vld [vmem:[#allocation3 + $0x2e] sm:$0xff]
      %v8795 = vld [vmem:[#allocation3 + $0x36] sm:$0xff]
      %v8796 = vld [vmem:[#allocation3 + $0x3e] sm:$0xff]
      %v8797 = vld [vmem:[#allocation3 + $0x46] sm:$0xff]
      %v8798 = vld [vmem:[#allocation3 + $0x4e] sm:$0xff]
      %v8799 = vld [vmem:[#allocation3 + $0x56] sm:$0xff]
      %v8800 = vld [vmem:[#allocation3 + $0x5e] sm:$0xff]
      %v8801 = vld [vmem:[#allocation3 + $0x66] sm:$0xff]
      %v8802 = vld [vmem:[#allocation3 + $0x6e] sm:$0xff]
      %v8803 = vld [vmem:[#allocation3 + $0x76] sm:$0xff]
      %v8804 = vld [vmem:[#allocation3 + $0x7e] sm:$0xff]
      %v8805 = vld [vmem:[#allocation3 + $0x86] sm:$0xff]
      %v8806 = vld [vmem:[#allocation3 + $0x8e] sm:$0xff]
      %v8807 = vld [vmem:[#allocation3 + $0x96] sm:$0xff]
      %v8808 = vld [vmem:[#allocation3 + $0x9e] sm:$0xff]
      %v8809 = vld [vmem:[#allocation3 + $0xa6] sm:$0xff]
      %v8810 = vld [vmem:[#allocation3 + $0xae] sm:$0xff]
      %v8811 = vld [vmem:[#allocation3 + $0xb6] sm:$0xff]
      %v8812 = vld [vmem:[#allocation3 + $0xbe] sm:$0xff]
      %v8813 = vld [vmem:[#allocation3 + $0xc6] sm:$0xff]
      %v8814 = vld [vmem:[#allocation3 + $0xce] sm:$0xff]
      %v8815 = vld [vmem:[#allocation3 + $0xd6] sm:$0xff]
      %v8816 = vld [vmem:[#allocation3 + $0xde] sm:$0xff]
      %8843 = vrot.lane.b32.xlu0 %v8791, 112
      %v8844 = vpop.permute.xlu0 %8843
      %8845 = vrot.lane.b32.xlu0 %v8792, 112
      %v8846 = vpop.permute.xlu0 %8845
      %8847 = vrot.lane.b32.xlu0 %v8793, 112
      %v8848 = vpop.permute.xlu0 %8847
      %8849 = vrot.lane.b32.xlu0 %v8794, 112
      %v8850 = vpop.permute.xlu0 %8849
      %8851 = vrot.lane.b32.xlu0 %v8795, 112
      %v8852 = vpop.permute.xlu0 %8851
      %8853 = vrot.lane.b32.xlu0 %v8796, 112
      %v8854 = vpop.permute.xlu0 %8853
      %8855 = vrot.lane.b32.xlu0 %v8797, 112
      %v8856 = vpop.permute.xlu0 %8855
      %8857 = vrot.lane.b32.xlu0 %v8798, 112
      %v8858 = vpop.permute.xlu0 %8857
      %8859 = vrot.lane.b32.xlu0 %v8799, 112
      %v8860 = vpop.permute.xlu0 %8859
      %8861 = vrot.lane.b32.xlu0 %v8800, 112
      %v8862 = vpop.permute.xlu0 %8861
      %8863 = vrot.lane.b32.xlu0 %v8801, 112
      %v8864 = vpop.permute.xlu0 %8863
      %8865 = vrot.lane.b32.xlu0 %v8802, 112
      %v8866 = vpop.permute.xlu0 %8865
      %8867 = vrot.lane.b32.xlu0 %v8803, 112
      %v8868 = vpop.permute.xlu0 %8867
      %8869 = vrot.lane.b32.xlu0 %v8804, 112
      %v8870 = vpop.permute.xlu0 %8869
      %8871 = vrot.lane.b32.xlu0 %v8805, 112
      %v8872 = vpop.permute.xlu0 %8871
      %8873 = vrot.lane.b32.xlu0 %v8806, 112
      %v8874 = vpop.permute.xlu0 %8873
      %8875 = vrot.lane.b32.xlu0 %v8807, 112
      %v8876 = vpop.permute.xlu0 %8875
      %8877 = vrot.lane.b32.xlu0 %v8808, 112
      %v8878 = vpop.permute.xlu0 %8877
      %8879 = vrot.lane.b32.xlu0 %v8809, 112
      %v8880 = vpop.permute.xlu0 %8879
      %8881 = vrot.lane.b32.xlu0 %v8810, 112
      %v8882 = vpop.permute.xlu0 %8881
      %8883 = vrot.lane.b32.xlu0 %v8811, 112
      %v8884 = vpop.permute.xlu0 %8883
      %8885 = vrot.lane.b32.xlu0 %v8812, 112
      %v8886 = vpop.permute.xlu0 %8885
      %8887 = vrot.lane.b32.xlu0 %v8813, 112
      %v8888 = vpop.permute.xlu0 %8887
      %8889 = vrot.lane.b32.xlu0 %v8814, 112
      %v8890 = vpop.permute.xlu0 %8889
      %8891 = vrot.lane.b32.xlu0 %v8815, 112
      %v8892 = vpop.permute.xlu0 %8891
      %8893 = vrot.lane.b32.xlu0 %v8816, 112
      %v8894 = vpop.permute.xlu0 %8893
      %8921 = vst.msk [vmem:[#allocation4 + $0x8] sm:$0xff] %vm7776, %v8844
      %8922 = vst.msk [vmem:[#allocation4 + $0x18] sm:$0xff] %vm7776, %v8846
      %8923 = vst.msk [vmem:[#allocation4 + $0x28] sm:$0xff] %vm7776, %v8848
      %8924 = vst.msk [vmem:[#allocation4 + $0x38] sm:$0xff] %vm7776, %v8850
      %8925 = vst.msk [vmem:[#allocation4 + $0x48] sm:$0xff] %vm7776, %v8852
      %8926 = vst.msk [vmem:[#allocation4 + $0x58] sm:$0xff] %vm7776, %v8854
      %8927 = vst.msk [vmem:[#allocation4 + $0x68] sm:$0xff] %vm7776, %v8856
      %8928 = vst.msk [vmem:[#allocation4 + $0x78] sm:$0xff] %vm7776, %v8858
      %8929 = vst.msk [vmem:[#allocation4 + $0x88] sm:$0xff] %vm7776, %v8860
      %8930 = vst.msk [vmem:[#allocation4 + $0x98] sm:$0xff] %vm7776, %v8862
      %8931 = vst.msk [vmem:[#allocation4 + $0xa8] sm:$0xff] %vm7776, %v8864
      %8932 = vst.msk [vmem:[#allocation4 + $0xb8] sm:$0xff] %vm7776, %v8866
      %8933 = vst.msk [vmem:[#allocation4 + $0xc8] sm:$0xff] %vm7776, %v8868
      %8934 = vst.msk [vmem:[#allocation4 + $0xd8] sm:$0xff] %vm7776, %v8870
      %8935 = vst.msk [vmem:[#allocation4 + $0xe8] sm:$0xff] %vm7776, %v8872
      %8936 = vst.msk [vmem:[#allocation4 + $0xf8] sm:$0xff] %vm7776, %v8874
      %8937 = vst.msk [vmem:[#allocation4 + $0x108] sm:$0xff] %vm7776, %v8876
      %8938 = vst.msk [vmem:[#allocation4 + $0x118] sm:$0xff] %vm7776, %v8878
      %8939 = vst.msk [vmem:[#allocation4 + $0x128] sm:$0xff] %vm7776, %v8880
      %8940 = vst.msk [vmem:[#allocation4 + $0x138] sm:$0xff] %vm7776, %v8882
      %8941 = vst.msk [vmem:[#allocation4 + $0x148] sm:$0xff] %vm7776, %v8884
      %8942 = vst.msk [vmem:[#allocation4 + $0x158] sm:$0xff] %vm7776, %v8886
      %8943 = vst.msk [vmem:[#allocation4 + $0x168] sm:$0xff] %vm7776, %v8888
      %8944 = vst.msk [vmem:[#allocation4 + $0x178] sm:$0xff] %vm7776, %v8890
      %8945 = vst.msk [vmem:[#allocation4 + $0x188] sm:$0xff] %vm7776, %v8892
      %8946 = vst.msk [vmem:[#allocation4 + $0x198] sm:$0xff] %vm7776, %v8894
      %v8947 = vld [vmem:[#allocation4] sm:$0xff]
      %v8948 = vld [vmem:[#allocation4 + $0x8] sm:$0xff]
      %v8949 = vld [vmem:[#allocation4 + $0x10] sm:$0xff]
      %v8950 = vld [vmem:[#allocation4 + $0x18] sm:$0xff]
      %v8951 = vld [vmem:[#allocation4 + $0x20] sm:$0xff]
      %v8952 = vld [vmem:[#allocation4 + $0x28] sm:$0xff]
      %v8953 = vld [vmem:[#allocation4 + $0x30] sm:$0xff]
      %v8954 = vld [vmem:[#allocation4 + $0x38] sm:$0xff]
      %v8955 = vld [vmem:[#allocation4 + $0x40] sm:$0xff]
      %v8956 = vld [vmem:[#allocation4 + $0x48] sm:$0xff]
      %v8957 = vld [vmem:[#allocation4 + $0x50] sm:$0xff]
      %v8958 = vld [vmem:[#allocation4 + $0x58] sm:$0xff]
      %v8959 = vld [vmem:[#allocation4 + $0x60] sm:$0xff]
      %v8960 = vld [vmem:[#allocation4 + $0x68] sm:$0xff]
      %v8961 = vld [vmem:[#allocation4 + $0x70] sm:$0xff]
      %v8962 = vld [vmem:[#allocation4 + $0x78] sm:$0xff]
      %v8963 = vld [vmem:[#allocation4 + $0x80] sm:$0xff]
      %v8964 = vld [vmem:[#allocation4 + $0x88] sm:$0xff]
      %v8965 = vld [vmem:[#allocation4 + $0x90] sm:$0xff]
      %v8966 = vld [vmem:[#allocation4 + $0x98] sm:$0xff]
      %v8967 = vld [vmem:[#allocation4 + $0xa0] sm:$0xff]
      %v8968 = vld [vmem:[#allocation4 + $0xa8] sm:$0xff]
      %v8969 = vld [vmem:[#allocation4 + $0xb0] sm:$0xff]
      %v8970 = vld [vmem:[#allocation4 + $0xb8] sm:$0xff]
      %v8971 = vld [vmem:[#allocation4 + $0xc0] sm:$0xff]
      %v8972 = vld [vmem:[#allocation4 + $0xc8] sm:$0xff]
      %v8973 = vld [vmem:[#allocation4 + $0xd0] sm:$0xff]
      %v8974 = vld [vmem:[#allocation4 + $0xd8] sm:$0xff]
      %v8975 = vld [vmem:[#allocation4 + $0xe0] sm:$0xff]
      %v8976 = vld [vmem:[#allocation4 + $0xe8] sm:$0xff]
      %v8977 = vld [vmem:[#allocation4 + $0xf0] sm:$0xff]
      %v8978 = vld [vmem:[#allocation4 + $0xf8] sm:$0xff]
      %v8979 = vld [vmem:[#allocation4 + $0x100] sm:$0xff]
      %v8980 = vld [vmem:[#allocation4 + $0x108] sm:$0xff]
      %v8981 = vld [vmem:[#allocation4 + $0x110] sm:$0xff]
      %v8982 = vld [vmem:[#allocation4 + $0x118] sm:$0xff]
      %v8983 = vld [vmem:[#allocation4 + $0x120] sm:$0xff]
      %v8984 = vld [vmem:[#allocation4 + $0x128] sm:$0xff]
      %v8985 = vld [vmem:[#allocation4 + $0x130] sm:$0xff]
      %v8986 = vld [vmem:[#allocation4 + $0x138] sm:$0xff]
      %v8987 = vld [vmem:[#allocation4 + $0x140] sm:$0xff]
      %v8988 = vld [vmem:[#allocation4 + $0x148] sm:$0xff]
      %v8989 = vld [vmem:[#allocation4 + $0x150] sm:$0xff]
      %v8990 = vld [vmem:[#allocation4 + $0x158] sm:$0xff]
      %v8991 = vld [vmem:[#allocation4 + $0x160] sm:$0xff]
      %v8992 = vld [vmem:[#allocation4 + $0x168] sm:$0xff]
      %v8993 = vld [vmem:[#allocation4 + $0x170] sm:$0xff]
      %v8994 = vld [vmem:[#allocation4 + $0x178] sm:$0xff]
      %v8995 = vld [vmem:[#allocation4 + $0x180] sm:$0xff]
      %v8996 = vld [vmem:[#allocation4 + $0x188] sm:$0xff]
      %v8997 = vld [vmem:[#allocation4 + $0x190] sm:$0xff]
      %v8998 = vld [vmem:[#allocation4 + $0x198] sm:$0xff]
      %v8999 = vld [vmem:[%s5] sm:$0xff]
      %v9000 = vld [vmem:[%s5 + $0x8] sm:$0xff]
      %v9001 = vld [vmem:[%s5 + $0x10] sm:$0xff]
      %v9002 = vld [vmem:[%s5 + $0x18] sm:$0xff]
      %v9003 = vld [vmem:[%s5 + $0x20] sm:$0xff]
      %v9004 = vld [vmem:[%s5 + $0x28] sm:$0xff]
      %v9005 = vld [vmem:[%s5 + $0x30] sm:$0xff]
      %v9006 = vld [vmem:[%s5 + $0x38] sm:$0xff]
      %v9007 = vld [vmem:[%s5 + $0x40] sm:$0xff]
      %v9008 = vld [vmem:[%s5 + $0x48] sm:$0xff]
      %v9009 = vld [vmem:[%s5 + $0x50] sm:$0xff]
      %v9010 = vld [vmem:[%s5 + $0x58] sm:$0xff]
      %v9011 = vld [vmem:[%s5 + $0x60] sm:$0xff]
      %v9012 = vld [vmem:[%s5 + $0x68] sm:$0xff]
      %v9013 = vld [vmem:[%s5 + $0x70] sm:$0xff]
      %v9014 = vld [vmem:[%s5 + $0x78] sm:$0xff]
      %v9015 = vld [vmem:[%s5 + $0x80] sm:$0xff]
      %v9016 = vld [vmem:[%s5 + $0x88] sm:$0xff]
      %v9017 = vld [vmem:[%s5 + $0x90] sm:$0xff]
      %v9018 = vld [vmem:[%s5 + $0x98] sm:$0xff]
      %v9019 = vld [vmem:[%s5 + $0xa0] sm:$0xff]
      %v9020 = vld [vmem:[%s5 + $0xa8] sm:$0xff]
      %v9021 = vld [vmem:[%s5 + $0xb0] sm:$0xff]
      %v9022 = vld [vmem:[%s5 + $0xb8] sm:$0xff]
      %v9023 = vld [vmem:[%s5 + $0xc0] sm:$0xff]
      %v9024 = vld [vmem:[%s5 + $0xc8] sm:$0xff]
      %v9025 = vld [vmem:[%s5 + $0xd0] sm:$0xff]
      %v9026 = vld [vmem:[%s5 + $0xd8] sm:$0xff]
      %v9027 = vld [vmem:[%s5 + $0xe0] sm:$0xff]
      %v9028 = vld [vmem:[%s5 + $0xe8] sm:$0xff]
      %v9029 = vld [vmem:[%s5 + $0xf0] sm:$0xff]
      %v9030 = vld [vmem:[%s5 + $0xf8] sm:$0xff]
      %v9031 = vld [vmem:[%s6] sm:$0x1]
      %v9033 = vlaneseq
      %v9034 = vshrl.u32 %v9033, 7
      %v9035 = vsub.s32 0, %v9034
      %v9036 = vrot.slane %v9031, %v9035
      %9038 = vmatprep.subr.mxu0 0.0
      %9039 = vmatpush1.msra.mxu0 %v8999
      %9040 = vmatprep.subr.mxu0 0.0
      %9041 = vmatpush1.msra.mxu0 %v9000
      %9042 = vmatprep.subr.mxu0 0.0
      %9043 = vmatpush1.msra.mxu0 %v9001
      %9044 = vmatprep.subr.mxu0 0.0
      %9045 = vmatpush1.msra.mxu0 %v9002
      %9046 = vmatprep.subr.mxu0 0.0
      %9047 = vmatpush1.msra.mxu0 %v9003
      %9048 = vmatprep.subr.mxu0 0.0
      %9049 = vmatpush1.msra.mxu0 %v9004
      %9050 = vmatprep.subr.mxu0 0.0
      %9051 = vmatpush1.msra.mxu0 %v9005
      %9052 = vmatprep.subr.mxu0 0.0
      %9053 = vmatpush1.msra.mxu0 %v9006
      %9054 = vmatprep.subr.mxu0 0.0
      %9055 = vmatpush1.msra.mxu0 %v9007
      %9056 = vmatprep.subr.mxu0 0.0
      %9057 = vmatpush1.msra.mxu0 %v9008
      %9058 = vmatprep.subr.mxu0 0.0
      %9059 = vmatpush1.msra.mxu0 %v9009
      %9060 = vmatprep.subr.mxu0 0.0
      %9061 = vmatpush1.msra.mxu0 %v9010
      %9062 = vmatprep.subr.mxu0 0.0
      %9063 = vmatpush1.msra.mxu0 %v9011
      %9064 = vmatprep.subr.mxu0 0.0
      %9065 = vmatpush1.msra.mxu0 %v9012
      %9066 = vmatprep.subr.mxu0 0.0
      %9067 = vmatpush1.msra.mxu0 %v9013
      %9068 = vmatprep.subr.mxu0 0.0
      %9069 = vmatpush1.msra.mxu0 %v9014
      %9070 = vmatprep.subr.mxu0 0.0
      %9071 = vmatpush1.msra.mxu0 %v9015
      %9072 = vmatprep.subr.mxu0 0.0
      %9073 = vmatpush1.msra.mxu0 %v9016
      %9074 = vmatprep.subr.mxu0 0.0
      %9075 = vmatpush1.msra.mxu0 %v9017
      %9076 = vmatprep.subr.mxu0 0.0
      %9077 = vmatpush1.msra.mxu0 %v9018
      %9078 = vmatprep.subr.mxu0 0.0
      %9079 = vmatpush1.msra.mxu0 %v9019
      %9080 = vmatprep.subr.mxu0 0.0
      %9081 = vmatpush1.msra.mxu0 %v9020
      %9082 = vmatprep.subr.mxu0 0.0
      %9083 = vmatpush1.msra.mxu0 %v9021
      %9084 = vmatprep.subr.mxu0 0.0
      %9085 = vmatpush1.msra.mxu0 %v9022
      %9086 = vmatprep.subr.mxu0 0.0
      %9087 = vmatpush1.msra.mxu0 %v9023
      %9088 = vmatprep.subr.mxu0 0.0
      %9089 = vmatpush1.msra.mxu0 %v9024
      %9090 = vmatprep.subr.mxu0 0.0
      %9091 = vmatpush1.msra.mxu0 %v9025
      %9092 = vmatprep.subr.mxu0 0.0
      %9093 = vmatpush1.msra.mxu0 %v9026
      %9094 = vmatprep.subr.mxu0 0.0
      %9095 = vmatpush1.msra.mxu0 %v9027
      %9096 = vmatprep.subr.mxu0 0.0
      %9097 = vmatpush1.msra.mxu0 %v9028
      %9098 = vmatprep.subr.mxu0 0.0
      %9099 = vmatpush1.msra.mxu0 %v9029
      %9100 = vmatprep.subr.mxu0 0.0
      %9101 = vmatpush1.msra.mxu0 %v9030
      %9102 = vmatprep.mubr.f32.mxu0 %v8948
      %9103 = vmatmul.mubr.f32.gmra.mrb[0].mxu0 %v8947
      %v9104 = vpop.f32.mrb[0].mxu0
      %v9105 = vadd.f32 %v9036, %v9104
      %v9106 = vpop.f32.mrb[0].mxu0
      %9107 = vmatprep.mubr.f32.mxu0 %v8950
      %9108 = vmatmul.mubr.f32.gmra.mrb[0].mxu0 %v8949
      %v9109 = vpop.f32.mrb[0].mxu0
      %v9110 = vadd.f32 %v9036, %v9109
      %v9111 = vpop.f32.mrb[0].mxu0
      %9112 = vmatprep.mubr.f32.mxu0 %v8952
      %9113 = vmatmul.mubr.f32.gmra.mrb[0].mxu0 %v8951
      %v9114 = vpop.f32.mrb[0].mxu0
      %v9115 = vadd.f32 %v9036, %v9114
      %v9116 = vpop.f32.mrb[0].mxu0
      %9117 = vmatprep.mubr.f32.mxu0 %v8954
      %9118 = vmatmul.mubr.f32.gmra.mrb[0].mxu0 %v8953
      %v9119 = vpop.f32.mrb[0].mxu0
      %v9120 = vadd.f32 %v9036, %v9119
      %v9121 = vpop.f32.mrb[0].mxu0
      %9122 = vmatprep.mubr.f32.mxu0 %v8956
      %9123 = vmatmul.mubr.f32.gmra.mrb[0].mxu0 %v8955
      %v9124 = vpop.f32.mrb[0].mxu0
      %v9125 = vadd.f32 %v9036, %v9124
      %v9126 = vpop.f32.mrb[0].mxu0
      %9127 = vmatprep.mubr.f32.mxu0 %v8958
      %9128 = vmatmul.mubr.f32.gmra.mrb[0].mxu0 %v8957
      %v9129 = vpop.f32.mrb[0].mxu0
      %v9130 = vadd.f32 %v9036, %v9129
      %v9131 = vpop.f32.mrb[0].mxu0
      %9132 = vmatprep.mubr.f32.mxu0 %v8960
      %9133 = vmatmul.mubr.f32.gmra.mrb[0].mxu0 %v8959
      %v9134 = vpop.f32.mrb[0].mxu0
      %v9135 = vadd.f32 %v9036, %v9134
      %v9136 = vpop.f32.mrb[0].mxu0
      %9137 = vmatprep.mubr.f32.mxu0 %v8962
      %9138 = vmatmul.mubr.f32.gmra.mrb[0].mxu0 %v8961
      %v9139 = vpop.f32.mrb[0].mxu0
      %v9140 = vadd.f32 %v9036, %v9139
      %v9141 = vpop.f32.mrb[0].mxu0
      %9142 = vmatprep.mubr.f32.mxu0 %v8964
      %9143 = vmatmul.mubr.f32.gmra.mrb[0].mxu0 %v8963
      %v9144 = vpop.f32.mrb[0].mxu0
      %v9145 = vadd.f32 %v9036, %v9144
      %v9146 = vpop.f32.mrb[0].mxu0
      %9147 = vmatprep.mubr.f32.mxu0 %v8966
      %9148 = vmatmul.mubr.f32.gmra.mrb[0].mxu0 %v8965
      %v9149 = vpop.f32.mrb[0].mxu0
      %v9150 = vadd.f32 %v9036, %v9149
      %v9151 = vpop.f32.mrb[0].mxu0
      %9152 = vmatprep.mubr.f32.mxu0 %v8968
      %9153 = vmatmul.mubr.f32.gmra.mrb[0].mxu0 %v8967
      %v9154 = vpop.f32.mrb[0].mxu0
      %v9155 = vpop.f32.mrb[0].mxu0
      %9156 = vmatprep.mubr.f32.mxu0 %v8970
      %9157 = vmatmul.mubr.f32.gmra.mrb[0].mxu0 %v8969
      %v9158 = vpop.f32.mrb[0].mxu0
      %v9159 = vpop.f32.mrb[0].mxu0
      %9160 = vmatprep.mubr.f32.mxu0 %v8972
      %9161 = vmatmul.mubr.f32.gmra.mrb[0].mxu0 %v8971
      %v9162 = vpop.f32.mrb[0].mxu0
      %v9163 = vpop.f32.mrb[0].mxu0
      %9164 = vmatprep.mubr.f32.mxu0 %v8974
      %9165 = vmatmul.mubr.f32.gmra.mrb[0].mxu0 %v8973
      %v9166 = vpop.f32.mrb[0].mxu0
      %v9167 = vadd.f32 %v9036, %v9166
      %v9168 = vpop.f32.mrb[0].mxu0
      %9169 = vmatprep.mubr.f32.mxu0 %v8976
      %9170 = vmatmul.mubr.f32.gmra.mrb[0].mxu0 %v8975
      %v9171 = vpop.f32.mrb[0].mxu0
      %v9172 = vadd.f32 %v9036, %v9171
      %v9173 = vpop.f32.mrb[0].mxu0
      %9174 = vmatprep.mubr.f32.mxu0 %v8978
      %9175 = vmatmul.mubr.f32.gmra.mrb[0].mxu0 %v8977
      %v9176 = vpop.f32.mrb[0].mxu0
      %v9177 = vadd.f32 %v9036, %v9176
      %v9178 = vpop.f32.mrb[0].mxu0
      %9179 = vmatprep.mubr.f32.mxu0 %v8980
      %9180 = vmatmul.mubr.f32.gmra.mrb[0].mxu0 %v8979
      %v9181 = vpop.f32.mrb[0].mxu0
      %v9182 = vadd.f32 %v9036, %v9181
      %v9183 = vpop.f32.mrb[0].mxu0
      %9184 = vmatprep.mubr.f32.mxu0 %v8982
      %9185 = vmatmul.mubr.f32.gmra.mrb[0].mxu0 %v8981
      %v9186 = vpop.f32.mrb[0].mxu0
      %v9187 = vadd.f32 %v9036, %v9186
      %v9188 = vpop.f32.mrb[0].mxu0
      %9189 = vmatprep.mubr.f32.mxu0 %v8984
      %9190 = vmatmul.mubr.f32.gmra.mrb[0].mxu0 %v8983
      %v9191 = vpop.f32.mrb[0].mxu0
      %v9192 = vadd.f32 %v9036, %v9191
      %v9193 = vpop.f32.mrb[0].mxu0
      %9194 = vmatprep.mubr.f32.mxu0 %v8986
      %9195 = vmatmul.mubr.f32.gmra.mrb[0].mxu0 %v8985
      %v9196 = vpop.f32.mrb[0].mxu0
      %v9197 = vadd.f32 %v9036, %v9196
      %v9198 = vpop.f32.mrb[0].mxu0
      %9199 = vmatprep.mubr.f32.mxu0 %v8988
      %9200 = vmatmul.mubr.f32.gmra.mrb[0].mxu0 %v8987
      %v9201 = vpop.f32.mrb[0].mxu0
      %v9202 = vadd.f32 %v9036, %v9201
      %v9203 = vpop.f32.mrb[0].mxu0
      %9204 = vmatprep.mubr.f32.mxu0 %v8990
      %9205 = vmatmul.mubr.f32.gmra.mrb[0].mxu0 %v8989
      %v9206 = vpop.f32.mrb[0].mxu0
      %v9207 = vadd.f32 %v9036, %v9206
      %v9208 = vpop.f32.mrb[0].mxu0
      %9209 = vmatprep.mubr.f32.mxu0 %v8992
      %9210 = vmatmul.mubr.f32.gmra.mrb[0].mxu0 %v8991
      %v9211 = vpop.f32.mrb[0].mxu0
      %v9212 = vadd.f32 %v9036, %v9211
      %v9213 = vpop.f32.mrb[0].mxu0
      %9214 = vmatprep.mubr.f32.mxu0 %v8994
      %9215 = vmatmul.mubr.f32.gmra.mrb[0].mxu0 %v8993
      %v9216 = vpop.f32.mrb[0].mxu0
      %v9217 = vpop.f32.mrb[0].mxu0
      %9218 = vmatprep.mubr.f32.mxu0 %v8996
      %9219 = vmatmul.mubr.f32.gmra.mrb[0].mxu0 %v8995
      %v9220 = vpop.f32.mrb[0].mxu0
      %v9221 = vpop.f32.mrb[0].mxu0
      %9222 = vmatprep.mubr.f32.mxu0 %v8998
      %9223 = vmatmul.mubr.f32.gmra.mrb[0].mxu0 %v8997
      %v9224 = vpop.f32.mrb[0].mxu0
      %v9225 = vpop.f32.mrb[0].mxu0
      %9226 = vdwg.mxu0
      %v9227 = vxor.u32 %v9105, 2147483648
      %v9228 = vxor.u32 %v9110, 2147483648
      %v9229 = vxor.u32 %v9115, 2147483648
      %v9230 = vxor.u32 %v9120, 2147483648
      %v9231 = vxor.u32 %v9125, 2147483648
      %v9232 = vxor.u32 %v9130, 2147483648
      %v9233 = vxor.u32 %v9135, 2147483648
      %v9234 = vxor.u32 %v9140, 2147483648
      %v9235 = vxor.u32 %v9145, 2147483648
      %v9236 = vxor.u32 %v9150, 2147483648
      %v9237 = vxor.u32 %v9167, 2147483648
      %v9238 = vxor.u32 %v9172, 2147483648
      %v9239 = vxor.u32 %v9177, 2147483648
      %v9240 = vxor.u32 %v9182, 2147483648
      %v9241 = vxor.u32 %v9187, 2147483648
      %v9242 = vxor.u32 %v9192, 2147483648
      %v9243 = vxor.u32 %v9197, 2147483648
      %v9244 = vxor.u32 %v9202, 2147483648
      %v9245 = vxor.u32 %v9207, 2147483648
      %v9246 = vxor.u32 %v9212, 2147483648
      %v9247 = vmul.f32 %v9227, 1.442695
      %v9248 = vpow.pop %v9247
      %v9249 = vmul.f32 %v9228, 1.442695
      %v9250 = vpow.pop %v9249
      %v9251 = vmul.f32 %v9229, 1.442695
      %v9252 = vpow.pop %v9251
      %v9253 = vmul.f32 %v9230, 1.442695
      %v9254 = vpow.pop %v9253
      %v9255 = vmul.f32 %v9231, 1.442695
      %v9256 = vpow.pop %v9255
      %v9257 = vmul.f32 %v9232, 1.442695
      %v9258 = vpow.pop %v9257
      %v9259 = vmul.f32 %v9233, 1.442695
      %v9260 = vpow.pop %v9259
      %v9261 = vmul.f32 %v9234, 1.442695
      %v9262 = vpow.pop %v9261
      %v9263 = vmul.f32 %v9235, 1.442695
      %v9264 = vpow.pop %v9263
      %v9265 = vmul.f32 %v9236, 1.442695
      %v9266 = vpow.pop %v9265
      %v9267 = vmul.f32 %v9237, 1.442695
      %v9268 = vpow.pop %v9267
      %v9269 = vmul.f32 %v9238, 1.442695
      %v9270 = vpow.pop %v9269
      %v9271 = vmul.f32 %v9239, 1.442695
      %v9272 = vpow.pop %v9271
      %v9273 = vmul.f32 %v9240, 1.442695
      %v9274 = vpow.pop %v9273
      %v9275 = vmul.f32 %v9241, 1.442695
      %v9276 = vpow.pop %v9275
      %v9277 = vmul.f32 %v9242, 1.442695
      %v9278 = vpow.pop %v9277
      %v9279 = vmul.f32 %v9243, 1.442695
      %v9280 = vpow.pop %v9279
      %v9281 = vmul.f32 %v9244, 1.442695
      %v9282 = vpow.pop %v9281
      %v9283 = vmul.f32 %v9245, 1.442695
      %v9284 = vpow.pop %v9283
      %v9285 = vmul.f32 %v9246, 1.442695
      %v9286 = vpow.pop %v9285
      %v9287 = vadd.f32 %v9248, 1.0
      %v9288 = vadd.f32 %v9250, 1.0
      %v9289 = vadd.f32 %v9252, 1.0
      %v9290 = vadd.f32 %v9254, 1.0
      %v9291 = vadd.f32 %v9256, 1.0
      %v9292 = vadd.f32 %v9258, 1.0
      %v9293 = vadd.f32 %v9260, 1.0
      %v9294 = vadd.f32 %v9262, 1.0
      %v9295 = vadd.f32 %v9264, 1.0
      %v9296 = vadd.f32 %v9266, 1.0
      %v9297 = vadd.f32 %v9268, 1.0
      %v9298 = vadd.f32 %v9270, 1.0
      %v9299 = vadd.f32 %v9272, 1.0
      %v9300 = vadd.f32 %v9274, 1.0
      %v9301 = vadd.f32 %v9276, 1.0
      %v9302 = vadd.f32 %v9278, 1.0
      %v9303 = vadd.f32 %v9280, 1.0
      %v9304 = vadd.f32 %v9282, 1.0
      %v9305 = vadd.f32 %v9284, 1.0
      %v9306 = vadd.f32 %v9286, 1.0
      %v9307 = vrcp.pop %v9287
      %v9308 = vmul.f32 1.0, %v9307
      %v9309 = vrcp.pop %v9288
      %v9310 = vmul.f32 1.0, %v9309
      %v9311 = vrcp.pop %v9289
      %v9312 = vmul.f32 1.0, %v9311
      %v9313 = vrcp.pop %v9290
      %v9314 = vmul.f32 1.0, %v9313
      %v9315 = vrcp.pop %v9291
      %v9316 = vmul.f32 1.0, %v9315
      %v9317 = vrcp.pop %v9292
      %v9318 = vmul.f32 1.0, %v9317
      %v9319 = vrcp.pop %v9293
      %v9320 = vmul.f32 1.0, %v9319
      %v9321 = vrcp.pop %v9294
      %v9322 = vmul.f32 1.0, %v9321
      %v9323 = vrcp.pop %v9295
      %v9324 = vmul.f32 1.0, %v9323
      %v9325 = vrcp.pop %v9296
      %v9326 = vmul.f32 1.0, %v9325
      %v9327 = vrcp.pop %v9297
      %v9328 = vmul.f32 1.0, %v9327
      %v9329 = vrcp.pop %v9298
      %v9330 = vmul.f32 1.0, %v9329
      %v9331 = vrcp.pop %v9299
      %v9332 = vmul.f32 1.0, %v9331
      %v9333 = vrcp.pop %v9300
      %v9334 = vmul.f32 1.0, %v9333
      %v9335 = vrcp.pop %v9301
      %v9336 = vmul.f32 1.0, %v9335
      %v9337 = vrcp.pop %v9302
      %v9338 = vmul.f32 1.0, %v9337
      %v9339 = vrcp.pop %v9303
      %v9340 = vmul.f32 1.0, %v9339
      %v9341 = vrcp.pop %v9304
      %v9342 = vmul.f32 1.0, %v9341
      %v9343 = vrcp.pop %v9305
      %v9344 = vmul.f32 1.0, %v9343
      %v9345 = vrcp.pop %v9306
      %v9346 = vmul.f32 1.0, %v9345
      %9347 = vst [vmem:[%s280] sm:$0xff] %v9308
      %9348 = vst [vmem:[%s280 + $0x8] sm:$0xff] %v9310
      %9349 = vst [vmem:[%s280 + $0x10] sm:$0xff] %v9312
      %9350 = vst [vmem:[%s280 + $0x18] sm:$0xff] %v9314
      %9351 = vst [vmem:[%s280 + $0x20] sm:$0xff] %v9316
      %9352 = vst [vmem:[%s280 + $0x28] sm:$0xff] %v9318
      %9353 = vst [vmem:[%s280 + $0x30] sm:$0xff] %v9320
      %9354 = vst [vmem:[%s280 + $0x38] sm:$0xff] %v9322
      %9355 = vst [vmem:[%s280 + $0x40] sm:$0xff] %v9324
      %9356 = vst [vmem:[%s280 + $0x48] sm:$0xff] %v9326
      %s9357 = scalar_lea.vmem %s280, 80
      %9358 = vst [vmem:[%s9357] sm:$0xff] %v9328
      %9359 = vst [vmem:[%s9357 + $0x8] sm:$0xff] %v9330
      %9360 = vst [vmem:[%s9357 + $0x10] sm:$0xff] %v9332
      %9361 = vst [vmem:[%s9357 + $0x18] sm:$0xff] %v9334
      %9362 = vst [vmem:[%s9357 + $0x20] sm:$0xff] %v9336
      %9363 = vst [vmem:[%s9357 + $0x28] sm:$0xff] %v9338
      %9364 = vst [vmem:[%s9357 + $0x30] sm:$0xff] %v9340
      %9365 = vst [vmem:[%s9357 + $0x38] sm:$0xff] %v9342
      %9366 = vst [vmem:[%s9357 + $0x40] sm:$0xff] %v9344
      %9367 = vst [vmem:[%s9357 + $0x48] sm:$0xff] %v9346
      %s9368 = smul.u32 2, %s18
      %p9369 = scmp.lt.s32.totalorder %s9368, 3
      %s9370 = scalar_select %p9369, %s9368, 3
      %s9371 = smul.addr %s9370, 10
      %s9372 = smul.addr %s9371, 8
      %s9373 = scalar_lea.vmem %s7, %s9372
      // Predicated region
      $region49: #{decoder_forward.1} parent=47 // pred_check
        %p9374 = pneg %p188
      $region50: #{decoder_forward.1} parent=47 // pred_check_branch
        %9376 = sbr.rel (%p9374) target = $region52
      $region51: #{decoder_forward.1} parent=47 // pred_region
        %s9377 = smul.u32 2, %s18
      $region52: #{decoder_forward.1} parent=47 // pred_fallthru
        _
    $region48: #{decoder_forward.1} parent=5 // pred_fallthru
      _
    %p9378 = scmp.le.s32.totalorder 2, %s13
    // Predicated region
    $region53: #{decoder_forward.1} parent=5 // pred_check
      %p9379 = pneg %p9378
    $region54: #{decoder_forward.1} parent=5 // pred_check_branch
      %9381 = sbr.rel (%p9379) target = $region56
    $region55: #{decoder_forward.1} parent=5 // pred_region
      %s9382 = ssub.s32 %s13, 2
      // Predicated region
      $region57: #{decoder_forward.1} parent=55 // pred_check
        %p9383 = pneg %p194
      $region58: #{decoder_forward.1} parent=55 // pred_check_branch
        %9385 = sbr.rel (%p9383) target = $region60
      $region59: #{decoder_forward.1} parent=55 // pred_region
        %s9386 = smul.u32 2, %s19
        %p9387 = scmp.lt.s32.totalorder %s9386, 3
        %s9388 = scalar_select %p9387, %s9386, 3
        %s9389 = smul.addr %s9388, 10
        %s9390 = smul.addr %s9389, 8
        %s9391 = scalar_lea.vmem %s7, %s9390
      $region60: #{decoder_forward.1} parent=55 // pred_fallthru
        _
    $region56: #{decoder_forward.1} parent=5 // pred_fallthru
      _
  $region6: #{decoder_forward.1} parent=0 // loop_footer
    %s17 = sadd.s32 1, %s13
  $region7: #{decoder_forward.1} parent=0 // loop_footer_branch
    %12 = sbr.rel target = $region3
  $region8: #{decoder_forward.1} parent=0 // loop_exit
    _

</llo_original>
